<compile_context>
chip_gen: v5e
topology: v5e:2x2
jax: 0.10.0
libtpu: 0.0.40
codegen_flags: <defaults>
</compile_context>

<pallas_src>
import jax
import jax.numpy as jnp
from jax import lax
from jax.experimental import pallas as pl
from jax.experimental.pallas import tpu as pltpu


SLACK = 32       # guard rows above/below the 16x16 flat slab so shifted tap reads stay in-bounds
IMG_TILE = 8     # images per grid step


def _interior_mask():
    # rows of the 16x16 flat slab; interior = padded coords (1..14, 1..14).  Cheap (shift/and).
    r = lax.broadcasted_iota(jnp.int32, (256, 1), 0)
    hp = r >> 4
    wp = r & 15
    ok = (hp >= 1) & (hp <= 14) & (wp >= 1) & (wp <= 14)
    return ok.astype(jnp.float32)


# ------------------------------------------------------------------ encoder conv kernel

def encoder_conv_kernel(p1_ref, w1_ref, b1_ref, w2_ref, b2_ref, w3_ref, b3_ref,
                        wr_ref, br_ref, out_ref, c1_s, f2_s, f3_s, c3_s):
    f32, bf16 = jnp.float32, jnp.bfloat16
    n_img = out_ref.shape[0]

    # Per-step slab zeroing (borders / slack only matter; interiors are rewritten per image).
    f2_s[...] = jnp.zeros_like(f2_s)
    f3_s[...] = jnp.zeros_like(f3_s)
    mask = _interior_mask()                                            # (256, 1), hoisted

    def one_image(t, carry):
        # ---- conv1 (3x3, 1->64) + relu : (896,9)@(9,64) MXU; rows = h*32 + w (pitch 32) ----
        p1 = p1_ref[t]                                                 # (896, 9) bf16
        c1 = jnp.dot(p1, w1_ref[...], preferred_element_type=f32) + b1_ref[...]
        c1_s[...] = jnp.maximum(c1, 0.0)

        # ---- maxpool 2x2 : 28x28 -> 14x14 (one-shot horizontal, aligned vertical slices) ----
        hmax = jnp.maximum(c1_s[pl.ds(0, 448, stride=2), :],
                           c1_s[pl.ds(1, 448, stride=2), :])           # (448,64): 28 groups of 16
        for h2 in range(14):
            row = jnp.maximum(hmax[32 * h2:32 * h2 + 14],
                              hmax[32 * h2 + 16:32 * h2 + 30])         # (14, 64)
            dst = SLACK + (h2 + 1) * 16 + 1
            f2_s[dst:dst + 14, :] = row                                # interior of the 16x16 slab

        # ---- conv2 (3x3) + relu : 9 shifted-slab taps, f32 vreg accumulation ----
        acc2 = jnp.zeros((256, 64), f32)
        for tp in range(9):
            off = (tp // 3 - 1) * 16 + (tp % 3 - 1)
            xin = f2_s[SLACK + off:SLACK + off + 256, :].astype(bf16)
            acc2 = acc2 + jnp.dot(xin, w2_ref[tp], preferred_element_type=f32)
        a2 = jnp.maximum(acc2 + b2_ref[...], 0.0) * mask               # masked borders = conv3 pad
        f3_s[SLACK:SLACK + 256, :] = a2

        # ---- conv3 (3x3) + residual 1x1(pooled conv1) + relu ----
        xres = f2_s[SLACK:SLACK + 256, :].astype(bf16)                 # residual = extra tap
        acc3 = jnp.dot(xres, wr_ref[...], preferred_element_type=f32)
        for tp in range(9):
            off = (tp // 3 - 1) * 16 + (tp % 3 - 1)
            xin = f3_s[SLACK + off:SLACK + off + 256, :].astype(bf16)
            acc3 = acc3 + jnp.dot(xin, w3_ref[tp], preferred_element_type=f32)
        c3_s[...] = jnp.maximum(acc3 + b3_ref[...] + br_ref[...], 0.0)

        # ---- maxpool 2x2 : 14x14 -> 7x7, vectorized; emit (56,64): 7 groups of [7 valid + 1 pad] ----
        hv = jnp.maximum(c3_s[pl.ds(17, 112, stride=2), :],
                         c3_s[pl.ds(18, 112, stride=2), :])            # (112, 64)
        blocks = [jnp.maximum(hv[16 * h3:16 * h3 + 8], hv[16 * h3 + 8:16 * h3 + 16])
                  for h3 in range(7)]                                  # each (8, 64); slot 7 = pad
        out_ref[t] = jnp.concatenate(blocks, axis=0).astype(out_ref.dtype)
        return carry

    lax.fori_loop(0, n_img, one_image, 0)


# ------------------------------------------------------------------ fused FC / VAE head kernel

def vae_head_kernel(xf_ref, eps_ref,
                    w1_ref, b1_ref, wmu_ref, bmu_ref, wlv_ref, blv_ref,
                    w4_ref, b4_ref, w5_ref, b5_ref, w6_ref, b6_ref,
                    recon_ref, mu_ref, lv_ref):
    f32, bf16 = jnp.float32, jnp.bfloat16
    # fc1 + relu (dropout1 / dropout2 are identity in eval mode)
    h = jnp.dot(xf_ref[...], w1_ref[...], preferred_element_type=f32) + b1_ref[...]
    h = jnp.maximum(h, 0.0).astype(bf16)
    # mu / log_var heads
    mu = jnp.dot(h, wmu_ref[...], preferred_element_type=f32) + bmu_ref[...]
    lv = jnp.dot(h, wlv_ref[...], preferred_element_type=f32) + blv_ref[...]
    # reparameterization: z = mu + eps * exp(log_var / 2)
    z = mu + eps_ref[...] * jnp.exp(lv * 0.5)
    # decoder: fc4 + relu, fc5 + relu, fc6 + sigmoid
    d = jnp.dot(z.astype(bf16), w4_ref[...], preferred_element_type=f32) + b4_ref[...]
    d = jnp.maximum(d, 0.0)
    d = jnp.dot(d.astype(bf16), w5_ref[...], preferred_element_type=f32) + b5_ref[...]
    d = jnp.maximum(d, 0.0)
    logits = jnp.dot(d.astype(bf16), w6_ref[...], preferred_element_type=f32) + b6_ref[...]
    e = jnp.exp(-jnp.abs(logits))                                      # stable sigmoid
    recon_ref[...] = jnp.where(logits >= 0.0, 1.0 / (1.0 + e), e / (1.0 + e))
    mu_ref[...] = mu
    lv_ref[...] = lv


# ------------------------------------------------------------------ pallas_call wrappers

_VMEM = pl.BlockSpec(memory_space=pltpu.MemorySpace.VMEM)


def encoder_conv(p1, p, img_tile):
    Bp = p1.shape[0]
    zero2 = lambda b: (0, 0)
    zero3 = lambda b: (0, 0, 0)
    return pl.pallas_call(
        encoder_conv_kernel,
        out_shape=jax.ShapeDtypeStruct((Bp, 56, 64), jnp.bfloat16),
        grid_spec=pltpu.PrefetchScalarGridSpec(
            num_scalar_prefetch=0,
            grid=(Bp // img_tile,),
            in_specs=[
                pl.BlockSpec((img_tile, 896, 9), lambda b: (b, 0, 0)),  # conv1 patches (pitch-32 rows)
                pl.BlockSpec((9, 64), zero2),                           # conv1 w (resident)
                pl.BlockSpec((1, 64), zero2),                           # conv1 b
                pl.BlockSpec((9, 64, 64), zero3),                       # conv2 w (tap-major)
                pl.BlockSpec((1, 64), zero2),                           # conv2 b
                pl.BlockSpec((9, 64, 64), zero3),                       # conv3 w
                pl.BlockSpec((1, 64), zero2),                           # conv3 b
                pl.BlockSpec((64, 64), zero2),                          # residual 1x1 w
                pl.BlockSpec((1, 64), zero2),                           # residual b
            ],
            out_specs=pl.BlockSpec((img_tile, 56, 64), lambda b: (b, 0, 0)),
            scratch_shapes=[
                pltpu.VMEM((896, 64), jnp.float32),                     # conv1 output (28x32 pitch)
                pltpu.VMEM((SLACK + 256 + SLACK, 64), jnp.float32),     # pooled conv1, padded 16x16 slab
                pltpu.VMEM((SLACK + 256 + SLACK, 64), jnp.float32),     # conv2 output, padded 16x16 slab
                pltpu.VMEM((256, 64), jnp.float32),                     # conv3 + residual output
            ],
        ),
        compiler_params=pltpu.CompilerParams(
            dimension_semantics=("parallel",),                          # image tiles independent
        ),
    )(p1, p['conv1_w'], p['conv1_b'], p['conv2_w'], p['conv2_b'],
      p['conv3_w'], p['conv3_b'], p['res_w'], p['res_b'])


def vae_head(xf, eps, p):
    # Single step: all FC weights (~2 MB bf16) and per-batch activations fit VMEM for small/medium B.
    Bp = xf.shape[0]
    return pl.pallas_call(
        vae_head_kernel,
        out_shape=(jax.ShapeDtypeStruct((Bp, 784), jnp.float32),
                   jax.ShapeDtypeStruct((Bp, 10), jnp.float32),
                   jax.ShapeDtypeStruct((Bp, 10), jnp.float32)),
        in_specs=[_VMEM] * 14,
        out_specs=(_VMEM, _VMEM, _VMEM),
    )(xf, eps, p['fc1_w'], p['fc1_b'], p['fc_mu_w'], p['fc_mu_b'],
      p['fc_lv_w'], p['fc_lv_b'], p['fc4_w'], p['fc4_b'],
      p['fc5_w'], p['fc5_b'], p['fc6_w'], p['fc6_b'])


# ------------------------------------------------------------------ glue

def conv1_patches(x_nchw):
    # 3x3 / stride 1 / pad 1 patches of the 1-channel input, row pitch padded 28 -> 32 so the
    # in-kernel pooling slices stay 8-aligned: (B,1,28,28) -> (B, 896, 9) bf16.
    B = x_nchw.shape[0]
    img = x_nchw[:, 0]                                   # (B, 28, 28)
    xp = jnp.pad(img, ((0, 0), (1, 1), (1, 1)))
    cols = [xp[:, dy:dy + 28, dx:dx + 28] for dy in range(3) for dx in range(3)]
    patch = jnp.stack(cols, axis=-1)                     # (B, 28, 28, 9)
    patch = jnp.pad(patch, ((0, 0), (0, 0), (0, 4), (0, 0)))   # pitch-32 rows (zeros, unused)
    return patch.reshape(B, 896, 9).astype(jnp.bfloat16)


def vae_forward(params, x_nchw, eps, img_tile=IMG_TILE):
    B = x_nchw.shape[0]
    Bp = ((B + img_tile - 1) // img_tile) * img_tile
    if Bp != B:                                          # pad batch to a multiple of IMG_TILE
        x_nchw = jnp.pad(x_nchw, ((0, Bp - B), (0, 0), (0, 0), (0, 0)))
        eps = jnp.pad(eps, ((0, Bp - B), (0, 0)))
    p1 = conv1_patches(x_nchw)
    feats = encoder_conv(p1, params, img_tile)           # (Bp, 56, 64) bf16 encoder features
    xf = feats.reshape(Bp, 56 * 64)                      # small XLA re-layout; pad slots hit zero fc1 rows
    recon, mu, log_var = vae_head(xf, eps, params)
    return recon[:B], mu[:B], log_var[:B]


# ------------------------------------------------------------------ params

def init_params(key):
    ks = jax.random.split(key, 20)

    def w(k, fan_in, shape):
        # MXU operands kept in bf16; accumulation stays f32 inside the kernels.
        return (jax.random.normal(k, shape, jnp.float32)
                / jnp.sqrt(jnp.float32(fan_in))).astype(jnp.bfloat16)

    def b(k, n):
        return jax.random.normal(k, (1, n), jnp.float32) * 0.01

    # fc1 rows follow the encoder's (7 row-groups x [7 valid + 1 pad] x 64 ch) feature layout;
    # the pad rows are zero.  (Trained PyTorch NCHW-flatten fc1 weights must be permuted to this
    # order once at load time.)
    fc1 = jax.random.normal(ks[8], (7, 8, 64, 128), jnp.float32) / jnp.sqrt(3136.0)
    fc1 = fc1.at[:, 7, :, :].set(0.0)
    fc1 = fc1.reshape(3584, 128).astype(jnp.bfloat16)

    return {
        # conv weights tap-major: conv1 (9, 64); conv2/3 (9 taps, Cin=64, Cout=64)
        'conv1_w': w(ks[0], 9 * 1, (9, 64)),        'conv1_b': b(ks[1], 64),
        'conv2_w': w(ks[2], 9 * 64, (9, 64, 64)),   'conv2_b': b(ks[3], 64),
        'conv3_w': w(ks[4], 9 * 64, (9, 64, 64)),   'conv3_b': b(ks[5], 64),
        'res_w':   w(ks[6], 64, (64, 64)),          'res_b':   b(ks[7], 64),
        'fc1_w':   fc1,                             'fc1_b':   b(ks[9], 128),
        'fc_mu_w': w(ks[10], 128, (128, 10)),       'fc_mu_b': b(ks[11], 10),
        'fc_lv_w': w(ks[12], 128, (128, 10)),       'fc_lv_b': b(ks[13], 10),
        'fc4_w':   w(ks[14], 10, (10, 256)),        'fc4_b':   b(ks[15], 256),
        'fc5_w':   w(ks[16], 256, (256, 512)),      'fc5_b':   b(ks[17], 512),
        'fc6_w':   w(ks[18], 512, (512, 784)),      'fc6_b':   b(ks[19], 784),
    }


# ------------------------------------------------------------------ main

if __name__ == "__main__":
    key = jax.random.PRNGKey(0)
    k_param, k_x, k_eps = jax.random.split(key, 3)

    B = 2
    x = jax.random.uniform(k_x, (B, 1, 28, 28), jnp.float32)   # MNIST-like NCHW input
    eps = jax.random.normal(k_eps, (B, 10), jnp.float32)       # reparameterization noise
    params = init_params(k_param)

    fwd = jax.jit(vae_forward)
    recon, mu, log_var = fwd(params, x, eps)
    jax.block_until_ready((recon, mu, log_var))

    assert recon.shape == (B, 784) and mu.shape == (B, 10) and log_var.shape == (B, 10)
    assert bool(jnp.all(jnp.isfinite(recon))) and bool(jnp.all(jnp.isfinite(mu)))
    assert bool(jnp.all(recon >= 0.0)) and bool(jnp.all(recon <= 1.0))

    print("KERNEL_OK")
</pallas_src>

<mosaic_0001>
module attributes {stable_mosaic.version = 11 : i64} {
  func.func @encoder_conv_kernel(%arg0: i32, %arg1: memref<8x896x9xbf16, #tpu.memory_space<vmem>>, %arg2: memref<9x64xbf16, #tpu.memory_space<vmem>>, %arg3: memref<1x64xf32, #tpu.memory_space<vmem>>, %arg4: memref<9x64x64xbf16, #tpu.memory_space<vmem>>, %arg5: memref<1x64xf32, #tpu.memory_space<vmem>>, %arg6: memref<9x64x64xbf16, #tpu.memory_space<vmem>>, %arg7: memref<1x64xf32, #tpu.memory_space<vmem>>, %arg8: memref<64x64xbf16, #tpu.memory_space<vmem>>, %arg9: memref<1x64xf32, #tpu.memory_space<vmem>>, %arg10: memref<8x56x64xbf16, #tpu.memory_space<vmem>>, %arg11: memref<896x64xf32, #tpu.memory_space<vmem>>, %arg12: memref<320x64xf32, #tpu.memory_space<vmem>>, %arg13: memref<320x64xf32, #tpu.memory_space<vmem>>, %arg14: memref<256x64xf32, #tpu.memory_space<vmem>>) attributes {dimension_semantics = [#tpu.dimension_semantics<parallel>], iteration_bounds = array<i64: 1>, scalar_prefetch = 0 : i64, scratch_operands = 4 : i64, tpu.core_type = #tpu.core_type<tc>, window_params = [{transform_indices = @transform_0, window_bounds = array<i64: 8, 896, 9>}, {pipeline_mode = #tpu.pipeline_mode<synchronous>, transform_indices = @transform_1, window_bounds = array<i64: 9, 64>}, {pipeline_mode = #tpu.pipeline_mode<synchronous>, transform_indices = @transform_2, window_bounds = array<i64: 1, 64>}, {pipeline_mode = #tpu.pipeline_mode<synchronous>, transform_indices = @transform_3, window_bounds = array<i64: 9, 64, 64>}, {pipeline_mode = #tpu.pipeline_mode<synchronous>, transform_indices = @transform_4, window_bounds = array<i64: 1, 64>}, {pipeline_mode = #tpu.pipeline_mode<synchronous>, transform_indices = @transform_5, window_bounds = array<i64: 9, 64, 64>}, {pipeline_mode = #tpu.pipeline_mode<synchronous>, transform_indices = @transform_6, window_bounds = array<i64: 1, 64>}, {pipeline_mode = #tpu.pipeline_mode<synchronous>, transform_indices = @transform_7, window_bounds = array<i64: 64, 64>}, {pipeline_mode = #tpu.pipeline_mode<synchronous>, transform_indices = @transform_8, window_bounds = array<i64: 1, 64>}, {transform_indices = @transform_9, window_bounds = array<i64: 8, 56, 64>}]} {
    %cst = arith.constant 0.000000e+00 : f32
    %0 = vector.broadcast %cst : f32 to vector<320x64xf32>
    %c0 = arith.constant 0 : index
    %c0_0 = arith.constant 0 : index
    %1 = vector.load %arg12[%c0, %c0_0] : memref<320x64xf32, #tpu.memory_space<vmem>>, vector<320x64xf32>
    tpu.vector_store %arg12[%c0, %c0_0], %0 {strides = array<i32>} : memref<320x64xf32, #tpu.memory_space<vmem>>, vector<320x64xf32>,
    %cst_1 = arith.constant 0.000000e+00 : f32
    %2 = vector.broadcast %cst_1 : f32 to vector<320x64xf32>
    %c0_2 = arith.constant 0 : index
    %c0_3 = arith.constant 0 : index
    %3 = vector.load %arg13[%c0_2, %c0_3] : memref<320x64xf32, #tpu.memory_space<vmem>>, vector<320x64xf32>
    tpu.vector_store %arg13[%c0_2, %c0_3], %2 {strides = array<i32>} : memref<320x64xf32, #tpu.memory_space<vmem>>, vector<320x64xf32>,
    %4 = tpu.iota {dimensions = array<i32: 0>} : vector<256x1xi32>
    %c4_i32 = arith.constant 4 : i32
    %5 = vector.broadcast %c4_i32 : i32 to vector<256x1xi32>
    %6 = arith.shrsi %4, %5 : vector<256x1xi32>
    %c15_i32 = arith.constant 15 : i32
    %7 = vector.broadcast %c15_i32 : i32 to vector<256x1xi32>
    %8 = arith.andi %4, %7 : vector<256x1xi32>
    %c1_i32 = arith.constant 1 : i32
    %9 = vector.broadcast %c1_i32 : i32 to vector<256x1xi32>
    %10 = arith.cmpi sge, %6, %9 : vector<256x1xi32>
    %c14_i32 = arith.constant 14 : i32
    %11 = vector.broadcast %c14_i32 : i32 to vector<256x1xi32>
    %12 = arith.cmpi sle, %6, %11 : vector<256x1xi32>
    %13 = arith.andi %10, %12 : vector<256x1xi1>
    %c1_i32_4 = arith.constant 1 : i32
    %14 = vector.broadcast %c1_i32_4 : i32 to vector<256x1xi32>
    %15 = arith.cmpi sge, %8, %14 : vector<256x1xi32>
    %16 = arith.andi %13, %15 : vector<256x1xi1>
    %c14_i32_5 = arith.constant 14 : i32
    %17 = vector.broadcast %c14_i32_5 : i32 to vector<256x1xi32>
    %18 = arith.cmpi sle, %8, %17 : vector<256x1xi32>
    %19 = arith.andi %16, %18 : vector<256x1xi1>
    %20 = arith.extui %19 : vector<256x1xi1> to vector<256x1xi32>
    %21 = arith.sitofp %20 : vector<256x1xi32> to vector<256x1xf32>
    %c0_i32 = arith.constant 0 : i32
    %c8_i32 = arith.constant 8 : i32
    %22 = arith.addi %c0_i32, %c8_i32 : i32
    %c1_i32_6 = arith.constant 1 : i32
    scf.for %arg15 = %c0_i32 to %22 step %c1_i32_6  : i32 {
      %23 = arith.index_cast %arg15 : i32 to index
      %c0_8 = arith.constant 0 : index
      %c0_9 = arith.constant 0 : index
      %24 = vector.load %arg1[%23, %c0_8, %c0_9] : memref<8x896x9xbf16, #tpu.memory_space<vmem>>, vector<1x896x9xbf16>
      %25 = vector.shape_cast %24 : vector<1x896x9xbf16> to vector<896x9xbf16>
      %c0_10 = arith.constant 0 : index
      %c0_11 = arith.constant 0 : index
      %26 = vector.load %arg2[%c0_10, %c0_11] : memref<9x64xbf16, #tpu.memory_space<vmem>>, vector<9x64xbf16>
      %cst_12 = arith.constant dense<0.000000e+00> : vector<896x64xf32>
      %27 = tpu.matmul %25, %26, %cst_12 {dimension_numbers = #tpu.dot_dimension_numbers<[1], [0], [0], [1], [0, 0, 1, 1], [], []>} : vector<896x9xbf16>, vector<9x64xbf16>, vector<896x64xf32> -> vector<896x64xf32>
      %c0_13 = arith.constant 0 : index
      %c0_14 = arith.constant 0 : index
      %28 = vector.load %arg3[%c0_13, %c0_14] : memref<1x64xf32, #tpu.memory_space<vmem>>, vector<1x64xf32>
      %29 = vector.broadcast %28 : vector<1x64xf32> to vector<896x64xf32>
      %30 = arith.addf %27, %29 : vector<896x64xf32>
      %cst_15 = arith.constant 0.000000e+00 : f32
      %31 = vector.broadcast %cst_15 : f32 to vector<896x64xf32>
      %32 = arith.maximumf %30, %31 : vector<896x64xf32>
      %c0_16 = arith.constant 0 : index
      %c0_17 = arith.constant 0 : index
      %33 = vector.load %arg11[%c0_16, %c0_17] : memref<896x64xf32, #tpu.memory_space<vmem>>, vector<896x64xf32>
      tpu.vector_store %arg11[%c0_16, %c0_17], %32 {strides = array<i32>} : memref<896x64xf32, #tpu.memory_space<vmem>>, vector<896x64xf32>,
      %c0_18 = arith.constant 0 : index
      %c0_19 = arith.constant 0 : index
      %34 = tpu.strided_load %arg11[%c0_18, %c0_19] {strides = array<i32: 2, 1>} : memref<896x64xf32, #tpu.memory_space<vmem>>, vector<448x64xf32>
      %c1 = arith.constant 1 : index
      %c0_20 = arith.constant 0 : index
      %35 = tpu.strided_load %arg11[%c1, %c0_20] {strides = array<i32: 2, 1>} : memref<896x64xf32, #tpu.memory_space<vmem>>, vector<448x64xf32>
      %36 = arith.maximumf %34, %35 : vector<448x64xf32>
      %37 = vector.extract_strided_slice %36 {offsets = [0, 0], sizes = [14, 64], strides = [1, 1]} : vector<448x64xf32> to vector<14x64xf32>
      %38 = vector.extract_strided_slice %36 {offsets = [16, 0], sizes = [14, 64], strides = [1, 1]} : vector<448x64xf32> to vector<14x64xf32>
      %39 = arith.maximumf %37, %38 : vector<14x64xf32>
      %c49 = arith.constant 49 : index
      %c0_21 = arith.constant 0 : index
      %40 = vector.load %arg12[%c49, %c0_21] : memref<320x64xf32, #tpu.memory_space<vmem>>, vector<14x64xf32>
      tpu.vector_store %arg12[%c49, %c0_21], %39 {strides = array<i32>} : memref<320x64xf32, #tpu.memory_space<vmem>>, vector<14x64xf32>,
      %41 = vector.extract_strided_slice %36 {offsets = [32, 0], sizes = [14, 64], strides = [1, 1]} : vector<448x64xf32> to vector<14x64xf32>
      %42 = vector.extract_strided_slice %36 {offsets = [48, 0], sizes = [14, 64], strides = [1, 1]} : vector<448x64xf32> to vector<14x64xf32>
      %43 = arith.maximumf %41, %42 : vector<14x64xf32>
      %c65 = arith.constant 65 : index
      %c0_22 = arith.constant 0 : index
      %44 = vector.load %arg12[%c65, %c0_22] : memref<320x64xf32, #tpu.memory_space<vmem>>, vector<14x64xf32>
      tpu.vector_store %arg12[%c65, %c0_22], %43 {strides = array<i32>} : memref<320x64xf32, #tpu.memory_space<vmem>>, vector<14x64xf32>,
      %45 = vector.extract_strided_slice %36 {offsets = [64, 0], sizes = [14, 64], strides = [1, 1]} : vector<448x64xf32> to vector<14x64xf32>
      %46 = vector.extract_strided_slice %36 {offsets = [80, 0], sizes = [14, 64], strides = [1, 1]} : vector<448x64xf32> to vector<14x64xf32>
      %47 = arith.maximumf %45, %46 : vector<14x64xf32>
      %c81 = arith.constant 81 : index
      %c0_23 = arith.constant 0 : index
      %48 = vector.load %arg12[%c81, %c0_23] : memref<320x64xf32, #tpu.memory_space<vmem>>, vector<14x64xf32>
      tpu.vector_store %arg12[%c81, %c0_23], %47 {strides = array<i32>} : memref<320x64xf32, #tpu.memory_space<vmem>>, vector<14x64xf32>,
      %49 = vector.extract_strided_slice %36 {offsets = [96, 0], sizes = [14, 64], strides = [1, 1]} : vector<448x64xf32> to vector<14x64xf32>
      %50 = vector.extract_strided_slice %36 {offsets = [112, 0], sizes = [14, 64], strides = [1, 1]} : vector<448x64xf32> to vector<14x64xf32>
      %51 = arith.maximumf %49, %50 : vector<14x64xf32>
      %c97 = arith.constant 97 : index
      %c0_24 = arith.constant 0 : index
      %52 = vector.load %arg12[%c97, %c0_24] : memref<320x64xf32, #tpu.memory_space<vmem>>, vector<14x64xf32>
      tpu.vector_store %arg12[%c97, %c0_24], %51 {strides = array<i32>} : memref<320x64xf32, #tpu.memory_space<vmem>>, vector<14x64xf32>,
      %53 = vector.extract_strided_slice %36 {offsets = [128, 0], sizes = [14, 64], strides = [1, 1]} : vector<448x64xf32> to vector<14x64xf32>
      %54 = vector.extract_strided_slice %36 {offsets = [144, 0], sizes = [14, 64], strides = [1, 1]} : vector<448x64xf32> to vector<14x64xf32>
      %55 = arith.maximumf %53, %54 : vector<14x64xf32>
      %c113 = arith.constant 113 : index
      %c0_25 = arith.constant 0 : index
      %56 = vector.load %arg12[%c113, %c0_25] : memref<320x64xf32, #tpu.memory_space<vmem>>, vector<14x64xf32>
      tpu.vector_store %arg12[%c113, %c0_25], %55 {strides = array<i32>} : memref<320x64xf32, #tpu.memory_space<vmem>>, vector<14x64xf32>,
      %57 = vector.extract_strided_slice %36 {offsets = [160, 0], sizes = [14, 64], strides = [1, 1]} : vector<448x64xf32> to vector<14x64xf32>
      %58 = vector.extract_strided_slice %36 {offsets = [176, 0], sizes = [14, 64], strides = [1, 1]} : vector<448x64xf32> to vector<14x64xf32>
      %59 = arith.maximumf %57, %58 : vector<14x64xf32>
      %c129 = arith.constant 129 : index
      %c0_26 = arith.constant 0 : index
      %60 = vector.load %arg12[%c129, %c0_26] : memref<320x64xf32, #tpu.memory_space<vmem>>, vector<14x64xf32>
      tpu.vector_store %arg12[%c129, %c0_26], %59 {strides = array<i32>} : memref<320x64xf32, #tpu.memory_space<vmem>>, vector<14x64xf32>,
      %61 = vector.extract_strided_slice %36 {offsets = [192, 0], sizes = [14, 64], strides = [1, 1]} : vector<448x64xf32> to vector<14x64xf32>
      %62 = vector.extract_strided_slice %36 {offsets = [208, 0], sizes = [14, 64], strides = [1, 1]} : vector<448x64xf32> to vector<14x64xf32>
      %63 = arith.maximumf %61, %62 : vector<14x64xf32>
      %c145 = arith.constant 145 : index
      %c0_27 = arith.constant 0 : index
      %64 = vector.load %arg12[%c145, %c0_27] : memref<320x64xf32, #tpu.memory_space<vmem>>, vector<14x64xf32>
      tpu.vector_store %arg12[%c145, %c0_27], %63 {strides = array<i32>} : memref<320x64xf32, #tpu.memory_space<vmem>>, vector<14x64xf32>,
      %65 = vector.extract_strided_slice %36 {offsets = [224, 0], sizes = [14, 64], strides = [1, 1]} : vector<448x64xf32> to vector<14x64xf32>
      %66 = vector.extract_strided_slice %36 {offsets = [240, 0], sizes = [14, 64], strides = [1, 1]} : vector<448x64xf32> to vector<14x64xf32>
      %67 = arith.maximumf %65, %66 : vector<14x64xf32>
      %c161 = arith.constant 161 : index
      %c0_28 = arith.constant 0 : index
      %68 = vector.load %arg12[%c161, %c0_28] : memref<320x64xf32, #tpu.memory_space<vmem>>, vector<14x64xf32>
      tpu.vector_store %arg12[%c161, %c0_28], %67 {strides = array<i32>} : memref<320x64xf32, #tpu.memory_space<vmem>>, vector<14x64xf32>,
      %69 = vector.extract_strided_slice %36 {offsets = [256, 0], sizes = [14, 64], strides = [1, 1]} : vector<448x64xf32> to vector<14x64xf32>
      %70 = vector.extract_strided_slice %36 {offsets = [272, 0], sizes = [14, 64], strides = [1, 1]} : vector<448x64xf32> to vector<14x64xf32>
      %71 = arith.maximumf %69, %70 : vector<14x64xf32>
      %c177 = arith.constant 177 : index
      %c0_29 = arith.constant 0 : index
      %72 = vector.load %arg12[%c177, %c0_29] : memref<320x64xf32, #tpu.memory_space<vmem>>, vector<14x64xf32>
      tpu.vector_store %arg12[%c177, %c0_29], %71 {strides = array<i32>} : memref<320x64xf32, #tpu.memory_space<vmem>>, vector<14x64xf32>,
      %73 = vector.extract_strided_slice %36 {offsets = [288, 0], sizes = [14, 64], strides = [1, 1]} : vector<448x64xf32> to vector<14x64xf32>
      %74 = vector.extract_strided_slice %36 {offsets = [304, 0], sizes = [14, 64], strides = [1, 1]} : vector<448x64xf32> to vector<14x64xf32>
      %75 = arith.maximumf %73, %74 : vector<14x64xf32>
      %c193 = arith.constant 193 : index
      %c0_30 = arith.constant 0 : index
      %76 = vector.load %arg12[%c193, %c0_30] : memref<320x64xf32, #tpu.memory_space<vmem>>, vector<14x64xf32>
      tpu.vector_store %arg12[%c193, %c0_30], %75 {strides = array<i32>} : memref<320x64xf32, #tpu.memory_space<vmem>>, vector<14x64xf32>,
      %77 = vector.extract_strided_slice %36 {offsets = [320, 0], sizes = [14, 64], strides = [1, 1]} : vector<448x64xf32> to vector<14x64xf32>
      %78 = vector.extract_strided_slice %36 {offsets = [336, 0], sizes = [14, 64], strides = [1, 1]} : vector<448x64xf32> to vector<14x64xf32>
      %79 = arith.maximumf %77, %78 : vector<14x64xf32>
      %c209 = arith.constant 209 : index
      %c0_31 = arith.constant 0 : index
      %80 = vector.load %arg12[%c209, %c0_31] : memref<320x64xf32, #tpu.memory_space<vmem>>, vector<14x64xf32>
      tpu.vector_store %arg12[%c209, %c0_31], %79 {strides = array<i32>} : memref<320x64xf32, #tpu.memory_space<vmem>>, vector<14x64xf32>,
      %81 = vector.extract_strided_slice %36 {offsets = [352, 0], sizes = [14, 64], strides = [1, 1]} : vector<448x64xf32> to vector<14x64xf32>
      %82 = vector.extract_strided_slice %36 {offsets = [368, 0], sizes = [14, 64], strides = [1, 1]} : vector<448x64xf32> to vector<14x64xf32>
      %83 = arith.maximumf %81, %82 : vector<14x64xf32>
      %c225 = arith.constant 225 : index
      %c0_32 = arith.constant 0 : index
      %84 = vector.load %arg12[%c225, %c0_32] : memref<320x64xf32, #tpu.memory_space<vmem>>, vector<14x64xf32>
      tpu.vector_store %arg12[%c225, %c0_32], %83 {strides = array<i32>} : memref<320x64xf32, #tpu.memory_space<vmem>>, vector<14x64xf32>,
      %85 = vector.extract_strided_slice %36 {offsets = [384, 0], sizes = [14, 64], strides = [1, 1]} : vector<448x64xf32> to vector<14x64xf32>
      %86 = vector.extract_strided_slice %36 {offsets = [400, 0], sizes = [14, 64], strides = [1, 1]} : vector<448x64xf32> to vector<14x64xf32>
      %87 = arith.maximumf %85, %86 : vector<14x64xf32>
      %c241 = arith.constant 241 : index
      %c0_33 = arith.constant 0 : index
      %88 = vector.load %arg12[%c241, %c0_33] : memref<320x64xf32, #tpu.memory_space<vmem>>, vector<14x64xf32>
      tpu.vector_store %arg12[%c241, %c0_33], %87 {strides = array<i32>} : memref<320x64xf32, #tpu.memory_space<vmem>>, vector<14x64xf32>,
      %89 = vector.extract_strided_slice %36 {offsets = [416, 0], sizes = [14, 64], strides = [1, 1]} : vector<448x64xf32> to vector<14x64xf32>
      %90 = vector.extract_strided_slice %36 {offsets = [432, 0], sizes = [14, 64], strides = [1, 1]} : vector<448x64xf32> to vector<14x64xf32>
      %91 = arith.maximumf %89, %90 : vector<14x64xf32>
      %c257 = arith.constant 257 : index
      %c0_34 = arith.constant 0 : index
      %92 = vector.load %arg12[%c257, %c0_34] : memref<320x64xf32, #tpu.memory_space<vmem>>, vector<14x64xf32>
      tpu.vector_store %arg12[%c257, %c0_34], %91 {strides = array<i32>} : memref<320x64xf32, #tpu.memory_space<vmem>>, vector<14x64xf32>,
      %cst_35 = arith.constant 0.000000e+00 : f32
      %93 = vector.broadcast %cst_35 : f32 to vector<256x64xf32>
      %c15 = arith.constant 15 : index
      %c0_36 = arith.constant 0 : index
      %94 = vector.load %arg12[%c15, %c0_36] : memref<320x64xf32, #tpu.memory_space<vmem>>, vector<256x64xf32>
      %95 = arith.truncf %94 : vector<256x64xf32> to vector<256x64xbf16>
      %c0_37 = arith.constant 0 : index
      %c0_38 = arith.constant 0 : index
      %c0_39 = arith.constant 0 : index
      %96 = vector.load %arg4[%c0_37, %c0_38, %c0_39] : memref<9x64x64xbf16, #tpu.memory_space<vmem>>, vector<1x64x64xbf16>
      %97 = vector.shape_cast %96 : vector<1x64x64xbf16> to vector<64x64xbf16>
      %cst_40 = arith.constant dense<0.000000e+00> : vector<256x64xf32>
      %98 = tpu.matmul %95, %97, %cst_40 {dimension_numbers = #tpu.dot_dimension_numbers<[1], [0], [0], [1], [0, 0, 1, 1], [], []>} : vector<256x64xbf16>, vector<64x64xbf16>, vector<256x64xf32> -> vector<256x64xf32>
      %99 = arith.addf %93, %98 : vector<256x64xf32>
      %c16 = arith.constant 16 : index
      %c0_41 = arith.constant 0 : index
      %100 = vector.load %arg12[%c16, %c0_41] : memref<320x64xf32, #tpu.memory_space<vmem>>, vector<256x64xf32>
      %101 = arith.truncf %100 : vector<256x64xf32> to vector<256x64xbf16>
      %c1_42 = arith.constant 1 : index
      %c0_43 = arith.constant 0 : index
      %c0_44 = arith.constant 0 : index
      %102 = vector.load %arg4[%c1_42, %c0_43, %c0_44] : memref<9x64x64xbf16, #tpu.memory_space<vmem>>, vector<1x64x64xbf16>
      %103 = vector.shape_cast %102 : vector<1x64x64xbf16> to vector<64x64xbf16>
      %cst_45 = arith.constant dense<0.000000e+00> : vector<256x64xf32>
      %104 = tpu.matmul %101, %103, %cst_45 {dimension_numbers = #tpu.dot_dimension_numbers<[1], [0], [0], [1], [0, 0, 1, 1], [], []>} : vector<256x64xbf16>, vector<64x64xbf16>, vector<256x64xf32> -> vector<256x64xf32>
      %105 = arith.addf %99, %104 : vector<256x64xf32>
      %c17 = arith.constant 17 : index
      %c0_46 = arith.constant 0 : index
      %106 = vector.load %arg12[%c17, %c0_46] : memref<320x64xf32, #tpu.memory_space<vmem>>, vector<256x64xf32>
      %107 = arith.truncf %106 : vector<256x64xf32> to vector<256x64xbf16>
      %c2 = arith.constant 2 : index
      %c0_47 = arith.constant 0 : index
      %c0_48 = arith.constant 0 : index
      %108 = vector.load %arg4[%c2, %c0_47, %c0_48] : memref<9x64x64xbf16, #tpu.memory_space<vmem>>, vector<1x64x64xbf16>
      %109 = vector.shape_cast %108 : vector<1x64x64xbf16> to vector<64x64xbf16>
      %cst_49 = arith.constant dense<0.000000e+00> : vector<256x64xf32>
      %110 = tpu.matmul %107, %109, %cst_49 {dimension_numbers = #tpu.dot_dimension_numbers<[1], [0], [0], [1], [0, 0, 1, 1], [], []>} : vector<256x64xbf16>, vector<64x64xbf16>, vector<256x64xf32> -> vector<256x64xf32>
      %111 = arith.addf %105, %110 : vector<256x64xf32>
      %c31 = arith.constant 31 : index
      %c0_50 = arith.constant 0 : index
      %112 = vector.load %arg12[%c31, %c0_50] : memref<320x64xf32, #tpu.memory_space<vmem>>, vector<256x64xf32>
      %113 = arith.truncf %112 : vector<256x64xf32> to vector<256x64xbf16>
      %c3 = arith.constant 3 : index
      %c0_51 = arith.constant 0 : index
      %c0_52 = arith.constant 0 : index
      %114 = vector.load %arg4[%c3, %c0_51, %c0_52] : memref<9x64x64xbf16, #tpu.memory_space<vmem>>, vector<1x64x64xbf16>
      %115 = vector.shape_cast %114 : vector<1x64x64xbf16> to vector<64x64xbf16>
      %cst_53 = arith.constant dense<0.000000e+00> : vector<256x64xf32>
      %116 = tpu.matmul %113, %115, %cst_53 {dimension_numbers = #tpu.dot_dimension_numbers<[1], [0], [0], [1], [0, 0, 1, 1], [], []>} : vector<256x64xbf16>, vector<64x64xbf16>, vector<256x64xf32> -> vector<256x64xf32>
      %117 = arith.addf %111, %116 : vector<256x64xf32>
      %c32 = arith.constant 32 : index
      %c0_54 = arith.constant 0 : index
      %118 = vector.load %arg12[%c32, %c0_54] : memref<320x64xf32, #tpu.memory_space<vmem>>, vector<256x64xf32>
      %119 = arith.truncf %118 : vector<256x64xf32> to vector<256x64xbf16>
      %c4 = arith.constant 4 : index
      %c0_55 = arith.constant 0 : index
      %c0_56 = arith.constant 0 : index
      %120 = vector.load %arg4[%c4, %c0_55, %c0_56] : memref<9x64x64xbf16, #tpu.memory_space<vmem>>, vector<1x64x64xbf16>
      %121 = vector.shape_cast %120 : vector<1x64x64xbf16> to vector<64x64xbf16>
      %cst_57 = arith.constant dense<0.000000e+00> : vector<256x64xf32>
      %122 = tpu.matmul %119, %121, %cst_57 {dimension_numbers = #tpu.dot_dimension_numbers<[1], [0], [0], [1], [0, 0, 1, 1], [], []>} : vector<256x64xbf16>, vector<64x64xbf16>, vector<256x64xf32> -> vector<256x64xf32>
      %123 = arith.addf %117, %122 : vector<256x64xf32>
      %c33 = arith.constant 33 : index
      %c0_58 = arith.constant 0 : index
      %124 = vector.load %arg12[%c33, %c0_58] : memref<320x64xf32, #tpu.memory_space<vmem>>, vector<256x64xf32>
      %125 = arith.truncf %124 : vector<256x64xf32> to vector<256x64xbf16>
      %c5 = arith.constant 5 : index
      %c0_59 = arith.constant 0 : index
      %c0_60 = arith.constant 0 : index
      %126 = vector.load %arg4[%c5, %c0_59, %c0_60] : memref<9x64x64xbf16, #tpu.memory_space<vmem>>, vector<1x64x64xbf16>
      %127 = vector.shape_cast %126 : vector<1x64x64xbf16> to vector<64x64xbf16>
      %cst_61 = arith.constant dense<0.000000e+00> : vector<256x64xf32>
      %128 = tpu.matmul %125, %127, %cst_61 {dimension_numbers = #tpu.dot_dimension_numbers<[1], [0], [0], [1], [0, 0, 1, 1], [], []>} : vector<256x64xbf16>, vector<64x64xbf16>, vector<256x64xf32> -> vector<256x64xf32>
      %129 = arith.addf %123, %128 : vector<256x64xf32>
      %c47 = arith.constant 47 : index
      %c0_62 = arith.constant 0 : index
      %130 = vector.load %arg12[%c47, %c0_62] : memref<320x64xf32, #tpu.memory_space<vmem>>, vector<256x64xf32>
      %131 = arith.truncf %130 : vector<256x64xf32> to vector<256x64xbf16>
      %c6 = arith.constant 6 : index
      %c0_63 = arith.constant 0 : index
      %c0_64 = arith.constant 0 : index
      %132 = vector.load %arg4[%c6, %c0_63, %c0_64] : memref<9x64x64xbf16, #tpu.memory_space<vmem>>, vector<1x64x64xbf16>
      %133 = vector.shape_cast %132 : vector<1x64x64xbf16> to vector<64x64xbf16>
      %cst_65 = arith.constant dense<0.000000e+00> : vector<256x64xf32>
      %134 = tpu.matmul %131, %133, %cst_65 {dimension_numbers = #tpu.dot_dimension_numbers<[1], [0], [0], [1], [0, 0, 1, 1], [], []>} : vector<256x64xbf16>, vector<64x64xbf16>, vector<256x64xf32> -> vector<256x64xf32>
      %135 = arith.addf %129, %134 : vector<256x64xf32>
      %c48 = arith.constant 48 : index
      %c0_66 = arith.constant 0 : index
      %136 = vector.load %arg12[%c48, %c0_66] : memref<320x64xf32, #tpu.memory_space<vmem>>, vector<256x64xf32>
      %137 = arith.truncf %136 : vector<256x64xf32> to vector<256x64xbf16>
      %c7 = arith.constant 7 : index
      %c0_67 = arith.constant 0 : index
      %c0_68 = arith.constant 0 : index
      %138 = vector.load %arg4[%c7, %c0_67, %c0_68] : memref<9x64x64xbf16, #tpu.memory_space<vmem>>, vector<1x64x64xbf16>
      %139 = vector.shape_cast %138 : vector<1x64x64xbf16> to vector<64x64xbf16>
      %cst_69 = arith.constant dense<0.000000e+00> : vector<256x64xf32>
      %140 = tpu.matmul %137, %139, %cst_69 {dimension_numbers = #tpu.dot_dimension_numbers<[1], [0], [0], [1], [0, 0, 1, 1], [], []>} : vector<256x64xbf16>, vector<64x64xbf16>, vector<256x64xf32> -> vector<256x64xf32>
      %141 = arith.addf %135, %140 : vector<256x64xf32>
      %c49_70 = arith.constant 49 : index
      %c0_71 = arith.constant 0 : index
      %142 = vector.load %arg12[%c49_70, %c0_71] : memref<320x64xf32, #tpu.memory_space<vmem>>, vector<256x64xf32>
      %143 = arith.truncf %142 : vector<256x64xf32> to vector<256x64xbf16>
      %c8 = arith.constant 8 : index
      %c0_72 = arith.constant 0 : index
      %c0_73 = arith.constant 0 : index
      %144 = vector.load %arg4[%c8, %c0_72, %c0_73] : memref<9x64x64xbf16, #tpu.memory_space<vmem>>, vector<1x64x64xbf16>
      %145 = vector.shape_cast %144 : vector<1x64x64xbf16> to vector<64x64xbf16>
      %cst_74 = arith.constant dense<0.000000e+00> : vector<256x64xf32>
      %146 = tpu.matmul %143, %145, %cst_74 {dimension_numbers = #tpu.dot_dimension_numbers<[1], [0], [0], [1], [0, 0, 1, 1], [], []>} : vector<256x64xbf16>, vector<64x64xbf16>, vector<256x64xf32> -> vector<256x64xf32>
      %147 = arith.addf %141, %146 : vector<256x64xf32>
      %c0_75 = arith.constant 0 : index
      %c0_76 = arith.constant 0 : index
      %148 = vector.load %arg5[%c0_75, %c0_76] : memref<1x64xf32, #tpu.memory_space<vmem>>, vector<1x64xf32>
      %149 = vector.broadcast %148 : vector<1x64xf32> to vector<256x64xf32>
      %150 = arith.addf %147, %149 : vector<256x64xf32>
      %cst_77 = arith.constant 0.000000e+00 : f32
      %151 = vector.broadcast %cst_77 : f32 to vector<256x64xf32>
      %152 = arith.maximumf %150, %151 : vector<256x64xf32>
      %153 = vector.broadcast %21 : vector<256x1xf32> to vector<256x64xf32>
      %154 = arith.mulf %152, %153 : vector<256x64xf32>
      %c32_78 = arith.constant 32 : index
      %c0_79 = arith.constant 0 : index
      %155 = vector.load %arg13[%c32_78, %c0_79] : memref<320x64xf32, #tpu.memory_space<vmem>>, vector<256x64xf32>
      tpu.vector_store %arg13[%c32_78, %c0_79], %154 {strides = array<i32>} : memref<320x64xf32, #tpu.memory_space<vmem>>, vector<256x64xf32>,
      %c32_80 = arith.constant 32 : index
      %c0_81 = arith.constant 0 : index
      %156 = vector.load %arg12[%c32_80, %c0_81] : memref<320x64xf32, #tpu.memory_space<vmem>>, vector<256x64xf32>
      %157 = arith.truncf %156 : vector<256x64xf32> to vector<256x64xbf16>
      %c0_82 = arith.constant 0 : index
      %c0_83 = arith.constant 0 : index
      %158 = vector.load %arg8[%c0_82, %c0_83] : memref<64x64xbf16, #tpu.memory_space<vmem>>, vector<64x64xbf16>
      %cst_84 = arith.constant dense<0.000000e+00> : vector<256x64xf32>
      %159 = tpu.matmul %157, %158, %cst_84 {dimension_numbers = #tpu.dot_dimension_numbers<[1], [0], [0], [1], [0, 0, 1, 1], [], []>} : vector<256x64xbf16>, vector<64x64xbf16>, vector<256x64xf32> -> vector<256x64xf32>
      %c15_85 = arith.constant 15 : index
      %c0_86 = arith.constant 0 : index
      %160 = vector.load %arg13[%c15_85, %c0_86] : memref<320x64xf32, #tpu.memory_space<vmem>>, vector<256x64xf32>
      %161 = arith.truncf %160 : vector<256x64xf32> to vector<256x64xbf16>
      %c0_87 = arith.constant 0 : index
      %c0_88 = arith.constant 0 : index
      %c0_89 = arith.constant 0 : index
      %162 = vector.load %arg6[%c0_87, %c0_88, %c0_89] : memref<9x64x64xbf16, #tpu.memory_space<vmem>>, vector<1x64x64xbf16>
      %163 = vector.shape_cast %162 : vector<1x64x64xbf16> to vector<64x64xbf16>
      %cst_90 = arith.constant dense<0.000000e+00> : vector<256x64xf32>
      %164 = tpu.matmul %161, %163, %cst_90 {dimension_numbers = #tpu.dot_dimension_numbers<[1], [0], [0], [1], [0, 0, 1, 1], [], []>} : vector<256x64xbf16>, vector<64x64xbf16>, vector<256x64xf32> -> vector<256x64xf32>
      %165 = arith.addf %159, %164 : vector<256x64xf32>
      %c16_91 = arith.constant 16 : index
      %c0_92 = arith.constant 0 : index
      %166 = vector.load %arg13[%c16_91, %c0_92] : memref<320x64xf32, #tpu.memory_space<vmem>>, vector<256x64xf32>
      %167 = arith.truncf %166 : vector<256x64xf32> to vector<256x64xbf16>
      %c1_93 = arith.constant 1 : index
      %c0_94 = arith.constant 0 : index
      %c0_95 = arith.constant 0 : index
      %168 = vector.load %arg6[%c1_93, %c0_94, %c0_95] : memref<9x64x64xbf16, #tpu.memory_space<vmem>>, vector<1x64x64xbf16>
      %169 = vector.shape_cast %168 : vector<1x64x64xbf16> to vector<64x64xbf16>
      %cst_96 = arith.constant dense<0.000000e+00> : vector<256x64xf32>
      %170 = tpu.matmul %167, %169, %cst_96 {dimension_numbers = #tpu.dot_dimension_numbers<[1], [0], [0], [1], [0, 0, 1, 1], [], []>} : vector<256x64xbf16>, vector<64x64xbf16>, vector<256x64xf32> -> vector<256x64xf32>
      %171 = arith.addf %165, %170 : vector<256x64xf32>
      %c17_97 = arith.constant 17 : index
      %c0_98 = arith.constant 0 : index
      %172 = vector.load %arg13[%c17_97, %c0_98] : memref<320x64xf32, #tpu.memory_space<vmem>>, vector<256x64xf32>
      %173 = arith.truncf %172 : vector<256x64xf32> to vector<256x64xbf16>
      %c2_99 = arith.constant 2 : index
      %c0_100 = arith.constant 0 : index
      %c0_101 = arith.constant 0 : index
      %174 = vector.load %arg6[%c2_99, %c0_100, %c0_101] : memref<9x64x64xbf16, #tpu.memory_space<vmem>>, vector<1x64x64xbf16>
      %175 = vector.shape_cast %174 : vector<1x64x64xbf16> to vector<64x64xbf16>
      %cst_102 = arith.constant dense<0.000000e+00> : vector<256x64xf32>
      %176 = tpu.matmul %173, %175, %cst_102 {dimension_numbers = #tpu.dot_dimension_numbers<[1], [0], [0], [1], [0, 0, 1, 1], [], []>} : vector<256x64xbf16>, vector<64x64xbf16>, vector<256x64xf32> -> vector<256x64xf32>
      %177 = arith.addf %171, %176 : vector<256x64xf32>
      %c31_103 = arith.constant 31 : index
      %c0_104 = arith.constant 0 : index
      %178 = vector.load %arg13[%c31_103, %c0_104] : memref<320x64xf32, #tpu.memory_space<vmem>>, vector<256x64xf32>
      %179 = arith.truncf %178 : vector<256x64xf32> to vector<256x64xbf16>
      %c3_105 = arith.constant 3 : index
      %c0_106 = arith.constant 0 : index
      %c0_107 = arith.constant 0 : index
      %180 = vector.load %arg6[%c3_105, %c0_106, %c0_107] : memref<9x64x64xbf16, #tpu.memory_space<vmem>>, vector<1x64x64xbf16>
      %181 = vector.shape_cast %180 : vector<1x64x64xbf16> to vector<64x64xbf16>
      %cst_108 = arith.constant dense<0.000000e+00> : vector<256x64xf32>
      %182 = tpu.matmul %179, %181, %cst_108 {dimension_numbers = #tpu.dot_dimension_numbers<[1], [0], [0], [1], [0, 0, 1, 1], [], []>} : vector<256x64xbf16>, vector<64x64xbf16>, vector<256x64xf32> -> vector<256x64xf32>
      %183 = arith.addf %177, %182 : vector<256x64xf32>
      %c32_109 = arith.constant 32 : index
      %c0_110 = arith.constant 0 : index
      %184 = vector.load %arg13[%c32_109, %c0_110] : memref<320x64xf32, #tpu.memory_space<vmem>>, vector<256x64xf32>
      %185 = arith.truncf %184 : vector<256x64xf32> to vector<256x64xbf16>
      %c4_111 = arith.constant 4 : index
      %c0_112 = arith.constant 0 : index
      %c0_113 = arith.constant 0 : index
      %186 = vector.load %arg6[%c4_111, %c0_112, %c0_113] : memref<9x64x64xbf16, #tpu.memory_space<vmem>>, vector<1x64x64xbf16>
      %187 = vector.shape_cast %186 : vector<1x64x64xbf16> to vector<64x64xbf16>
      %cst_114 = arith.constant dense<0.000000e+00> : vector<256x64xf32>
      %188 = tpu.matmul %185, %187, %cst_114 {dimension_numbers = #tpu.dot_dimension_numbers<[1], [0], [0], [1], [0, 0, 1, 1], [], []>} : vector<256x64xbf16>, vector<64x64xbf16>, vector<256x64xf32> -> vector<256x64xf32>
      %189 = arith.addf %183, %188 : vector<256x64xf32>
      %c33_115 = arith.constant 33 : index
      %c0_116 = arith.constant 0 : index
      %190 = vector.load %arg13[%c33_115, %c0_116] : memref<320x64xf32, #tpu.memory_space<vmem>>, vector<256x64xf32>
      %191 = arith.truncf %190 : vector<256x64xf32> to vector<256x64xbf16>
      %c5_117 = arith.constant 5 : index
      %c0_118 = arith.constant 0 : index
      %c0_119 = arith.constant 0 : index
      %192 = vector.load %arg6[%c5_117, %c0_118, %c0_119] : memref<9x64x64xbf16, #tpu.memory_space<vmem>>, vector<1x64x64xbf16>
      %193 = vector.shape_cast %192 : vector<1x64x64xbf16> to vector<64x64xbf16>
      %cst_120 = arith.constant dense<0.000000e+00> : vector<256x64xf32>
      %194 = tpu.matmul %191, %193, %cst_120 {dimension_numbers = #tpu.dot_dimension_numbers<[1], [0], [0], [1], [0, 0, 1, 1], [], []>} : vector<256x64xbf16>, vector<64x64xbf16>, vector<256x64xf32> -> vector<256x64xf32>
      %195 = arith.addf %189, %194 : vector<256x64xf32>
      %c47_121 = arith.constant 47 : index
      %c0_122 = arith.constant 0 : index
      %196 = vector.load %arg13[%c47_121, %c0_122] : memref<320x64xf32, #tpu.memory_space<vmem>>, vector<256x64xf32>
      %197 = arith.truncf %196 : vector<256x64xf32> to vector<256x64xbf16>
      %c6_123 = arith.constant 6 : index
      %c0_124 = arith.constant 0 : index
      %c0_125 = arith.constant 0 : index
      %198 = vector.load %arg6[%c6_123, %c0_124, %c0_125] : memref<9x64x64xbf16, #tpu.memory_space<vmem>>, vector<1x64x64xbf16>
      %199 = vector.shape_cast %198 : vector<1x64x64xbf16> to vector<64x64xbf16>
      %cst_126 = arith.constant dense<0.000000e+00> : vector<256x64xf32>
      %200 = tpu.matmul %197, %199, %cst_126 {dimension_numbers = #tpu.dot_dimension_numbers<[1], [0], [0], [1], [0, 0, 1, 1], [], []>} : vector<256x64xbf16>, vector<64x64xbf16>, vector<256x64xf32> -> vector<256x64xf32>
      %201 = arith.addf %195, %200 : vector<256x64xf32>
      %c48_127 = arith.constant 48 : index
      %c0_128 = arith.constant 0 : index
      %202 = vector.load %arg13[%c48_127, %c0_128] : memref<320x64xf32, #tpu.memory_space<vmem>>, vector<256x64xf32>
      %203 = arith.truncf %202 : vector<256x64xf32> to vector<256x64xbf16>
      %c7_129 = arith.constant 7 : index
      %c0_130 = arith.constant 0 : index
      %c0_131 = arith.constant 0 : index
      %204 = vector.load %arg6[%c7_129, %c0_130, %c0_131] : memref<9x64x64xbf16, #tpu.memory_space<vmem>>, vector<1x64x64xbf16>
      %205 = vector.shape_cast %204 : vector<1x64x64xbf16> to vector<64x64xbf16>
      %cst_132 = arith.constant dense<0.000000e+00> : vector<256x64xf32>
      %206 = tpu.matmul %203, %205, %cst_132 {dimension_numbers = #tpu.dot_dimension_numbers<[1], [0], [0], [1], [0, 0, 1, 1], [], []>} : vector<256x64xbf16>, vector<64x64xbf16>, vector<256x64xf32> -> vector<256x64xf32>
      %207 = arith.addf %201, %206 : vector<256x64xf32>
      %c49_133 = arith.constant 49 : index
      %c0_134 = arith.constant 0 : index
      %208 = vector.load %arg13[%c49_133, %c0_134] : memref<320x64xf32, #tpu.memory_space<vmem>>, vector<256x64xf32>
      %209 = arith.truncf %208 : vector<256x64xf32> to vector<256x64xbf16>
      %c8_135 = arith.constant 8 : index
      %c0_136 = arith.constant 0 : index
      %c0_137 = arith.constant 0 : index
      %210 = vector.load %arg6[%c8_135, %c0_136, %c0_137] : memref<9x64x64xbf16, #tpu.memory_space<vmem>>, vector<1x64x64xbf16>
      %211 = vector.shape_cast %210 : vector<1x64x64xbf16> to vector<64x64xbf16>
      %cst_138 = arith.constant dense<0.000000e+00> : vector<256x64xf32>
      %212 = tpu.matmul %209, %211, %cst_138 {dimension_numbers = #tpu.dot_dimension_numbers<[1], [0], [0], [1], [0, 0, 1, 1], [], []>} : vector<256x64xbf16>, vector<64x64xbf16>, vector<256x64xf32> -> vector<256x64xf32>
      %213 = arith.addf %207, %212 : vector<256x64xf32>
      %c0_139 = arith.constant 0 : index
      %c0_140 = arith.constant 0 : index
      %214 = vector.load %arg7[%c0_139, %c0_140] : memref<1x64xf32, #tpu.memory_space<vmem>>, vector<1x64xf32>
      %215 = vector.broadcast %214 : vector<1x64xf32> to vector<256x64xf32>
      %216 = arith.addf %213, %215 : vector<256x64xf32>
      %c0_141 = arith.constant 0 : index
      %c0_142 = arith.constant 0 : index
      %217 = vector.load %arg9[%c0_141, %c0_142] : memref<1x64xf32, #tpu.memory_space<vmem>>, vector<1x64xf32>
      %218 = vector.broadcast %217 : vector<1x64xf32> to vector<256x64xf32>
      %219 = arith.addf %216, %218 : vector<256x64xf32>
      %cst_143 = arith.constant 0.000000e+00 : f32
      %220 = vector.broadcast %cst_143 : f32 to vector<256x64xf32>
      %221 = arith.maximumf %219, %220 : vector<256x64xf32>
      %c0_144 = arith.constant 0 : index
      %c0_145 = arith.constant 0 : index
      %222 = vector.load %arg14[%c0_144, %c0_145] : memref<256x64xf32, #tpu.memory_space<vmem>>, vector<256x64xf32>
      tpu.vector_store %arg14[%c0_144, %c0_145], %221 {strides = array<i32>} : memref<256x64xf32, #tpu.memory_space<vmem>>, vector<256x64xf32>,
      %c17_146 = arith.constant 17 : index
      %c0_147 = arith.constant 0 : index
      %223 = tpu.strided_load %arg14[%c17_146, %c0_147] {strides = array<i32: 2, 1>} : memref<256x64xf32, #tpu.memory_space<vmem>>, vector<112x64xf32>
      %c18 = arith.constant 18 : index
      %c0_148 = arith.constant 0 : index
      %224 = tpu.strided_load %arg14[%c18, %c0_148] {strides = array<i32: 2, 1>} : memref<256x64xf32, #tpu.memory_space<vmem>>, vector<112x64xf32>
      %225 = arith.maximumf %223, %224 : vector<112x64xf32>
      %226 = vector.extract_strided_slice %225 {offsets = [0, 0], sizes = [8, 64], strides = [1, 1]} : vector<112x64xf32> to vector<8x64xf32>
      %227 = vector.extract_strided_slice %225 {offsets = [8, 0], sizes = [8, 64], strides = [1, 1]} : vector<112x64xf32> to vector<8x64xf32>
      %228 = arith.maximumf %226, %227 : vector<8x64xf32>
      %229 = vector.extract_strided_slice %225 {offsets = [16, 0], sizes = [8, 64], strides = [1, 1]} : vector<112x64xf32> to vector<8x64xf32>
      %230 = vector.extract_strided_slice %225 {offsets = [24, 0], sizes = [8, 64], strides = [1, 1]} : vector<112x64xf32> to vector<8x64xf32>
      %231 = arith.maximumf %229, %230 : vector<8x64xf32>
      %232 = vector.extract_strided_slice %225 {offsets = [32, 0], sizes = [8, 64], strides = [1, 1]} : vector<112x64xf32> to vector<8x64xf32>
      %233 = vector.extract_strided_slice %225 {offsets = [40, 0], sizes = [8, 64], strides = [1, 1]} : vector<112x64xf32> to vector<8x64xf32>
      %234 = arith.maximumf %232, %233 : vector<8x64xf32>
      %235 = vector.extract_strided_slice %225 {offsets = [48, 0], sizes = [8, 64], strides = [1, 1]} : vector<112x64xf32> to vector<8x64xf32>
      %236 = vector.extract_strided_slice %225 {offsets = [56, 0], sizes = [8, 64], strides = [1, 1]} : vector<112x64xf32> to vector<8x64xf32>
      %237 = arith.maximumf %235, %236 : vector<8x64xf32>
      %238 = vector.extract_strided_slice %225 {offsets = [64, 0], sizes = [8, 64], strides = [1, 1]} : vector<112x64xf32> to vector<8x64xf32>
      %239 = vector.extract_strided_slice %225 {offsets = [72, 0], sizes = [8, 64], strides = [1, 1]} : vector<112x64xf32> to vector<8x64xf32>
      %240 = arith.maximumf %238, %239 : vector<8x64xf32>
      %241 = vector.extract_strided_slice %225 {offsets = [80, 0], sizes = [8, 64], strides = [1, 1]} : vector<112x64xf32> to vector<8x64xf32>
      %242 = vector.extract_strided_slice %225 {offsets = [88, 0], sizes = [8, 64], strides = [1, 1]} : vector<112x64xf32> to vector<8x64xf32>
      %243 = arith.maximumf %241, %242 : vector<8x64xf32>
      %244 = vector.extract_strided_slice %225 {offsets = [96, 0], sizes = [8, 64], strides = [1, 1]} : vector<112x64xf32> to vector<8x64xf32>
      %245 = vector.extract_strided_slice %225 {offsets = [104, 0], sizes = [8, 64], strides = [1, 1]} : vector<112x64xf32> to vector<8x64xf32>
      %246 = arith.maximumf %244, %245 : vector<8x64xf32>
      %247 = tpu.concatenate %228, %231, %234, %237, %240, %243, %246 in 0 : vector<8x64xf32>, vector<8x64xf32>, vector<8x64xf32>, vector<8x64xf32>, vector<8x64xf32>, vector<8x64xf32>, vector<8x64xf32> -> vector<56x64xf32>
      %248 = arith.truncf %247 : vector<56x64xf32> to vector<56x64xbf16>
      %249 = arith.index_cast %arg15 : i32 to index
      %c0_149 = arith.constant 0 : index
      %c0_150 = arith.constant 0 : index
      %250 = vector.load %arg10[%249, %c0_149, %c0_150] : memref<8x56x64xbf16, #tpu.memory_space<vmem>>, vector<1x56x64xbf16>
      %251 = vector.shape_cast %250 : vector<1x56x64xbf16> to vector<56x64xbf16>
      %252 = vector.shape_cast %248 : vector<56x64xbf16> to vector<1x56x64xbf16>
      tpu.vector_store %arg10[%249, %c0_149, %c0_150], %252 {strides = array<i32>} : memref<8x56x64xbf16, #tpu.memory_space<vmem>>, vector<1x56x64xbf16>,
    }
    %c8_i32_7 = arith.constant 8 : i32
    return
  }
  func.func @transform_0(%arg0: i32) -> (i32, i32, i32) {
    %c0_i32 = arith.constant 0 : i32
    %c0_i32_0 = arith.constant 0 : i32
    %c0_i32_1 = arith.constant 0 : i32
    return %arg0, %c0_i32, %c0_i32_0 : i32, i32, i32
  }
  func.func @transform_1(%arg0: i32) -> (i32, i32) {
    %c0_i32 = arith.constant 0 : i32
    %c0_i32_0 = arith.constant 0 : i32
    %c0_i32_1 = arith.constant 0 : i32
    return %c0_i32, %c0_i32_0 : i32, i32
  }
  func.func @transform_2(%arg0: i32) -> (i32, i32) {
    %c0_i32 = arith.constant 0 : i32
    %c0_i32_0 = arith.constant 0 : i32
    %c0_i32_1 = arith.constant 0 : i32
    return %c0_i32, %c0_i32_0 : i32, i32
  }
  func.func @transform_3(%arg0: i32) -> (i32, i32, i32) {
    %c0_i32 = arith.constant 0 : i32
    %c0_i32_0 = arith.constant 0 : i32
    %c0_i32_1 = arith.constant 0 : i32
    %c0_i32_2 = arith.constant 0 : i32
    return %c0_i32, %c0_i32_0, %c0_i32_1 : i32, i32, i32
  }
  func.func @transform_4(%arg0: i32) -> (i32, i32) {
    %c0_i32 = arith.constant 0 : i32
    %c0_i32_0 = arith.constant 0 : i32
    %c0_i32_1 = arith.constant 0 : i32
    return %c0_i32, %c0_i32_0 : i32, i32
  }
  func.func @transform_5(%arg0: i32) -> (i32, i32, i32) {
    %c0_i32 = arith.constant 0 : i32
    %c0_i32_0 = arith.constant 0 : i32
    %c0_i32_1 = arith.constant 0 : i32
    %c0_i32_2 = arith.constant 0 : i32
    return %c0_i32, %c0_i32_0, %c0_i32_1 : i32, i32, i32
  }
  func.func @transform_6(%arg0: i32) -> (i32, i32) {
    %c0_i32 = arith.constant 0 : i32
    %c0_i32_0 = arith.constant 0 : i32
    %c0_i32_1 = arith.constant 0 : i32
    return %c0_i32, %c0_i32_0 : i32, i32
  }
  func.func @transform_7(%arg0: i32) -> (i32, i32) {
    %c0_i32 = arith.constant 0 : i32
    %c0_i32_0 = arith.constant 0 : i32
    %c0_i32_1 = arith.constant 0 : i32
    return %c0_i32, %c0_i32_0 : i32, i32
  }
  func.func @transform_8(%arg0: i32) -> (i32, i32) {
    %c0_i32 = arith.constant 0 : i32
    %c0_i32_0 = arith.constant 0 : i32
    %c0_i32_1 = arith.constant 0 : i32
    return %c0_i32, %c0_i32_0 : i32, i32
  }
  func.func @transform_9(%arg0: i32) -> (i32, i32, i32) {
    %c0_i32 = arith.constant 0 : i32
    %c0_i32_0 = arith.constant 0 : i32
    %c0_i32_1 = arith.constant 0 : i32
    return %arg0, %c0_i32, %c0_i32_0 : i32, i32, i32
  }
}

module attributes {stable_mosaic.version = 11 : i64} {
  func.func @vae_head_kernel(%arg0: memref<8x3584xbf16, #tpu.memory_space<vmem>>, %arg1: memref<8x10xf32, #tpu.memory_space<vmem>>, %arg2: memref<3584x128xbf16, #tpu.memory_space<vmem>>, %arg3: memref<1x128xf32, #tpu.memory_space<vmem>>, %arg4: memref<128x10xbf16, #tpu.memory_space<vmem>>, %arg5: memref<1x10xf32, #tpu.memory_space<vmem>>, %arg6: memref<128x10xbf16, #tpu.memory_space<vmem>>, %arg7: memref<1x10xf32, #tpu.memory_space<vmem>>, %arg8: memref<10x256xbf16, #tpu.memory_space<vmem>>, %arg9: memref<1x256xf32, #tpu.memory_space<vmem>>, %arg10: memref<256x512xbf16, #tpu.memory_space<vmem>>, %arg11: memref<1x512xf32, #tpu.memory_space<vmem>>, %arg12: memref<512x784xbf16, #tpu.memory_space<vmem>>, %arg13: memref<1x784xf32, #tpu.memory_space<vmem>>, %arg14: memref<8x784xf32, #tpu.memory_space<vmem>>, %arg15: memref<8x10xf32, #tpu.memory_space<vmem>>, %arg16: memref<8x10xf32, #tpu.memory_space<vmem>>) attributes {dimension_semantics = [], scalar_prefetch = 0 : i64, scratch_operands = 0 : i64, tpu.core_type = #tpu.core_type<tc>} {
    %c0 = arith.constant 0 : index
    %c0_0 = arith.constant 0 : index
    %0 = vector.load %arg0[%c0, %c0_0] : memref<8x3584xbf16, #tpu.memory_space<vmem>>, vector<8x3584xbf16>
    %c0_1 = arith.constant 0 : index
    %c0_2 = arith.constant 0 : index
    %1 = vector.load %arg2[%c0_1, %c0_2] : memref<3584x128xbf16, #tpu.memory_space<vmem>>, vector<3584x128xbf16>
    %cst = arith.constant dense<0.000000e+00> : vector<8x128xf32>
    %2 = tpu.matmul %0, %1, %cst {dimension_numbers = #tpu.dot_dimension_numbers<[1], [0], [0], [1], [0, 0, 1, 1], [], []>} : vector<8x3584xbf16>, vector<3584x128xbf16>, vector<8x128xf32> -> vector<8x128xf32>
    %c0_3 = arith.constant 0 : index
    %c0_4 = arith.constant 0 : index
    %3 = vector.load %arg3[%c0_3, %c0_4] : memref<1x128xf32, #tpu.memory_space<vmem>>, vector<1x128xf32>
    %4 = vector.broadcast %3 : vector<1x128xf32> to vector<8x128xf32>
    %5 = arith.addf %2, %4 : vector<8x128xf32>
    %cst_5 = arith.constant 0.000000e+00 : f32
    %6 = vector.broadcast %cst_5 : f32 to vector<8x128xf32>
    %7 = arith.maximumf %5, %6 : vector<8x128xf32>
    %8 = arith.truncf %7 : vector<8x128xf32> to vector<8x128xbf16>
    %c0_6 = arith.constant 0 : index
    %c0_7 = arith.constant 0 : index
    %9 = vector.load %arg4[%c0_6, %c0_7] : memref<128x10xbf16, #tpu.memory_space<vmem>>, vector<128x10xbf16>
    %cst_8 = arith.constant dense<0.000000e+00> : vector<8x10xf32>
    %10 = tpu.matmul %8, %9, %cst_8 {dimension_numbers = #tpu.dot_dimension_numbers<[1], [0], [0], [1], [0, 0, 1, 1], [], []>} : vector<8x128xbf16>, vector<128x10xbf16>, vector<8x10xf32> -> vector<8x10xf32>
    %c0_9 = arith.constant 0 : index
    %c0_10 = arith.constant 0 : index
    %11 = vector.load %arg5[%c0_9, %c0_10] : memref<1x10xf32, #tpu.memory_space<vmem>>, vector<1x10xf32>
    %12 = vector.broadcast %11 : vector<1x10xf32> to vector<8x10xf32>
    %13 = arith.addf %10, %12 : vector<8x10xf32>
    %c0_11 = arith.constant 0 : index
    %c0_12 = arith.constant 0 : index
    %14 = vector.load %arg6[%c0_11, %c0_12] : memref<128x10xbf16, #tpu.memory_space<vmem>>, vector<128x10xbf16>
    %cst_13 = arith.constant dense<0.000000e+00> : vector<8x10xf32>
    %15 = tpu.matmul %8, %14, %cst_13 {dimension_numbers = #tpu.dot_dimension_numbers<[1], [0], [0], [1], [0, 0, 1, 1], [], []>} : vector<8x128xbf16>, vector<128x10xbf16>, vector<8x10xf32> -> vector<8x10xf32>
    %c0_14 = arith.constant 0 : index
    %c0_15 = arith.constant 0 : index
    %16 = vector.load %arg7[%c0_14, %c0_15] : memref<1x10xf32, #tpu.memory_space<vmem>>, vector<1x10xf32>
    %17 = vector.broadcast %16 : vector<1x10xf32> to vector<8x10xf32>
    %18 = arith.addf %15, %17 : vector<8x10xf32>
    %c0_16 = arith.constant 0 : index
    %c0_17 = arith.constant 0 : index
    %19 = vector.load %arg1[%c0_16, %c0_17] : memref<8x10xf32, #tpu.memory_space<vmem>>, vector<8x10xf32>
    %cst_18 = arith.constant 5.000000e-01 : f32
    %20 = vector.broadcast %cst_18 : f32 to vector<8x10xf32>
    %21 = arith.mulf %18, %20 : vector<8x10xf32>
    %22 = math.exp %21 : vector<8x10xf32>
    %23 = arith.mulf %19, %22 : vector<8x10xf32>
    %24 = arith.addf %13, %23 : vector<8x10xf32>
    %25 = arith.truncf %24 : vector<8x10xf32> to vector<8x10xbf16>
    %c0_19 = arith.constant 0 : index
    %c0_20 = arith.constant 0 : index
    %26 = vector.load %arg8[%c0_19, %c0_20] : memref<10x256xbf16, #tpu.memory_space<vmem>>, vector<10x256xbf16>
    %cst_21 = arith.constant dense<0.000000e+00> : vector<8x256xf32>
    %27 = tpu.matmul %25, %26, %cst_21 {dimension_numbers = #tpu.dot_dimension_numbers<[1], [0], [0], [1], [0, 0, 1, 1], [], []>} : vector<8x10xbf16>, vector<10x256xbf16>, vector<8x256xf32> -> vector<8x256xf32>
    %c0_22 = arith.constant 0 : index
    %c0_23 = arith.constant 0 : index
    %28 = vector.load %arg9[%c0_22, %c0_23] : memref<1x256xf32, #tpu.memory_space<vmem>>, vector<1x256xf32>
    %29 = vector.broadcast %28 : vector<1x256xf32> to vector<8x256xf32>
    %30 = arith.addf %27, %29 : vector<8x256xf32>
    %cst_24 = arith.constant 0.000000e+00 : f32
    %31 = vector.broadcast %cst_24 : f32 to vector<8x256xf32>
    %32 = arith.maximumf %30, %31 : vector<8x256xf32>
    %33 = arith.truncf %32 : vector<8x256xf32> to vector<8x256xbf16>
    %c0_25 = arith.constant 0 : index
    %c0_26 = arith.constant 0 : index
    %34 = vector.load %arg10[%c0_25, %c0_26] : memref<256x512xbf16, #tpu.memory_space<vmem>>, vector<256x512xbf16>
    %cst_27 = arith.constant dense<0.000000e+00> : vector<8x512xf32>
    %35 = tpu.matmul %33, %34, %cst_27 {dimension_numbers = #tpu.dot_dimension_numbers<[1], [0], [0], [1], [0, 0, 1, 1], [], []>} : vector<8x256xbf16>, vector<256x512xbf16>, vector<8x512xf32> -> vector<8x512xf32>
    %c0_28 = arith.constant 0 : index
    %c0_29 = arith.constant 0 : index
    %36 = vector.load %arg11[%c0_28, %c0_29] : memref<1x512xf32, #tpu.memory_space<vmem>>, vector<1x512xf32>
    %37 = vector.broadcast %36 : vector<1x512xf32> to vector<8x512xf32>
    %38 = arith.addf %35, %37 : vector<8x512xf32>
    %cst_30 = arith.constant 0.000000e+00 : f32
    %39 = vector.broadcast %cst_30 : f32 to vector<8x512xf32>
    %40 = arith.maximumf %38, %39 : vector<8x512xf32>
    %41 = arith.truncf %40 : vector<8x512xf32> to vector<8x512xbf16>
    %c0_31 = arith.constant 0 : index
    %c0_32 = arith.constant 0 : index
    %42 = vector.load %arg12[%c0_31, %c0_32] : memref<512x784xbf16, #tpu.memory_space<vmem>>, vector<512x784xbf16>
    %cst_33 = arith.constant dense<0.000000e+00> : vector<8x784xf32>
    %43 = tpu.matmul %41, %42, %cst_33 {dimension_numbers = #tpu.dot_dimension_numbers<[1], [0], [0], [1], [0, 0, 1, 1], [], []>} : vector<8x512xbf16>, vector<512x784xbf16>, vector<8x784xf32> -> vector<8x784xf32>
    %c0_34 = arith.constant 0 : index
    %c0_35 = arith.constant 0 : index
    %44 = vector.load %arg13[%c0_34, %c0_35] : memref<1x784xf32, #tpu.memory_space<vmem>>, vector<1x784xf32>
    %45 = vector.broadcast %44 : vector<1x784xf32> to vector<8x784xf32>
    %46 = arith.addf %43, %45 : vector<8x784xf32>
    %47 = math.absf %46 : vector<8x784xf32>
    %cst_36 = arith.constant 0.000000e+00 : f32
    %48 = vector.broadcast %cst_36 : f32 to vector<8x784xf32>
    %49 = arith.subf %48, %47 : vector<8x784xf32>
    %50 = math.exp %49 : vector<8x784xf32>
    %cst_37 = arith.constant 0.000000e+00 : f32
    %51 = vector.broadcast %cst_37 : f32 to vector<8x784xf32>
    %52 = arith.cmpf oge, %46, %51 : vector<8x784xf32>
    %cst_38 = arith.constant 1.000000e+00 : f32
    %53 = vector.broadcast %cst_38 : f32 to vector<8x784xf32>
    %54 = arith.addf %53, %50 : vector<8x784xf32>
    %cst_39 = arith.constant 1.000000e+00 : f32
    %55 = vector.broadcast %cst_39 : f32 to vector<8x784xf32>
    %56 = arith.divf %55, %54 : vector<8x784xf32>
    %cst_40 = arith.constant 1.000000e+00 : f32
    %57 = vector.broadcast %cst_40 : f32 to vector<8x784xf32>
    %58 = arith.addf %57, %50 : vector<8x784xf32>
    %59 = arith.divf %50, %58 : vector<8x784xf32>
    %60 = arith.select %52, %56, %59 : vector<8x784xi1>, vector<8x784xf32>
    %c0_41 = arith.constant 0 : index
    %c0_42 = arith.constant 0 : index
    %61 = vector.load %arg14[%c0_41, %c0_42] : memref<8x784xf32, #tpu.memory_space<vmem>>, vector<8x784xf32>
    tpu.vector_store %arg14[%c0_41, %c0_42], %60 {strides = array<i32>} : memref<8x784xf32, #tpu.memory_space<vmem>>, vector<8x784xf32>,
    %c0_43 = arith.constant 0 : index
    %c0_44 = arith.constant 0 : index
    %62 = vector.load %arg15[%c0_43, %c0_44] : memref<8x10xf32, #tpu.memory_space<vmem>>, vector<8x10xf32>
    tpu.vector_store %arg15[%c0_43, %c0_44], %13 {strides = array<i32>} : memref<8x10xf32, #tpu.memory_space<vmem>>, vector<8x10xf32>,
    %c0_45 = arith.constant 0 : index
    %c0_46 = arith.constant 0 : index
    %63 = vector.load %arg16[%c0_45, %c0_46] : memref<8x10xf32, #tpu.memory_space<vmem>>, vector<8x10xf32>
    tpu.vector_store %arg16[%c0_45, %c0_46], %18 {strides = array<i32>} : memref<8x10xf32, #tpu.memory_space<vmem>>, vector<8x10xf32>,
    return
  }
}

</mosaic_0001>

<llo_original>
// kernel: vae_forward.2
$region0: #{vae_forward.2}
  #allocation0 [shape = 'u32[]', space=smem, size = 0x4, offset = 0x4, fixed_abs, tag = 'smem constant byte address 0x4 - core index']
  #allocation1 [shape = 'u32[72,128]{1,0:T(1,128)}', space=vmem, size = 0x9000, scoped, tag = 'internal scratch']
  #allocation2 [shape = 'f32[896,64]{1,0:T(8,128)}', space=vmem, size = 0x70000, scoped, tag = 'scratch operand']
  #allocation3 [shape = 'f32[320,64]{1,0:T(8,128)}', space=vmem, size = 0x28000, scoped, tag = 'scratch operand']
  #allocation4 [shape = 'f32[320,64]{1,0:T(8,128)}', space=vmem, size = 0x28000, scoped, tag = 'scratch operand']
  #allocation5 [shape = 'f32[256,64]{1,0:T(8,128)}', space=vmem, size = 0x20000, scoped, tag = 'scratch operand']
  %s0 = inlined_call_operand.vmem [shape: bf16[8,896,9], index: 0, kind: input, shape index: {}]
  %s1 = inlined_call_operand.vmem [shape: bf16[9,64], index: 1, kind: input, shape index: {}]
  %s2 = inlined_call_operand.vmem [shape: f32[1,64], index: 2, kind: input, shape index: {}]
  %s3 = inlined_call_operand.vmem [shape: bf16[9,64,64], index: 3, kind: input, shape index: {}]
  %s4 = inlined_call_operand.vmem [shape: f32[1,64], index: 4, kind: input, shape index: {}]
  %s5 = inlined_call_operand.vmem [shape: bf16[9,64,64], index: 5, kind: input, shape index: {}]
  %s6 = inlined_call_operand.vmem [shape: f32[1,64], index: 6, kind: input, shape index: {}]
  %s7 = inlined_call_operand.vmem [shape: bf16[64,64], index: 7, kind: input, shape index: {}]
  %s8 = inlined_call_operand.vmem [shape: f32[1,64], index: 8, kind: input, shape index: {}]
  %s9 = inlined_call_operand.vmem [shape: bf16[8,56,64], index: 9, kind: output, shape index: {}]
  %s10 = sld [smem:[#allocation0]]
  $region53: #{vae_forward.2} parent=0
    _
  %s12 = ssub.s32 1, %s10
  %s13 = scalar_select 0, %s12, %s10
  // Predicated region
  $region2: #{vae_forward.2} parent=0 // pred_check
    _
  $region3: #{vae_forward.2} parent=0 // pred_check_branch
    %15 = sbr.rel (0) target = $region5
  $region4: #{vae_forward.2} parent=0 // pred_region
    _
  $region5: #{vae_forward.2} parent=0 // pred_fallthru
    _
  // Predicated region
  $region6: #{vae_forward.2} parent=0 // pred_check
    _
  $region7: #{vae_forward.2} parent=0 // pred_check_branch
    %17 = sbr.rel (0) target = $region9
  $region8: #{vae_forward.2} parent=0 // pred_region
    _
  $region9: #{vae_forward.2} parent=0 // pred_fallthru
    _
  // Predicated region
  $region10: #{vae_forward.2} parent=0 // pred_check
    _
  $region11: #{vae_forward.2} parent=0 // pred_check_branch
    %19 = sbr.rel (0) target = $region13
  $region12: #{vae_forward.2} parent=0 // pred_region
    _
  $region13: #{vae_forward.2} parent=0 // pred_fallthru
    _
  // Predicated region
  $region14: #{vae_forward.2} parent=0 // pred_check
    _
  $region15: #{vae_forward.2} parent=0 // pred_check_branch
    %21 = sbr.rel (0) target = $region17
  $region16: #{vae_forward.2} parent=0 // pred_region
    _
  $region17: #{vae_forward.2} parent=0 // pred_fallthru
    _
  // Predicated region
  $region18: #{vae_forward.2} parent=0 // pred_check
    _
  $region19: #{vae_forward.2} parent=0 // pred_check_branch
    %23 = sbr.rel (0) target = $region21
  $region20: #{vae_forward.2} parent=0 // pred_region
    _
  $region21: #{vae_forward.2} parent=0 // pred_fallthru
    _
  // Predicated region
  $region22: #{vae_forward.2} parent=0 // pred_check
    _
  $region23: #{vae_forward.2} parent=0 // pred_check_branch
    %25 = sbr.rel (0) target = $region25
  $region24: #{vae_forward.2} parent=0 // pred_region
    _
  $region25: #{vae_forward.2} parent=0 // pred_fallthru
    _
  // Predicated region
  $region26: #{vae_forward.2} parent=0 // pred_check
    _
  $region27: #{vae_forward.2} parent=0 // pred_check_branch
    %27 = sbr.rel (0) target = $region29
  $region28: #{vae_forward.2} parent=0 // pred_region
    _
  $region29: #{vae_forward.2} parent=0 // pred_fallthru
    _
  // Predicated region
  $region30: #{vae_forward.2} parent=0 // pred_check
    _
  $region31: #{vae_forward.2} parent=0 // pred_check_branch
    %29 = sbr.rel (0) target = $region33
  $region32: #{vae_forward.2} parent=0 // pred_region
    _
  $region33: #{vae_forward.2} parent=0 // pred_fallthru
    _
  // Predicated region
  $region34: #{vae_forward.2} parent=0 // pred_check
    _
  $region35: #{vae_forward.2} parent=0 // pred_check_branch
    %31 = sbr.rel (0) target = $region37
  $region36: #{vae_forward.2} parent=0 // pred_region
    _
  $region37: #{vae_forward.2} parent=0 // pred_fallthru
    _
  %vm33 = vcmask 523264
  %34 = vst.msk [vmem:[#allocation3] sm:$0xff] %vm33, 0.0
  %35 = vst.msk [vmem:[#allocation3 + $0x8] sm:$0xff] %vm33, 0.0
  %36 = vst.msk [vmem:[#allocation3 + $0x10] sm:$0xff] %vm33, 0.0
  %37 = vst.msk [vmem:[#allocation3 + $0x18] sm:$0xff] %vm33, 0.0
  %38 = vst.msk [vmem:[#allocation3 + $0x20] sm:$0xff] %vm33, 0.0
  %39 = vst.msk [vmem:[#allocation3 + $0x28] sm:$0xff] %vm33, 0.0
  %40 = vst.msk [vmem:[#allocation3 + $0x30] sm:$0xff] %vm33, 0.0
  %41 = vst.msk [vmem:[#allocation3 + $0x38] sm:$0xff] %vm33, 0.0
  %42 = vst.msk [vmem:[#allocation3 + $0x40] sm:$0xff] %vm33, 0.0
  %43 = vst.msk [vmem:[#allocation3 + $0x48] sm:$0xff] %vm33, 0.0
  %44 = vst.msk [vmem:[#allocation3 + $0x50] sm:$0xff] %vm33, 0.0
  %45 = vst.msk [vmem:[#allocation3 + $0x58] sm:$0xff] %vm33, 0.0
  %46 = vst.msk [vmem:[#allocation3 + $0x60] sm:$0xff] %vm33, 0.0
  %47 = vst.msk [vmem:[#allocation3 + $0x68] sm:$0xff] %vm33, 0.0
  %48 = vst.msk [vmem:[#allocation3 + $0x70] sm:$0xff] %vm33, 0.0
  %49 = vst.msk [vmem:[#allocation3 + $0x78] sm:$0xff] %vm33, 0.0
  %50 = vst.msk [vmem:[#allocation3 + $0x80] sm:$0xff] %vm33, 0.0
  %51 = vst.msk [vmem:[#allocation3 + $0x88] sm:$0xff] %vm33, 0.0
  %52 = vst.msk [vmem:[#allocation3 + $0x90] sm:$0xff] %vm33, 0.0
  %53 = vst.msk [vmem:[#allocation3 + $0x98] sm:$0xff] %vm33, 0.0
  %54 = vst.msk [vmem:[#allocation3 + $0xa0] sm:$0xff] %vm33, 0.0
  %55 = vst.msk [vmem:[#allocation3 + $0xa8] sm:$0xff] %vm33, 0.0
  %56 = vst.msk [vmem:[#allocation3 + $0xb0] sm:$0xff] %vm33, 0.0
  %57 = vst.msk [vmem:[#allocation3 + $0xb8] sm:$0xff] %vm33, 0.0
  %58 = vst.msk [vmem:[#allocation3 + $0xc0] sm:$0xff] %vm33, 0.0
  %59 = vst.msk [vmem:[#allocation3 + $0xc8] sm:$0xff] %vm33, 0.0
  %60 = vst.msk [vmem:[#allocation3 + $0xd0] sm:$0xff] %vm33, 0.0
  %61 = vst.msk [vmem:[#allocation3 + $0xd8] sm:$0xff] %vm33, 0.0
  %62 = vst.msk [vmem:[#allocation3 + $0xe0] sm:$0xff] %vm33, 0.0
  %63 = vst.msk [vmem:[#allocation3 + $0xe8] sm:$0xff] %vm33, 0.0
  %64 = vst.msk [vmem:[#allocation3 + $0xf0] sm:$0xff] %vm33, 0.0
  %65 = vst.msk [vmem:[#allocation3 + $0xf8] sm:$0xff] %vm33, 0.0
  %66 = vst.msk [vmem:[#allocation3 + $0x100] sm:$0xff] %vm33, 0.0
  %67 = vst.msk [vmem:[#allocation3 + $0x108] sm:$0xff] %vm33, 0.0
  %68 = vst.msk [vmem:[#allocation3 + $0x110] sm:$0xff] %vm33, 0.0
  %69 = vst.msk [vmem:[#allocation3 + $0x118] sm:$0xff] %vm33, 0.0
  %70 = vst.msk [vmem:[#allocation3 + $0x120] sm:$0xff] %vm33, 0.0
  %71 = vst.msk [vmem:[#allocation3 + $0x128] sm:$0xff] %vm33, 0.0
  %72 = vst.msk [vmem:[#allocation3 + $0x130] sm:$0xff] %vm33, 0.0
  %73 = vst.msk [vmem:[#allocation3 + $0x138] sm:$0xff] %vm33, 0.0
  %74 = vst.msk [vmem:[#allocation4] sm:$0xff] %vm33, 0.0
  %75 = vst.msk [vmem:[#allocation4 + $0x8] sm:$0xff] %vm33, 0.0
  %76 = vst.msk [vmem:[#allocation4 + $0x10] sm:$0xff] %vm33, 0.0
  %77 = vst.msk [vmem:[#allocation4 + $0x18] sm:$0xff] %vm33, 0.0
  %78 = vst.msk [vmem:[#allocation4 + $0x20] sm:$0xff] %vm33, 0.0
  %79 = vst.msk [vmem:[#allocation4 + $0x28] sm:$0xff] %vm33, 0.0
  %80 = vst.msk [vmem:[#allocation4 + $0x30] sm:$0xff] %vm33, 0.0
  %81 = vst.msk [vmem:[#allocation4 + $0x38] sm:$0xff] %vm33, 0.0
  %82 = vst.msk [vmem:[#allocation4 + $0x40] sm:$0xff] %vm33, 0.0
  %83 = vst.msk [vmem:[#allocation4 + $0x48] sm:$0xff] %vm33, 0.0
  %84 = vst.msk [vmem:[#allocation4 + $0x50] sm:$0xff] %vm33, 0.0
  %85 = vst.msk [vmem:[#allocation4 + $0x58] sm:$0xff] %vm33, 0.0
  %86 = vst.msk [vmem:[#allocation4 + $0x60] sm:$0xff] %vm33, 0.0
  %87 = vst.msk [vmem:[#allocation4 + $0x68] sm:$0xff] %vm33, 0.0
  %88 = vst.msk [vmem:[#allocation4 + $0x70] sm:$0xff] %vm33, 0.0
  %89 = vst.msk [vmem:[#allocation4 + $0x78] sm:$0xff] %vm33, 0.0
  %90 = vst.msk [vmem:[#allocation4 + $0x80] sm:$0xff] %vm33, 0.0
  %91 = vst.msk [vmem:[#allocation4 + $0x88] sm:$0xff] %vm33, 0.0
  %92 = vst.msk [vmem:[#allocation4 + $0x90] sm:$0xff] %vm33, 0.0
  %93 = vst.msk [vmem:[#allocation4 + $0x98] sm:$0xff] %vm33, 0.0
  %94 = vst.msk [vmem:[#allocation4 + $0xa0] sm:$0xff] %vm33, 0.0
  %95 = vst.msk [vmem:[#allocation4 + $0xa8] sm:$0xff] %vm33, 0.0
  %96 = vst.msk [vmem:[#allocation4 + $0xb0] sm:$0xff] %vm33, 0.0
  %97 = vst.msk [vmem:[#allocation4 + $0xb8] sm:$0xff] %vm33, 0.0
  %98 = vst.msk [vmem:[#allocation4 + $0xc0] sm:$0xff] %vm33, 0.0
  %99 = vst.msk [vmem:[#allocation4 + $0xc8] sm:$0xff] %vm33, 0.0
  %100 = vst.msk [vmem:[#allocation4 + $0xd0] sm:$0xff] %vm33, 0.0
  %101 = vst.msk [vmem:[#allocation4 + $0xd8] sm:$0xff] %vm33, 0.0
  %102 = vst.msk [vmem:[#allocation4 + $0xe0] sm:$0xff] %vm33, 0.0
  %103 = vst.msk [vmem:[#allocation4 + $0xe8] sm:$0xff] %vm33, 0.0
  %104 = vst.msk [vmem:[#allocation4 + $0xf0] sm:$0xff] %vm33, 0.0
  %105 = vst.msk [vmem:[#allocation4 + $0xf8] sm:$0xff] %vm33, 0.0
  %106 = vst.msk [vmem:[#allocation4 + $0x100] sm:$0xff] %vm33, 0.0
  %107 = vst.msk [vmem:[#allocation4 + $0x108] sm:$0xff] %vm33, 0.0
  %108 = vst.msk [vmem:[#allocation4 + $0x110] sm:$0xff] %vm33, 0.0
  %109 = vst.msk [vmem:[#allocation4 + $0x118] sm:$0xff] %vm33, 0.0
  %110 = vst.msk [vmem:[#allocation4 + $0x120] sm:$0xff] %vm33, 0.0
  %111 = vst.msk [vmem:[#allocation4 + $0x128] sm:$0xff] %vm33, 0.0
  %112 = vst.msk [vmem:[#allocation4 + $0x130] sm:$0xff] %vm33, 0.0
  %113 = vst.msk [vmem:[#allocation4 + $0x138] sm:$0xff] %vm33, 0.0
  %v114 = vlaneseq
  %v115 = vshrl.u32 %v114, 7
  %v116 = vadd.s32 %v115, 8
  %v117 = vadd.s32 %v115, 16
  %v118 = vadd.s32 %v115, 24
  %v119 = vadd.s32 %v115, 32
  %v120 = vadd.s32 %v115, 40
  %v121 = vadd.s32 %v115, 48
  %v122 = vadd.s32 %v115, 56
  %v123 = vadd.s32 %v115, 64
  %v124 = vadd.s32 %v115, 72
  %v125 = vadd.s32 %v115, 80
  %v126 = vadd.s32 %v115, 88
  %v127 = vadd.s32 %v115, 96
  %v128 = vadd.s32 %v115, 104
  %v129 = vadd.s32 %v115, 112
  %v130 = vadd.s32 %v115, 120
  %v131 = vadd.s32 %v115, 128
  %v132 = vadd.s32 %v115, 136
  %v133 = vadd.s32 %v115, 144
  %v134 = vadd.s32 %v115, 152
  %v135 = vadd.s32 %v115, 160
  %v136 = vadd.s32 %v115, 168
  %v137 = vadd.s32 %v115, 176
  %v138 = vadd.s32 %v115, 184
  %v139 = vadd.s32 %v115, 192
  %v140 = vadd.s32 %v115, 200
  %v141 = vadd.s32 %v115, 208
  %v142 = vadd.s32 %v115, 216
  %v143 = vadd.s32 %v115, 224
  %v144 = vadd.s32 %v115, 232
  %v145 = vadd.s32 %v115, 240
  %v146 = vadd.s32 %v115, 248
  %v147 = vshra.s32 %v115, 4
  %v148 = vshra.s32 %v116, 4
  %v149 = vshra.s32 %v117, 4
  %v150 = vshra.s32 %v118, 4
  %v151 = vshra.s32 %v119, 4
  %v152 = vshra.s32 %v120, 4
  %v153 = vshra.s32 %v121, 4
  %v154 = vshra.s32 %v122, 4
  %v155 = vshra.s32 %v123, 4
  %v156 = vshra.s32 %v124, 4
  %v157 = vshra.s32 %v125, 4
  %v158 = vshra.s32 %v126, 4
  %v159 = vshra.s32 %v127, 4
  %v160 = vshra.s32 %v128, 4
  %v161 = vshra.s32 %v129, 4
  %v162 = vshra.s32 %v130, 4
  %v163 = vshra.s32 %v131, 4
  %v164 = vshra.s32 %v132, 4
  %v165 = vshra.s32 %v133, 4
  %v166 = vshra.s32 %v134, 4
  %v167 = vshra.s32 %v135, 4
  %v168 = vshra.s32 %v136, 4
  %v169 = vshra.s32 %v137, 4
  %v170 = vshra.s32 %v138, 4
  %v171 = vshra.s32 %v139, 4
  %v172 = vshra.s32 %v140, 4
  %v173 = vshra.s32 %v141, 4
  %v174 = vshra.s32 %v142, 4
  %v175 = vshra.s32 %v143, 4
  %v176 = vshra.s32 %v144, 4
  %v177 = vshra.s32 %v145, 4
  %v178 = vshra.s32 %v146, 4
  %v179 = vand.u32 %v115, 15
  %v180 = vand.u32 %v116, 15
  %v181 = vand.u32 %v117, 15
  %v182 = vand.u32 %v118, 15
  %v183 = vand.u32 %v119, 15
  %v184 = vand.u32 %v120, 15
  %v185 = vand.u32 %v121, 15
  %v186 = vand.u32 %v122, 15
  %v187 = vand.u32 %v123, 15
  %v188 = vand.u32 %v124, 15
  %v189 = vand.u32 %v125, 15
  %v190 = vand.u32 %v126, 15
  %v191 = vand.u32 %v127, 15
  %v192 = vand.u32 %v128, 15
  %v193 = vand.u32 %v129, 15
  %v194 = vand.u32 %v130, 15
  %v195 = vand.u32 %v131, 15
  %v196 = vand.u32 %v132, 15
  %v197 = vand.u32 %v133, 15
  %v198 = vand.u32 %v134, 15
  %v199 = vand.u32 %v135, 15
  %v200 = vand.u32 %v136, 15
  %v201 = vand.u32 %v137, 15
  %v202 = vand.u32 %v138, 15
  %v203 = vand.u32 %v139, 15
  %v204 = vand.u32 %v140, 15
  %v205 = vand.u32 %v141, 15
  %v206 = vand.u32 %v142, 15
  %v207 = vand.u32 %v143, 15
  %v208 = vand.u32 %v144, 15
  %v209 = vand.u32 %v145, 15
  %v210 = vand.u32 %v146, 15
  %vm211 = vcmp.ge.s32.totalorder %v147, 1
  %vm212 = vcmp.ge.s32.totalorder %v148, 1
  %vm213 = vcmp.ge.s32.totalorder %v149, 1
  %vm214 = vcmp.ge.s32.totalorder %v150, 1
  %vm215 = vcmp.ge.s32.totalorder %v151, 1
  %vm216 = vcmp.ge.s32.totalorder %v152, 1
  %vm217 = vcmp.ge.s32.totalorder %v153, 1
  %vm218 = vcmp.ge.s32.totalorder %v154, 1
  %vm219 = vcmp.ge.s32.totalorder %v155, 1
  %vm220 = vcmp.ge.s32.totalorder %v156, 1
  %vm221 = vcmp.ge.s32.totalorder %v157, 1
  %vm222 = vcmp.ge.s32.totalorder %v158, 1
  %vm223 = vcmp.ge.s32.totalorder %v159, 1
  %vm224 = vcmp.ge.s32.totalorder %v160, 1
  %vm225 = vcmp.ge.s32.totalorder %v161, 1
  %vm226 = vcmp.ge.s32.totalorder %v162, 1
  %vm227 = vcmp.ge.s32.totalorder %v163, 1
  %vm228 = vcmp.ge.s32.totalorder %v164, 1
  %vm229 = vcmp.ge.s32.totalorder %v165, 1
  %vm230 = vcmp.ge.s32.totalorder %v166, 1
  %vm231 = vcmp.ge.s32.totalorder %v167, 1
  %vm232 = vcmp.ge.s32.totalorder %v168, 1
  %vm233 = vcmp.ge.s32.totalorder %v169, 1
  %vm234 = vcmp.ge.s32.totalorder %v170, 1
  %vm235 = vcmp.ge.s32.totalorder %v171, 1
  %vm236 = vcmp.ge.s32.totalorder %v172, 1
  %vm237 = vcmp.ge.s32.totalorder %v173, 1
  %vm238 = vcmp.ge.s32.totalorder %v174, 1
  %vm239 = vcmp.ge.s32.totalorder %v175, 1
  %vm240 = vcmp.ge.s32.totalorder %v176, 1
  %vm241 = vcmp.ge.s32.totalorder %v177, 1
  %vm242 = vcmp.ge.s32.totalorder %v178, 1
  %vm243 = vcmp.le.s32.totalorder %v147, 14
  %vm244 = vcmp.le.s32.totalorder %v148, 14
  %vm245 = vcmp.le.s32.totalorder %v149, 14
  %vm246 = vcmp.le.s32.totalorder %v150, 14
  %vm247 = vcmp.le.s32.totalorder %v151, 14
  %vm248 = vcmp.le.s32.totalorder %v152, 14
  %vm249 = vcmp.le.s32.totalorder %v153, 14
  %vm250 = vcmp.le.s32.totalorder %v154, 14
  %vm251 = vcmp.le.s32.totalorder %v155, 14
  %vm252 = vcmp.le.s32.totalorder %v156, 14
  %vm253 = vcmp.le.s32.totalorder %v157, 14
  %vm254 = vcmp.le.s32.totalorder %v158, 14
  %vm255 = vcmp.le.s32.totalorder %v159, 14
  %vm256 = vcmp.le.s32.totalorder %v160, 14
  %vm257 = vcmp.le.s32.totalorder %v161, 14
  %vm258 = vcmp.le.s32.totalorder %v162, 14
  %vm259 = vcmp.le.s32.totalorder %v163, 14
  %vm260 = vcmp.le.s32.totalorder %v164, 14
  %vm261 = vcmp.le.s32.totalorder %v165, 14
  %vm262 = vcmp.le.s32.totalorder %v166, 14
  %vm263 = vcmp.le.s32.totalorder %v167, 14
  %vm264 = vcmp.le.s32.totalorder %v168, 14
  %vm265 = vcmp.le.s32.totalorder %v169, 14
  %vm266 = vcmp.le.s32.totalorder %v170, 14
  %vm267 = vcmp.le.s32.totalorder %v171, 14
  %vm268 = vcmp.le.s32.totalorder %v172, 14
  %vm269 = vcmp.le.s32.totalorder %v173, 14
  %vm270 = vcmp.le.s32.totalorder %v174, 14
  %vm271 = vcmp.le.s32.totalorder %v175, 14
  %vm272 = vcmp.le.s32.totalorder %v176, 14
  %vm273 = vcmp.le.s32.totalorder %v177, 14
  %vm274 = vcmp.le.s32.totalorder %v178, 14
  %vm275 = vmand %vm211, %vm243
  %vm276 = vmand %vm212, %vm244
  %vm277 = vmand %vm213, %vm245
  %vm278 = vmand %vm214, %vm246
  %vm279 = vmand %vm215, %vm247
  %vm280 = vmand %vm216, %vm248
  %vm281 = vmand %vm217, %vm249
  %vm282 = vmand %vm218, %vm250
  %vm283 = vmand %vm219, %vm251
  %vm284 = vmand %vm220, %vm252
  %vm285 = vmand %vm221, %vm253
  %vm286 = vmand %vm222, %vm254
  %vm287 = vmand %vm223, %vm255
  %vm288 = vmand %vm224, %vm256
  %vm289 = vmand %vm225, %vm257
  %vm290 = vmand %vm226, %vm258
  %vm291 = vmand %vm227, %vm259
  %vm292 = vmand %vm228, %vm260
  %vm293 = vmand %vm229, %vm261
  %vm294 = vmand %vm230, %vm262
  %vm295 = vmand %vm231, %vm263
  %vm296 = vmand %vm232, %vm264
  %vm297 = vmand %vm233, %vm265
  %vm298 = vmand %vm234, %vm266
  %vm299 = vmand %vm235, %vm267
  %vm300 = vmand %vm236, %vm268
  %vm301 = vmand %vm237, %vm269
  %vm302 = vmand %vm238, %vm270
  %vm303 = vmand %vm239, %vm271
  %vm304 = vmand %vm240, %vm272
  %vm305 = vmand %vm241, %vm273
  %vm306 = vmand %vm242, %vm274
  %vm307 = vcmp.ge.s32.totalorder %v179, 1
  %vm308 = vcmp.ge.s32.totalorder %v180, 1
  %vm309 = vcmp.ge.s32.totalorder %v181, 1
  %vm310 = vcmp.ge.s32.totalorder %v182, 1
  %vm311 = vcmp.ge.s32.totalorder %v183, 1
  %vm312 = vcmp.ge.s32.totalorder %v184, 1
  %vm313 = vcmp.ge.s32.totalorder %v185, 1
  %vm314 = vcmp.ge.s32.totalorder %v186, 1
  %vm315 = vcmp.ge.s32.totalorder %v187, 1
  %vm316 = vcmp.ge.s32.totalorder %v188, 1
  %vm317 = vcmp.ge.s32.totalorder %v189, 1
  %vm318 = vcmp.ge.s32.totalorder %v190, 1
  %vm319 = vcmp.ge.s32.totalorder %v191, 1
  %vm320 = vcmp.ge.s32.totalorder %v192, 1
  %vm321 = vcmp.ge.s32.totalorder %v193, 1
  %vm322 = vcmp.ge.s32.totalorder %v194, 1
  %vm323 = vcmp.ge.s32.totalorder %v195, 1
  %vm324 = vcmp.ge.s32.totalorder %v196, 1
  %vm325 = vcmp.ge.s32.totalorder %v197, 1
  %vm326 = vcmp.ge.s32.totalorder %v198, 1
  %vm327 = vcmp.ge.s32.totalorder %v199, 1
  %vm328 = vcmp.ge.s32.totalorder %v200, 1
  %vm329 = vcmp.ge.s32.totalorder %v201, 1
  %vm330 = vcmp.ge.s32.totalorder %v202, 1
  %vm331 = vcmp.ge.s32.totalorder %v203, 1
  %vm332 = vcmp.ge.s32.totalorder %v204, 1
  %vm333 = vcmp.ge.s32.totalorder %v205, 1
  %vm334 = vcmp.ge.s32.totalorder %v206, 1
  %vm335 = vcmp.ge.s32.totalorder %v207, 1
  %vm336 = vcmp.ge.s32.totalorder %v208, 1
  %vm337 = vcmp.ge.s32.totalorder %v209, 1
  %vm338 = vcmp.ge.s32.totalorder %v210, 1
  %vm339 = vmand %vm275, %vm307
  %vm340 = vmand %vm276, %vm308
  %vm341 = vmand %vm277, %vm309
  %vm342 = vmand %vm278, %vm310
  %vm343 = vmand %vm279, %vm311
  %vm344 = vmand %vm280, %vm312
  %vm345 = vmand %vm281, %vm313
  %vm346 = vmand %vm282, %vm314
  %vm347 = vmand %vm283, %vm315
  %vm348 = vmand %vm284, %vm316
  %vm349 = vmand %vm285, %vm317
  %vm350 = vmand %vm286, %vm318
  %vm351 = vmand %vm287, %vm319
  %vm352 = vmand %vm288, %vm320
  %vm353 = vmand %vm289, %vm321
  %vm354 = vmand %vm290, %vm322
  %vm355 = vmand %vm291, %vm323
  %vm356 = vmand %vm292, %vm324
  %vm357 = vmand %vm293, %vm325
  %vm358 = vmand %vm294, %vm326
  %vm359 = vmand %vm295, %vm327
  %vm360 = vmand %vm296, %vm328
  %vm361 = vmand %vm297, %vm329
  %vm362 = vmand %vm298, %vm330
  %vm363 = vmand %vm299, %vm331
  %vm364 = vmand %vm300, %vm332
  %vm365 = vmand %vm301, %vm333
  %vm366 = vmand %vm302, %vm334
  %vm367 = vmand %vm303, %vm335
  %vm368 = vmand %vm304, %vm336
  %vm369 = vmand %vm305, %vm337
  %vm370 = vmand %vm306, %vm338
  %vm371 = vcmp.le.s32.totalorder %v179, 14
  %vm372 = vcmp.le.s32.totalorder %v180, 14
  %vm373 = vcmp.le.s32.totalorder %v181, 14
  %vm374 = vcmp.le.s32.totalorder %v182, 14
  %vm375 = vcmp.le.s32.totalorder %v183, 14
  %vm376 = vcmp.le.s32.totalorder %v184, 14
  %vm377 = vcmp.le.s32.totalorder %v185, 14
  %vm378 = vcmp.le.s32.totalorder %v186, 14
  %vm379 = vcmp.le.s32.totalorder %v187, 14
  %vm380 = vcmp.le.s32.totalorder %v188, 14
  %vm381 = vcmp.le.s32.totalorder %v189, 14
  %vm382 = vcmp.le.s32.totalorder %v190, 14
  %vm383 = vcmp.le.s32.totalorder %v191, 14
  %vm384 = vcmp.le.s32.totalorder %v192, 14
  %vm385 = vcmp.le.s32.totalorder %v193, 14
  %vm386 = vcmp.le.s32.totalorder %v194, 14
  %vm387 = vcmp.le.s32.totalorder %v195, 14
  %vm388 = vcmp.le.s32.totalorder %v196, 14
  %vm389 = vcmp.le.s32.totalorder %v197, 14
  %vm390 = vcmp.le.s32.totalorder %v198, 14
  %vm391 = vcmp.le.s32.totalorder %v199, 14
  %vm392 = vcmp.le.s32.totalorder %v200, 14
  %vm393 = vcmp.le.s32.totalorder %v201, 14
  %vm394 = vcmp.le.s32.totalorder %v202, 14
  %vm395 = vcmp.le.s32.totalorder %v203, 14
  %vm396 = vcmp.le.s32.totalorder %v204, 14
  %vm397 = vcmp.le.s32.totalorder %v205, 14
  %vm398 = vcmp.le.s32.totalorder %v206, 14
  %vm399 = vcmp.le.s32.totalorder %v207, 14
  %vm400 = vcmp.le.s32.totalorder %v208, 14
  %vm401 = vcmp.le.s32.totalorder %v209, 14
  %vm402 = vcmp.le.s32.totalorder %v210, 14
  %vm403 = vmand %vm339, %vm371
  %vm404 = vmand %vm340, %vm372
  %vm405 = vmand %vm341, %vm373
  %vm406 = vmand %vm342, %vm374
  %vm407 = vmand %vm343, %vm375
  %vm408 = vmand %vm344, %vm376
  %vm409 = vmand %vm345, %vm377
  %vm410 = vmand %vm346, %vm378
  %vm411 = vmand %vm347, %vm379
  %vm412 = vmand %vm348, %vm380
  %vm413 = vmand %vm349, %vm381
  %vm414 = vmand %vm350, %vm382
  %vm415 = vmand %vm351, %vm383
  %vm416 = vmand %vm352, %vm384
  %vm417 = vmand %vm353, %vm385
  %vm418 = vmand %vm354, %vm386
  %vm419 = vmand %vm355, %vm387
  %vm420 = vmand %vm356, %vm388
  %vm421 = vmand %vm357, %vm389
  %vm422 = vmand %vm358, %vm390
  %vm423 = vmand %vm359, %vm391
  %vm424 = vmand %vm360, %vm392
  %vm425 = vmand %vm361, %vm393
  %vm426 = vmand %vm362, %vm394
  %vm427 = vmand %vm363, %vm395
  %vm428 = vmand %vm364, %vm396
  %vm429 = vmand %vm365, %vm397
  %vm430 = vmand %vm366, %vm398
  %vm431 = vmand %vm367, %vm399
  %vm432 = vmand %vm368, %vm400
  %vm433 = vmand %vm369, %vm401
  %vm434 = vmand %vm370, %vm402
  %v435 = vsel %vm403, 1, 0
  %v436 = vsel %vm404, 1, 0
  %v437 = vsel %vm405, 1, 0
  %v438 = vsel %vm406, 1, 0
  %v439 = vsel %vm407, 1, 0
  %v440 = vsel %vm408, 1, 0
  %v441 = vsel %vm409, 1, 0
  %v442 = vsel %vm410, 1, 0
  %v443 = vsel %vm411, 1, 0
  %v444 = vsel %vm412, 1, 0
  %v445 = vsel %vm413, 1, 0
  %v446 = vsel %vm414, 1, 0
  %v447 = vsel %vm415, 1, 0
  %v448 = vsel %vm416, 1, 0
  %v449 = vsel %vm417, 1, 0
  %v450 = vsel %vm418, 1, 0
  %v451 = vsel %vm419, 1, 0
  %v452 = vsel %vm420, 1, 0
  %v453 = vsel %vm421, 1, 0
  %v454 = vsel %vm422, 1, 0
  %v455 = vsel %vm423, 1, 0
  %v456 = vsel %vm424, 1, 0
  %v457 = vsel %vm425, 1, 0
  %v458 = vsel %vm426, 1, 0
  %v459 = vsel %vm427, 1, 0
  %v460 = vsel %vm428, 1, 0
  %v461 = vsel %vm429, 1, 0
  %v462 = vsel %vm430, 1, 0
  %v463 = vsel %vm431, 1, 0
  %v464 = vsel %vm432, 1, 0
  %v465 = vsel %vm433, 1, 0
  %v466 = vsel %vm434, 1, 0
  %v467 = vcvt.s32.f32 %v435
  %v468 = vcvt.s32.f32 %v436
  %v469 = vcvt.s32.f32 %v437
  %v470 = vcvt.s32.f32 %v438
  %v471 = vcvt.s32.f32 %v439
  %v472 = vcvt.s32.f32 %v440
  %v473 = vcvt.s32.f32 %v441
  %v474 = vcvt.s32.f32 %v442
  %v475 = vcvt.s32.f32 %v443
  %v476 = vcvt.s32.f32 %v444
  %v477 = vcvt.s32.f32 %v445
  %v478 = vcvt.s32.f32 %v446
  %v479 = vcvt.s32.f32 %v447
  %v480 = vcvt.s32.f32 %v448
  %v481 = vcvt.s32.f32 %v449
  %v482 = vcvt.s32.f32 %v450
  %v483 = vcvt.s32.f32 %v451
  %v484 = vcvt.s32.f32 %v452
  %v485 = vcvt.s32.f32 %v453
  %v486 = vcvt.s32.f32 %v454
  %v487 = vcvt.s32.f32 %v455
  %v488 = vcvt.s32.f32 %v456
  %v489 = vcvt.s32.f32 %v457
  %v490 = vcvt.s32.f32 %v458
  %v491 = vcvt.s32.f32 %v459
  %v492 = vcvt.s32.f32 %v460
  %v493 = vcvt.s32.f32 %v461
  %v494 = vcvt.s32.f32 %v462
  %v495 = vcvt.s32.f32 %v463
  %v496 = vcvt.s32.f32 %v464
  %v497 = vcvt.s32.f32 %v465
  %v498 = vcvt.s32.f32 %v466
  loop: start=0, step=1, limit=8
  $region38: #{vae_forward.2} parent=0 // loop_pre_header
    _
  $region39: #{vae_forward.2} parent=0 // loop_header
    %s500 = sphi 0, %s504
    %p501 = scmp.ge.s32.totalorder %s500, 8
  $region40: #{vae_forward.2} parent=0 // loop_header_branch
    %503 = sbr.rel (%p501) target = $region44
  $region41: #{vae_forward.2} parent=0 // loop_body
    %s505 = smul.u32 %s500, 112
    %s506 = smul.addr %s505, 4
    %s507 = scalar_lea.vmem %s0, %s506
    %v508 = vld [vmem:[%s507] sm:$0xf]
    %v509 = vld [vmem:[%s507 + $0x4] sm:$0xf]
    %v510 = vld [vmem:[%s507 + $0x8] sm:$0xf]
    %v511 = vld [vmem:[%s507 + $0xc] sm:$0xf]
    %v512 = vld [vmem:[%s507 + $0x10] sm:$0xf]
    %v513 = vld [vmem:[%s507 + $0x14] sm:$0xf]
    %v514 = vld [vmem:[%s507 + $0x18] sm:$0xf]
    %v515 = vld [vmem:[%s507 + $0x1c] sm:$0xf]
    %v516 = vld [vmem:[%s507 + $0x20] sm:$0xf]
    %v517 = vld [vmem:[%s507 + $0x24] sm:$0xf]
    %v518 = vld [vmem:[%s507 + $0x28] sm:$0xf]
    %v519 = vld [vmem:[%s507 + $0x2c] sm:$0xf]
    %v520 = vld [vmem:[%s507 + $0x30] sm:$0xf]
    %v521 = vld [vmem:[%s507 + $0x34] sm:$0xf]
    %v522 = vld [vmem:[%s507 + $0x38] sm:$0xf]
    %v523 = vld [vmem:[%s507 + $0x3c] sm:$0xf]
    %v524 = vld [vmem:[%s507 + $0x40] sm:$0xf]
    %v525 = vld [vmem:[%s507 + $0x44] sm:$0xf]
    %v526 = vld [vmem:[%s507 + $0x48] sm:$0xf]
    %v527 = vld [vmem:[%s507 + $0x4c] sm:$0xf]
    %v528 = vld [vmem:[%s507 + $0x50] sm:$0xf]
    %v529 = vld [vmem:[%s507 + $0x54] sm:$0xf]
    %v530 = vld [vmem:[%s507 + $0x58] sm:$0xf]
    %v531 = vld [vmem:[%s507 + $0x5c] sm:$0xf]
    %v532 = vld [vmem:[%s507 + $0x60] sm:$0xf]
    %v533 = vld [vmem:[%s507 + $0x64] sm:$0xf]
    %v534 = vld [vmem:[%s507 + $0x68] sm:$0xf]
    %v535 = vld [vmem:[%s507 + $0x6c] sm:$0xf]
    %v536 = vld [vmem:[%s507 + $0x70] sm:$0xf]
    %v537 = vld [vmem:[%s507 + $0x74] sm:$0xf]
    %v538 = vld [vmem:[%s507 + $0x78] sm:$0xf]
    %v539 = vld [vmem:[%s507 + $0x7c] sm:$0xf]
    %v540 = vld [vmem:[%s507 + $0x80] sm:$0xf]
    %v541 = vld [vmem:[%s507 + $0x84] sm:$0xf]
    %v542 = vld [vmem:[%s507 + $0x88] sm:$0xf]
    %v543 = vld [vmem:[%s507 + $0x8c] sm:$0xf]
    %v544 = vld [vmem:[%s507 + $0x90] sm:$0xf]
    %v545 = vld [vmem:[%s507 + $0x94] sm:$0xf]
    %v546 = vld [vmem:[%s507 + $0x98] sm:$0xf]
    %v547 = vld [vmem:[%s507 + $0x9c] sm:$0xf]
    %v548 = vld [vmem:[%s507 + $0xa0] sm:$0xf]
    %v549 = vld [vmem:[%s507 + $0xa4] sm:$0xf]
    %v550 = vld [vmem:[%s507 + $0xa8] sm:$0xf]
    %v551 = vld [vmem:[%s507 + $0xac] sm:$0xf]
    %v552 = vld [vmem:[%s507 + $0xb0] sm:$0xf]
    %v553 = vld [vmem:[%s507 + $0xb4] sm:$0xf]
    %v554 = vld [vmem:[%s507 + $0xb8] sm:$0xf]
    %v555 = vld [vmem:[%s507 + $0xbc] sm:$0xf]
    %v556 = vld [vmem:[%s507 + $0xc0] sm:$0xf]
    %v557 = vld [vmem:[%s507 + $0xc4] sm:$0xf]
    %v558 = vld [vmem:[%s507 + $0xc8] sm:$0xf]
    %v559 = vld [vmem:[%s507 + $0xcc] sm:$0xf]
    %v560 = vld [vmem:[%s507 + $0xd0] sm:$0xf]
    %v561 = vld [vmem:[%s507 + $0xd4] sm:$0xf]
    %v562 = vld [vmem:[%s507 + $0xd8] sm:$0xf]
    %v563 = vld [vmem:[%s507 + $0xdc] sm:$0xf]
    %v564 = vld [vmem:[%s507 + $0xe0] sm:$0xf]
    %v565 = vld [vmem:[%s507 + $0xe4] sm:$0xf]
    %v566 = vld [vmem:[%s507 + $0xe8] sm:$0xf]
    %v567 = vld [vmem:[%s507 + $0xec] sm:$0xf]
    %v568 = vld [vmem:[%s507 + $0xf0] sm:$0xf]
    %v569 = vld [vmem:[%s507 + $0xf4] sm:$0xf]
    %v570 = vld [vmem:[%s507 + $0xf8] sm:$0xf]
    %v571 = vld [vmem:[%s507 + $0xfc] sm:$0xf]
    %v572 = vld [vmem:[%s507 + $0x100] sm:$0xf]
    %v573 = vld [vmem:[%s507 + $0x104] sm:$0xf]
    %v574 = vld [vmem:[%s507 + $0x108] sm:$0xf]
    %v575 = vld [vmem:[%s507 + $0x10c] sm:$0xf]
    %v576 = vld [vmem:[%s507 + $0x110] sm:$0xf]
    %v577 = vld [vmem:[%s507 + $0x114] sm:$0xf]
    %v578 = vld [vmem:[%s507 + $0x118] sm:$0xf]
    %v579 = vld [vmem:[%s507 + $0x11c] sm:$0xf]
    %v580 = vld [vmem:[%s507 + $0x120] sm:$0xf]
    %v581 = vld [vmem:[%s507 + $0x124] sm:$0xf]
    %v582 = vld [vmem:[%s507 + $0x128] sm:$0xf]
    %v583 = vld [vmem:[%s507 + $0x12c] sm:$0xf]
    %v584 = vld [vmem:[%s507 + $0x130] sm:$0xf]
    %v585 = vld [vmem:[%s507 + $0x134] sm:$0xf]
    %v586 = vld [vmem:[%s507 + $0x138] sm:$0xf]
    %v587 = vld [vmem:[%s507 + $0x13c] sm:$0xf]
    %v588 = vld [vmem:[%s507 + $0x140] sm:$0xf]
    %v589 = vld [vmem:[%s507 + $0x144] sm:$0xf]
    %v590 = vld [vmem:[%s507 + $0x148] sm:$0xf]
    %v591 = vld [vmem:[%s507 + $0x14c] sm:$0xf]
    %v592 = vld [vmem:[%s507 + $0x150] sm:$0xf]
    %v593 = vld [vmem:[%s507 + $0x154] sm:$0xf]
    %v594 = vld [vmem:[%s507 + $0x158] sm:$0xf]
    %v595 = vld [vmem:[%s507 + $0x15c] sm:$0xf]
    %v596 = vld [vmem:[%s507 + $0x160] sm:$0xf]
    %v597 = vld [vmem:[%s507 + $0x164] sm:$0xf]
    %v598 = vld [vmem:[%s507 + $0x168] sm:$0xf]
    %v599 = vld [vmem:[%s507 + $0x16c] sm:$0xf]
    %v600 = vld [vmem:[%s507 + $0x170] sm:$0xf]
    %v601 = vld [vmem:[%s507 + $0x174] sm:$0xf]
    %v602 = vld [vmem:[%s507 + $0x178] sm:$0xf]
    %v603 = vld [vmem:[%s507 + $0x17c] sm:$0xf]
    %v604 = vld [vmem:[%s507 + $0x180] sm:$0xf]
    %v605 = vld [vmem:[%s507 + $0x184] sm:$0xf]
    %v606 = vld [vmem:[%s507 + $0x188] sm:$0xf]
    %v607 = vld [vmem:[%s507 + $0x18c] sm:$0xf]
    %v608 = vld [vmem:[%s507 + $0x190] sm:$0xf]
    %v609 = vld [vmem:[%s507 + $0x194] sm:$0xf]
    %v610 = vld [vmem:[%s507 + $0x198] sm:$0xf]
    %v611 = vld [vmem:[%s507 + $0x19c] sm:$0xf]
    %v612 = vld [vmem:[%s507 + $0x1a0] sm:$0xf]
    %v613 = vld [vmem:[%s507 + $0x1a4] sm:$0xf]
    %v614 = vld [vmem:[%s507 + $0x1a8] sm:$0xf]
    %v615 = vld [vmem:[%s507 + $0x1ac] sm:$0xf]
    %v616 = vld [vmem:[%s507 + $0x1b0] sm:$0xf]
    %v617 = vld [vmem:[%s507 + $0x1b4] sm:$0xf]
    %v618 = vld [vmem:[%s507 + $0x1b8] sm:$0xf]
    %v619 = vld [vmem:[%s507 + $0x1bc] sm:$0xf]
    %v620 = vld [vmem:[%s1] sm:$0xf]
    %v621 = vld [vmem:[%s1 + $0x4] sm:$0x1]
    %v622 = vld [vmem:[%s2] sm:$0x1]
    %v624 = vperm.slane %v622, 0
    %v738 = vunpack.c.l.b16 %v508
    %v739 = vunpack.c.l.b16 %v509
    %v740 = vunpack.c.l.b16 %v510
    %v741 = vunpack.c.l.b16 %v511
    %v742 = vunpack.c.l.b16 %v512
    %v743 = vunpack.c.l.b16 %v513
    %v744 = vunpack.c.l.b16 %v514
    %v745 = vunpack.c.l.b16 %v515
    %v746 = vunpack.c.l.b16 %v516
    %v747 = vunpack.c.l.b16 %v517
    %v748 = vunpack.c.l.b16 %v518
    %v749 = vunpack.c.l.b16 %v519
    %v750 = vunpack.c.l.b16 %v520
    %v751 = vunpack.c.l.b16 %v521
    %v752 = vunpack.c.l.b16 %v522
    %v753 = vunpack.c.l.b16 %v523
    %v754 = vunpack.c.l.b16 %v524
    %v755 = vunpack.c.l.b16 %v525
    %v756 = vunpack.c.l.b16 %v526
    %v757 = vunpack.c.l.b16 %v527
    %v758 = vunpack.c.l.b16 %v528
    %v759 = vunpack.c.l.b16 %v529
    %v760 = vunpack.c.l.b16 %v530
    %v761 = vunpack.c.l.b16 %v531
    %v762 = vunpack.c.l.b16 %v532
    %v763 = vunpack.c.l.b16 %v533
    %v764 = vunpack.c.l.b16 %v534
    %v765 = vunpack.c.l.b16 %v535
    %v766 = vunpack.c.l.b16 %v536
    %v767 = vunpack.c.l.b16 %v537
    %v768 = vunpack.c.l.b16 %v538
    %v769 = vunpack.c.l.b16 %v539
    %v770 = vunpack.c.l.b16 %v540
    %v771 = vunpack.c.l.b16 %v541
    %v772 = vunpack.c.l.b16 %v542
    %v773 = vunpack.c.l.b16 %v543
    %v774 = vunpack.c.l.b16 %v544
    %v775 = vunpack.c.l.b16 %v545
    %v776 = vunpack.c.l.b16 %v546
    %v777 = vunpack.c.l.b16 %v547
    %v778 = vunpack.c.l.b16 %v548
    %v779 = vunpack.c.l.b16 %v549
    %v780 = vunpack.c.l.b16 %v550
    %v781 = vunpack.c.l.b16 %v551
    %v782 = vunpack.c.l.b16 %v552
    %v783 = vunpack.c.l.b16 %v553
    %v784 = vunpack.c.l.b16 %v554
    %v785 = vunpack.c.l.b16 %v555
    %v786 = vunpack.c.l.b16 %v556
    %v787 = vunpack.c.l.b16 %v557
    %v788 = vunpack.c.l.b16 %v558
    %v789 = vunpack.c.l.b16 %v559
    %v790 = vunpack.c.l.b16 %v560
    %v791 = vunpack.c.l.b16 %v561
    %v792 = vunpack.c.l.b16 %v562
    %v793 = vunpack.c.l.b16 %v563
    %v794 = vunpack.c.l.b16 %v564
    %v795 = vunpack.c.l.b16 %v565
    %v796 = vunpack.c.l.b16 %v566
    %v797 = vunpack.c.l.b16 %v567
    %v798 = vunpack.c.l.b16 %v568
    %v799 = vunpack.c.l.b16 %v569
    %v800 = vunpack.c.l.b16 %v570
    %v801 = vunpack.c.l.b16 %v571
    %v802 = vunpack.c.l.b16 %v572
    %v803 = vunpack.c.l.b16 %v573
    %v804 = vunpack.c.l.b16 %v574
    %v805 = vunpack.c.l.b16 %v575
    %v806 = vunpack.c.l.b16 %v576
    %v807 = vunpack.c.l.b16 %v577
    %v808 = vunpack.c.l.b16 %v578
    %v809 = vunpack.c.l.b16 %v579
    %v810 = vunpack.c.l.b16 %v580
    %v811 = vunpack.c.l.b16 %v581
    %v812 = vunpack.c.l.b16 %v582
    %v813 = vunpack.c.l.b16 %v583
    %v814 = vunpack.c.l.b16 %v584
    %v815 = vunpack.c.l.b16 %v585
    %v816 = vunpack.c.l.b16 %v586
    %v817 = vunpack.c.l.b16 %v587
    %v818 = vunpack.c.l.b16 %v588
    %v819 = vunpack.c.l.b16 %v589
    %v820 = vunpack.c.l.b16 %v590
    %v821 = vunpack.c.l.b16 %v591
    %v822 = vunpack.c.l.b16 %v592
    %v823 = vunpack.c.l.b16 %v593
    %v824 = vunpack.c.l.b16 %v594
    %v825 = vunpack.c.l.b16 %v595
    %v826 = vunpack.c.l.b16 %v596
    %v827 = vunpack.c.l.b16 %v597
    %v828 = vunpack.c.l.b16 %v598
    %v829 = vunpack.c.l.b16 %v599
    %v830 = vunpack.c.l.b16 %v600
    %v831 = vunpack.c.l.b16 %v601
    %v832 = vunpack.c.l.b16 %v602
    %v833 = vunpack.c.l.b16 %v603
    %v834 = vunpack.c.l.b16 %v604
    %v835 = vunpack.c.l.b16 %v605
    %v836 = vunpack.c.l.b16 %v606
    %v837 = vunpack.c.l.b16 %v607
    %v838 = vunpack.c.l.b16 %v608
    %v839 = vunpack.c.l.b16 %v609
    %v840 = vunpack.c.l.b16 %v610
    %v841 = vunpack.c.l.b16 %v611
    %v842 = vunpack.c.l.b16 %v612
    %v843 = vunpack.c.l.b16 %v613
    %v844 = vunpack.c.l.b16 %v614
    %v845 = vunpack.c.l.b16 %v615
    %v846 = vunpack.c.l.b16 %v616
    %v847 = vunpack.c.l.b16 %v617
    %v848 = vunpack.c.l.b16 %v618
    %v849 = vunpack.c.l.b16 %v619
    %v850 = vpack.c.b16 %v739, %v738
    %v851 = vpack.c.b16 %v741, %v740
    %v852 = vpack.c.b16 %v743, %v742
    %v853 = vpack.c.b16 %v745, %v744
    %v854 = vpack.c.b16 %v747, %v746
    %v855 = vpack.c.b16 %v749, %v748
    %v856 = vpack.c.b16 %v751, %v750
    %v857 = vpack.c.b16 %v753, %v752
    %v858 = vpack.c.b16 %v755, %v754
    %v859 = vpack.c.b16 %v757, %v756
    %v860 = vpack.c.b16 %v759, %v758
    %v861 = vpack.c.b16 %v761, %v760
    %v862 = vpack.c.b16 %v763, %v762
    %v863 = vpack.c.b16 %v765, %v764
    %v864 = vpack.c.b16 %v767, %v766
    %v865 = vpack.c.b16 %v769, %v768
    %v866 = vpack.c.b16 %v771, %v770
    %v867 = vpack.c.b16 %v773, %v772
    %v868 = vpack.c.b16 %v775, %v774
    %v869 = vpack.c.b16 %v777, %v776
    %v870 = vpack.c.b16 %v779, %v778
    %v871 = vpack.c.b16 %v781, %v780
    %v872 = vpack.c.b16 %v783, %v782
    %v873 = vpack.c.b16 %v785, %v784
    %v874 = vpack.c.b16 %v787, %v786
    %v875 = vpack.c.b16 %v789, %v788
    %v876 = vpack.c.b16 %v791, %v790
    %v877 = vpack.c.b16 %v793, %v792
    %v878 = vpack.c.b16 %v795, %v794
    %v879 = vpack.c.b16 %v797, %v796
    %v880 = vpack.c.b16 %v799, %v798
    %v881 = vpack.c.b16 %v801, %v800
    %v882 = vpack.c.b16 %v803, %v802
    %v883 = vpack.c.b16 %v805, %v804
    %v884 = vpack.c.b16 %v807, %v806
    %v885 = vpack.c.b16 %v809, %v808
    %v886 = vpack.c.b16 %v811, %v810
    %v887 = vpack.c.b16 %v813, %v812
    %v888 = vpack.c.b16 %v815, %v814
    %v889 = vpack.c.b16 %v817, %v816
    %v890 = vpack.c.b16 %v819, %v818
    %v891 = vpack.c.b16 %v821, %v820
    %v892 = vpack.c.b16 %v823, %v822
    %v893 = vpack.c.b16 %v825, %v824
    %v894 = vpack.c.b16 %v827, %v826
    %v895 = vpack.c.b16 %v829, %v828
    %v896 = vpack.c.b16 %v831, %v830
    %v897 = vpack.c.b16 %v833, %v832
    %v898 = vpack.c.b16 %v835, %v834
    %v899 = vpack.c.b16 %v837, %v836
    %v900 = vpack.c.b16 %v839, %v838
    %v901 = vpack.c.b16 %v841, %v840
    %v902 = vpack.c.b16 %v843, %v842
    %v903 = vpack.c.b16 %v845, %v844
    %v904 = vpack.c.b16 %v847, %v846
    %v905 = vpack.c.b16 %v849, %v848
    %v908 = vunpack.c.l.b16 %v620
    %v909 = vunpack.c.l.b16 %v621
    %v910 = vpack.c.b16 %v909, %v908
    %vm911 = vcmask 72704
    %v913 = vsel %vm911, %v850, 0
    %v916 = vsel %vm911, %v851, 0
    %v919 = vsel %vm911, %v852, 0
    %v922 = vsel %vm911, %v853, 0
    %v925 = vsel %vm911, %v854, 0
    %v928 = vsel %vm911, %v855, 0
    %v931 = vsel %vm911, %v856, 0
    %v934 = vsel %vm911, %v857, 0
    %v937 = vsel %vm911, %v858, 0
    %v940 = vsel %vm911, %v859, 0
    %v943 = vsel %vm911, %v860, 0
    %v946 = vsel %vm911, %v861, 0
    %v949 = vsel %vm911, %v862, 0
    %v952 = vsel %vm911, %v863, 0
    %v955 = vsel %vm911, %v864, 0
    %v958 = vsel %vm911, %v865, 0
    %v961 = vsel %vm911, %v866, 0
    %v964 = vsel %vm911, %v867, 0
    %v967 = vsel %vm911, %v868, 0
    %v970 = vsel %vm911, %v869, 0
    %v973 = vsel %vm911, %v870, 0
    %v976 = vsel %vm911, %v871, 0
    %v979 = vsel %vm911, %v872, 0
    %v982 = vsel %vm911, %v873, 0
    %v985 = vsel %vm911, %v874, 0
    %v988 = vsel %vm911, %v875, 0
    %v991 = vsel %vm911, %v876, 0
    %v994 = vsel %vm911, %v877, 0
    %v997 = vsel %vm911, %v878, 0
    %v1000 = vsel %vm911, %v879, 0
    %v1003 = vsel %vm911, %v880, 0
    %v1006 = vsel %vm911, %v881, 0
    %v1009 = vsel %vm911, %v882, 0
    %v1012 = vsel %vm911, %v883, 0
    %v1015 = vsel %vm911, %v884, 0
    %v1018 = vsel %vm911, %v885, 0
    %v1021 = vsel %vm911, %v886, 0
    %v1024 = vsel %vm911, %v887, 0
    %v1027 = vsel %vm911, %v888, 0
    %v1030 = vsel %vm911, %v889, 0
    %v1033 = vsel %vm911, %v890, 0
    %v1036 = vsel %vm911, %v891, 0
    %v1039 = vsel %vm911, %v892, 0
    %v1042 = vsel %vm911, %v893, 0
    %v1045 = vsel %vm911, %v894, 0
    %v1048 = vsel %vm911, %v895, 0
    %v1051 = vsel %vm911, %v896, 0
    %v1054 = vsel %vm911, %v897, 0
    %v1057 = vsel %vm911, %v898, 0
    %v1060 = vsel %vm911, %v899, 0
    %v1063 = vsel %vm911, %v900, 0
    %v1066 = vsel %vm911, %v901, 0
    %v1069 = vsel %vm911, %v902, 0
    %v1072 = vsel %vm911, %v903, 0
    %v1075 = vsel %vm911, %v904, 0
    %v1078 = vsel %vm911, %v905, 0
    %vm1080 = vcmask 1043456
    %vm1081 = vcmask 1044480
    %v1082 = vsel %vm1080, 4294967295, 65535
    %v1083 = vsel %vm1081, %v1082, 0
    %v1085 = vand.u32 %v910, %v1083
    %1087 = vmatpush.bf16.msra.mxu0 0
    %1088 = vmatpush.bf16.msra.mxu0 0
    %1089 = vmatpush.bf16.msra.mxu0 0
    %1090 = vmatpush.bf16.msra.mxu0 0
    %1091 = vmatpush.bf16.msra.mxu0 0
    %1092 = vmatpush.bf16.msra.mxu0 0
    %1093 = vmatpush.bf16.msra.mxu0 0
    %1094 = vmatpush.bf16.msra.mxu0 %v1085
    %1095 = vmatmul.bf16.gmra.mxu0 %v913
    %v1096 = vpop.f32.mrf.mxu0
    %v1097 = vadd.f32 %v624, %v1096
    %v1098 = vpop.f32.mrf.mxu0
    %v1099 = vadd.f32 %v624, %v1098
    %1100 = vmatmul.bf16.gmra.mxu0 %v916
    %v1101 = vpop.f32.mrf.mxu0
    %v1102 = vadd.f32 %v624, %v1101
    %v1103 = vpop.f32.mrf.mxu0
    %v1104 = vadd.f32 %v624, %v1103
    %1105 = vmatmul.bf16.gmra.mxu0 %v919
    %v1106 = vpop.f32.mrf.mxu0
    %v1107 = vadd.f32 %v624, %v1106
    %v1108 = vpop.f32.mrf.mxu0
    %v1109 = vadd.f32 %v624, %v1108
    %1110 = vmatmul.bf16.gmra.mxu0 %v922
    %v1111 = vpop.f32.mrf.mxu0
    %v1112 = vadd.f32 %v624, %v1111
    %v1113 = vpop.f32.mrf.mxu0
    %v1114 = vadd.f32 %v624, %v1113
    %1115 = vmatmul.bf16.gmra.mxu0 %v925
    %v1116 = vpop.f32.mrf.mxu0
    %v1117 = vadd.f32 %v624, %v1116
    %v1118 = vpop.f32.mrf.mxu0
    %v1119 = vadd.f32 %v624, %v1118
    %1120 = vmatmul.bf16.gmra.mxu0 %v928
    %v1121 = vpop.f32.mrf.mxu0
    %v1122 = vadd.f32 %v624, %v1121
    %v1123 = vpop.f32.mrf.mxu0
    %v1124 = vadd.f32 %v624, %v1123
    %1125 = vmatmul.bf16.gmra.mxu0 %v931
    %v1126 = vpop.f32.mrf.mxu0
    %v1127 = vadd.f32 %v624, %v1126
    %v1128 = vpop.f32.mrf.mxu0
    %v1129 = vadd.f32 %v624, %v1128
    %1130 = vmatmul.bf16.gmra.mxu0 %v934
    %v1131 = vpop.f32.mrf.mxu0
    %v1132 = vadd.f32 %v624, %v1131
    %v1133 = vpop.f32.mrf.mxu0
    %v1134 = vadd.f32 %v624, %v1133
    %1135 = vmatmul.bf16.gmra.mxu0 %v937
    %v1136 = vpop.f32.mrf.mxu0
    %v1137 = vadd.f32 %v624, %v1136
    %v1138 = vpop.f32.mrf.mxu0
    %v1139 = vadd.f32 %v624, %v1138
    %1140 = vmatmul.bf16.gmra.mxu0 %v940
    %v1141 = vpop.f32.mrf.mxu0
    %v1142 = vadd.f32 %v624, %v1141
    %v1143 = vpop.f32.mrf.mxu0
    %v1144 = vadd.f32 %v624, %v1143
    %1145 = vmatmul.bf16.gmra.mxu0 %v943
    %v1146 = vpop.f32.mrf.mxu0
    %v1147 = vadd.f32 %v624, %v1146
    %v1148 = vpop.f32.mrf.mxu0
    %v1149 = vadd.f32 %v624, %v1148
    %1150 = vmatmul.bf16.gmra.mxu0 %v946
    %v1151 = vpop.f32.mrf.mxu0
    %v1152 = vadd.f32 %v624, %v1151
    %v1153 = vpop.f32.mrf.mxu0
    %v1154 = vadd.f32 %v624, %v1153
    %1155 = vmatmul.bf16.gmra.mxu0 %v949
    %v1156 = vpop.f32.mrf.mxu0
    %v1157 = vadd.f32 %v624, %v1156
    %v1158 = vpop.f32.mrf.mxu0
    %v1159 = vadd.f32 %v624, %v1158
    %1160 = vmatmul.bf16.gmra.mxu0 %v952
    %v1161 = vpop.f32.mrf.mxu0
    %v1162 = vadd.f32 %v624, %v1161
    %v1163 = vpop.f32.mrf.mxu0
    %v1164 = vadd.f32 %v624, %v1163
    %1165 = vmatmul.bf16.gmra.mxu0 %v955
    %v1166 = vpop.f32.mrf.mxu0
    %v1167 = vadd.f32 %v624, %v1166
    %v1168 = vpop.f32.mrf.mxu0
    %v1169 = vadd.f32 %v624, %v1168
    %1170 = vmatmul.bf16.gmra.mxu0 %v958
    %v1171 = vpop.f32.mrf.mxu0
    %v1172 = vadd.f32 %v624, %v1171
    %v1173 = vpop.f32.mrf.mxu0
    %v1174 = vadd.f32 %v624, %v1173
    %1175 = vmatmul.bf16.gmra.mxu0 %v961
    %v1176 = vpop.f32.mrf.mxu0
    %v1177 = vadd.f32 %v624, %v1176
    %v1178 = vpop.f32.mrf.mxu0
    %v1179 = vadd.f32 %v624, %v1178
    %1180 = vmatmul.bf16.gmra.mxu0 %v964
    %v1181 = vpop.f32.mrf.mxu0
    %v1182 = vadd.f32 %v624, %v1181
    %v1183 = vpop.f32.mrf.mxu0
    %v1184 = vadd.f32 %v624, %v1183
    %1185 = vmatmul.bf16.gmra.mxu0 %v967
    %v1186 = vpop.f32.mrf.mxu0
    %v1187 = vadd.f32 %v624, %v1186
    %v1188 = vpop.f32.mrf.mxu0
    %v1189 = vadd.f32 %v624, %v1188
    %1190 = vmatmul.bf16.gmra.mxu0 %v970
    %v1191 = vpop.f32.mrf.mxu0
    %v1192 = vadd.f32 %v624, %v1191
    %v1193 = vpop.f32.mrf.mxu0
    %v1194 = vadd.f32 %v624, %v1193
    %1195 = vmatmul.bf16.gmra.mxu0 %v973
    %v1196 = vpop.f32.mrf.mxu0
    %v1197 = vadd.f32 %v624, %v1196
    %v1198 = vpop.f32.mrf.mxu0
    %v1199 = vadd.f32 %v624, %v1198
    %1200 = vmatmul.bf16.gmra.mxu0 %v976
    %v1201 = vpop.f32.mrf.mxu0
    %v1202 = vadd.f32 %v624, %v1201
    %v1203 = vpop.f32.mrf.mxu0
    %v1204 = vadd.f32 %v624, %v1203
    %1205 = vmatmul.bf16.gmra.mxu0 %v979
    %v1206 = vpop.f32.mrf.mxu0
    %v1207 = vadd.f32 %v624, %v1206
    %v1208 = vpop.f32.mrf.mxu0
    %v1209 = vadd.f32 %v624, %v1208
    %1210 = vmatmul.bf16.gmra.mxu0 %v982
    %v1211 = vpop.f32.mrf.mxu0
    %v1212 = vadd.f32 %v624, %v1211
    %v1213 = vpop.f32.mrf.mxu0
    %v1214 = vadd.f32 %v624, %v1213
    %1215 = vmatmul.bf16.gmra.mxu0 %v985
    %v1216 = vpop.f32.mrf.mxu0
    %v1217 = vadd.f32 %v624, %v1216
    %v1218 = vpop.f32.mrf.mxu0
    %v1219 = vadd.f32 %v624, %v1218
    %1220 = vmatmul.bf16.gmra.mxu0 %v988
    %v1221 = vpop.f32.mrf.mxu0
    %v1222 = vadd.f32 %v624, %v1221
    %v1223 = vpop.f32.mrf.mxu0
    %v1224 = vadd.f32 %v624, %v1223
    %1225 = vmatmul.bf16.gmra.mxu0 %v991
    %v1226 = vpop.f32.mrf.mxu0
    %v1227 = vadd.f32 %v624, %v1226
    %v1228 = vpop.f32.mrf.mxu0
    %v1229 = vadd.f32 %v624, %v1228
    %1230 = vmatmul.bf16.gmra.mxu0 %v994
    %v1231 = vpop.f32.mrf.mxu0
    %v1232 = vadd.f32 %v624, %v1231
    %v1233 = vpop.f32.mrf.mxu0
    %v1234 = vadd.f32 %v624, %v1233
    %1235 = vmatmul.bf16.gmra.mxu0 %v997
    %v1236 = vpop.f32.mrf.mxu0
    %v1237 = vadd.f32 %v624, %v1236
    %v1238 = vpop.f32.mrf.mxu0
    %v1239 = vadd.f32 %v624, %v1238
    %1240 = vmatmul.bf16.gmra.mxu0 %v1000
    %v1241 = vpop.f32.mrf.mxu0
    %v1242 = vadd.f32 %v624, %v1241
    %v1243 = vpop.f32.mrf.mxu0
    %v1244 = vadd.f32 %v624, %v1243
    %1245 = vmatmul.bf16.gmra.mxu0 %v1003
    %v1246 = vpop.f32.mrf.mxu0
    %v1247 = vadd.f32 %v624, %v1246
    %v1248 = vpop.f32.mrf.mxu0
    %v1249 = vadd.f32 %v624, %v1248
    %1250 = vmatmul.bf16.gmra.mxu0 %v1006
    %v1251 = vpop.f32.mrf.mxu0
    %v1252 = vadd.f32 %v624, %v1251
    %v1253 = vpop.f32.mrf.mxu0
    %v1254 = vadd.f32 %v624, %v1253
    %1255 = vmatmul.bf16.gmra.mxu0 %v1009
    %v1256 = vpop.f32.mrf.mxu0
    %v1257 = vadd.f32 %v624, %v1256
    %v1258 = vpop.f32.mrf.mxu0
    %v1259 = vadd.f32 %v624, %v1258
    %1260 = vmatmul.bf16.gmra.mxu0 %v1012
    %v1261 = vpop.f32.mrf.mxu0
    %v1262 = vadd.f32 %v624, %v1261
    %v1263 = vpop.f32.mrf.mxu0
    %v1264 = vadd.f32 %v624, %v1263
    %1265 = vmatmul.bf16.gmra.mxu0 %v1015
    %v1266 = vpop.f32.mrf.mxu0
    %v1267 = vadd.f32 %v624, %v1266
    %v1268 = vpop.f32.mrf.mxu0
    %v1269 = vadd.f32 %v624, %v1268
    %1270 = vmatmul.bf16.gmra.mxu0 %v1018
    %v1271 = vpop.f32.mrf.mxu0
    %v1272 = vadd.f32 %v624, %v1271
    %v1273 = vpop.f32.mrf.mxu0
    %v1274 = vadd.f32 %v624, %v1273
    %1275 = vmatmul.bf16.gmra.mxu0 %v1021
    %v1276 = vpop.f32.mrf.mxu0
    %v1277 = vadd.f32 %v624, %v1276
    %v1278 = vpop.f32.mrf.mxu0
    %v1279 = vadd.f32 %v624, %v1278
    %1280 = vmatmul.bf16.gmra.mxu0 %v1024
    %v1281 = vpop.f32.mrf.mxu0
    %v1282 = vadd.f32 %v624, %v1281
    %v1283 = vpop.f32.mrf.mxu0
    %v1284 = vadd.f32 %v624, %v1283
    %1285 = vmatmul.bf16.gmra.mxu0 %v1027
    %v1286 = vpop.f32.mrf.mxu0
    %v1287 = vadd.f32 %v624, %v1286
    %v1288 = vpop.f32.mrf.mxu0
    %v1289 = vadd.f32 %v624, %v1288
    %1290 = vmatmul.bf16.gmra.mxu0 %v1030
    %v1291 = vpop.f32.mrf.mxu0
    %v1292 = vadd.f32 %v624, %v1291
    %v1293 = vpop.f32.mrf.mxu0
    %v1294 = vadd.f32 %v624, %v1293
    %1295 = vmatmul.bf16.gmra.mxu0 %v1033
    %v1296 = vpop.f32.mrf.mxu0
    %v1297 = vadd.f32 %v624, %v1296
    %v1298 = vpop.f32.mrf.mxu0
    %v1299 = vadd.f32 %v624, %v1298
    %1300 = vmatmul.bf16.gmra.mxu0 %v1036
    %v1301 = vpop.f32.mrf.mxu0
    %v1302 = vadd.f32 %v624, %v1301
    %v1303 = vpop.f32.mrf.mxu0
    %v1304 = vadd.f32 %v624, %v1303
    %1305 = vmatmul.bf16.gmra.mxu0 %v1039
    %v1306 = vpop.f32.mrf.mxu0
    %v1307 = vadd.f32 %v624, %v1306
    %v1308 = vpop.f32.mrf.mxu0
    %v1309 = vadd.f32 %v624, %v1308
    %1310 = vmatmul.bf16.gmra.mxu0 %v1042
    %v1311 = vpop.f32.mrf.mxu0
    %v1312 = vadd.f32 %v624, %v1311
    %v1313 = vpop.f32.mrf.mxu0
    %v1314 = vadd.f32 %v624, %v1313
    %1315 = vmatmul.bf16.gmra.mxu0 %v1045
    %v1316 = vpop.f32.mrf.mxu0
    %v1317 = vadd.f32 %v624, %v1316
    %v1318 = vpop.f32.mrf.mxu0
    %v1319 = vadd.f32 %v624, %v1318
    %1320 = vmatmul.bf16.gmra.mxu0 %v1048
    %v1321 = vpop.f32.mrf.mxu0
    %v1322 = vadd.f32 %v624, %v1321
    %v1323 = vpop.f32.mrf.mxu0
    %v1324 = vadd.f32 %v624, %v1323
    %1325 = vmatmul.bf16.gmra.mxu0 %v1051
    %v1326 = vpop.f32.mrf.mxu0
    %v1327 = vadd.f32 %v624, %v1326
    %v1328 = vpop.f32.mrf.mxu0
    %v1329 = vadd.f32 %v624, %v1328
    %1330 = vmatmul.bf16.gmra.mxu0 %v1054
    %v1331 = vpop.f32.mrf.mxu0
    %v1332 = vadd.f32 %v624, %v1331
    %v1333 = vpop.f32.mrf.mxu0
    %v1334 = vadd.f32 %v624, %v1333
    %1335 = vmatmul.bf16.gmra.mxu0 %v1057
    %v1336 = vpop.f32.mrf.mxu0
    %v1337 = vadd.f32 %v624, %v1336
    %v1338 = vpop.f32.mrf.mxu0
    %v1339 = vadd.f32 %v624, %v1338
    %1340 = vmatmul.bf16.gmra.mxu0 %v1060
    %v1341 = vpop.f32.mrf.mxu0
    %v1342 = vadd.f32 %v624, %v1341
    %v1343 = vpop.f32.mrf.mxu0
    %v1344 = vadd.f32 %v624, %v1343
    %1345 = vmatmul.bf16.gmra.mxu0 %v1063
    %v1346 = vpop.f32.mrf.mxu0
    %v1347 = vadd.f32 %v624, %v1346
    %v1348 = vpop.f32.mrf.mxu0
    %v1349 = vadd.f32 %v624, %v1348
    %1350 = vmatmul.bf16.gmra.mxu0 %v1066
    %v1351 = vpop.f32.mrf.mxu0
    %v1352 = vadd.f32 %v624, %v1351
    %v1353 = vpop.f32.mrf.mxu0
    %v1354 = vadd.f32 %v624, %v1353
    %1355 = vmatmul.bf16.gmra.mxu0 %v1069
    %v1356 = vpop.f32.mrf.mxu0
    %v1357 = vadd.f32 %v624, %v1356
    %v1358 = vpop.f32.mrf.mxu0
    %v1359 = vadd.f32 %v624, %v1358
    %1360 = vmatmul.bf16.gmra.mxu0 %v1072
    %v1361 = vpop.f32.mrf.mxu0
    %v1362 = vadd.f32 %v624, %v1361
    %v1363 = vpop.f32.mrf.mxu0
    %v1364 = vadd.f32 %v624, %v1363
    %1365 = vmatmul.bf16.gmra.mxu0 %v1075
    %v1366 = vpop.f32.mrf.mxu0
    %v1367 = vadd.f32 %v624, %v1366
    %v1368 = vpop.f32.mrf.mxu0
    %v1369 = vadd.f32 %v624, %v1368
    %1370 = vmatmul.bf16.gmra.mxu0 %v1078
    %v1371 = vpop.f32.mrf.mxu0
    %v1372 = vadd.f32 %v624, %v1371
    %v1373 = vpop.f32.mrf.mxu0
    %v1374 = vadd.f32 %v624, %v1373
    %1375 = vdwg.mxu0
    %v1376 = vmax.f32 %v1097, 0.0
    %v1377 = vmax.f32 %v1099, 0.0
    %v1378 = vmax.f32 %v1102, 0.0
    %v1379 = vmax.f32 %v1104, 0.0
    %v1380 = vmax.f32 %v1107, 0.0
    %v1381 = vmax.f32 %v1109, 0.0
    %v1382 = vmax.f32 %v1112, 0.0
    %v1383 = vmax.f32 %v1114, 0.0
    %v1384 = vmax.f32 %v1117, 0.0
    %v1385 = vmax.f32 %v1119, 0.0
    %v1386 = vmax.f32 %v1122, 0.0
    %v1387 = vmax.f32 %v1124, 0.0
    %v1388 = vmax.f32 %v1127, 0.0
    %v1389 = vmax.f32 %v1129, 0.0
    %v1390 = vmax.f32 %v1132, 0.0
    %v1391 = vmax.f32 %v1134, 0.0
    %v1392 = vmax.f32 %v1137, 0.0
    %v1393 = vmax.f32 %v1139, 0.0
    %v1394 = vmax.f32 %v1142, 0.0
    %v1395 = vmax.f32 %v1144, 0.0
    %v1396 = vmax.f32 %v1147, 0.0
    %v1397 = vmax.f32 %v1149, 0.0
    %v1398 = vmax.f32 %v1152, 0.0
    %v1399 = vmax.f32 %v1154, 0.0
    %v1400 = vmax.f32 %v1157, 0.0
    %v1401 = vmax.f32 %v1159, 0.0
    %v1402 = vmax.f32 %v1162, 0.0
    %v1403 = vmax.f32 %v1164, 0.0
    %v1404 = vmax.f32 %v1167, 0.0
    %v1405 = vmax.f32 %v1169, 0.0
    %v1406 = vmax.f32 %v1172, 0.0
    %v1407 = vmax.f32 %v1174, 0.0
    %v1408 = vmax.f32 %v1177, 0.0
    %v1409 = vmax.f32 %v1179, 0.0
    %v1410 = vmax.f32 %v1182, 0.0
    %v1411 = vmax.f32 %v1184, 0.0
    %v1412 = vmax.f32 %v1187, 0.0
    %v1413 = vmax.f32 %v1189, 0.0
    %v1414 = vmax.f32 %v1192, 0.0
    %v1415 = vmax.f32 %v1194, 0.0
    %v1416 = vmax.f32 %v1197, 0.0
    %v1417 = vmax.f32 %v1199, 0.0
    %v1418 = vmax.f32 %v1202, 0.0
    %v1419 = vmax.f32 %v1204, 0.0
    %v1420 = vmax.f32 %v1207, 0.0
    %v1421 = vmax.f32 %v1209, 0.0
    %v1422 = vmax.f32 %v1212, 0.0
    %v1423 = vmax.f32 %v1214, 0.0
    %v1424 = vmax.f32 %v1217, 0.0
    %v1425 = vmax.f32 %v1219, 0.0
    %v1426 = vmax.f32 %v1222, 0.0
    %v1427 = vmax.f32 %v1224, 0.0
    %v1428 = vmax.f32 %v1227, 0.0
    %v1429 = vmax.f32 %v1229, 0.0
    %v1430 = vmax.f32 %v1232, 0.0
    %v1431 = vmax.f32 %v1234, 0.0
    %v1432 = vmax.f32 %v1237, 0.0
    %v1433 = vmax.f32 %v1239, 0.0
    %v1434 = vmax.f32 %v1242, 0.0
    %v1435 = vmax.f32 %v1244, 0.0
    %v1436 = vmax.f32 %v1247, 0.0
    %v1437 = vmax.f32 %v1249, 0.0
    %v1438 = vmax.f32 %v1252, 0.0
    %v1439 = vmax.f32 %v1254, 0.0
    %v1440 = vmax.f32 %v1257, 0.0
    %v1441 = vmax.f32 %v1259, 0.0
    %v1442 = vmax.f32 %v1262, 0.0
    %v1443 = vmax.f32 %v1264, 0.0
    %v1444 = vmax.f32 %v1267, 0.0
    %v1445 = vmax.f32 %v1269, 0.0
    %v1446 = vmax.f32 %v1272, 0.0
    %v1447 = vmax.f32 %v1274, 0.0
    %v1448 = vmax.f32 %v1277, 0.0
    %v1449 = vmax.f32 %v1279, 0.0
    %v1450 = vmax.f32 %v1282, 0.0
    %v1451 = vmax.f32 %v1284, 0.0
    %v1452 = vmax.f32 %v1287, 0.0
    %v1453 = vmax.f32 %v1289, 0.0
    %v1454 = vmax.f32 %v1292, 0.0
    %v1455 = vmax.f32 %v1294, 0.0
    %v1456 = vmax.f32 %v1297, 0.0
    %v1457 = vmax.f32 %v1299, 0.0
    %v1458 = vmax.f32 %v1302, 0.0
    %v1459 = vmax.f32 %v1304, 0.0
    %v1460 = vmax.f32 %v1307, 0.0
    %v1461 = vmax.f32 %v1309, 0.0
    %v1462 = vmax.f32 %v1312, 0.0
    %v1463 = vmax.f32 %v1314, 0.0
    %v1464 = vmax.f32 %v1317, 0.0
    %v1465 = vmax.f32 %v1319, 0.0
    %v1466 = vmax.f32 %v1322, 0.0
    %v1467 = vmax.f32 %v1324, 0.0
    %v1468 = vmax.f32 %v1327, 0.0
    %v1469 = vmax.f32 %v1329, 0.0
    %v1470 = vmax.f32 %v1332, 0.0
    %v1471 = vmax.f32 %v1334, 0.0
    %v1472 = vmax.f32 %v1337, 0.0
    %v1473 = vmax.f32 %v1339, 0.0
    %v1474 = vmax.f32 %v1342, 0.0
    %v1475 = vmax.f32 %v1344, 0.0
    %v1476 = vmax.f32 %v1347, 0.0
    %v1477 = vmax.f32 %v1349, 0.0
    %v1478 = vmax.f32 %v1352, 0.0
    %v1479 = vmax.f32 %v1354, 0.0
    %v1480 = vmax.f32 %v1357, 0.0
    %v1481 = vmax.f32 %v1359, 0.0
    %v1482 = vmax.f32 %v1362, 0.0
    %v1483 = vmax.f32 %v1364, 0.0
    %v1484 = vmax.f32 %v1367, 0.0
    %v1485 = vmax.f32 %v1369, 0.0
    %v1486 = vmax.f32 %v1372, 0.0
    %v1487 = vmax.f32 %v1374, 0.0
    %1488 = vst.msk [vmem:[#allocation2] sm:$0xff] %vm33, %v1376
    %1489 = vst.msk [vmem:[#allocation2 + $0x8] sm:$0xff] %vm33, %v1377
    %1490 = vst.msk [vmem:[#allocation2 + $0x10] sm:$0xff] %vm33, %v1378
    %1491 = vst.msk [vmem:[#allocation2 + $0x18] sm:$0xff] %vm33, %v1379
    %1492 = vst.msk [vmem:[#allocation2 + $0x20] sm:$0xff] %vm33, %v1380
    %1493 = vst.msk [vmem:[#allocation2 + $0x28] sm:$0xff] %vm33, %v1381
    %1494 = vst.msk [vmem:[#allocation2 + $0x30] sm:$0xff] %vm33, %v1382
    %1495 = vst.msk [vmem:[#allocation2 + $0x38] sm:$0xff] %vm33, %v1383
    %1496 = vst.msk [vmem:[#allocation2 + $0x40] sm:$0xff] %vm33, %v1384
    %1497 = vst.msk [vmem:[#allocation2 + $0x48] sm:$0xff] %vm33, %v1385
    %1498 = vst.msk [vmem:[#allocation2 + $0x50] sm:$0xff] %vm33, %v1386
    %1499 = vst.msk [vmem:[#allocation2 + $0x58] sm:$0xff] %vm33, %v1387
    %1500 = vst.msk [vmem:[#allocation2 + $0x60] sm:$0xff] %vm33, %v1388
    %1501 = vst.msk [vmem:[#allocation2 + $0x68] sm:$0xff] %vm33, %v1389
    %1502 = vst.msk [vmem:[#allocation2 + $0x70] sm:$0xff] %vm33, %v1390
    %1503 = vst.msk [vmem:[#allocation2 + $0x78] sm:$0xff] %vm33, %v1391
    %1504 = vst.msk [vmem:[#allocation2 + $0x80] sm:$0xff] %vm33, %v1392
    %1505 = vst.msk [vmem:[#allocation2 + $0x88] sm:$0xff] %vm33, %v1393
    %1506 = vst.msk [vmem:[#allocation2 + $0x90] sm:$0xff] %vm33, %v1394
    %1507 = vst.msk [vmem:[#allocation2 + $0x98] sm:$0xff] %vm33, %v1395
    %1508 = vst.msk [vmem:[#allocation2 + $0xa0] sm:$0xff] %vm33, %v1396
    %1509 = vst.msk [vmem:[#allocation2 + $0xa8] sm:$0xff] %vm33, %v1397
    %1510 = vst.msk [vmem:[#allocation2 + $0xb0] sm:$0xff] %vm33, %v1398
    %1511 = vst.msk [vmem:[#allocation2 + $0xb8] sm:$0xff] %vm33, %v1399
    %1512 = vst.msk [vmem:[#allocation2 + $0xc0] sm:$0xff] %vm33, %v1400
    %1513 = vst.msk [vmem:[#allocation2 + $0xc8] sm:$0xff] %vm33, %v1401
    %1514 = vst.msk [vmem:[#allocation2 + $0xd0] sm:$0xff] %vm33, %v1402
    %1515 = vst.msk [vmem:[#allocation2 + $0xd8] sm:$0xff] %vm33, %v1403
    %1516 = vst.msk [vmem:[#allocation2 + $0xe0] sm:$0xff] %vm33, %v1404
    %1517 = vst.msk [vmem:[#allocation2 + $0xe8] sm:$0xff] %vm33, %v1405
    %1518 = vst.msk [vmem:[#allocation2 + $0xf0] sm:$0xff] %vm33, %v1406
    %1519 = vst.msk [vmem:[#allocation2 + $0xf8] sm:$0xff] %vm33, %v1407
    %1520 = vst.msk [vmem:[#allocation2 + $0x100] sm:$0xff] %vm33, %v1408
    %1521 = vst.msk [vmem:[#allocation2 + $0x108] sm:$0xff] %vm33, %v1409
    %1522 = vst.msk [vmem:[#allocation2 + $0x110] sm:$0xff] %vm33, %v1410
    %1523 = vst.msk [vmem:[#allocation2 + $0x118] sm:$0xff] %vm33, %v1411
    %1524 = vst.msk [vmem:[#allocation2 + $0x120] sm:$0xff] %vm33, %v1412
    %1525 = vst.msk [vmem:[#allocation2 + $0x128] sm:$0xff] %vm33, %v1413
    %1526 = vst.msk [vmem:[#allocation2 + $0x130] sm:$0xff] %vm33, %v1414
    %1527 = vst.msk [vmem:[#allocation2 + $0x138] sm:$0xff] %vm33, %v1415
    %1528 = vst.msk [vmem:[#allocation2 + $0x140] sm:$0xff] %vm33, %v1416
    %1529 = vst.msk [vmem:[#allocation2 + $0x148] sm:$0xff] %vm33, %v1417
    %1530 = vst.msk [vmem:[#allocation2 + $0x150] sm:$0xff] %vm33, %v1418
    %1531 = vst.msk [vmem:[#allocation2 + $0x158] sm:$0xff] %vm33, %v1419
    %1532 = vst.msk [vmem:[#allocation2 + $0x160] sm:$0xff] %vm33, %v1420
    %1533 = vst.msk [vmem:[#allocation2 + $0x168] sm:$0xff] %vm33, %v1421
    %1534 = vst.msk [vmem:[#allocation2 + $0x170] sm:$0xff] %vm33, %v1422
    %1535 = vst.msk [vmem:[#allocation2 + $0x178] sm:$0xff] %vm33, %v1423
    %1536 = vst.msk [vmem:[#allocation2 + $0x180] sm:$0xff] %vm33, %v1424
    %1537 = vst.msk [vmem:[#allocation2 + $0x188] sm:$0xff] %vm33, %v1425
    %1538 = vst.msk [vmem:[#allocation2 + $0x190] sm:$0xff] %vm33, %v1426
    %1539 = vst.msk [vmem:[#allocation2 + $0x198] sm:$0xff] %vm33, %v1427
    %1540 = vst.msk [vmem:[#allocation2 + $0x1a0] sm:$0xff] %vm33, %v1428
    %1541 = vst.msk [vmem:[#allocation2 + $0x1a8] sm:$0xff] %vm33, %v1429
    %1542 = vst.msk [vmem:[#allocation2 + $0x1b0] sm:$0xff] %vm33, %v1430
    %1543 = vst.msk [vmem:[#allocation2 + $0x1b8] sm:$0xff] %vm33, %v1431
    %1544 = vst.msk [vmem:[#allocation2 + $0x1c0] sm:$0xff] %vm33, %v1432
    %1545 = vst.msk [vmem:[#allocation2 + $0x1c8] sm:$0xff] %vm33, %v1433
    %1546 = vst.msk [vmem:[#allocation2 + $0x1d0] sm:$0xff] %vm33, %v1434
    %1547 = vst.msk [vmem:[#allocation2 + $0x1d8] sm:$0xff] %vm33, %v1435
    %1548 = vst.msk [vmem:[#allocation2 + $0x1e0] sm:$0xff] %vm33, %v1436
    %1549 = vst.msk [vmem:[#allocation2 + $0x1e8] sm:$0xff] %vm33, %v1437
    %1550 = vst.msk [vmem:[#allocation2 + $0x1f0] sm:$0xff] %vm33, %v1438
    %1551 = vst.msk [vmem:[#allocation2 + $0x1f8] sm:$0xff] %vm33, %v1439
    %1552 = vst.msk [vmem:[#allocation2 + $0x200] sm:$0xff] %vm33, %v1440
    %1553 = vst.msk [vmem:[#allocation2 + $0x208] sm:$0xff] %vm33, %v1441
    %1554 = vst.msk [vmem:[#allocation2 + $0x210] sm:$0xff] %vm33, %v1442
    %1555 = vst.msk [vmem:[#allocation2 + $0x218] sm:$0xff] %vm33, %v1443
    %1556 = vst.msk [vmem:[#allocation2 + $0x220] sm:$0xff] %vm33, %v1444
    %1557 = vst.msk [vmem:[#allocation2 + $0x228] sm:$0xff] %vm33, %v1445
    %1558 = vst.msk [vmem:[#allocation2 + $0x230] sm:$0xff] %vm33, %v1446
    %1559 = vst.msk [vmem:[#allocation2 + $0x238] sm:$0xff] %vm33, %v1447
    %1560 = vst.msk [vmem:[#allocation2 + $0x240] sm:$0xff] %vm33, %v1448
    %1561 = vst.msk [vmem:[#allocation2 + $0x248] sm:$0xff] %vm33, %v1449
    %1562 = vst.msk [vmem:[#allocation2 + $0x250] sm:$0xff] %vm33, %v1450
    %1563 = vst.msk [vmem:[#allocation2 + $0x258] sm:$0xff] %vm33, %v1451
    %1564 = vst.msk [vmem:[#allocation2 + $0x260] sm:$0xff] %vm33, %v1452
    %1565 = vst.msk [vmem:[#allocation2 + $0x268] sm:$0xff] %vm33, %v1453
    %1566 = vst.msk [vmem:[#allocation2 + $0x270] sm:$0xff] %vm33, %v1454
    %1567 = vst.msk [vmem:[#allocation2 + $0x278] sm:$0xff] %vm33, %v1455
    %1568 = vst.msk [vmem:[#allocation2 + $0x280] sm:$0xff] %vm33, %v1456
    %1569 = vst.msk [vmem:[#allocation2 + $0x288] sm:$0xff] %vm33, %v1457
    %1570 = vst.msk [vmem:[#allocation2 + $0x290] sm:$0xff] %vm33, %v1458
    %1571 = vst.msk [vmem:[#allocation2 + $0x298] sm:$0xff] %vm33, %v1459
    %1572 = vst.msk [vmem:[#allocation2 + $0x2a0] sm:$0xff] %vm33, %v1460
    %1573 = vst.msk [vmem:[#allocation2 + $0x2a8] sm:$0xff] %vm33, %v1461
    %1574 = vst.msk [vmem:[#allocation2 + $0x2b0] sm:$0xff] %vm33, %v1462
    %1575 = vst.msk [vmem:[#allocation2 + $0x2b8] sm:$0xff] %vm33, %v1463
    %1576 = vst.msk [vmem:[#allocation2 + $0x2c0] sm:$0xff] %vm33, %v1464
    %1577 = vst.msk [vmem:[#allocation2 + $0x2c8] sm:$0xff] %vm33, %v1465
    %1578 = vst.msk [vmem:[#allocation2 + $0x2d0] sm:$0xff] %vm33, %v1466
    %1579 = vst.msk [vmem:[#allocation2 + $0x2d8] sm:$0xff] %vm33, %v1467
    %1580 = vst.msk [vmem:[#allocation2 + $0x2e0] sm:$0xff] %vm33, %v1468
    %1581 = vst.msk [vmem:[#allocation2 + $0x2e8] sm:$0xff] %vm33, %v1469
    %1582 = vst.msk [vmem:[#allocation2 + $0x2f0] sm:$0xff] %vm33, %v1470
    %1583 = vst.msk [vmem:[#allocation2 + $0x2f8] sm:$0xff] %vm33, %v1471
    %1584 = vst.msk [vmem:[#allocation2 + $0x300] sm:$0xff] %vm33, %v1472
    %1585 = vst.msk [vmem:[#allocation2 + $0x308] sm:$0xff] %vm33, %v1473
    %1586 = vst.msk [vmem:[#allocation2 + $0x310] sm:$0xff] %vm33, %v1474
    %1587 = vst.msk [vmem:[#allocation2 + $0x318] sm:$0xff] %vm33, %v1475
    %1588 = vst.msk [vmem:[#allocation2 + $0x320] sm:$0xff] %vm33, %v1476
    %1589 = vst.msk [vmem:[#allocation2 + $0x328] sm:$0xff] %vm33, %v1477
    %1590 = vst.msk [vmem:[#allocation2 + $0x330] sm:$0xff] %vm33, %v1478
    %1591 = vst.msk [vmem:[#allocation2 + $0x338] sm:$0xff] %vm33, %v1479
    %1592 = vst.msk [vmem:[#allocation2 + $0x340] sm:$0xff] %vm33, %v1480
    %1593 = vst.msk [vmem:[#allocation2 + $0x348] sm:$0xff] %vm33, %v1481
    %1594 = vst.msk [vmem:[#allocation2 + $0x350] sm:$0xff] %vm33, %v1482
    %1595 = vst.msk [vmem:[#allocation2 + $0x358] sm:$0xff] %vm33, %v1483
    %1596 = vst.msk [vmem:[#allocation2 + $0x360] sm:$0xff] %vm33, %v1484
    %1597 = vst.msk [vmem:[#allocation2 + $0x368] sm:$0xff] %vm33, %v1485
    %1598 = vst.msk [vmem:[#allocation2 + $0x370] sm:$0xff] %vm33, %v1486
    %1599 = vst.msk [vmem:[#allocation2 + $0x378] sm:$0xff] %vm33, %v1487
    %v1600 = vld [vmem:[#allocation2] ss:$2 sm:$0xff]
    %s1601 = scalar_lea.vmem [#allocation2], 16
    %v1602 = vld [vmem:[%s1601] ss:$2 sm:$0xff]
    %s1603 = scalar_lea.vmem [#allocation2], 32
    %v1604 = vld [vmem:[%s1603] ss:$2 sm:$0xff]
    %s1605 = scalar_lea.vmem [#allocation2], 48
    %v1606 = vld [vmem:[%s1605] ss:$2 sm:$0xff]
    %s1607 = scalar_lea.vmem [#allocation2], 64
    %v1608 = vld [vmem:[%s1607] ss:$2 sm:$0xff]
    %s1609 = scalar_lea.vmem [#allocation2], 80
    %v1610 = vld [vmem:[%s1609] ss:$2 sm:$0xff]
    %s1611 = scalar_lea.vmem [#allocation2], 96
    %v1612 = vld [vmem:[%s1611] ss:$2 sm:$0xff]
    %s1613 = scalar_lea.vmem [#allocation2], 112
    %v1614 = vld [vmem:[%s1613] ss:$2 sm:$0xff]
    %s1615 = scalar_lea.vmem [#allocation2], 128
    %v1616 = vld [vmem:[%s1615] ss:$2 sm:$0xff]
    %s1617 = scalar_lea.vmem [#allocation2], 144
    %v1618 = vld [vmem:[%s1617] ss:$2 sm:$0xff]
    %s1619 = scalar_lea.vmem [#allocation2], 160
    %v1620 = vld [vmem:[%s1619] ss:$2 sm:$0xff]
    %s1621 = scalar_lea.vmem [#allocation2], 176
    %v1622 = vld [vmem:[%s1621] ss:$2 sm:$0xff]
    %s1623 = scalar_lea.vmem [#allocation2], 192
    %v1624 = vld [vmem:[%s1623] ss:$2 sm:$0xff]
    %s1625 = scalar_lea.vmem [#allocation2], 208
    %v1626 = vld [vmem:[%s1625] ss:$2 sm:$0xff]
    %s1627 = scalar_lea.vmem [#allocation2], 224
    %v1628 = vld [vmem:[%s1627] ss:$2 sm:$0xff]
    %s1629 = scalar_lea.vmem [#allocation2], 240
    %v1630 = vld [vmem:[%s1629] ss:$2 sm:$0xff]
    %s1631 = scalar_lea.vmem [#allocation2], 256
    %v1632 = vld [vmem:[%s1631] ss:$2 sm:$0xff]
    %s1633 = scalar_lea.vmem [#allocation2], 272
    %v1634 = vld [vmem:[%s1633] ss:$2 sm:$0xff]
    %s1635 = scalar_lea.vmem [#allocation2], 288
    %v1636 = vld [vmem:[%s1635] ss:$2 sm:$0xff]
    %s1637 = scalar_lea.vmem [#allocation2], 304
    %v1638 = vld [vmem:[%s1637] ss:$2 sm:$0xff]
    %s1639 = scalar_lea.vmem [#allocation2], 320
    %v1640 = vld [vmem:[%s1639] ss:$2 sm:$0xff]
    %s1641 = scalar_lea.vmem [#allocation2], 336
    %v1642 = vld [vmem:[%s1641] ss:$2 sm:$0xff]
    %s1643 = scalar_lea.vmem [#allocation2], 352
    %v1644 = vld [vmem:[%s1643] ss:$2 sm:$0xff]
    %s1645 = scalar_lea.vmem [#allocation2], 368
    %v1646 = vld [vmem:[%s1645] ss:$2 sm:$0xff]
    %s1647 = scalar_lea.vmem [#allocation2], 384
    %v1648 = vld [vmem:[%s1647] ss:$2 sm:$0xff]
    %s1649 = scalar_lea.vmem [#allocation2], 400
    %v1650 = vld [vmem:[%s1649] ss:$2 sm:$0xff]
    %s1651 = scalar_lea.vmem [#allocation2], 416
    %v1652 = vld [vmem:[%s1651] ss:$2 sm:$0xff]
    %s1653 = scalar_lea.vmem [#allocation2], 432
    %v1654 = vld [vmem:[%s1653] ss:$2 sm:$0xff]
    %s1655 = scalar_lea.vmem [#allocation2], 448
    %v1656 = vld [vmem:[%s1655] ss:$2 sm:$0xff]
    %s1657 = scalar_lea.vmem [#allocation2], 464
    %v1658 = vld [vmem:[%s1657] ss:$2 sm:$0xff]
    %s1659 = scalar_lea.vmem [#allocation2], 480
    %v1660 = vld [vmem:[%s1659] ss:$2 sm:$0xff]
    %s1661 = scalar_lea.vmem [#allocation2], 496
    %v1662 = vld [vmem:[%s1661] ss:$2 sm:$0xff]
    %s1663 = scalar_lea.vmem [#allocation2], 512
    %v1664 = vld [vmem:[%s1663] ss:$2 sm:$0xff]
    %s1665 = scalar_lea.vmem [#allocation2], 528
    %v1666 = vld [vmem:[%s1665] ss:$2 sm:$0xff]
    %s1667 = scalar_lea.vmem [#allocation2], 544
    %v1668 = vld [vmem:[%s1667] ss:$2 sm:$0xff]
    %s1669 = scalar_lea.vmem [#allocation2], 560
    %v1670 = vld [vmem:[%s1669] ss:$2 sm:$0xff]
    %s1671 = scalar_lea.vmem [#allocation2], 576
    %v1672 = vld [vmem:[%s1671] ss:$2 sm:$0xff]
    %s1673 = scalar_lea.vmem [#allocation2], 592
    %v1674 = vld [vmem:[%s1673] ss:$2 sm:$0xff]
    %s1675 = scalar_lea.vmem [#allocation2], 608
    %v1676 = vld [vmem:[%s1675] ss:$2 sm:$0xff]
    %s1677 = scalar_lea.vmem [#allocation2], 624
    %v1678 = vld [vmem:[%s1677] ss:$2 sm:$0xff]
    %s1679 = scalar_lea.vmem [#allocation2], 640
    %v1680 = vld [vmem:[%s1679] ss:$2 sm:$0xff]
    %s1681 = scalar_lea.vmem [#allocation2], 656
    %v1682 = vld [vmem:[%s1681] ss:$2 sm:$0xff]
    %s1683 = scalar_lea.vmem [#allocation2], 672
    %v1684 = vld [vmem:[%s1683] ss:$2 sm:$0xff]
    %s1685 = scalar_lea.vmem [#allocation2], 688
    %v1686 = vld [vmem:[%s1685] ss:$2 sm:$0xff]
    %s1687 = scalar_lea.vmem [#allocation2], 704
    %v1688 = vld [vmem:[%s1687] ss:$2 sm:$0xff]
    %s1689 = scalar_lea.vmem [#allocation2], 720
    %v1690 = vld [vmem:[%s1689] ss:$2 sm:$0xff]
    %s1691 = scalar_lea.vmem [#allocation2], 736
    %v1692 = vld [vmem:[%s1691] ss:$2 sm:$0xff]
    %s1693 = scalar_lea.vmem [#allocation2], 752
    %v1694 = vld [vmem:[%s1693] ss:$2 sm:$0xff]
    %s1695 = scalar_lea.vmem [#allocation2], 768
    %v1696 = vld [vmem:[%s1695] ss:$2 sm:$0xff]
    %s1697 = scalar_lea.vmem [#allocation2], 784
    %v1698 = vld [vmem:[%s1697] ss:$2 sm:$0xff]
    %s1699 = scalar_lea.vmem [#allocation2], 800
    %v1700 = vld [vmem:[%s1699] ss:$2 sm:$0xff]
    %s1701 = scalar_lea.vmem [#allocation2], 816
    %v1702 = vld [vmem:[%s1701] ss:$2 sm:$0xff]
    %s1703 = scalar_lea.vmem [#allocation2], 832
    %v1704 = vld [vmem:[%s1703] ss:$2 sm:$0xff]
    %s1705 = scalar_lea.vmem [#allocation2], 848
    %v1706 = vld [vmem:[%s1705] ss:$2 sm:$0xff]
    %s1707 = scalar_lea.vmem [#allocation2], 864
    %v1708 = vld [vmem:[%s1707] ss:$2 sm:$0xff]
    %s1709 = scalar_lea.vmem [#allocation2], 880
    %v1710 = vld [vmem:[%s1709] ss:$2 sm:$0xff]
    %s1711 = scalar_lea.vmem [#allocation2], 1
    %v1712 = vld [vmem:[%s1711] ss:$2 sm:$0xff]
    %s1713 = scalar_lea.vmem [#allocation2], 17
    %v1714 = vld [vmem:[%s1713] ss:$2 sm:$0xff]
    %s1715 = scalar_lea.vmem [#allocation2], 33
    %v1716 = vld [vmem:[%s1715] ss:$2 sm:$0xff]
    %s1717 = scalar_lea.vmem [#allocation2], 49
    %v1718 = vld [vmem:[%s1717] ss:$2 sm:$0xff]
    %s1719 = scalar_lea.vmem [#allocation2], 65
    %v1720 = vld [vmem:[%s1719] ss:$2 sm:$0xff]
    %s1721 = scalar_lea.vmem [#allocation2], 81
    %v1722 = vld [vmem:[%s1721] ss:$2 sm:$0xff]
    %s1723 = scalar_lea.vmem [#allocation2], 97
    %v1724 = vld [vmem:[%s1723] ss:$2 sm:$0xff]
    %s1725 = scalar_lea.vmem [#allocation2], 113
    %v1726 = vld [vmem:[%s1725] ss:$2 sm:$0xff]
    %s1727 = scalar_lea.vmem [#allocation2], 129
    %v1728 = vld [vmem:[%s1727] ss:$2 sm:$0xff]
    %s1729 = scalar_lea.vmem [#allocation2], 145
    %v1730 = vld [vmem:[%s1729] ss:$2 sm:$0xff]
    %s1731 = scalar_lea.vmem [#allocation2], 161
    %v1732 = vld [vmem:[%s1731] ss:$2 sm:$0xff]
    %s1733 = scalar_lea.vmem [#allocation2], 177
    %v1734 = vld [vmem:[%s1733] ss:$2 sm:$0xff]
    %s1735 = scalar_lea.vmem [#allocation2], 193
    %v1736 = vld [vmem:[%s1735] ss:$2 sm:$0xff]
    %s1737 = scalar_lea.vmem [#allocation2], 209
    %v1738 = vld [vmem:[%s1737] ss:$2 sm:$0xff]
    %s1739 = scalar_lea.vmem [#allocation2], 225
    %v1740 = vld [vmem:[%s1739] ss:$2 sm:$0xff]
    %s1741 = scalar_lea.vmem [#allocation2], 241
    %v1742 = vld [vmem:[%s1741] ss:$2 sm:$0xff]
    %s1743 = scalar_lea.vmem [#allocation2], 257
    %v1744 = vld [vmem:[%s1743] ss:$2 sm:$0xff]
    %s1745 = scalar_lea.vmem [#allocation2], 273
    %v1746 = vld [vmem:[%s1745] ss:$2 sm:$0xff]
    %s1747 = scalar_lea.vmem [#allocation2], 289
    %v1748 = vld [vmem:[%s1747] ss:$2 sm:$0xff]
    %s1749 = scalar_lea.vmem [#allocation2], 305
    %v1750 = vld [vmem:[%s1749] ss:$2 sm:$0xff]
    %s1751 = scalar_lea.vmem [#allocation2], 321
    %v1752 = vld [vmem:[%s1751] ss:$2 sm:$0xff]
    %s1753 = scalar_lea.vmem [#allocation2], 337
    %v1754 = vld [vmem:[%s1753] ss:$2 sm:$0xff]
    %s1755 = scalar_lea.vmem [#allocation2], 353
    %v1756 = vld [vmem:[%s1755] ss:$2 sm:$0xff]
    %s1757 = scalar_lea.vmem [#allocation2], 369
    %v1758 = vld [vmem:[%s1757] ss:$2 sm:$0xff]
    %s1759 = scalar_lea.vmem [#allocation2], 385
    %v1760 = vld [vmem:[%s1759] ss:$2 sm:$0xff]
    %s1761 = scalar_lea.vmem [#allocation2], 401
    %v1762 = vld [vmem:[%s1761] ss:$2 sm:$0xff]
    %s1763 = scalar_lea.vmem [#allocation2], 417
    %v1764 = vld [vmem:[%s1763] ss:$2 sm:$0xff]
    %s1765 = scalar_lea.vmem [#allocation2], 433
    %v1766 = vld [vmem:[%s1765] ss:$2 sm:$0xff]
    %s1767 = scalar_lea.vmem [#allocation2], 449
    %v1768 = vld [vmem:[%s1767] ss:$2 sm:$0xff]
    %s1769 = scalar_lea.vmem [#allocation2], 465
    %v1770 = vld [vmem:[%s1769] ss:$2 sm:$0xff]
    %s1771 = scalar_lea.vmem [#allocation2], 481
    %v1772 = vld [vmem:[%s1771] ss:$2 sm:$0xff]
    %s1773 = scalar_lea.vmem [#allocation2], 497
    %v1774 = vld [vmem:[%s1773] ss:$2 sm:$0xff]
    %s1775 = scalar_lea.vmem [#allocation2], 513
    %v1776 = vld [vmem:[%s1775] ss:$2 sm:$0xff]
    %s1777 = scalar_lea.vmem [#allocation2], 529
    %v1778 = vld [vmem:[%s1777] ss:$2 sm:$0xff]
    %s1779 = scalar_lea.vmem [#allocation2], 545
    %v1780 = vld [vmem:[%s1779] ss:$2 sm:$0xff]
    %s1781 = scalar_lea.vmem [#allocation2], 561
    %v1782 = vld [vmem:[%s1781] ss:$2 sm:$0xff]
    %s1783 = scalar_lea.vmem [#allocation2], 577
    %v1784 = vld [vmem:[%s1783] ss:$2 sm:$0xff]
    %s1785 = scalar_lea.vmem [#allocation2], 593
    %v1786 = vld [vmem:[%s1785] ss:$2 sm:$0xff]
    %s1787 = scalar_lea.vmem [#allocation2], 609
    %v1788 = vld [vmem:[%s1787] ss:$2 sm:$0xff]
    %s1789 = scalar_lea.vmem [#allocation2], 625
    %v1790 = vld [vmem:[%s1789] ss:$2 sm:$0xff]
    %s1791 = scalar_lea.vmem [#allocation2], 641
    %v1792 = vld [vmem:[%s1791] ss:$2 sm:$0xff]
    %s1793 = scalar_lea.vmem [#allocation2], 657
    %v1794 = vld [vmem:[%s1793] ss:$2 sm:$0xff]
    %s1795 = scalar_lea.vmem [#allocation2], 673
    %v1796 = vld [vmem:[%s1795] ss:$2 sm:$0xff]
    %s1797 = scalar_lea.vmem [#allocation2], 689
    %v1798 = vld [vmem:[%s1797] ss:$2 sm:$0xff]
    %s1799 = scalar_lea.vmem [#allocation2], 705
    %v1800 = vld [vmem:[%s1799] ss:$2 sm:$0xff]
    %s1801 = scalar_lea.vmem [#allocation2], 721
    %v1802 = vld [vmem:[%s1801] ss:$2 sm:$0xff]
    %s1803 = scalar_lea.vmem [#allocation2], 737
    %v1804 = vld [vmem:[%s1803] ss:$2 sm:$0xff]
    %s1805 = scalar_lea.vmem [#allocation2], 753
    %v1806 = vld [vmem:[%s1805] ss:$2 sm:$0xff]
    %s1807 = scalar_lea.vmem [#allocation2], 769
    %v1808 = vld [vmem:[%s1807] ss:$2 sm:$0xff]
    %s1809 = scalar_lea.vmem [#allocation2], 785
    %v1810 = vld [vmem:[%s1809] ss:$2 sm:$0xff]
    %s1811 = scalar_lea.vmem [#allocation2], 801
    %v1812 = vld [vmem:[%s1811] ss:$2 sm:$0xff]
    %s1813 = scalar_lea.vmem [#allocation2], 817
    %v1814 = vld [vmem:[%s1813] ss:$2 sm:$0xff]
    %s1815 = scalar_lea.vmem [#allocation2], 833
    %v1816 = vld [vmem:[%s1815] ss:$2 sm:$0xff]
    %s1817 = scalar_lea.vmem [#allocation2], 849
    %v1818 = vld [vmem:[%s1817] ss:$2 sm:$0xff]
    %s1819 = scalar_lea.vmem [#allocation2], 865
    %v1820 = vld [vmem:[%s1819] ss:$2 sm:$0xff]
    %s1821 = scalar_lea.vmem [#allocation2], 881
    %v1822 = vld [vmem:[%s1821] ss:$2 sm:$0xff]
    %v1823 = vmax.f32 %v1600, %v1712
    %v1824 = vmax.f32 %v1602, %v1714
    %v1825 = vmax.f32 %v1604, %v1716
    %v1826 = vmax.f32 %v1606, %v1718
    %v1827 = vmax.f32 %v1608, %v1720
    %v1828 = vmax.f32 %v1610, %v1722
    %v1829 = vmax.f32 %v1612, %v1724
    %v1830 = vmax.f32 %v1614, %v1726
    %v1831 = vmax.f32 %v1616, %v1728
    %v1832 = vmax.f32 %v1618, %v1730
    %v1833 = vmax.f32 %v1620, %v1732
    %v1834 = vmax.f32 %v1622, %v1734
    %v1835 = vmax.f32 %v1624, %v1736
    %v1836 = vmax.f32 %v1626, %v1738
    %v1837 = vmax.f32 %v1628, %v1740
    %v1838 = vmax.f32 %v1630, %v1742
    %v1839 = vmax.f32 %v1632, %v1744
    %v1840 = vmax.f32 %v1634, %v1746
    %v1841 = vmax.f32 %v1636, %v1748
    %v1842 = vmax.f32 %v1638, %v1750
    %v1843 = vmax.f32 %v1640, %v1752
    %v1844 = vmax.f32 %v1642, %v1754
    %v1845 = vmax.f32 %v1644, %v1756
    %v1846 = vmax.f32 %v1646, %v1758
    %v1847 = vmax.f32 %v1648, %v1760
    %v1848 = vmax.f32 %v1650, %v1762
    %v1849 = vmax.f32 %v1652, %v1764
    %v1850 = vmax.f32 %v1654, %v1766
    %v1851 = vmax.f32 %v1656, %v1768
    %v1852 = vmax.f32 %v1658, %v1770
    %v1853 = vmax.f32 %v1660, %v1772
    %v1854 = vmax.f32 %v1662, %v1774
    %v1855 = vmax.f32 %v1664, %v1776
    %v1856 = vmax.f32 %v1666, %v1778
    %v1857 = vmax.f32 %v1668, %v1780
    %v1858 = vmax.f32 %v1670, %v1782
    %v1859 = vmax.f32 %v1672, %v1784
    %v1860 = vmax.f32 %v1674, %v1786
    %v1861 = vmax.f32 %v1676, %v1788
    %v1862 = vmax.f32 %v1678, %v1790
    %v1863 = vmax.f32 %v1680, %v1792
    %v1864 = vmax.f32 %v1682, %v1794
    %v1865 = vmax.f32 %v1684, %v1796
    %v1866 = vmax.f32 %v1686, %v1798
    %v1867 = vmax.f32 %v1688, %v1800
    %v1868 = vmax.f32 %v1690, %v1802
    %v1869 = vmax.f32 %v1692, %v1804
    %v1870 = vmax.f32 %v1694, %v1806
    %v1871 = vmax.f32 %v1696, %v1808
    %v1872 = vmax.f32 %v1698, %v1810
    %v1873 = vmax.f32 %v1700, %v1812
    %v1874 = vmax.f32 %v1702, %v1814
    %v1875 = vmax.f32 %v1704, %v1816
    %v1876 = vmax.f32 %v1706, %v1818
    %v1877 = vmax.f32 %v1708, %v1820
    %v1878 = vmax.f32 %v1710, %v1822
    %v1879 = vmax.f32 %v1823, %v1825
    %v1880 = vmax.f32 %v1824, %v1826
    %1881 = vst.msk [vmem:[#allocation3 + $0x31] sm:$0xff] %vm33, %v1879
    %vm1882 = vcmask 521216
    %1883 = vst.msk [vmem:[#allocation3 + $0x39] sm:$0x3f] %vm1882, %v1880
    %v1884 = vmax.f32 %v1827, %v1829
    %v1885 = vmax.f32 %v1828, %v1830
    %1886 = vst.msk [vmem:[#allocation3 + $0x41] sm:$0xff] %vm33, %v1884
    %1887 = vst.msk [vmem:[#allocation3 + $0x49] sm:$0x3f] %vm1882, %v1885
    %v1888 = vmax.f32 %v1831, %v1833
    %v1889 = vmax.f32 %v1832, %v1834
    %1890 = vst.msk [vmem:[#allocation3 + $0x51] sm:$0xff] %vm33, %v1888
    %1891 = vst.msk [vmem:[#allocation3 + $0x59] sm:$0x3f] %vm1882, %v1889
    %v1892 = vmax.f32 %v1835, %v1837
    %v1893 = vmax.f32 %v1836, %v1838
    %1894 = vst.msk [vmem:[#allocation3 + $0x61] sm:$0xff] %vm33, %v1892
    %1895 = vst.msk [vmem:[#allocation3 + $0x69] sm:$0x3f] %vm1882, %v1893
    %v1896 = vmax.f32 %v1839, %v1841
    %v1897 = vmax.f32 %v1840, %v1842
    %1898 = vst.msk [vmem:[#allocation3 + $0x71] sm:$0xff] %vm33, %v1896
    %1899 = vst.msk [vmem:[#allocation3 + $0x79] sm:$0x3f] %vm1882, %v1897
    %v1900 = vmax.f32 %v1843, %v1845
    %v1901 = vmax.f32 %v1844, %v1846
    %1902 = vst.msk [vmem:[#allocation3 + $0x81] sm:$0xff] %vm33, %v1900
    %1903 = vst.msk [vmem:[#allocation3 + $0x89] sm:$0x3f] %vm1882, %v1901
    %v1904 = vmax.f32 %v1847, %v1849
    %v1905 = vmax.f32 %v1848, %v1850
    %1906 = vst.msk [vmem:[#allocation3 + $0x91] sm:$0xff] %vm33, %v1904
    %1907 = vst.msk [vmem:[#allocation3 + $0x99] sm:$0x3f] %vm1882, %v1905
    %v1908 = vmax.f32 %v1851, %v1853
    %v1909 = vmax.f32 %v1852, %v1854
    %1910 = vst.msk [vmem:[#allocation3 + $0xa1] sm:$0xff] %vm33, %v1908
    %1911 = vst.msk [vmem:[#allocation3 + $0xa9] sm:$0x3f] %vm1882, %v1909
    %v1912 = vmax.f32 %v1855, %v1857
    %v1913 = vmax.f32 %v1856, %v1858
    %1914 = vst.msk [vmem:[#allocation3 + $0xb1] sm:$0xff] %vm33, %v1912
    %1915 = vst.msk [vmem:[#allocation3 + $0xb9] sm:$0x3f] %vm1882, %v1913
    %v1916 = vmax.f32 %v1859, %v1861
    %v1917 = vmax.f32 %v1860, %v1862
    %1918 = vst.msk [vmem:[#allocation3 + $0xc1] sm:$0xff] %vm33, %v1916
    %1919 = vst.msk [vmem:[#allocation3 + $0xc9] sm:$0x3f] %vm1882, %v1917
    %v1920 = vmax.f32 %v1863, %v1865
    %v1921 = vmax.f32 %v1864, %v1866
    %1922 = vst.msk [vmem:[#allocation3 + $0xd1] sm:$0xff] %vm33, %v1920
    %1923 = vst.msk [vmem:[#allocation3 + $0xd9] sm:$0x3f] %vm1882, %v1921
    %v1924 = vmax.f32 %v1867, %v1869
    %v1925 = vmax.f32 %v1868, %v1870
    %1926 = vst.msk [vmem:[#allocation3 + $0xe1] sm:$0xff] %vm33, %v1924
    %1927 = vst.msk [vmem:[#allocation3 + $0xe9] sm:$0x3f] %vm1882, %v1925
    %v1928 = vmax.f32 %v1871, %v1873
    %v1929 = vmax.f32 %v1872, %v1874
    %1930 = vst.msk [vmem:[#allocation3 + $0xf1] sm:$0xff] %vm33, %v1928
    %1931 = vst.msk [vmem:[#allocation3 + $0xf9] sm:$0x3f] %vm1882, %v1929
    %v1932 = vmax.f32 %v1875, %v1877
    %v1933 = vmax.f32 %v1876, %v1878
    %1934 = vst.msk [vmem:[#allocation3 + $0x101] sm:$0xff] %vm33, %v1932
    %1935 = vst.msk [vmem:[#allocation3 + $0x109] sm:$0x3f] %vm1882, %v1933
    %v1936 = vld [vmem:[#allocation3 + $0xf] sm:$0xff]
    %v1937 = vld [vmem:[#allocation3 + $0x17] sm:$0xff]
    %v1938 = vld [vmem:[#allocation3 + $0x1f] sm:$0xff]
    %v1939 = vld [vmem:[#allocation3 + $0x27] sm:$0xff]
    %v1940 = vld [vmem:[#allocation3 + $0x2f] sm:$0xff]
    %v1941 = vld [vmem:[#allocation3 + $0x37] sm:$0xff]
    %v1942 = vld [vmem:[#allocation3 + $0x3f] sm:$0xff]
    %v1943 = vld [vmem:[#allocation3 + $0x47] sm:$0xff]
    %v1944 = vld [vmem:[#allocation3 + $0x4f] sm:$0xff]
    %v1945 = vld [vmem:[#allocation3 + $0x57] sm:$0xff]
    %v1946 = vld [vmem:[#allocation3 + $0x5f] sm:$0xff]
    %v1947 = vld [vmem:[#allocation3 + $0x67] sm:$0xff]
    %v1948 = vld [vmem:[#allocation3 + $0x6f] sm:$0xff]
    %v1949 = vld [vmem:[#allocation3 + $0x77] sm:$0xff]
    %v1950 = vld [vmem:[#allocation3 + $0x7f] sm:$0xff]
    %v1951 = vld [vmem:[#allocation3 + $0x87] sm:$0xff]
    %v1952 = vld [vmem:[#allocation3 + $0x8f] sm:$0xff]
    %v1953 = vld [vmem:[#allocation3 + $0x97] sm:$0xff]
    %v1954 = vld [vmem:[#allocation3 + $0x9f] sm:$0xff]
    %v1955 = vld [vmem:[#allocation3 + $0xa7] sm:$0xff]
    %v1956 = vld [vmem:[#allocation3 + $0xaf] sm:$0xff]
    %v1957 = vld [vmem:[#allocation3 + $0xb7] sm:$0xff]
    %v1958 = vld [vmem:[#allocation3 + $0xbf] sm:$0xff]
    %v1959 = vld [vmem:[#allocation3 + $0xc7] sm:$0xff]
    %v1960 = vld [vmem:[#allocation3 + $0xcf] sm:$0xff]
    %v1961 = vld [vmem:[#allocation3 + $0xd7] sm:$0xff]
    %v1962 = vld [vmem:[#allocation3 + $0xdf] sm:$0xff]
    %v1963 = vld [vmem:[#allocation3 + $0xe7] sm:$0xff]
    %v1964 = vld [vmem:[#allocation3 + $0xef] sm:$0xff]
    %v1965 = vld [vmem:[#allocation3 + $0xf7] sm:$0xff]
    %v1966 = vld [vmem:[#allocation3 + $0xff] sm:$0xff]
    %v1967 = vld [vmem:[#allocation3 + $0x107] sm:$0xff]
    %v1968 = vpack.c.bf16 %v1937, %v1936
    %v1969 = vpack.c.bf16 %v1939, %v1938
    %v1970 = vpack.c.bf16 %v1941, %v1940
    %v1971 = vpack.c.bf16 %v1943, %v1942
    %v1972 = vpack.c.bf16 %v1945, %v1944
    %v1973 = vpack.c.bf16 %v1947, %v1946
    %v1974 = vpack.c.bf16 %v1949, %v1948
    %v1975 = vpack.c.bf16 %v1951, %v1950
    %v1976 = vpack.c.bf16 %v1953, %v1952
    %v1977 = vpack.c.bf16 %v1955, %v1954
    %v1978 = vpack.c.bf16 %v1957, %v1956
    %v1979 = vpack.c.bf16 %v1959, %v1958
    %v1980 = vpack.c.bf16 %v1961, %v1960
    %v1981 = vpack.c.bf16 %v1963, %v1962
    %v1982 = vpack.c.bf16 %v1965, %v1964
    %v1983 = vpack.c.bf16 %v1967, %v1966
    %v1984 = vld [vmem:[%s3] sm:$0xf]
    %v1985 = vld [vmem:[%s3 + $0x4] sm:$0xf]
    %v1986 = vld [vmem:[%s3 + $0x8] sm:$0xf]
    %v1987 = vld [vmem:[%s3 + $0xc] sm:$0xf]
    %v1988 = vld [vmem:[%s3 + $0x10] sm:$0xf]
    %v1989 = vld [vmem:[%s3 + $0x14] sm:$0xf]
    %v1990 = vld [vmem:[%s3 + $0x18] sm:$0xf]
    %v1991 = vld [vmem:[%s3 + $0x1c] sm:$0xf]
    %v1992 = vld [vmem:[#allocation3 + $0x10] sm:$0xff]
    %v1993 = vld [vmem:[#allocation3 + $0x18] sm:$0xff]
    %v1994 = vld [vmem:[#allocation3 + $0x20] sm:$0xff]
    %v1995 = vld [vmem:[#allocation3 + $0x28] sm:$0xff]
    %v1996 = vld [vmem:[#allocation3 + $0x30] sm:$0xff]
    %v1997 = vld [vmem:[#allocation3 + $0x38] sm:$0xff]
    %v1998 = vld [vmem:[#allocation3 + $0x40] sm:$0xff]
    %v1999 = vld [vmem:[#allocation3 + $0x48] sm:$0xff]
    %v2000 = vld [vmem:[#allocation3 + $0x50] sm:$0xff]
    %v2001 = vld [vmem:[#allocation3 + $0x58] sm:$0xff]
    %v2002 = vld [vmem:[#allocation3 + $0x60] sm:$0xff]
    %v2003 = vld [vmem:[#allocation3 + $0x68] sm:$0xff]
    %v2004 = vld [vmem:[#allocation3 + $0x70] sm:$0xff]
    %v2005 = vld [vmem:[#allocation3 + $0x78] sm:$0xff]
    %v2006 = vld [vmem:[#allocation3 + $0x80] sm:$0xff]
    %v2007 = vld [vmem:[#allocation3 + $0x88] sm:$0xff]
    %v2008 = vld [vmem:[#allocation3 + $0x90] sm:$0xff]
    %v2009 = vld [vmem:[#allocation3 + $0x98] sm:$0xff]
    %v2010 = vld [vmem:[#allocation3 + $0xa0] sm:$0xff]
    %v2011 = vld [vmem:[#allocation3 + $0xa8] sm:$0xff]
    %v2012 = vld [vmem:[#allocation3 + $0xb0] sm:$0xff]
    %v2013 = vld [vmem:[#allocation3 + $0xb8] sm:$0xff]
    %v2014 = vld [vmem:[#allocation3 + $0xc0] sm:$0xff]
    %v2015 = vld [vmem:[#allocation3 + $0xc8] sm:$0xff]
    %v2016 = vld [vmem:[#allocation3 + $0xd0] sm:$0xff]
    %v2017 = vld [vmem:[#allocation3 + $0xd8] sm:$0xff]
    %v2018 = vld [vmem:[#allocation3 + $0xe0] sm:$0xff]
    %v2019 = vld [vmem:[#allocation3 + $0xe8] sm:$0xff]
    %v2020 = vld [vmem:[#allocation3 + $0xf0] sm:$0xff]
    %v2021 = vld [vmem:[#allocation3 + $0xf8] sm:$0xff]
    %v2022 = vld [vmem:[#allocation3 + $0x100] sm:$0xff]
    %v2023 = vld [vmem:[#allocation3 + $0x108] sm:$0xff]
    %v2024 = vpack.c.bf16 %v1993, %v1992
    %v2025 = vpack.c.bf16 %v1995, %v1994
    %v2026 = vpack.c.bf16 %v1997, %v1996
    %v2027 = vpack.c.bf16 %v1999, %v1998
    %v2028 = vpack.c.bf16 %v2001, %v2000
    %v2029 = vpack.c.bf16 %v2003, %v2002
    %v2030 = vpack.c.bf16 %v2005, %v2004
    %v2031 = vpack.c.bf16 %v2007, %v2006
    %v2032 = vpack.c.bf16 %v2009, %v2008
    %v2033 = vpack.c.bf16 %v2011, %v2010
    %v2034 = vpack.c.bf16 %v2013, %v2012
    %v2035 = vpack.c.bf16 %v2015, %v2014
    %v2036 = vpack.c.bf16 %v2017, %v2016
    %v2037 = vpack.c.bf16 %v2019, %v2018
    %v2038 = vpack.c.bf16 %v2021, %v2020
    %v2039 = vpack.c.bf16 %v2023, %v2022
    %s2040 = scalar_lea.vmem %s3, 32
    %v2041 = vld [vmem:[%s2040] sm:$0xf]
    %v2042 = vld [vmem:[%s2040 + $0x4] sm:$0xf]
    %v2043 = vld [vmem:[%s2040 + $0x8] sm:$0xf]
    %v2044 = vld [vmem:[%s2040 + $0xc] sm:$0xf]
    %v2045 = vld [vmem:[%s2040 + $0x10] sm:$0xf]
    %v2046 = vld [vmem:[%s2040 + $0x14] sm:$0xf]
    %v2047 = vld [vmem:[%s2040 + $0x18] sm:$0xf]
    %v2048 = vld [vmem:[%s2040 + $0x1c] sm:$0xf]
    %v2057 = vunpack.c.l.b16 %v2041
    %v2058 = vunpack.c.l.b16 %v2042
    %v2059 = vunpack.c.l.b16 %v2043
    %v2060 = vunpack.c.l.b16 %v2044
    %v2061 = vunpack.c.l.b16 %v2045
    %v2062 = vunpack.c.l.b16 %v2046
    %v2063 = vunpack.c.l.b16 %v2047
    %v2064 = vunpack.c.l.b16 %v2048
    %v2065 = vpack.c.b16 %v2058, %v2057
    %v2066 = vpack.c.b16 %v2060, %v2059
    %v2067 = vpack.c.b16 %v2062, %v2061
    %v2068 = vpack.c.b16 %v2064, %v2063
    %v2074 = vsel %vm33, %v2024, 0
    %v2077 = vsel %vm33, %v2025, 0
    %v2080 = vsel %vm33, %v2026, 0
    %v2083 = vsel %vm33, %v2027, 0
    %v2086 = vsel %vm33, %v2028, 0
    %v2089 = vsel %vm33, %v2029, 0
    %v2092 = vsel %vm33, %v2030, 0
    %v2095 = vsel %vm33, %v2031, 0
    %v2098 = vsel %vm33, %v2032, 0
    %v2101 = vsel %vm33, %v2033, 0
    %v2104 = vsel %vm33, %v2034, 0
    %v2107 = vsel %vm33, %v2035, 0
    %v2110 = vsel %vm33, %v2036, 0
    %v2113 = vsel %vm33, %v2037, 0
    %v2116 = vsel %vm33, %v2038, 0
    %v2119 = vsel %vm33, %v2039, 0
    %2121 = vmatpush.bf16.msra.mxu0 0
    %2122 = vmatpush.bf16.msra.mxu0 0
    %2123 = vmatpush.bf16.msra.mxu0 0
    %2124 = vmatpush.bf16.msra.mxu0 0
    %2125 = vmatpush.bf16.msra.mxu0 %v2068
    %2126 = vmatpush.bf16.msra.mxu0 %v2067
    %2127 = vmatpush.bf16.msra.mxu0 %v2066
    %2128 = vmatpush.bf16.msra.mxu0 %v2065
    %2129 = vmatmul.bf16.gmra.mxu0 %v2074
    %v2130 = vpop.f32.mrf.mxu0
    %v2131 = vadd.f32 0.0, %v2130
    %v2132 = vpop.f32.mrf.mxu0
    %v2133 = vadd.f32 0.0, %v2132
    %2134 = vmatmul.bf16.gmra.mxu0 %v2077
    %v2135 = vpop.f32.mrf.mxu0
    %v2136 = vadd.f32 0.0, %v2135
    %v2137 = vpop.f32.mrf.mxu0
    %v2138 = vadd.f32 0.0, %v2137
    %2139 = vmatmul.bf16.gmra.mxu0 %v2080
    %v2140 = vpop.f32.mrf.mxu0
    %v2141 = vadd.f32 0.0, %v2140
    %v2142 = vpop.f32.mrf.mxu0
    %v2143 = vadd.f32 0.0, %v2142
    %2144 = vmatmul.bf16.gmra.mxu0 %v2083
    %v2145 = vpop.f32.mrf.mxu0
    %v2146 = vadd.f32 0.0, %v2145
    %v2147 = vpop.f32.mrf.mxu0
    %v2148 = vadd.f32 0.0, %v2147
    %2149 = vmatmul.bf16.gmra.mxu0 %v2086
    %v2150 = vpop.f32.mrf.mxu0
    %v2151 = vadd.f32 0.0, %v2150
    %v2152 = vpop.f32.mrf.mxu0
    %v2153 = vadd.f32 0.0, %v2152
    %2154 = vmatmul.bf16.gmra.mxu0 %v2089
    %v2155 = vpop.f32.mrf.mxu0
    %v2156 = vadd.f32 0.0, %v2155
    %v2157 = vpop.f32.mrf.mxu0
    %v2158 = vadd.f32 0.0, %v2157
    %2159 = vmatmul.bf16.gmra.mxu0 %v2092
    %v2160 = vpop.f32.mrf.mxu0
    %v2161 = vadd.f32 0.0, %v2160
    %v2162 = vpop.f32.mrf.mxu0
    %v2163 = vadd.f32 0.0, %v2162
    %2164 = vmatmul.bf16.gmra.mxu0 %v2095
    %v2165 = vpop.f32.mrf.mxu0
    %v2166 = vadd.f32 0.0, %v2165
    %v2167 = vpop.f32.mrf.mxu0
    %v2168 = vadd.f32 0.0, %v2167
    %2169 = vmatmul.bf16.gmra.mxu0 %v2098
    %v2170 = vpop.f32.mrf.mxu0
    %v2171 = vadd.f32 0.0, %v2170
    %v2172 = vpop.f32.mrf.mxu0
    %v2173 = vadd.f32 0.0, %v2172
    %2174 = vmatmul.bf16.gmra.mxu0 %v2101
    %v2175 = vpop.f32.mrf.mxu0
    %v2176 = vadd.f32 0.0, %v2175
    %v2177 = vpop.f32.mrf.mxu0
    %v2178 = vadd.f32 0.0, %v2177
    %2179 = vmatmul.bf16.gmra.mxu0 %v2104
    %v2180 = vpop.f32.mrf.mxu0
    %v2181 = vadd.f32 0.0, %v2180
    %v2182 = vpop.f32.mrf.mxu0
    %v2183 = vadd.f32 0.0, %v2182
    %2184 = vmatmul.bf16.gmra.mxu0 %v2107
    %v2185 = vpop.f32.mrf.mxu0
    %v2186 = vadd.f32 0.0, %v2185
    %v2187 = vpop.f32.mrf.mxu0
    %v2188 = vadd.f32 0.0, %v2187
    %2189 = vmatmul.bf16.gmra.mxu0 %v2110
    %v2190 = vpop.f32.mrf.mxu0
    %v2191 = vadd.f32 0.0, %v2190
    %v2192 = vpop.f32.mrf.mxu0
    %v2193 = vadd.f32 0.0, %v2192
    %2194 = vmatmul.bf16.gmra.mxu0 %v2113
    %v2195 = vpop.f32.mrf.mxu0
    %v2196 = vadd.f32 0.0, %v2195
    %v2197 = vpop.f32.mrf.mxu0
    %v2198 = vadd.f32 0.0, %v2197
    %2199 = vmatmul.bf16.gmra.mxu0 %v2116
    %v2200 = vpop.f32.mrf.mxu0
    %v2201 = vadd.f32 0.0, %v2200
    %v2202 = vpop.f32.mrf.mxu0
    %v2203 = vadd.f32 0.0, %v2202
    %2204 = vmatmul.bf16.gmra.mxu0 %v2119
    %v2205 = vpop.f32.mrf.mxu0
    %v2206 = vadd.f32 0.0, %v2205
    %v2207 = vpop.f32.mrf.mxu0
    %v2208 = vadd.f32 0.0, %v2207
    %2209 = vdwg.mxu0
    %v2218 = vunpack.c.l.b16 %v1984
    %v2219 = vunpack.c.l.b16 %v1985
    %v2220 = vunpack.c.l.b16 %v1986
    %v2221 = vunpack.c.l.b16 %v1987
    %v2222 = vunpack.c.l.b16 %v1988
    %v2223 = vunpack.c.l.b16 %v1989
    %v2224 = vunpack.c.l.b16 %v1990
    %v2225 = vunpack.c.l.b16 %v1991
    %v2226 = vpack.c.b16 %v2219, %v2218
    %v2227 = vpack.c.b16 %v2221, %v2220
    %v2228 = vpack.c.b16 %v2223, %v2222
    %v2229 = vpack.c.b16 %v2225, %v2224
    %v2235 = vsel %vm33, %v1968, 0
    %v2238 = vsel %vm33, %v1969, 0
    %v2241 = vsel %vm33, %v1970, 0
    %v2244 = vsel %vm33, %v1971, 0
    %v2247 = vsel %vm33, %v1972, 0
    %v2250 = vsel %vm33, %v1973, 0
    %v2253 = vsel %vm33, %v1974, 0
    %v2256 = vsel %vm33, %v1975, 0
    %v2259 = vsel %vm33, %v1976, 0
    %v2262 = vsel %vm33, %v1977, 0
    %v2265 = vsel %vm33, %v1978, 0
    %v2268 = vsel %vm33, %v1979, 0
    %v2271 = vsel %vm33, %v1980, 0
    %v2274 = vsel %vm33, %v1981, 0
    %v2277 = vsel %vm33, %v1982, 0
    %v2280 = vsel %vm33, %v1983, 0
    %2282 = vmatpush.bf16.msra.mxu0 0
    %2283 = vmatpush.bf16.msra.mxu0 0
    %2284 = vmatpush.bf16.msra.mxu0 0
    %2285 = vmatpush.bf16.msra.mxu0 0
    %2286 = vmatpush.bf16.msra.mxu0 %v2229
    %2287 = vmatpush.bf16.msra.mxu0 %v2228
    %2288 = vmatpush.bf16.msra.mxu0 %v2227
    %2289 = vmatpush.bf16.msra.mxu0 %v2226
    %2290 = vmatmul.bf16.gmra.mxu0 %v2235
    %v2291 = vpop.f32.mrf.mxu0
    %v2292 = vadd.f32 %v2131, %v2291
    %v2293 = vpop.f32.mrf.mxu0
    %v2294 = vadd.f32 %v2133, %v2293
    %2295 = vmatmul.bf16.gmra.mxu0 %v2238
    %v2296 = vpop.f32.mrf.mxu0
    %v2297 = vadd.f32 %v2136, %v2296
    %v2298 = vpop.f32.mrf.mxu0
    %v2299 = vadd.f32 %v2138, %v2298
    %2300 = vmatmul.bf16.gmra.mxu0 %v2241
    %v2301 = vpop.f32.mrf.mxu0
    %v2302 = vadd.f32 %v2141, %v2301
    %v2303 = vpop.f32.mrf.mxu0
    %v2304 = vadd.f32 %v2143, %v2303
    %2305 = vmatmul.bf16.gmra.mxu0 %v2244
    %v2306 = vpop.f32.mrf.mxu0
    %v2307 = vadd.f32 %v2146, %v2306
    %v2308 = vpop.f32.mrf.mxu0
    %v2309 = vadd.f32 %v2148, %v2308
    %2310 = vmatmul.bf16.gmra.mxu0 %v2247
    %v2311 = vpop.f32.mrf.mxu0
    %v2312 = vadd.f32 %v2151, %v2311
    %v2313 = vpop.f32.mrf.mxu0
    %v2314 = vadd.f32 %v2153, %v2313
    %2315 = vmatmul.bf16.gmra.mxu0 %v2250
    %v2316 = vpop.f32.mrf.mxu0
    %v2317 = vadd.f32 %v2156, %v2316
    %v2318 = vpop.f32.mrf.mxu0
    %v2319 = vadd.f32 %v2158, %v2318
    %2320 = vmatmul.bf16.gmra.mxu0 %v2253
    %v2321 = vpop.f32.mrf.mxu0
    %v2322 = vadd.f32 %v2161, %v2321
    %v2323 = vpop.f32.mrf.mxu0
    %v2324 = vadd.f32 %v2163, %v2323
    %2325 = vmatmul.bf16.gmra.mxu0 %v2256
    %v2326 = vpop.f32.mrf.mxu0
    %v2327 = vadd.f32 %v2166, %v2326
    %v2328 = vpop.f32.mrf.mxu0
    %v2329 = vadd.f32 %v2168, %v2328
    %2330 = vmatmul.bf16.gmra.mxu0 %v2259
    %v2331 = vpop.f32.mrf.mxu0
    %v2332 = vadd.f32 %v2171, %v2331
    %v2333 = vpop.f32.mrf.mxu0
    %v2334 = vadd.f32 %v2173, %v2333
    %2335 = vmatmul.bf16.gmra.mxu0 %v2262
    %v2336 = vpop.f32.mrf.mxu0
    %v2337 = vadd.f32 %v2176, %v2336
    %v2338 = vpop.f32.mrf.mxu0
    %v2339 = vadd.f32 %v2178, %v2338
    %2340 = vmatmul.bf16.gmra.mxu0 %v2265
    %v2341 = vpop.f32.mrf.mxu0
    %v2342 = vadd.f32 %v2181, %v2341
    %v2343 = vpop.f32.mrf.mxu0
    %v2344 = vadd.f32 %v2183, %v2343
    %2345 = vmatmul.bf16.gmra.mxu0 %v2268
    %v2346 = vpop.f32.mrf.mxu0
    %v2347 = vadd.f32 %v2186, %v2346
    %v2348 = vpop.f32.mrf.mxu0
    %v2349 = vadd.f32 %v2188, %v2348
    %2350 = vmatmul.bf16.gmra.mxu0 %v2271
    %v2351 = vpop.f32.mrf.mxu0
    %v2352 = vadd.f32 %v2191, %v2351
    %v2353 = vpop.f32.mrf.mxu0
    %v2354 = vadd.f32 %v2193, %v2353
    %2355 = vmatmul.bf16.gmra.mxu0 %v2274
    %v2356 = vpop.f32.mrf.mxu0
    %v2357 = vadd.f32 %v2196, %v2356
    %v2358 = vpop.f32.mrf.mxu0
    %v2359 = vadd.f32 %v2198, %v2358
    %2360 = vmatmul.bf16.gmra.mxu0 %v2277
    %v2361 = vpop.f32.mrf.mxu0
    %v2362 = vadd.f32 %v2201, %v2361
    %v2363 = vpop.f32.mrf.mxu0
    %v2364 = vadd.f32 %v2203, %v2363
    %2365 = vmatmul.bf16.gmra.mxu0 %v2280
    %v2366 = vpop.f32.mrf.mxu0
    %v2367 = vadd.f32 %v2206, %v2366
    %v2368 = vpop.f32.mrf.mxu0
    %v2369 = vadd.f32 %v2208, %v2368
    %2370 = vdwg.mxu0
    %v2371 = vld [vmem:[#allocation3 + $0x11] sm:$0xff]
    %v2372 = vld [vmem:[#allocation3 + $0x19] sm:$0xff]
    %v2373 = vld [vmem:[#allocation3 + $0x21] sm:$0xff]
    %v2374 = vld [vmem:[#allocation3 + $0x29] sm:$0xff]
    %v2375 = vld [vmem:[#allocation3 + $0x31] sm:$0xff]
    %v2376 = vld [vmem:[#allocation3 + $0x39] sm:$0xff]
    %v2377 = vld [vmem:[#allocation3 + $0x41] sm:$0xff]
    %v2378 = vld [vmem:[#allocation3 + $0x49] sm:$0xff]
    %v2379 = vld [vmem:[#allocation3 + $0x51] sm:$0xff]
    %v2380 = vld [vmem:[#allocation3 + $0x59] sm:$0xff]
    %v2381 = vld [vmem:[#allocation3 + $0x61] sm:$0xff]
    %v2382 = vld [vmem:[#allocation3 + $0x69] sm:$0xff]
    %v2383 = vld [vmem:[#allocation3 + $0x71] sm:$0xff]
    %v2384 = vld [vmem:[#allocation3 + $0x79] sm:$0xff]
    %v2385 = vld [vmem:[#allocation3 + $0x81] sm:$0xff]
    %v2386 = vld [vmem:[#allocation3 + $0x89] sm:$0xff]
    %v2387 = vld [vmem:[#allocation3 + $0x91] sm:$0xff]
    %v2388 = vld [vmem:[#allocation3 + $0x99] sm:$0xff]
    %v2389 = vld [vmem:[#allocation3 + $0xa1] sm:$0xff]
    %v2390 = vld [vmem:[#allocation3 + $0xa9] sm:$0xff]
    %v2391 = vld [vmem:[#allocation3 + $0xb1] sm:$0xff]
    %v2392 = vld [vmem:[#allocation3 + $0xb9] sm:$0xff]
    %v2393 = vld [vmem:[#allocation3 + $0xc1] sm:$0xff]
    %v2394 = vld [vmem:[#allocation3 + $0xc9] sm:$0xff]
    %v2395 = vld [vmem:[#allocation3 + $0xd1] sm:$0xff]
    %v2396 = vld [vmem:[#allocation3 + $0xd9] sm:$0xff]
    %v2397 = vld [vmem:[#allocation3 + $0xe1] sm:$0xff]
    %v2398 = vld [vmem:[#allocation3 + $0xe9] sm:$0xff]
    %v2399 = vld [vmem:[#allocation3 + $0xf1] sm:$0xff]
    %v2400 = vld [vmem:[#allocation3 + $0xf9] sm:$0xff]
    %v2401 = vld [vmem:[#allocation3 + $0x101] sm:$0xff]
    %v2402 = vld [vmem:[#allocation3 + $0x109] sm:$0xff]
    %v2403 = vpack.c.bf16 %v2372, %v2371
    %v2404 = vpack.c.bf16 %v2374, %v2373
    %v2405 = vpack.c.bf16 %v2376, %v2375
    %v2406 = vpack.c.bf16 %v2378, %v2377
    %v2407 = vpack.c.bf16 %v2380, %v2379
    %v2408 = vpack.c.bf16 %v2382, %v2381
    %v2409 = vpack.c.bf16 %v2384, %v2383
    %v2410 = vpack.c.bf16 %v2386, %v2385
    %v2411 = vpack.c.bf16 %v2388, %v2387
    %v2412 = vpack.c.bf16 %v2390, %v2389
    %v2413 = vpack.c.bf16 %v2392, %v2391
    %v2414 = vpack.c.bf16 %v2394, %v2393
    %v2415 = vpack.c.bf16 %v2396, %v2395
    %v2416 = vpack.c.bf16 %v2398, %v2397
    %v2417 = vpack.c.bf16 %v2400, %v2399
    %v2418 = vpack.c.bf16 %v2402, %v2401
    %s2419 = scalar_lea.vmem %s3, 64
    %v2420 = vld [vmem:[%s2419] sm:$0xf]
    %v2421 = vld [vmem:[%s2419 + $0x4] sm:$0xf]
    %v2422 = vld [vmem:[%s2419 + $0x8] sm:$0xf]
    %v2423 = vld [vmem:[%s2419 + $0xc] sm:$0xf]
    %v2424 = vld [vmem:[%s2419 + $0x10] sm:$0xf]
    %v2425 = vld [vmem:[%s2419 + $0x14] sm:$0xf]
    %v2426 = vld [vmem:[%s2419 + $0x18] sm:$0xf]
    %v2427 = vld [vmem:[%s2419 + $0x1c] sm:$0xf]
    %v2436 = vunpack.c.l.b16 %v2420
    %v2437 = vunpack.c.l.b16 %v2421
    %v2438 = vunpack.c.l.b16 %v2422
    %v2439 = vunpack.c.l.b16 %v2423
    %v2440 = vunpack.c.l.b16 %v2424
    %v2441 = vunpack.c.l.b16 %v2425
    %v2442 = vunpack.c.l.b16 %v2426
    %v2443 = vunpack.c.l.b16 %v2427
    %v2444 = vpack.c.b16 %v2437, %v2436
    %v2445 = vpack.c.b16 %v2439, %v2438
    %v2446 = vpack.c.b16 %v2441, %v2440
    %v2447 = vpack.c.b16 %v2443, %v2442
    %v2453 = vsel %vm33, %v2403, 0
    %v2456 = vsel %vm33, %v2404, 0
    %v2459 = vsel %vm33, %v2405, 0
    %v2462 = vsel %vm33, %v2406, 0
    %v2465 = vsel %vm33, %v2407, 0
    %v2468 = vsel %vm33, %v2408, 0
    %v2471 = vsel %vm33, %v2409, 0
    %v2474 = vsel %vm33, %v2410, 0
    %v2477 = vsel %vm33, %v2411, 0
    %v2480 = vsel %vm33, %v2412, 0
    %v2483 = vsel %vm33, %v2413, 0
    %v2486 = vsel %vm33, %v2414, 0
    %v2489 = vsel %vm33, %v2415, 0
    %v2492 = vsel %vm33, %v2416, 0
    %v2495 = vsel %vm33, %v2417, 0
    %v2498 = vsel %vm33, %v2418, 0
    %2500 = vmatpush.bf16.msra.mxu0 0
    %2501 = vmatpush.bf16.msra.mxu0 0
    %2502 = vmatpush.bf16.msra.mxu0 0
    %2503 = vmatpush.bf16.msra.mxu0 0
    %2504 = vmatpush.bf16.msra.mxu0 %v2447
    %2505 = vmatpush.bf16.msra.mxu0 %v2446
    %2506 = vmatpush.bf16.msra.mxu0 %v2445
    %2507 = vmatpush.bf16.msra.mxu0 %v2444
    %2508 = vmatmul.bf16.gmra.mxu0 %v2453
    %v2509 = vpop.f32.mrf.mxu0
    %v2510 = vadd.f32 0.0, %v2509
    %v2511 = vpop.f32.mrf.mxu0
    %v2512 = vadd.f32 0.0, %v2511
    %2513 = vmatmul.bf16.gmra.mxu0 %v2456
    %v2514 = vpop.f32.mrf.mxu0
    %v2515 = vadd.f32 0.0, %v2514
    %v2516 = vpop.f32.mrf.mxu0
    %v2517 = vadd.f32 0.0, %v2516
    %2518 = vmatmul.bf16.gmra.mxu0 %v2459
    %v2519 = vpop.f32.mrf.mxu0
    %v2520 = vadd.f32 0.0, %v2519
    %v2521 = vpop.f32.mrf.mxu0
    %v2522 = vadd.f32 0.0, %v2521
    %2523 = vmatmul.bf16.gmra.mxu0 %v2462
    %v2524 = vpop.f32.mrf.mxu0
    %v2525 = vadd.f32 0.0, %v2524
    %v2526 = vpop.f32.mrf.mxu0
    %v2527 = vadd.f32 0.0, %v2526
    %2528 = vmatmul.bf16.gmra.mxu0 %v2465
    %v2529 = vpop.f32.mrf.mxu0
    %v2530 = vadd.f32 0.0, %v2529
    %v2531 = vpop.f32.mrf.mxu0
    %v2532 = vadd.f32 0.0, %v2531
    %2533 = vmatmul.bf16.gmra.mxu0 %v2468
    %v2534 = vpop.f32.mrf.mxu0
    %v2535 = vadd.f32 0.0, %v2534
    %v2536 = vpop.f32.mrf.mxu0
    %v2537 = vadd.f32 0.0, %v2536
    %2538 = vmatmul.bf16.gmra.mxu0 %v2471
    %v2539 = vpop.f32.mrf.mxu0
    %v2540 = vadd.f32 0.0, %v2539
    %v2541 = vpop.f32.mrf.mxu0
    %v2542 = vadd.f32 0.0, %v2541
    %2543 = vmatmul.bf16.gmra.mxu0 %v2474
    %v2544 = vpop.f32.mrf.mxu0
    %v2545 = vadd.f32 0.0, %v2544
    %v2546 = vpop.f32.mrf.mxu0
    %v2547 = vadd.f32 0.0, %v2546
    %2548 = vmatmul.bf16.gmra.mxu0 %v2477
    %v2549 = vpop.f32.mrf.mxu0
    %v2550 = vadd.f32 0.0, %v2549
    %v2551 = vpop.f32.mrf.mxu0
    %v2552 = vadd.f32 0.0, %v2551
    %2553 = vmatmul.bf16.gmra.mxu0 %v2480
    %v2554 = vpop.f32.mrf.mxu0
    %v2555 = vadd.f32 0.0, %v2554
    %v2556 = vpop.f32.mrf.mxu0
    %v2557 = vadd.f32 0.0, %v2556
    %2558 = vmatmul.bf16.gmra.mxu0 %v2483
    %v2559 = vpop.f32.mrf.mxu0
    %v2560 = vadd.f32 0.0, %v2559
    %v2561 = vpop.f32.mrf.mxu0
    %v2562 = vadd.f32 0.0, %v2561
    %2563 = vmatmul.bf16.gmra.mxu0 %v2486
    %v2564 = vpop.f32.mrf.mxu0
    %v2565 = vadd.f32 0.0, %v2564
    %v2566 = vpop.f32.mrf.mxu0
    %v2567 = vadd.f32 0.0, %v2566
    %2568 = vmatmul.bf16.gmra.mxu0 %v2489
    %v2569 = vpop.f32.mrf.mxu0
    %v2570 = vadd.f32 0.0, %v2569
    %v2571 = vpop.f32.mrf.mxu0
    %v2572 = vadd.f32 0.0, %v2571
    %2573 = vmatmul.bf16.gmra.mxu0 %v2492
    %v2574 = vpop.f32.mrf.mxu0
    %v2575 = vadd.f32 0.0, %v2574
    %v2576 = vpop.f32.mrf.mxu0
    %v2577 = vadd.f32 0.0, %v2576
    %2578 = vmatmul.bf16.gmra.mxu0 %v2495
    %v2579 = vpop.f32.mrf.mxu0
    %v2580 = vadd.f32 0.0, %v2579
    %v2581 = vpop.f32.mrf.mxu0
    %v2582 = vadd.f32 0.0, %v2581
    %2583 = vmatmul.bf16.gmra.mxu0 %v2498
    %v2584 = vpop.f32.mrf.mxu0
    %v2585 = vadd.f32 0.0, %v2584
    %v2586 = vpop.f32.mrf.mxu0
    %v2587 = vadd.f32 0.0, %v2586
    %2588 = vdwg.mxu0
    %v2589 = vadd.f32 %v2292, %v2510
    %v2590 = vadd.f32 %v2294, %v2512
    %v2591 = vadd.f32 %v2297, %v2515
    %v2592 = vadd.f32 %v2299, %v2517
    %v2593 = vadd.f32 %v2302, %v2520
    %v2594 = vadd.f32 %v2304, %v2522
    %v2595 = vadd.f32 %v2307, %v2525
    %v2596 = vadd.f32 %v2309, %v2527
    %v2597 = vadd.f32 %v2312, %v2530
    %v2598 = vadd.f32 %v2314, %v2532
    %v2599 = vadd.f32 %v2317, %v2535
    %v2600 = vadd.f32 %v2319, %v2537
    %v2601 = vadd.f32 %v2322, %v2540
    %v2602 = vadd.f32 %v2324, %v2542
    %v2603 = vadd.f32 %v2327, %v2545
    %v2604 = vadd.f32 %v2329, %v2547
    %v2605 = vadd.f32 %v2332, %v2550
    %v2606 = vadd.f32 %v2334, %v2552
    %v2607 = vadd.f32 %v2337, %v2555
    %v2608 = vadd.f32 %v2339, %v2557
    %v2609 = vadd.f32 %v2342, %v2560
    %v2610 = vadd.f32 %v2344, %v2562
    %v2611 = vadd.f32 %v2347, %v2565
    %v2612 = vadd.f32 %v2349, %v2567
    %v2613 = vadd.f32 %v2352, %v2570
    %v2614 = vadd.f32 %v2354, %v2572
    %v2615 = vadd.f32 %v2357, %v2575
    %v2616 = vadd.f32 %v2359, %v2577
    %v2617 = vadd.f32 %v2362, %v2580
    %v2618 = vadd.f32 %v2364, %v2582
    %v2619 = vadd.f32 %v2367, %v2585
    %v2620 = vadd.f32 %v2369, %v2587
    %v2621 = vld [vmem:[#allocation3 + $0x1f] sm:$0xff]
    %v2622 = vld [vmem:[#allocation3 + $0x27] sm:$0xff]
    %v2623 = vld [vmem:[#allocation3 + $0x2f] sm:$0xff]
    %v2624 = vld [vmem:[#allocation3 + $0x37] sm:$0xff]
    %v2625 = vld [vmem:[#allocation3 + $0x3f] sm:$0xff]
    %v2626 = vld [vmem:[#allocation3 + $0x47] sm:$0xff]
    %v2627 = vld [vmem:[#allocation3 + $0x4f] sm:$0xff]
    %v2628 = vld [vmem:[#allocation3 + $0x57] sm:$0xff]
    %v2629 = vld [vmem:[#allocation3 + $0x5f] sm:$0xff]
    %v2630 = vld [vmem:[#allocation3 + $0x67] sm:$0xff]
    %v2631 = vld [vmem:[#allocation3 + $0x6f] sm:$0xff]
    %v2632 = vld [vmem:[#allocation3 + $0x77] sm:$0xff]
    %v2633 = vld [vmem:[#allocation3 + $0x7f] sm:$0xff]
    %v2634 = vld [vmem:[#allocation3 + $0x87] sm:$0xff]
    %v2635 = vld [vmem:[#allocation3 + $0x8f] sm:$0xff]
    %v2636 = vld [vmem:[#allocation3 + $0x97] sm:$0xff]
    %v2637 = vld [vmem:[#allocation3 + $0x9f] sm:$0xff]
    %v2638 = vld [vmem:[#allocation3 + $0xa7] sm:$0xff]
    %v2639 = vld [vmem:[#allocation3 + $0xaf] sm:$0xff]
    %v2640 = vld [vmem:[#allocation3 + $0xb7] sm:$0xff]
    %v2641 = vld [vmem:[#allocation3 + $0xbf] sm:$0xff]
    %v2642 = vld [vmem:[#allocation3 + $0xc7] sm:$0xff]
    %v2643 = vld [vmem:[#allocation3 + $0xcf] sm:$0xff]
    %v2644 = vld [vmem:[#allocation3 + $0xd7] sm:$0xff]
    %v2645 = vld [vmem:[#allocation3 + $0xdf] sm:$0xff]
    %v2646 = vld [vmem:[#allocation3 + $0xe7] sm:$0xff]
    %v2647 = vld [vmem:[#allocation3 + $0xef] sm:$0xff]
    %v2648 = vld [vmem:[#allocation3 + $0xf7] sm:$0xff]
    %v2649 = vld [vmem:[#allocation3 + $0xff] sm:$0xff]
    %v2650 = vld [vmem:[#allocation3 + $0x107] sm:$0xff]
    %v2651 = vld [vmem:[#allocation3 + $0x10f] sm:$0xff]
    %v2652 = vld [vmem:[#allocation3 + $0x117] sm:$0xff]
    %v2653 = vpack.c.bf16 %v2622, %v2621
    %v2654 = vpack.c.bf16 %v2624, %v2623
    %v2655 = vpack.c.bf16 %v2626, %v2625
    %v2656 = vpack.c.bf16 %v2628, %v2627
    %v2657 = vpack.c.bf16 %v2630, %v2629
    %v2658 = vpack.c.bf16 %v2632, %v2631
    %v2659 = vpack.c.bf16 %v2634, %v2633
    %v2660 = vpack.c.bf16 %v2636, %v2635
    %v2661 = vpack.c.bf16 %v2638, %v2637
    %v2662 = vpack.c.bf16 %v2640, %v2639
    %v2663 = vpack.c.bf16 %v2642, %v2641
    %v2664 = vpack.c.bf16 %v2644, %v2643
    %v2665 = vpack.c.bf16 %v2646, %v2645
    %v2666 = vpack.c.bf16 %v2648, %v2647
    %v2667 = vpack.c.bf16 %v2650, %v2649
    %v2668 = vpack.c.bf16 %v2652, %v2651
    %s2669 = scalar_lea.vmem %s3, 96
    %v2670 = vld [vmem:[%s2669] sm:$0xf]
    %v2671 = vld [vmem:[%s2669 + $0x4] sm:$0xf]
    %v2672 = vld [vmem:[%s2669 + $0x8] sm:$0xf]
    %v2673 = vld [vmem:[%s2669 + $0xc] sm:$0xf]
    %v2674 = vld [vmem:[%s2669 + $0x10] sm:$0xf]
    %v2675 = vld [vmem:[%s2669 + $0x14] sm:$0xf]
    %v2676 = vld [vmem:[%s2669 + $0x18] sm:$0xf]
    %v2677 = vld [vmem:[%s2669 + $0x1c] sm:$0xf]
    %v2686 = vunpack.c.l.b16 %v2670
    %v2687 = vunpack.c.l.b16 %v2671
    %v2688 = vunpack.c.l.b16 %v2672
    %v2689 = vunpack.c.l.b16 %v2673
    %v2690 = vunpack.c.l.b16 %v2674
    %v2691 = vunpack.c.l.b16 %v2675
    %v2692 = vunpack.c.l.b16 %v2676
    %v2693 = vunpack.c.l.b16 %v2677
    %v2694 = vpack.c.b16 %v2687, %v2686
    %v2695 = vpack.c.b16 %v2689, %v2688
    %v2696 = vpack.c.b16 %v2691, %v2690
    %v2697 = vpack.c.b16 %v2693, %v2692
    %v2703 = vsel %vm33, %v2653, 0
    %v2706 = vsel %vm33, %v2654, 0
    %v2709 = vsel %vm33, %v2655, 0
    %v2712 = vsel %vm33, %v2656, 0
    %v2715 = vsel %vm33, %v2657, 0
    %v2718 = vsel %vm33, %v2658, 0
    %v2721 = vsel %vm33, %v2659, 0
    %v2724 = vsel %vm33, %v2660, 0
    %v2727 = vsel %vm33, %v2661, 0
    %v2730 = vsel %vm33, %v2662, 0
    %v2733 = vsel %vm33, %v2663, 0
    %v2736 = vsel %vm33, %v2664, 0
    %v2739 = vsel %vm33, %v2665, 0
    %v2742 = vsel %vm33, %v2666, 0
    %v2745 = vsel %vm33, %v2667, 0
    %v2748 = vsel %vm33, %v2668, 0
    %2750 = vmatpush.bf16.msra.mxu0 0
    %2751 = vmatpush.bf16.msra.mxu0 0
    %2752 = vmatpush.bf16.msra.mxu0 0
    %2753 = vmatpush.bf16.msra.mxu0 0
    %2754 = vmatpush.bf16.msra.mxu0 %v2697
    %2755 = vmatpush.bf16.msra.mxu0 %v2696
    %2756 = vmatpush.bf16.msra.mxu0 %v2695
    %2757 = vmatpush.bf16.msra.mxu0 %v2694
    %2758 = vmatmul.bf16.gmra.mxu0 %v2703
    %v2759 = vpop.f32.mrf.mxu0
    %v2760 = vadd.f32 0.0, %v2759
    %v2761 = vpop.f32.mrf.mxu0
    %v2762 = vadd.f32 0.0, %v2761
    %2763 = vmatmul.bf16.gmra.mxu0 %v2706
    %v2764 = vpop.f32.mrf.mxu0
    %v2765 = vadd.f32 0.0, %v2764
    %v2766 = vpop.f32.mrf.mxu0
    %v2767 = vadd.f32 0.0, %v2766
    %2768 = vmatmul.bf16.gmra.mxu0 %v2709
    %v2769 = vpop.f32.mrf.mxu0
    %v2770 = vadd.f32 0.0, %v2769
    %v2771 = vpop.f32.mrf.mxu0
    %v2772 = vadd.f32 0.0, %v2771
    %2773 = vmatmul.bf16.gmra.mxu0 %v2712
    %v2774 = vpop.f32.mrf.mxu0
    %v2775 = vadd.f32 0.0, %v2774
    %v2776 = vpop.f32.mrf.mxu0
    %v2777 = vadd.f32 0.0, %v2776
    %2778 = vmatmul.bf16.gmra.mxu0 %v2715
    %v2779 = vpop.f32.mrf.mxu0
    %v2780 = vadd.f32 0.0, %v2779
    %v2781 = vpop.f32.mrf.mxu0
    %v2782 = vadd.f32 0.0, %v2781
    %2783 = vmatmul.bf16.gmra.mxu0 %v2718
    %v2784 = vpop.f32.mrf.mxu0
    %v2785 = vadd.f32 0.0, %v2784
    %v2786 = vpop.f32.mrf.mxu0
    %v2787 = vadd.f32 0.0, %v2786
    %2788 = vmatmul.bf16.gmra.mxu0 %v2721
    %v2789 = vpop.f32.mrf.mxu0
    %v2790 = vadd.f32 0.0, %v2789
    %v2791 = vpop.f32.mrf.mxu0
    %v2792 = vadd.f32 0.0, %v2791
    %2793 = vmatmul.bf16.gmra.mxu0 %v2724
    %v2794 = vpop.f32.mrf.mxu0
    %v2795 = vadd.f32 0.0, %v2794
    %v2796 = vpop.f32.mrf.mxu0
    %v2797 = vadd.f32 0.0, %v2796
    %2798 = vmatmul.bf16.gmra.mxu0 %v2727
    %v2799 = vpop.f32.mrf.mxu0
    %v2800 = vadd.f32 0.0, %v2799
    %v2801 = vpop.f32.mrf.mxu0
    %v2802 = vadd.f32 0.0, %v2801
    %2803 = vmatmul.bf16.gmra.mxu0 %v2730
    %v2804 = vpop.f32.mrf.mxu0
    %v2805 = vadd.f32 0.0, %v2804
    %v2806 = vpop.f32.mrf.mxu0
    %v2807 = vadd.f32 0.0, %v2806
    %2808 = vmatmul.bf16.gmra.mxu0 %v2733
    %v2809 = vpop.f32.mrf.mxu0
    %v2810 = vadd.f32 0.0, %v2809
    %v2811 = vpop.f32.mrf.mxu0
    %v2812 = vadd.f32 0.0, %v2811
    %2813 = vmatmul.bf16.gmra.mxu0 %v2736
    %v2814 = vpop.f32.mrf.mxu0
    %v2815 = vadd.f32 0.0, %v2814
    %v2816 = vpop.f32.mrf.mxu0
    %v2817 = vadd.f32 0.0, %v2816
    %2818 = vmatmul.bf16.gmra.mxu0 %v2739
    %v2819 = vpop.f32.mrf.mxu0
    %v2820 = vadd.f32 0.0, %v2819
    %v2821 = vpop.f32.mrf.mxu0
    %v2822 = vadd.f32 0.0, %v2821
    %2823 = vmatmul.bf16.gmra.mxu0 %v2742
    %v2824 = vpop.f32.mrf.mxu0
    %v2825 = vadd.f32 0.0, %v2824
    %v2826 = vpop.f32.mrf.mxu0
    %v2827 = vadd.f32 0.0, %v2826
    %2828 = vmatmul.bf16.gmra.mxu0 %v2745
    %v2829 = vpop.f32.mrf.mxu0
    %v2830 = vadd.f32 0.0, %v2829
    %v2831 = vpop.f32.mrf.mxu0
    %v2832 = vadd.f32 0.0, %v2831
    %2833 = vmatmul.bf16.gmra.mxu0 %v2748
    %v2834 = vpop.f32.mrf.mxu0
    %v2835 = vadd.f32 0.0, %v2834
    %v2836 = vpop.f32.mrf.mxu0
    %v2837 = vadd.f32 0.0, %v2836
    %2838 = vdwg.mxu0
    %v2839 = vadd.f32 %v2589, %v2760
    %v2840 = vadd.f32 %v2590, %v2762
    %v2841 = vadd.f32 %v2591, %v2765
    %v2842 = vadd.f32 %v2592, %v2767
    %v2843 = vadd.f32 %v2593, %v2770
    %v2844 = vadd.f32 %v2594, %v2772
    %v2845 = vadd.f32 %v2595, %v2775
    %v2846 = vadd.f32 %v2596, %v2777
    %v2847 = vadd.f32 %v2597, %v2780
    %v2848 = vadd.f32 %v2598, %v2782
    %v2849 = vadd.f32 %v2599, %v2785
    %v2850 = vadd.f32 %v2600, %v2787
    %v2851 = vadd.f32 %v2601, %v2790
    %v2852 = vadd.f32 %v2602, %v2792
    %v2853 = vadd.f32 %v2603, %v2795
    %v2854 = vadd.f32 %v2604, %v2797
    %v2855 = vadd.f32 %v2605, %v2800
    %v2856 = vadd.f32 %v2606, %v2802
    %v2857 = vadd.f32 %v2607, %v2805
    %v2858 = vadd.f32 %v2608, %v2807
    %v2859 = vadd.f32 %v2609, %v2810
    %v2860 = vadd.f32 %v2610, %v2812
    %v2861 = vadd.f32 %v2611, %v2815
    %v2862 = vadd.f32 %v2612, %v2817
    %v2863 = vadd.f32 %v2613, %v2820
    %v2864 = vadd.f32 %v2614, %v2822
    %v2865 = vadd.f32 %v2615, %v2825
    %v2866 = vadd.f32 %v2616, %v2827
    %v2867 = vadd.f32 %v2617, %v2830
    %v2868 = vadd.f32 %v2618, %v2832
    %v2869 = vadd.f32 %v2619, %v2835
    %v2870 = vadd.f32 %v2620, %v2837
    %v2871 = vld [vmem:[#allocation3 + $0x20] sm:$0xff]
    %v2872 = vld [vmem:[#allocation3 + $0x28] sm:$0xff]
    %v2873 = vld [vmem:[#allocation3 + $0x30] sm:$0xff]
    %v2874 = vld [vmem:[#allocation3 + $0x38] sm:$0xff]
    %v2875 = vld [vmem:[#allocation3 + $0x40] sm:$0xff]
    %v2876 = vld [vmem:[#allocation3 + $0x48] sm:$0xff]
    %v2877 = vld [vmem:[#allocation3 + $0x50] sm:$0xff]
    %v2878 = vld [vmem:[#allocation3 + $0x58] sm:$0xff]
    %v2879 = vld [vmem:[#allocation3 + $0x60] sm:$0xff]
    %v2880 = vld [vmem:[#allocation3 + $0x68] sm:$0xff]
    %v2881 = vld [vmem:[#allocation3 + $0x70] sm:$0xff]
    %v2882 = vld [vmem:[#allocation3 + $0x78] sm:$0xff]
    %v2883 = vld [vmem:[#allocation3 + $0x80] sm:$0xff]
    %v2884 = vld [vmem:[#allocation3 + $0x88] sm:$0xff]
    %v2885 = vld [vmem:[#allocation3 + $0x90] sm:$0xff]
    %v2886 = vld [vmem:[#allocation3 + $0x98] sm:$0xff]
    %v2887 = vld [vmem:[#allocation3 + $0xa0] sm:$0xff]
    %v2888 = vld [vmem:[#allocation3 + $0xa8] sm:$0xff]
    %v2889 = vld [vmem:[#allocation3 + $0xb0] sm:$0xff]
    %v2890 = vld [vmem:[#allocation3 + $0xb8] sm:$0xff]
    %v2891 = vld [vmem:[#allocation3 + $0xc0] sm:$0xff]
    %v2892 = vld [vmem:[#allocation3 + $0xc8] sm:$0xff]
    %v2893 = vld [vmem:[#allocation3 + $0xd0] sm:$0xff]
    %v2894 = vld [vmem:[#allocation3 + $0xd8] sm:$0xff]
    %v2895 = vld [vmem:[#allocation3 + $0xe0] sm:$0xff]
    %v2896 = vld [vmem:[#allocation3 + $0xe8] sm:$0xff]
    %v2897 = vld [vmem:[#allocation3 + $0xf0] sm:$0xff]
    %v2898 = vld [vmem:[#allocation3 + $0xf8] sm:$0xff]
    %v2899 = vld [vmem:[#allocation3 + $0x100] sm:$0xff]
    %v2900 = vld [vmem:[#allocation3 + $0x108] sm:$0xff]
    %v2901 = vld [vmem:[#allocation3 + $0x110] sm:$0xff]
    %v2902 = vld [vmem:[#allocation3 + $0x118] sm:$0xff]
    %v2903 = vpack.c.bf16 %v2872, %v2871
    %v2904 = vpack.c.bf16 %v2874, %v2873
    %v2905 = vpack.c.bf16 %v2876, %v2875
    %v2906 = vpack.c.bf16 %v2878, %v2877
    %v2907 = vpack.c.bf16 %v2880, %v2879
    %v2908 = vpack.c.bf16 %v2882, %v2881
    %v2909 = vpack.c.bf16 %v2884, %v2883
    %v2910 = vpack.c.bf16 %v2886, %v2885
    %v2911 = vpack.c.bf16 %v2888, %v2887
    %v2912 = vpack.c.bf16 %v2890, %v2889
    %v2913 = vpack.c.bf16 %v2892, %v2891
    %v2914 = vpack.c.bf16 %v2894, %v2893
    %v2915 = vpack.c.bf16 %v2896, %v2895
    %v2916 = vpack.c.bf16 %v2898, %v2897
    %v2917 = vpack.c.bf16 %v2900, %v2899
    %v2918 = vpack.c.bf16 %v2902, %v2901
    %s2919 = scalar_lea.vmem %s3, 128
    %v2920 = vld [vmem:[%s2919] sm:$0xf]
    %v2921 = vld [vmem:[%s2919 + $0x4] sm:$0xf]
    %v2922 = vld [vmem:[%s2919 + $0x8] sm:$0xf]
    %v2923 = vld [vmem:[%s2919 + $0xc] sm:$0xf]
    %v2924 = vld [vmem:[%s2919 + $0x10] sm:$0xf]
    %v2925 = vld [vmem:[%s2919 + $0x14] sm:$0xf]
    %v2926 = vld [vmem:[%s2919 + $0x18] sm:$0xf]
    %v2927 = vld [vmem:[%s2919 + $0x1c] sm:$0xf]
    %v2936 = vunpack.c.l.b16 %v2920
    %v2937 = vunpack.c.l.b16 %v2921
    %v2938 = vunpack.c.l.b16 %v2922
    %v2939 = vunpack.c.l.b16 %v2923
    %v2940 = vunpack.c.l.b16 %v2924
    %v2941 = vunpack.c.l.b16 %v2925
    %v2942 = vunpack.c.l.b16 %v2926
    %v2943 = vunpack.c.l.b16 %v2927
    %v2944 = vpack.c.b16 %v2937, %v2936
    %v2945 = vpack.c.b16 %v2939, %v2938
    %v2946 = vpack.c.b16 %v2941, %v2940
    %v2947 = vpack.c.b16 %v2943, %v2942
    %v2953 = vsel %vm33, %v2903, 0
    %v2956 = vsel %vm33, %v2904, 0
    %v2959 = vsel %vm33, %v2905, 0
    %v2962 = vsel %vm33, %v2906, 0
    %v2965 = vsel %vm33, %v2907, 0
    %v2968 = vsel %vm33, %v2908, 0
    %v2971 = vsel %vm33, %v2909, 0
    %v2974 = vsel %vm33, %v2910, 0
    %v2977 = vsel %vm33, %v2911, 0
    %v2980 = vsel %vm33, %v2912, 0
    %v2983 = vsel %vm33, %v2913, 0
    %v2986 = vsel %vm33, %v2914, 0
    %v2989 = vsel %vm33, %v2915, 0
    %v2992 = vsel %vm33, %v2916, 0
    %v2995 = vsel %vm33, %v2917, 0
    %v2998 = vsel %vm33, %v2918, 0
    %3000 = vmatpush.bf16.msra.mxu0 0
    %3001 = vmatpush.bf16.msra.mxu0 0
    %3002 = vmatpush.bf16.msra.mxu0 0
    %3003 = vmatpush.bf16.msra.mxu0 0
    %3004 = vmatpush.bf16.msra.mxu0 %v2947
    %3005 = vmatpush.bf16.msra.mxu0 %v2946
    %3006 = vmatpush.bf16.msra.mxu0 %v2945
    %3007 = vmatpush.bf16.msra.mxu0 %v2944
    %3008 = vmatmul.bf16.gmra.mxu0 %v2953
    %v3009 = vpop.f32.mrf.mxu0
    %v3010 = vadd.f32 0.0, %v3009
    %v3011 = vpop.f32.mrf.mxu0
    %v3012 = vadd.f32 0.0, %v3011
    %3013 = vmatmul.bf16.gmra.mxu0 %v2956
    %v3014 = vpop.f32.mrf.mxu0
    %v3015 = vadd.f32 0.0, %v3014
    %v3016 = vpop.f32.mrf.mxu0
    %v3017 = vadd.f32 0.0, %v3016
    %3018 = vmatmul.bf16.gmra.mxu0 %v2959
    %v3019 = vpop.f32.mrf.mxu0
    %v3020 = vadd.f32 0.0, %v3019
    %v3021 = vpop.f32.mrf.mxu0
    %v3022 = vadd.f32 0.0, %v3021
    %3023 = vmatmul.bf16.gmra.mxu0 %v2962
    %v3024 = vpop.f32.mrf.mxu0
    %v3025 = vadd.f32 0.0, %v3024
    %v3026 = vpop.f32.mrf.mxu0
    %v3027 = vadd.f32 0.0, %v3026
    %3028 = vmatmul.bf16.gmra.mxu0 %v2965
    %v3029 = vpop.f32.mrf.mxu0
    %v3030 = vadd.f32 0.0, %v3029
    %v3031 = vpop.f32.mrf.mxu0
    %v3032 = vadd.f32 0.0, %v3031
    %3033 = vmatmul.bf16.gmra.mxu0 %v2968
    %v3034 = vpop.f32.mrf.mxu0
    %v3035 = vadd.f32 0.0, %v3034
    %v3036 = vpop.f32.mrf.mxu0
    %v3037 = vadd.f32 0.0, %v3036
    %3038 = vmatmul.bf16.gmra.mxu0 %v2971
    %v3039 = vpop.f32.mrf.mxu0
    %v3040 = vadd.f32 0.0, %v3039
    %v3041 = vpop.f32.mrf.mxu0
    %v3042 = vadd.f32 0.0, %v3041
    %3043 = vmatmul.bf16.gmra.mxu0 %v2974
    %v3044 = vpop.f32.mrf.mxu0
    %v3045 = vadd.f32 0.0, %v3044
    %v3046 = vpop.f32.mrf.mxu0
    %v3047 = vadd.f32 0.0, %v3046
    %3048 = vmatmul.bf16.gmra.mxu0 %v2977
    %v3049 = vpop.f32.mrf.mxu0
    %v3050 = vadd.f32 0.0, %v3049
    %v3051 = vpop.f32.mrf.mxu0
    %v3052 = vadd.f32 0.0, %v3051
    %3053 = vmatmul.bf16.gmra.mxu0 %v2980
    %v3054 = vpop.f32.mrf.mxu0
    %v3055 = vadd.f32 0.0, %v3054
    %v3056 = vpop.f32.mrf.mxu0
    %v3057 = vadd.f32 0.0, %v3056
    %3058 = vmatmul.bf16.gmra.mxu0 %v2983
    %v3059 = vpop.f32.mrf.mxu0
    %v3060 = vadd.f32 0.0, %v3059
    %v3061 = vpop.f32.mrf.mxu0
    %v3062 = vadd.f32 0.0, %v3061
    %3063 = vmatmul.bf16.gmra.mxu0 %v2986
    %v3064 = vpop.f32.mrf.mxu0
    %v3065 = vadd.f32 0.0, %v3064
    %v3066 = vpop.f32.mrf.mxu0
    %v3067 = vadd.f32 0.0, %v3066
    %3068 = vmatmul.bf16.gmra.mxu0 %v2989
    %v3069 = vpop.f32.mrf.mxu0
    %v3070 = vadd.f32 0.0, %v3069
    %v3071 = vpop.f32.mrf.mxu0
    %v3072 = vadd.f32 0.0, %v3071
    %3073 = vmatmul.bf16.gmra.mxu0 %v2992
    %v3074 = vpop.f32.mrf.mxu0
    %v3075 = vadd.f32 0.0, %v3074
    %v3076 = vpop.f32.mrf.mxu0
    %v3077 = vadd.f32 0.0, %v3076
    %3078 = vmatmul.bf16.gmra.mxu0 %v2995
    %v3079 = vpop.f32.mrf.mxu0
    %v3080 = vadd.f32 0.0, %v3079
    %v3081 = vpop.f32.mrf.mxu0
    %v3082 = vadd.f32 0.0, %v3081
    %3083 = vmatmul.bf16.gmra.mxu0 %v2998
    %v3084 = vpop.f32.mrf.mxu0
    %v3085 = vadd.f32 0.0, %v3084
    %v3086 = vpop.f32.mrf.mxu0
    %v3087 = vadd.f32 0.0, %v3086
    %3088 = vdwg.mxu0
    %v3089 = vadd.f32 %v2839, %v3010
    %v3090 = vadd.f32 %v2840, %v3012
    %v3091 = vadd.f32 %v2841, %v3015
    %v3092 = vadd.f32 %v2842, %v3017
    %v3093 = vadd.f32 %v2843, %v3020
    %v3094 = vadd.f32 %v2844, %v3022
    %v3095 = vadd.f32 %v2845, %v3025
    %v3096 = vadd.f32 %v2846, %v3027
    %v3097 = vadd.f32 %v2847, %v3030
    %v3098 = vadd.f32 %v2848, %v3032
    %v3099 = vadd.f32 %v2849, %v3035
    %v3100 = vadd.f32 %v2850, %v3037
    %v3101 = vadd.f32 %v2851, %v3040
    %v3102 = vadd.f32 %v2852, %v3042
    %v3103 = vadd.f32 %v2853, %v3045
    %v3104 = vadd.f32 %v2854, %v3047
    %v3105 = vadd.f32 %v2855, %v3050
    %v3106 = vadd.f32 %v2856, %v3052
    %v3107 = vadd.f32 %v2857, %v3055
    %v3108 = vadd.f32 %v2858, %v3057
    %v3109 = vadd.f32 %v2859, %v3060
    %v3110 = vadd.f32 %v2860, %v3062
    %v3111 = vadd.f32 %v2861, %v3065
    %v3112 = vadd.f32 %v2862, %v3067
    %v3113 = vadd.f32 %v2863, %v3070
    %v3114 = vadd.f32 %v2864, %v3072
    %v3115 = vadd.f32 %v2865, %v3075
    %v3116 = vadd.f32 %v2866, %v3077
    %v3117 = vadd.f32 %v2867, %v3080
    %v3118 = vadd.f32 %v2868, %v3082
    %v3119 = vadd.f32 %v2869, %v3085
    %v3120 = vadd.f32 %v2870, %v3087
    %v3121 = vld [vmem:[#allocation3 + $0x21] sm:$0xff]
    %v3122 = vld [vmem:[#allocation3 + $0x29] sm:$0xff]
    %v3123 = vld [vmem:[#allocation3 + $0x31] sm:$0xff]
    %v3124 = vld [vmem:[#allocation3 + $0x39] sm:$0xff]
    %v3125 = vld [vmem:[#allocation3 + $0x41] sm:$0xff]
    %v3126 = vld [vmem:[#allocation3 + $0x49] sm:$0xff]
    %v3127 = vld [vmem:[#allocation3 + $0x51] sm:$0xff]
    %v3128 = vld [vmem:[#allocation3 + $0x59] sm:$0xff]
    %v3129 = vld [vmem:[#allocation3 + $0x61] sm:$0xff]
    %v3130 = vld [vmem:[#allocation3 + $0x69] sm:$0xff]
    %v3131 = vld [vmem:[#allocation3 + $0x71] sm:$0xff]
    %v3132 = vld [vmem:[#allocation3 + $0x79] sm:$0xff]
    %v3133 = vld [vmem:[#allocation3 + $0x81] sm:$0xff]
    %v3134 = vld [vmem:[#allocation3 + $0x89] sm:$0xff]
    %v3135 = vld [vmem:[#allocation3 + $0x91] sm:$0xff]
    %v3136 = vld [vmem:[#allocation3 + $0x99] sm:$0xff]
    %v3137 = vld [vmem:[#allocation3 + $0xa1] sm:$0xff]
    %v3138 = vld [vmem:[#allocation3 + $0xa9] sm:$0xff]
    %v3139 = vld [vmem:[#allocation3 + $0xb1] sm:$0xff]
    %v3140 = vld [vmem:[#allocation3 + $0xb9] sm:$0xff]
    %v3141 = vld [vmem:[#allocation3 + $0xc1] sm:$0xff]
    %v3142 = vld [vmem:[#allocation3 + $0xc9] sm:$0xff]
    %v3143 = vld [vmem:[#allocation3 + $0xd1] sm:$0xff]
    %v3144 = vld [vmem:[#allocation3 + $0xd9] sm:$0xff]
    %v3145 = vld [vmem:[#allocation3 + $0xe1] sm:$0xff]
    %v3146 = vld [vmem:[#allocation3 + $0xe9] sm:$0xff]
    %v3147 = vld [vmem:[#allocation3 + $0xf1] sm:$0xff]
    %v3148 = vld [vmem:[#allocation3 + $0xf9] sm:$0xff]
    %v3149 = vld [vmem:[#allocation3 + $0x101] sm:$0xff]
    %v3150 = vld [vmem:[#allocation3 + $0x109] sm:$0xff]
    %v3151 = vld [vmem:[#allocation3 + $0x111] sm:$0xff]
    %v3152 = vld [vmem:[#allocation3 + $0x119] sm:$0xff]
    %v3153 = vpack.c.bf16 %v3122, %v3121
    %v3154 = vpack.c.bf16 %v3124, %v3123
    %v3155 = vpack.c.bf16 %v3126, %v3125
    %v3156 = vpack.c.bf16 %v3128, %v3127
    %v3157 = vpack.c.bf16 %v3130, %v3129
    %v3158 = vpack.c.bf16 %v3132, %v3131
    %v3159 = vpack.c.bf16 %v3134, %v3133
    %v3160 = vpack.c.bf16 %v3136, %v3135
    %v3161 = vpack.c.bf16 %v3138, %v3137
    %v3162 = vpack.c.bf16 %v3140, %v3139
    %v3163 = vpack.c.bf16 %v3142, %v3141
    %v3164 = vpack.c.bf16 %v3144, %v3143
    %v3165 = vpack.c.bf16 %v3146, %v3145
    %v3166 = vpack.c.bf16 %v3148, %v3147
    %v3167 = vpack.c.bf16 %v3150, %v3149
    %v3168 = vpack.c.bf16 %v3152, %v3151
    %s3169 = scalar_lea.vmem %s3, 160
    %v3170 = vld [vmem:[%s3169] sm:$0xf]
    %v3171 = vld [vmem:[%s3169 + $0x4] sm:$0xf]
    %v3172 = vld [vmem:[%s3169 + $0x8] sm:$0xf]
    %v3173 = vld [vmem:[%s3169 + $0xc] sm:$0xf]
    %v3174 = vld [vmem:[%s3169 + $0x10] sm:$0xf]
    %v3175 = vld [vmem:[%s3169 + $0x14] sm:$0xf]
    %v3176 = vld [vmem:[%s3169 + $0x18] sm:$0xf]
    %v3177 = vld [vmem:[%s3169 + $0x1c] sm:$0xf]
    %v3186 = vunpack.c.l.b16 %v3170
    %v3187 = vunpack.c.l.b16 %v3171
    %v3188 = vunpack.c.l.b16 %v3172
    %v3189 = vunpack.c.l.b16 %v3173
    %v3190 = vunpack.c.l.b16 %v3174
    %v3191 = vunpack.c.l.b16 %v3175
    %v3192 = vunpack.c.l.b16 %v3176
    %v3193 = vunpack.c.l.b16 %v3177
    %v3194 = vpack.c.b16 %v3187, %v3186
    %v3195 = vpack.c.b16 %v3189, %v3188
    %v3196 = vpack.c.b16 %v3191, %v3190
    %v3197 = vpack.c.b16 %v3193, %v3192
    %v3203 = vsel %vm33, %v3153, 0
    %v3206 = vsel %vm33, %v3154, 0
    %v3209 = vsel %vm33, %v3155, 0
    %v3212 = vsel %vm33, %v3156, 0
    %v3215 = vsel %vm33, %v3157, 0
    %v3218 = vsel %vm33, %v3158, 0
    %v3221 = vsel %vm33, %v3159, 0
    %v3224 = vsel %vm33, %v3160, 0
    %v3227 = vsel %vm33, %v3161, 0
    %v3230 = vsel %vm33, %v3162, 0
    %v3233 = vsel %vm33, %v3163, 0
    %v3236 = vsel %vm33, %v3164, 0
    %v3239 = vsel %vm33, %v3165, 0
    %v3242 = vsel %vm33, %v3166, 0
    %v3245 = vsel %vm33, %v3167, 0
    %v3248 = vsel %vm33, %v3168, 0
    %3250 = vmatpush.bf16.msra.mxu0 0
    %3251 = vmatpush.bf16.msra.mxu0 0
    %3252 = vmatpush.bf16.msra.mxu0 0
    %3253 = vmatpush.bf16.msra.mxu0 0
    %3254 = vmatpush.bf16.msra.mxu0 %v3197
    %3255 = vmatpush.bf16.msra.mxu0 %v3196
    %3256 = vmatpush.bf16.msra.mxu0 %v3195
    %3257 = vmatpush.bf16.msra.mxu0 %v3194
    %3258 = vmatmul.bf16.gmra.mxu0 %v3203
    %v3259 = vpop.f32.mrf.mxu0
    %v3260 = vadd.f32 0.0, %v3259
    %v3261 = vpop.f32.mrf.mxu0
    %v3262 = vadd.f32 0.0, %v3261
    %3263 = vmatmul.bf16.gmra.mxu0 %v3206
    %v3264 = vpop.f32.mrf.mxu0
    %v3265 = vadd.f32 0.0, %v3264
    %v3266 = vpop.f32.mrf.mxu0
    %v3267 = vadd.f32 0.0, %v3266
    %3268 = vmatmul.bf16.gmra.mxu0 %v3209
    %v3269 = vpop.f32.mrf.mxu0
    %v3270 = vadd.f32 0.0, %v3269
    %v3271 = vpop.f32.mrf.mxu0
    %v3272 = vadd.f32 0.0, %v3271
    %3273 = vmatmul.bf16.gmra.mxu0 %v3212
    %v3274 = vpop.f32.mrf.mxu0
    %v3275 = vadd.f32 0.0, %v3274
    %v3276 = vpop.f32.mrf.mxu0
    %v3277 = vadd.f32 0.0, %v3276
    %3278 = vmatmul.bf16.gmra.mxu0 %v3215
    %v3279 = vpop.f32.mrf.mxu0
    %v3280 = vadd.f32 0.0, %v3279
    %v3281 = vpop.f32.mrf.mxu0
    %v3282 = vadd.f32 0.0, %v3281
    %3283 = vmatmul.bf16.gmra.mxu0 %v3218
    %v3284 = vpop.f32.mrf.mxu0
    %v3285 = vadd.f32 0.0, %v3284
    %v3286 = vpop.f32.mrf.mxu0
    %v3287 = vadd.f32 0.0, %v3286
    %3288 = vmatmul.bf16.gmra.mxu0 %v3221
    %v3289 = vpop.f32.mrf.mxu0
    %v3290 = vadd.f32 0.0, %v3289
    %v3291 = vpop.f32.mrf.mxu0
    %v3292 = vadd.f32 0.0, %v3291
    %3293 = vmatmul.bf16.gmra.mxu0 %v3224
    %v3294 = vpop.f32.mrf.mxu0
    %v3295 = vadd.f32 0.0, %v3294
    %v3296 = vpop.f32.mrf.mxu0
    %v3297 = vadd.f32 0.0, %v3296
    %3298 = vmatmul.bf16.gmra.mxu0 %v3227
    %v3299 = vpop.f32.mrf.mxu0
    %v3300 = vadd.f32 0.0, %v3299
    %v3301 = vpop.f32.mrf.mxu0
    %v3302 = vadd.f32 0.0, %v3301
    %3303 = vmatmul.bf16.gmra.mxu0 %v3230
    %v3304 = vpop.f32.mrf.mxu0
    %v3305 = vadd.f32 0.0, %v3304
    %v3306 = vpop.f32.mrf.mxu0
    %v3307 = vadd.f32 0.0, %v3306
    %3308 = vmatmul.bf16.gmra.mxu0 %v3233
    %v3309 = vpop.f32.mrf.mxu0
    %v3310 = vadd.f32 0.0, %v3309
    %v3311 = vpop.f32.mrf.mxu0
    %v3312 = vadd.f32 0.0, %v3311
    %3313 = vmatmul.bf16.gmra.mxu0 %v3236
    %v3314 = vpop.f32.mrf.mxu0
    %v3315 = vadd.f32 0.0, %v3314
    %v3316 = vpop.f32.mrf.mxu0
    %v3317 = vadd.f32 0.0, %v3316
    %3318 = vmatmul.bf16.gmra.mxu0 %v3239
    %v3319 = vpop.f32.mrf.mxu0
    %v3320 = vadd.f32 0.0, %v3319
    %v3321 = vpop.f32.mrf.mxu0
    %v3322 = vadd.f32 0.0, %v3321
    %3323 = vmatmul.bf16.gmra.mxu0 %v3242
    %v3324 = vpop.f32.mrf.mxu0
    %v3325 = vadd.f32 0.0, %v3324
    %v3326 = vpop.f32.mrf.mxu0
    %v3327 = vadd.f32 0.0, %v3326
    %3328 = vmatmul.bf16.gmra.mxu0 %v3245
    %v3329 = vpop.f32.mrf.mxu0
    %v3330 = vadd.f32 0.0, %v3329
    %v3331 = vpop.f32.mrf.mxu0
    %v3332 = vadd.f32 0.0, %v3331
    %3333 = vmatmul.bf16.gmra.mxu0 %v3248
    %v3334 = vpop.f32.mrf.mxu0
    %v3335 = vadd.f32 0.0, %v3334
    %v3336 = vpop.f32.mrf.mxu0
    %v3337 = vadd.f32 0.0, %v3336
    %3338 = vdwg.mxu0
    %v3339 = vadd.f32 %v3089, %v3260
    %v3340 = vadd.f32 %v3090, %v3262
    %v3341 = vadd.f32 %v3091, %v3265
    %v3342 = vadd.f32 %v3092, %v3267
    %v3343 = vadd.f32 %v3093, %v3270
    %v3344 = vadd.f32 %v3094, %v3272
    %v3345 = vadd.f32 %v3095, %v3275
    %v3346 = vadd.f32 %v3096, %v3277
    %v3347 = vadd.f32 %v3097, %v3280
    %v3348 = vadd.f32 %v3098, %v3282
    %v3349 = vadd.f32 %v3099, %v3285
    %v3350 = vadd.f32 %v3100, %v3287
    %v3351 = vadd.f32 %v3101, %v3290
    %v3352 = vadd.f32 %v3102, %v3292
    %v3353 = vadd.f32 %v3103, %v3295
    %v3354 = vadd.f32 %v3104, %v3297
    %v3355 = vadd.f32 %v3105, %v3300
    %v3356 = vadd.f32 %v3106, %v3302
    %v3357 = vadd.f32 %v3107, %v3305
    %v3358 = vadd.f32 %v3108, %v3307
    %v3359 = vadd.f32 %v3109, %v3310
    %v3360 = vadd.f32 %v3110, %v3312
    %v3361 = vadd.f32 %v3111, %v3315
    %v3362 = vadd.f32 %v3112, %v3317
    %v3363 = vadd.f32 %v3113, %v3320
    %v3364 = vadd.f32 %v3114, %v3322
    %v3365 = vadd.f32 %v3115, %v3325
    %v3366 = vadd.f32 %v3116, %v3327
    %v3367 = vadd.f32 %v3117, %v3330
    %v3368 = vadd.f32 %v3118, %v3332
    %v3369 = vadd.f32 %v3119, %v3335
    %v3370 = vadd.f32 %v3120, %v3337
    %v3371 = vld [vmem:[#allocation3 + $0x2f] sm:$0xff]
    %v3372 = vld [vmem:[#allocation3 + $0x37] sm:$0xff]
    %v3373 = vld [vmem:[#allocation3 + $0x3f] sm:$0xff]
    %v3374 = vld [vmem:[#allocation3 + $0x47] sm:$0xff]
    %v3375 = vld [vmem:[#allocation3 + $0x4f] sm:$0xff]
    %v3376 = vld [vmem:[#allocation3 + $0x57] sm:$0xff]
    %v3377 = vld [vmem:[#allocation3 + $0x5f] sm:$0xff]
    %v3378 = vld [vmem:[#allocation3 + $0x67] sm:$0xff]
    %v3379 = vld [vmem:[#allocation3 + $0x6f] sm:$0xff]
    %v3380 = vld [vmem:[#allocation3 + $0x77] sm:$0xff]
    %v3381 = vld [vmem:[#allocation3 + $0x7f] sm:$0xff]
    %v3382 = vld [vmem:[#allocation3 + $0x87] sm:$0xff]
    %v3383 = vld [vmem:[#allocation3 + $0x8f] sm:$0xff]
    %v3384 = vld [vmem:[#allocation3 + $0x97] sm:$0xff]
    %v3385 = vld [vmem:[#allocation3 + $0x9f] sm:$0xff]
    %v3386 = vld [vmem:[#allocation3 + $0xa7] sm:$0xff]
    %v3387 = vld [vmem:[#allocation3 + $0xaf] sm:$0xff]
    %v3388 = vld [vmem:[#allocation3 + $0xb7] sm:$0xff]
    %v3389 = vld [vmem:[#allocation3 + $0xbf] sm:$0xff]
    %v3390 = vld [vmem:[#allocation3 + $0xc7] sm:$0xff]
    %v3391 = vld [vmem:[#allocation3 + $0xcf] sm:$0xff]
    %v3392 = vld [vmem:[#allocation3 + $0xd7] sm:$0xff]
    %v3393 = vld [vmem:[#allocation3 + $0xdf] sm:$0xff]
    %v3394 = vld [vmem:[#allocation3 + $0xe7] sm:$0xff]
    %v3395 = vld [vmem:[#allocation3 + $0xef] sm:$0xff]
    %v3396 = vld [vmem:[#allocation3 + $0xf7] sm:$0xff]
    %v3397 = vld [vmem:[#allocation3 + $0xff] sm:$0xff]
    %v3398 = vld [vmem:[#allocation3 + $0x107] sm:$0xff]
    %v3399 = vld [vmem:[#allocation3 + $0x10f] sm:$0xff]
    %v3400 = vld [vmem:[#allocation3 + $0x117] sm:$0xff]
    %v3401 = vld [vmem:[#allocation3 + $0x11f] sm:$0xff]
    %v3402 = vld [vmem:[#allocation3 + $0x127] sm:$0xff]
    %v3403 = vpack.c.bf16 %v3372, %v3371
    %v3404 = vpack.c.bf16 %v3374, %v3373
    %v3405 = vpack.c.bf16 %v3376, %v3375
    %v3406 = vpack.c.bf16 %v3378, %v3377
    %v3407 = vpack.c.bf16 %v3380, %v3379
    %v3408 = vpack.c.bf16 %v3382, %v3381
    %v3409 = vpack.c.bf16 %v3384, %v3383
    %v3410 = vpack.c.bf16 %v3386, %v3385
    %v3411 = vpack.c.bf16 %v3388, %v3387
    %v3412 = vpack.c.bf16 %v3390, %v3389
    %v3413 = vpack.c.bf16 %v3392, %v3391
    %v3414 = vpack.c.bf16 %v3394, %v3393
    %v3415 = vpack.c.bf16 %v3396, %v3395
    %v3416 = vpack.c.bf16 %v3398, %v3397
    %v3417 = vpack.c.bf16 %v3400, %v3399
    %v3418 = vpack.c.bf16 %v3402, %v3401
    %s3419 = scalar_lea.vmem %s3, 192
    %v3420 = vld [vmem:[%s3419] sm:$0xf]
    %v3421 = vld [vmem:[%s3419 + $0x4] sm:$0xf]
    %v3422 = vld [vmem:[%s3419 + $0x8] sm:$0xf]
    %v3423 = vld [vmem:[%s3419 + $0xc] sm:$0xf]
    %v3424 = vld [vmem:[%s3419 + $0x10] sm:$0xf]
    %v3425 = vld [vmem:[%s3419 + $0x14] sm:$0xf]
    %v3426 = vld [vmem:[%s3419 + $0x18] sm:$0xf]
    %v3427 = vld [vmem:[%s3419 + $0x1c] sm:$0xf]
    %v3436 = vunpack.c.l.b16 %v3420
    %v3437 = vunpack.c.l.b16 %v3421
    %v3438 = vunpack.c.l.b16 %v3422
    %v3439 = vunpack.c.l.b16 %v3423
    %v3440 = vunpack.c.l.b16 %v3424
    %v3441 = vunpack.c.l.b16 %v3425
    %v3442 = vunpack.c.l.b16 %v3426
    %v3443 = vunpack.c.l.b16 %v3427
    %v3444 = vpack.c.b16 %v3437, %v3436
    %v3445 = vpack.c.b16 %v3439, %v3438
    %v3446 = vpack.c.b16 %v3441, %v3440
    %v3447 = vpack.c.b16 %v3443, %v3442
    %v3453 = vsel %vm33, %v3403, 0
    %v3456 = vsel %vm33, %v3404, 0
    %v3459 = vsel %vm33, %v3405, 0
    %v3462 = vsel %vm33, %v3406, 0
    %v3465 = vsel %vm33, %v3407, 0
    %v3468 = vsel %vm33, %v3408, 0
    %v3471 = vsel %vm33, %v3409, 0
    %v3474 = vsel %vm33, %v3410, 0
    %v3477 = vsel %vm33, %v3411, 0
    %v3480 = vsel %vm33, %v3412, 0
    %v3483 = vsel %vm33, %v3413, 0
    %v3486 = vsel %vm33, %v3414, 0
    %v3489 = vsel %vm33, %v3415, 0
    %v3492 = vsel %vm33, %v3416, 0
    %v3495 = vsel %vm33, %v3417, 0
    %v3498 = vsel %vm33, %v3418, 0
    %3500 = vmatpush.bf16.msra.mxu0 0
    %3501 = vmatpush.bf16.msra.mxu0 0
    %3502 = vmatpush.bf16.msra.mxu0 0
    %3503 = vmatpush.bf16.msra.mxu0 0
    %3504 = vmatpush.bf16.msra.mxu0 %v3447
    %3505 = vmatpush.bf16.msra.mxu0 %v3446
    %3506 = vmatpush.bf16.msra.mxu0 %v3445
    %3507 = vmatpush.bf16.msra.mxu0 %v3444
    %3508 = vmatmul.bf16.gmra.mxu0 %v3453
    %v3509 = vpop.f32.mrf.mxu0
    %v3510 = vadd.f32 0.0, %v3509
    %v3511 = vpop.f32.mrf.mxu0
    %v3512 = vadd.f32 0.0, %v3511
    %3513 = vmatmul.bf16.gmra.mxu0 %v3456
    %v3514 = vpop.f32.mrf.mxu0
    %v3515 = vadd.f32 0.0, %v3514
    %v3516 = vpop.f32.mrf.mxu0
    %v3517 = vadd.f32 0.0, %v3516
    %3518 = vmatmul.bf16.gmra.mxu0 %v3459
    %v3519 = vpop.f32.mrf.mxu0
    %v3520 = vadd.f32 0.0, %v3519
    %v3521 = vpop.f32.mrf.mxu0
    %v3522 = vadd.f32 0.0, %v3521
    %3523 = vmatmul.bf16.gmra.mxu0 %v3462
    %v3524 = vpop.f32.mrf.mxu0
    %v3525 = vadd.f32 0.0, %v3524
    %v3526 = vpop.f32.mrf.mxu0
    %v3527 = vadd.f32 0.0, %v3526
    %3528 = vmatmul.bf16.gmra.mxu0 %v3465
    %v3529 = vpop.f32.mrf.mxu0
    %v3530 = vadd.f32 0.0, %v3529
    %v3531 = vpop.f32.mrf.mxu0
    %v3532 = vadd.f32 0.0, %v3531
    %3533 = vmatmul.bf16.gmra.mxu0 %v3468
    %v3534 = vpop.f32.mrf.mxu0
    %v3535 = vadd.f32 0.0, %v3534
    %v3536 = vpop.f32.mrf.mxu0
    %v3537 = vadd.f32 0.0, %v3536
    %3538 = vmatmul.bf16.gmra.mxu0 %v3471
    %v3539 = vpop.f32.mrf.mxu0
    %v3540 = vadd.f32 0.0, %v3539
    %v3541 = vpop.f32.mrf.mxu0
    %v3542 = vadd.f32 0.0, %v3541
    %3543 = vmatmul.bf16.gmra.mxu0 %v3474
    %v3544 = vpop.f32.mrf.mxu0
    %v3545 = vadd.f32 0.0, %v3544
    %v3546 = vpop.f32.mrf.mxu0
    %v3547 = vadd.f32 0.0, %v3546
    %3548 = vmatmul.bf16.gmra.mxu0 %v3477
    %v3549 = vpop.f32.mrf.mxu0
    %v3550 = vadd.f32 0.0, %v3549
    %v3551 = vpop.f32.mrf.mxu0
    %v3552 = vadd.f32 0.0, %v3551
    %3553 = vmatmul.bf16.gmra.mxu0 %v3480
    %v3554 = vpop.f32.mrf.mxu0
    %v3555 = vadd.f32 0.0, %v3554
    %v3556 = vpop.f32.mrf.mxu0
    %v3557 = vadd.f32 0.0, %v3556
    %3558 = vmatmul.bf16.gmra.mxu0 %v3483
    %v3559 = vpop.f32.mrf.mxu0
    %v3560 = vadd.f32 0.0, %v3559
    %v3561 = vpop.f32.mrf.mxu0
    %v3562 = vadd.f32 0.0, %v3561
    %3563 = vmatmul.bf16.gmra.mxu0 %v3486
    %v3564 = vpop.f32.mrf.mxu0
    %v3565 = vadd.f32 0.0, %v3564
    %v3566 = vpop.f32.mrf.mxu0
    %v3567 = vadd.f32 0.0, %v3566
    %3568 = vmatmul.bf16.gmra.mxu0 %v3489
    %v3569 = vpop.f32.mrf.mxu0
    %v3570 = vadd.f32 0.0, %v3569
    %v3571 = vpop.f32.mrf.mxu0
    %v3572 = vadd.f32 0.0, %v3571
    %3573 = vmatmul.bf16.gmra.mxu0 %v3492
    %v3574 = vpop.f32.mrf.mxu0
    %v3575 = vadd.f32 0.0, %v3574
    %v3576 = vpop.f32.mrf.mxu0
    %v3577 = vadd.f32 0.0, %v3576
    %3578 = vmatmul.bf16.gmra.mxu0 %v3495
    %v3579 = vpop.f32.mrf.mxu0
    %v3580 = vadd.f32 0.0, %v3579
    %v3581 = vpop.f32.mrf.mxu0
    %v3582 = vadd.f32 0.0, %v3581
    %3583 = vmatmul.bf16.gmra.mxu0 %v3498
    %v3584 = vpop.f32.mrf.mxu0
    %v3585 = vadd.f32 0.0, %v3584
    %v3586 = vpop.f32.mrf.mxu0
    %v3587 = vadd.f32 0.0, %v3586
    %3588 = vdwg.mxu0
    %v3589 = vadd.f32 %v3339, %v3510
    %v3590 = vadd.f32 %v3340, %v3512
    %v3591 = vadd.f32 %v3341, %v3515
    %v3592 = vadd.f32 %v3342, %v3517
    %v3593 = vadd.f32 %v3343, %v3520
    %v3594 = vadd.f32 %v3344, %v3522
    %v3595 = vadd.f32 %v3345, %v3525
    %v3596 = vadd.f32 %v3346, %v3527
    %v3597 = vadd.f32 %v3347, %v3530
    %v3598 = vadd.f32 %v3348, %v3532
    %v3599 = vadd.f32 %v3349, %v3535
    %v3600 = vadd.f32 %v3350, %v3537
    %v3601 = vadd.f32 %v3351, %v3540
    %v3602 = vadd.f32 %v3352, %v3542
    %v3603 = vadd.f32 %v3353, %v3545
    %v3604 = vadd.f32 %v3354, %v3547
    %v3605 = vadd.f32 %v3355, %v3550
    %v3606 = vadd.f32 %v3356, %v3552
    %v3607 = vadd.f32 %v3357, %v3555
    %v3608 = vadd.f32 %v3358, %v3557
    %v3609 = vadd.f32 %v3359, %v3560
    %v3610 = vadd.f32 %v3360, %v3562
    %v3611 = vadd.f32 %v3361, %v3565
    %v3612 = vadd.f32 %v3362, %v3567
    %v3613 = vadd.f32 %v3363, %v3570
    %v3614 = vadd.f32 %v3364, %v3572
    %v3615 = vadd.f32 %v3365, %v3575
    %v3616 = vadd.f32 %v3366, %v3577
    %v3617 = vadd.f32 %v3367, %v3580
    %v3618 = vadd.f32 %v3368, %v3582
    %v3619 = vadd.f32 %v3369, %v3585
    %v3620 = vadd.f32 %v3370, %v3587
    %v3621 = vld [vmem:[#allocation3 + $0x30] sm:$0xff]
    %v3622 = vld [vmem:[#allocation3 + $0x38] sm:$0xff]
    %v3623 = vld [vmem:[#allocation3 + $0x40] sm:$0xff]
    %v3624 = vld [vmem:[#allocation3 + $0x48] sm:$0xff]
    %v3625 = vld [vmem:[#allocation3 + $0x50] sm:$0xff]
    %v3626 = vld [vmem:[#allocation3 + $0x58] sm:$0xff]
    %v3627 = vld [vmem:[#allocation3 + $0x60] sm:$0xff]
    %v3628 = vld [vmem:[#allocation3 + $0x68] sm:$0xff]
    %v3629 = vld [vmem:[#allocation3 + $0x70] sm:$0xff]
    %v3630 = vld [vmem:[#allocation3 + $0x78] sm:$0xff]
    %v3631 = vld [vmem:[#allocation3 + $0x80] sm:$0xff]
    %v3632 = vld [vmem:[#allocation3 + $0x88] sm:$0xff]
    %v3633 = vld [vmem:[#allocation3 + $0x90] sm:$0xff]
    %v3634 = vld [vmem:[#allocation3 + $0x98] sm:$0xff]
    %v3635 = vld [vmem:[#allocation3 + $0xa0] sm:$0xff]
    %v3636 = vld [vmem:[#allocation3 + $0xa8] sm:$0xff]
    %v3637 = vld [vmem:[#allocation3 + $0xb0] sm:$0xff]
    %v3638 = vld [vmem:[#allocation3 + $0xb8] sm:$0xff]
    %v3639 = vld [vmem:[#allocation3 + $0xc0] sm:$0xff]
    %v3640 = vld [vmem:[#allocation3 + $0xc8] sm:$0xff]
    %v3641 = vld [vmem:[#allocation3 + $0xd0] sm:$0xff]
    %v3642 = vld [vmem:[#allocation3 + $0xd8] sm:$0xff]
    %v3643 = vld [vmem:[#allocation3 + $0xe0] sm:$0xff]
    %v3644 = vld [vmem:[#allocation3 + $0xe8] sm:$0xff]
    %v3645 = vld [vmem:[#allocation3 + $0xf0] sm:$0xff]
    %v3646 = vld [vmem:[#allocation3 + $0xf8] sm:$0xff]
    %v3647 = vld [vmem:[#allocation3 + $0x100] sm:$0xff]
    %v3648 = vld [vmem:[#allocation3 + $0x108] sm:$0xff]
    %v3649 = vld [vmem:[#allocation3 + $0x110] sm:$0xff]
    %v3650 = vld [vmem:[#allocation3 + $0x118] sm:$0xff]
    %v3651 = vld [vmem:[#allocation3 + $0x120] sm:$0xff]
    %v3652 = vld [vmem:[#allocation3 + $0x128] sm:$0xff]
    %v3653 = vpack.c.bf16 %v3622, %v3621
    %v3654 = vpack.c.bf16 %v3624, %v3623
    %v3655 = vpack.c.bf16 %v3626, %v3625
    %v3656 = vpack.c.bf16 %v3628, %v3627
    %v3657 = vpack.c.bf16 %v3630, %v3629
    %v3658 = vpack.c.bf16 %v3632, %v3631
    %v3659 = vpack.c.bf16 %v3634, %v3633
    %v3660 = vpack.c.bf16 %v3636, %v3635
    %v3661 = vpack.c.bf16 %v3638, %v3637
    %v3662 = vpack.c.bf16 %v3640, %v3639
    %v3663 = vpack.c.bf16 %v3642, %v3641
    %v3664 = vpack.c.bf16 %v3644, %v3643
    %v3665 = vpack.c.bf16 %v3646, %v3645
    %v3666 = vpack.c.bf16 %v3648, %v3647
    %v3667 = vpack.c.bf16 %v3650, %v3649
    %v3668 = vpack.c.bf16 %v3652, %v3651
    %s3669 = scalar_lea.vmem %s3, 224
    %v3670 = vld [vmem:[%s3669] sm:$0xf]
    %v3671 = vld [vmem:[%s3669 + $0x4] sm:$0xf]
    %v3672 = vld [vmem:[%s3669 + $0x8] sm:$0xf]
    %v3673 = vld [vmem:[%s3669 + $0xc] sm:$0xf]
    %v3674 = vld [vmem:[%s3669 + $0x10] sm:$0xf]
    %v3675 = vld [vmem:[%s3669 + $0x14] sm:$0xf]
    %v3676 = vld [vmem:[%s3669 + $0x18] sm:$0xf]
    %v3677 = vld [vmem:[%s3669 + $0x1c] sm:$0xf]
    %v3686 = vunpack.c.l.b16 %v3670
    %v3687 = vunpack.c.l.b16 %v3671
    %v3688 = vunpack.c.l.b16 %v3672
    %v3689 = vunpack.c.l.b16 %v3673
    %v3690 = vunpack.c.l.b16 %v3674
    %v3691 = vunpack.c.l.b16 %v3675
    %v3692 = vunpack.c.l.b16 %v3676
    %v3693 = vunpack.c.l.b16 %v3677
    %v3694 = vpack.c.b16 %v3687, %v3686
    %v3695 = vpack.c.b16 %v3689, %v3688
    %v3696 = vpack.c.b16 %v3691, %v3690
    %v3697 = vpack.c.b16 %v3693, %v3692
    %v3703 = vsel %vm33, %v3653, 0
    %v3706 = vsel %vm33, %v3654, 0
    %v3709 = vsel %vm33, %v3655, 0
    %v3712 = vsel %vm33, %v3656, 0
    %v3715 = vsel %vm33, %v3657, 0
    %v3718 = vsel %vm33, %v3658, 0
    %v3721 = vsel %vm33, %v3659, 0
    %v3724 = vsel %vm33, %v3660, 0
    %v3727 = vsel %vm33, %v3661, 0
    %v3730 = vsel %vm33, %v3662, 0
    %v3733 = vsel %vm33, %v3663, 0
    %v3736 = vsel %vm33, %v3664, 0
    %v3739 = vsel %vm33, %v3665, 0
    %v3742 = vsel %vm33, %v3666, 0
    %v3745 = vsel %vm33, %v3667, 0
    %v3748 = vsel %vm33, %v3668, 0
    %3750 = vmatpush.bf16.msra.mxu0 0
    %3751 = vmatpush.bf16.msra.mxu0 0
    %3752 = vmatpush.bf16.msra.mxu0 0
    %3753 = vmatpush.bf16.msra.mxu0 0
    %3754 = vmatpush.bf16.msra.mxu0 %v3697
    %3755 = vmatpush.bf16.msra.mxu0 %v3696
    %3756 = vmatpush.bf16.msra.mxu0 %v3695
    %3757 = vmatpush.bf16.msra.mxu0 %v3694
    %3758 = vmatmul.bf16.gmra.mxu0 %v3703
    %v3759 = vpop.f32.mrf.mxu0
    %v3760 = vadd.f32 0.0, %v3759
    %v3761 = vpop.f32.mrf.mxu0
    %v3762 = vadd.f32 0.0, %v3761
    %3763 = vmatmul.bf16.gmra.mxu0 %v3706
    %v3764 = vpop.f32.mrf.mxu0
    %v3765 = vadd.f32 0.0, %v3764
    %v3766 = vpop.f32.mrf.mxu0
    %v3767 = vadd.f32 0.0, %v3766
    %3768 = vmatmul.bf16.gmra.mxu0 %v3709
    %v3769 = vpop.f32.mrf.mxu0
    %v3770 = vadd.f32 0.0, %v3769
    %v3771 = vpop.f32.mrf.mxu0
    %v3772 = vadd.f32 0.0, %v3771
    %3773 = vmatmul.bf16.gmra.mxu0 %v3712
    %v3774 = vpop.f32.mrf.mxu0
    %v3775 = vadd.f32 0.0, %v3774
    %v3776 = vpop.f32.mrf.mxu0
    %v3777 = vadd.f32 0.0, %v3776
    %3778 = vmatmul.bf16.gmra.mxu0 %v3715
    %v3779 = vpop.f32.mrf.mxu0
    %v3780 = vadd.f32 0.0, %v3779
    %v3781 = vpop.f32.mrf.mxu0
    %v3782 = vadd.f32 0.0, %v3781
    %3783 = vmatmul.bf16.gmra.mxu0 %v3718
    %v3784 = vpop.f32.mrf.mxu0
    %v3785 = vadd.f32 0.0, %v3784
    %v3786 = vpop.f32.mrf.mxu0
    %v3787 = vadd.f32 0.0, %v3786
    %3788 = vmatmul.bf16.gmra.mxu0 %v3721
    %v3789 = vpop.f32.mrf.mxu0
    %v3790 = vadd.f32 0.0, %v3789
    %v3791 = vpop.f32.mrf.mxu0
    %v3792 = vadd.f32 0.0, %v3791
    %3793 = vmatmul.bf16.gmra.mxu0 %v3724
    %v3794 = vpop.f32.mrf.mxu0
    %v3795 = vadd.f32 0.0, %v3794
    %v3796 = vpop.f32.mrf.mxu0
    %v3797 = vadd.f32 0.0, %v3796
    %3798 = vmatmul.bf16.gmra.mxu0 %v3727
    %v3799 = vpop.f32.mrf.mxu0
    %v3800 = vadd.f32 0.0, %v3799
    %v3801 = vpop.f32.mrf.mxu0
    %v3802 = vadd.f32 0.0, %v3801
    %3803 = vmatmul.bf16.gmra.mxu0 %v3730
    %v3804 = vpop.f32.mrf.mxu0
    %v3805 = vadd.f32 0.0, %v3804
    %v3806 = vpop.f32.mrf.mxu0
    %v3807 = vadd.f32 0.0, %v3806
    %3808 = vmatmul.bf16.gmra.mxu0 %v3733
    %v3809 = vpop.f32.mrf.mxu0
    %v3810 = vadd.f32 0.0, %v3809
    %v3811 = vpop.f32.mrf.mxu0
    %v3812 = vadd.f32 0.0, %v3811
    %3813 = vmatmul.bf16.gmra.mxu0 %v3736
    %v3814 = vpop.f32.mrf.mxu0
    %v3815 = vadd.f32 0.0, %v3814
    %v3816 = vpop.f32.mrf.mxu0
    %v3817 = vadd.f32 0.0, %v3816
    %3818 = vmatmul.bf16.gmra.mxu0 %v3739
    %v3819 = vpop.f32.mrf.mxu0
    %v3820 = vadd.f32 0.0, %v3819
    %v3821 = vpop.f32.mrf.mxu0
    %v3822 = vadd.f32 0.0, %v3821
    %3823 = vmatmul.bf16.gmra.mxu0 %v3742
    %v3824 = vpop.f32.mrf.mxu0
    %v3825 = vadd.f32 0.0, %v3824
    %v3826 = vpop.f32.mrf.mxu0
    %v3827 = vadd.f32 0.0, %v3826
    %3828 = vmatmul.bf16.gmra.mxu0 %v3745
    %v3829 = vpop.f32.mrf.mxu0
    %v3830 = vadd.f32 0.0, %v3829
    %v3831 = vpop.f32.mrf.mxu0
    %v3832 = vadd.f32 0.0, %v3831
    %3833 = vmatmul.bf16.gmra.mxu0 %v3748
    %v3834 = vpop.f32.mrf.mxu0
    %v3835 = vadd.f32 0.0, %v3834
    %v3836 = vpop.f32.mrf.mxu0
    %v3837 = vadd.f32 0.0, %v3836
    %3838 = vdwg.mxu0
    %v3839 = vadd.f32 %v3589, %v3760
    %v3840 = vadd.f32 %v3590, %v3762
    %v3841 = vadd.f32 %v3591, %v3765
    %v3842 = vadd.f32 %v3592, %v3767
    %v3843 = vadd.f32 %v3593, %v3770
    %v3844 = vadd.f32 %v3594, %v3772
    %v3845 = vadd.f32 %v3595, %v3775
    %v3846 = vadd.f32 %v3596, %v3777
    %v3847 = vadd.f32 %v3597, %v3780
    %v3848 = vadd.f32 %v3598, %v3782
    %v3849 = vadd.f32 %v3599, %v3785
    %v3850 = vadd.f32 %v3600, %v3787
    %v3851 = vadd.f32 %v3601, %v3790
    %v3852 = vadd.f32 %v3602, %v3792
    %v3853 = vadd.f32 %v3603, %v3795
    %v3854 = vadd.f32 %v3604, %v3797
    %v3855 = vadd.f32 %v3605, %v3800
    %v3856 = vadd.f32 %v3606, %v3802
    %v3857 = vadd.f32 %v3607, %v3805
    %v3858 = vadd.f32 %v3608, %v3807
    %v3859 = vadd.f32 %v3609, %v3810
    %v3860 = vadd.f32 %v3610, %v3812
    %v3861 = vadd.f32 %v3611, %v3815
    %v3862 = vadd.f32 %v3612, %v3817
    %v3863 = vadd.f32 %v3613, %v3820
    %v3864 = vadd.f32 %v3614, %v3822
    %v3865 = vadd.f32 %v3615, %v3825
    %v3866 = vadd.f32 %v3616, %v3827
    %v3867 = vadd.f32 %v3617, %v3830
    %v3868 = vadd.f32 %v3618, %v3832
    %v3869 = vadd.f32 %v3619, %v3835
    %v3870 = vadd.f32 %v3620, %v3837
    %v3871 = vld [vmem:[#allocation3 + $0x31] sm:$0xff]
    %v3872 = vld [vmem:[#allocation3 + $0x39] sm:$0xff]
    %v3873 = vld [vmem:[#allocation3 + $0x41] sm:$0xff]
    %v3874 = vld [vmem:[#allocation3 + $0x49] sm:$0xff]
    %v3875 = vld [vmem:[#allocation3 + $0x51] sm:$0xff]
    %v3876 = vld [vmem:[#allocation3 + $0x59] sm:$0xff]
    %v3877 = vld [vmem:[#allocation3 + $0x61] sm:$0xff]
    %v3878 = vld [vmem:[#allocation3 + $0x69] sm:$0xff]
    %v3879 = vld [vmem:[#allocation3 + $0x71] sm:$0xff]
    %v3880 = vld [vmem:[#allocation3 + $0x79] sm:$0xff]
    %v3881 = vld [vmem:[#allocation3 + $0x81] sm:$0xff]
    %v3882 = vld [vmem:[#allocation3 + $0x89] sm:$0xff]
    %v3883 = vld [vmem:[#allocation3 + $0x91] sm:$0xff]
    %v3884 = vld [vmem:[#allocation3 + $0x99] sm:$0xff]
    %v3885 = vld [vmem:[#allocation3 + $0xa1] sm:$0xff]
    %v3886 = vld [vmem:[#allocation3 + $0xa9] sm:$0xff]
    %v3887 = vld [vmem:[#allocation3 + $0xb1] sm:$0xff]
    %v3888 = vld [vmem:[#allocation3 + $0xb9] sm:$0xff]
    %v3889 = vld [vmem:[#allocation3 + $0xc1] sm:$0xff]
    %v3890 = vld [vmem:[#allocation3 + $0xc9] sm:$0xff]
    %v3891 = vld [vmem:[#allocation3 + $0xd1] sm:$0xff]
    %v3892 = vld [vmem:[#allocation3 + $0xd9] sm:$0xff]
    %v3893 = vld [vmem:[#allocation3 + $0xe1] sm:$0xff]
    %v3894 = vld [vmem:[#allocation3 + $0xe9] sm:$0xff]
    %v3895 = vld [vmem:[#allocation3 + $0xf1] sm:$0xff]
    %v3896 = vld [vmem:[#allocation3 + $0xf9] sm:$0xff]
    %v3897 = vld [vmem:[#allocation3 + $0x101] sm:$0xff]
    %v3898 = vld [vmem:[#allocation3 + $0x109] sm:$0xff]
    %v3899 = vld [vmem:[#allocation3 + $0x111] sm:$0xff]
    %v3900 = vld [vmem:[#allocation3 + $0x119] sm:$0xff]
    %v3901 = vld [vmem:[#allocation3 + $0x121] sm:$0xff]
    %v3902 = vld [vmem:[#allocation3 + $0x129] sm:$0xff]
    %v3903 = vpack.c.bf16 %v3872, %v3871
    %v3904 = vpack.c.bf16 %v3874, %v3873
    %v3905 = vpack.c.bf16 %v3876, %v3875
    %v3906 = vpack.c.bf16 %v3878, %v3877
    %v3907 = vpack.c.bf16 %v3880, %v3879
    %v3908 = vpack.c.bf16 %v3882, %v3881
    %v3909 = vpack.c.bf16 %v3884, %v3883
    %v3910 = vpack.c.bf16 %v3886, %v3885
    %v3911 = vpack.c.bf16 %v3888, %v3887
    %v3912 = vpack.c.bf16 %v3890, %v3889
    %v3913 = vpack.c.bf16 %v3892, %v3891
    %v3914 = vpack.c.bf16 %v3894, %v3893
    %v3915 = vpack.c.bf16 %v3896, %v3895
    %v3916 = vpack.c.bf16 %v3898, %v3897
    %v3917 = vpack.c.bf16 %v3900, %v3899
    %v3918 = vpack.c.bf16 %v3902, %v3901
    %s3919 = scalar_lea.vmem %s3, 256
    %v3920 = vld [vmem:[%s3919] sm:$0xf]
    %v3921 = vld [vmem:[%s3919 + $0x4] sm:$0xf]
    %v3922 = vld [vmem:[%s3919 + $0x8] sm:$0xf]
    %v3923 = vld [vmem:[%s3919 + $0xc] sm:$0xf]
    %v3924 = vld [vmem:[%s3919 + $0x10] sm:$0xf]
    %v3925 = vld [vmem:[%s3919 + $0x14] sm:$0xf]
    %v3926 = vld [vmem:[%s3919 + $0x18] sm:$0xf]
    %v3927 = vld [vmem:[%s3919 + $0x1c] sm:$0xf]
    %v3936 = vunpack.c.l.b16 %v3920
    %v3937 = vunpack.c.l.b16 %v3921
    %v3938 = vunpack.c.l.b16 %v3922
    %v3939 = vunpack.c.l.b16 %v3923
    %v3940 = vunpack.c.l.b16 %v3924
    %v3941 = vunpack.c.l.b16 %v3925
    %v3942 = vunpack.c.l.b16 %v3926
    %v3943 = vunpack.c.l.b16 %v3927
    %v3944 = vpack.c.b16 %v3937, %v3936
    %v3945 = vpack.c.b16 %v3939, %v3938
    %v3946 = vpack.c.b16 %v3941, %v3940
    %v3947 = vpack.c.b16 %v3943, %v3942
    %v3953 = vsel %vm33, %v3903, 0
    %v3956 = vsel %vm33, %v3904, 0
    %v3959 = vsel %vm33, %v3905, 0
    %v3962 = vsel %vm33, %v3906, 0
    %v3965 = vsel %vm33, %v3907, 0
    %v3968 = vsel %vm33, %v3908, 0
    %v3971 = vsel %vm33, %v3909, 0
    %v3974 = vsel %vm33, %v3910, 0
    %v3977 = vsel %vm33, %v3911, 0
    %v3980 = vsel %vm33, %v3912, 0
    %v3983 = vsel %vm33, %v3913, 0
    %v3986 = vsel %vm33, %v3914, 0
    %v3989 = vsel %vm33, %v3915, 0
    %v3992 = vsel %vm33, %v3916, 0
    %v3995 = vsel %vm33, %v3917, 0
    %v3998 = vsel %vm33, %v3918, 0
    %4000 = vmatpush.bf16.msra.mxu0 0
    %4001 = vmatpush.bf16.msra.mxu0 0
    %4002 = vmatpush.bf16.msra.mxu0 0
    %4003 = vmatpush.bf16.msra.mxu0 0
    %4004 = vmatpush.bf16.msra.mxu0 %v3947
    %4005 = vmatpush.bf16.msra.mxu0 %v3946
    %4006 = vmatpush.bf16.msra.mxu0 %v3945
    %4007 = vmatpush.bf16.msra.mxu0 %v3944
    %4008 = vmatmul.bf16.gmra.mxu0 %v3953
    %v4009 = vpop.f32.mrf.mxu0
    %v4010 = vadd.f32 0.0, %v4009
    %v4011 = vpop.f32.mrf.mxu0
    %v4012 = vadd.f32 0.0, %v4011
    %4013 = vmatmul.bf16.gmra.mxu0 %v3956
    %v4014 = vpop.f32.mrf.mxu0
    %v4015 = vadd.f32 0.0, %v4014
    %v4016 = vpop.f32.mrf.mxu0
    %v4017 = vadd.f32 0.0, %v4016
    %4018 = vmatmul.bf16.gmra.mxu0 %v3959
    %v4019 = vpop.f32.mrf.mxu0
    %v4020 = vadd.f32 0.0, %v4019
    %v4021 = vpop.f32.mrf.mxu0
    %v4022 = vadd.f32 0.0, %v4021
    %4023 = vmatmul.bf16.gmra.mxu0 %v3962
    %v4024 = vpop.f32.mrf.mxu0
    %v4025 = vadd.f32 0.0, %v4024
    %v4026 = vpop.f32.mrf.mxu0
    %v4027 = vadd.f32 0.0, %v4026
    %4028 = vmatmul.bf16.gmra.mxu0 %v3965
    %v4029 = vpop.f32.mrf.mxu0
    %v4030 = vadd.f32 0.0, %v4029
    %v4031 = vpop.f32.mrf.mxu0
    %v4032 = vadd.f32 0.0, %v4031
    %4033 = vmatmul.bf16.gmra.mxu0 %v3968
    %v4034 = vpop.f32.mrf.mxu0
    %v4035 = vadd.f32 0.0, %v4034
    %v4036 = vpop.f32.mrf.mxu0
    %v4037 = vadd.f32 0.0, %v4036
    %4038 = vmatmul.bf16.gmra.mxu0 %v3971
    %v4039 = vpop.f32.mrf.mxu0
    %v4040 = vadd.f32 0.0, %v4039
    %v4041 = vpop.f32.mrf.mxu0
    %v4042 = vadd.f32 0.0, %v4041
    %4043 = vmatmul.bf16.gmra.mxu0 %v3974
    %v4044 = vpop.f32.mrf.mxu0
    %v4045 = vadd.f32 0.0, %v4044
    %v4046 = vpop.f32.mrf.mxu0
    %v4047 = vadd.f32 0.0, %v4046
    %4048 = vmatmul.bf16.gmra.mxu0 %v3977
    %v4049 = vpop.f32.mrf.mxu0
    %v4050 = vadd.f32 0.0, %v4049
    %v4051 = vpop.f32.mrf.mxu0
    %v4052 = vadd.f32 0.0, %v4051
    %4053 = vmatmul.bf16.gmra.mxu0 %v3980
    %v4054 = vpop.f32.mrf.mxu0
    %v4055 = vadd.f32 0.0, %v4054
    %v4056 = vpop.f32.mrf.mxu0
    %v4057 = vadd.f32 0.0, %v4056
    %4058 = vmatmul.bf16.gmra.mxu0 %v3983
    %v4059 = vpop.f32.mrf.mxu0
    %v4060 = vadd.f32 0.0, %v4059
    %v4061 = vpop.f32.mrf.mxu0
    %v4062 = vadd.f32 0.0, %v4061
    %4063 = vmatmul.bf16.gmra.mxu0 %v3986
    %v4064 = vpop.f32.mrf.mxu0
    %v4065 = vadd.f32 0.0, %v4064
    %v4066 = vpop.f32.mrf.mxu0
    %v4067 = vadd.f32 0.0, %v4066
    %4068 = vmatmul.bf16.gmra.mxu0 %v3989
    %v4069 = vpop.f32.mrf.mxu0
    %v4070 = vadd.f32 0.0, %v4069
    %v4071 = vpop.f32.mrf.mxu0
    %v4072 = vadd.f32 0.0, %v4071
    %4073 = vmatmul.bf16.gmra.mxu0 %v3992
    %v4074 = vpop.f32.mrf.mxu0
    %v4075 = vadd.f32 0.0, %v4074
    %v4076 = vpop.f32.mrf.mxu0
    %v4077 = vadd.f32 0.0, %v4076
    %4078 = vmatmul.bf16.gmra.mxu0 %v3995
    %v4079 = vpop.f32.mrf.mxu0
    %v4080 = vadd.f32 0.0, %v4079
    %v4081 = vpop.f32.mrf.mxu0
    %v4082 = vadd.f32 0.0, %v4081
    %4083 = vmatmul.bf16.gmra.mxu0 %v3998
    %v4084 = vpop.f32.mrf.mxu0
    %v4085 = vadd.f32 0.0, %v4084
    %v4086 = vpop.f32.mrf.mxu0
    %v4087 = vadd.f32 0.0, %v4086
    %4088 = vdwg.mxu0
    %v4089 = vadd.f32 %v3839, %v4010
    %v4090 = vadd.f32 %v3840, %v4012
    %v4091 = vadd.f32 %v3841, %v4015
    %v4092 = vadd.f32 %v3842, %v4017
    %v4093 = vadd.f32 %v3843, %v4020
    %v4094 = vadd.f32 %v3844, %v4022
    %v4095 = vadd.f32 %v3845, %v4025
    %v4096 = vadd.f32 %v3846, %v4027
    %v4097 = vadd.f32 %v3847, %v4030
    %v4098 = vadd.f32 %v3848, %v4032
    %v4099 = vadd.f32 %v3849, %v4035
    %v4100 = vadd.f32 %v3850, %v4037
    %v4101 = vadd.f32 %v3851, %v4040
    %v4102 = vadd.f32 %v3852, %v4042
    %v4103 = vadd.f32 %v3853, %v4045
    %v4104 = vadd.f32 %v3854, %v4047
    %v4105 = vadd.f32 %v3855, %v4050
    %v4106 = vadd.f32 %v3856, %v4052
    %v4107 = vadd.f32 %v3857, %v4055
    %v4108 = vadd.f32 %v3858, %v4057
    %v4109 = vadd.f32 %v3859, %v4060
    %v4110 = vadd.f32 %v3860, %v4062
    %v4111 = vadd.f32 %v3861, %v4065
    %v4112 = vadd.f32 %v3862, %v4067
    %v4113 = vadd.f32 %v3863, %v4070
    %v4114 = vadd.f32 %v3864, %v4072
    %v4115 = vadd.f32 %v3865, %v4075
    %v4116 = vadd.f32 %v3866, %v4077
    %v4117 = vadd.f32 %v3867, %v4080
    %v4118 = vadd.f32 %v3868, %v4082
    %v4119 = vadd.f32 %v3869, %v4085
    %v4120 = vadd.f32 %v3870, %v4087
    %v4121 = vld [vmem:[%s4] sm:$0x1]
    %v4123 = vperm.slane %v4121, 0
    %v4125 = vadd.f32 %v4089, %v4123
    %v4126 = vadd.f32 %v4090, %v4123
    %v4127 = vadd.f32 %v4091, %v4123
    %v4128 = vadd.f32 %v4092, %v4123
    %v4129 = vadd.f32 %v4093, %v4123
    %v4130 = vadd.f32 %v4094, %v4123
    %v4131 = vadd.f32 %v4095, %v4123
    %v4132 = vadd.f32 %v4096, %v4123
    %v4133 = vadd.f32 %v4097, %v4123
    %v4134 = vadd.f32 %v4098, %v4123
    %v4135 = vadd.f32 %v4099, %v4123
    %v4136 = vadd.f32 %v4100, %v4123
    %v4137 = vadd.f32 %v4101, %v4123
    %v4138 = vadd.f32 %v4102, %v4123
    %v4139 = vadd.f32 %v4103, %v4123
    %v4140 = vadd.f32 %v4104, %v4123
    %v4141 = vadd.f32 %v4105, %v4123
    %v4142 = vadd.f32 %v4106, %v4123
    %v4143 = vadd.f32 %v4107, %v4123
    %v4144 = vadd.f32 %v4108, %v4123
    %v4145 = vadd.f32 %v4109, %v4123
    %v4146 = vadd.f32 %v4110, %v4123
    %v4147 = vadd.f32 %v4111, %v4123
    %v4148 = vadd.f32 %v4112, %v4123
    %v4149 = vadd.f32 %v4113, %v4123
    %v4150 = vadd.f32 %v4114, %v4123
    %v4151 = vadd.f32 %v4115, %v4123
    %v4152 = vadd.f32 %v4116, %v4123
    %v4153 = vadd.f32 %v4117, %v4123
    %v4154 = vadd.f32 %v4118, %v4123
    %v4155 = vadd.f32 %v4119, %v4123
    %v4156 = vadd.f32 %v4120, %v4123
    %v4157 = vmax.f32 %v4125, 0.0
    %v4158 = vmax.f32 %v4126, 0.0
    %v4159 = vmax.f32 %v4127, 0.0
    %v4160 = vmax.f32 %v4128, 0.0
    %v4161 = vmax.f32 %v4129, 0.0
    %v4162 = vmax.f32 %v4130, 0.0
    %v4163 = vmax.f32 %v4131, 0.0
    %v4164 = vmax.f32 %v4132, 0.0
    %v4165 = vmax.f32 %v4133, 0.0
    %v4166 = vmax.f32 %v4134, 0.0
    %v4167 = vmax.f32 %v4135, 0.0
    %v4168 = vmax.f32 %v4136, 0.0
    %v4169 = vmax.f32 %v4137, 0.0
    %v4170 = vmax.f32 %v4138, 0.0
    %v4171 = vmax.f32 %v4139, 0.0
    %v4172 = vmax.f32 %v4140, 0.0
    %v4173 = vmax.f32 %v4141, 0.0
    %v4174 = vmax.f32 %v4142, 0.0
    %v4175 = vmax.f32 %v4143, 0.0
    %v4176 = vmax.f32 %v4144, 0.0
    %v4177 = vmax.f32 %v4145, 0.0
    %v4178 = vmax.f32 %v4146, 0.0
    %v4179 = vmax.f32 %v4147, 0.0
    %v4180 = vmax.f32 %v4148, 0.0
    %v4181 = vmax.f32 %v4149, 0.0
    %v4182 = vmax.f32 %v4150, 0.0
    %v4183 = vmax.f32 %v4151, 0.0
    %v4184 = vmax.f32 %v4152, 0.0
    %v4185 = vmax.f32 %v4153, 0.0
    %v4186 = vmax.f32 %v4154, 0.0
    %v4187 = vmax.f32 %v4155, 0.0
    %v4188 = vmax.f32 %v4156, 0.0
    %v4189 = vmul.f32 %v4157, %v467
    %v4190 = vmul.f32 %v4158, %v468
    %v4191 = vmul.f32 %v4159, %v469
    %v4192 = vmul.f32 %v4160, %v470
    %v4193 = vmul.f32 %v4161, %v471
    %v4194 = vmul.f32 %v4162, %v472
    %v4195 = vmul.f32 %v4163, %v473
    %v4196 = vmul.f32 %v4164, %v474
    %v4197 = vmul.f32 %v4165, %v475
    %v4198 = vmul.f32 %v4166, %v476
    %v4199 = vmul.f32 %v4167, %v477
    %v4200 = vmul.f32 %v4168, %v478
    %v4201 = vmul.f32 %v4169, %v479
    %v4202 = vmul.f32 %v4170, %v480
    %v4203 = vmul.f32 %v4171, %v481
    %v4204 = vmul.f32 %v4172, %v482
    %v4205 = vmul.f32 %v4173, %v483
    %v4206 = vmul.f32 %v4174, %v484
    %v4207 = vmul.f32 %v4175, %v485
    %v4208 = vmul.f32 %v4176, %v486
    %v4209 = vmul.f32 %v4177, %v487
    %v4210 = vmul.f32 %v4178, %v488
    %v4211 = vmul.f32 %v4179, %v489
    %v4212 = vmul.f32 %v4180, %v490
    %v4213 = vmul.f32 %v4181, %v491
    %v4214 = vmul.f32 %v4182, %v492
    %v4215 = vmul.f32 %v4183, %v493
    %v4216 = vmul.f32 %v4184, %v494
    %v4217 = vmul.f32 %v4185, %v495
    %v4218 = vmul.f32 %v4186, %v496
    %v4219 = vmul.f32 %v4187, %v497
    %v4220 = vmul.f32 %v4188, %v498
    %4221 = vst.msk [vmem:[#allocation4 + $0x20] sm:$0xff] %vm33, %v4189
    %4222 = vst.msk [vmem:[#allocation4 + $0x28] sm:$0xff] %vm33, %v4190
    %4223 = vst.msk [vmem:[#allocation4 + $0x30] sm:$0xff] %vm33, %v4191
    %4224 = vst.msk [vmem:[#allocation4 + $0x38] sm:$0xff] %vm33, %v4192
    %4225 = vst.msk [vmem:[#allocation4 + $0x40] sm:$0xff] %vm33, %v4193
    %4226 = vst.msk [vmem:[#allocation4 + $0x48] sm:$0xff] %vm33, %v4194
    %4227 = vst.msk [vmem:[#allocation4 + $0x50] sm:$0xff] %vm33, %v4195
    %4228 = vst.msk [vmem:[#allocation4 + $0x58] sm:$0xff] %vm33, %v4196
    %4229 = vst.msk [vmem:[#allocation4 + $0x60] sm:$0xff] %vm33, %v4197
    %4230 = vst.msk [vmem:[#allocation4 + $0x68] sm:$0xff] %vm33, %v4198
    %4231 = vst.msk [vmem:[#allocation4 + $0x70] sm:$0xff] %vm33, %v4199
    %4232 = vst.msk [vmem:[#allocation4 + $0x78] sm:$0xff] %vm33, %v4200
    %4233 = vst.msk [vmem:[#allocation4 + $0x80] sm:$0xff] %vm33, %v4201
    %4234 = vst.msk [vmem:[#allocation4 + $0x88] sm:$0xff] %vm33, %v4202
    %4235 = vst.msk [vmem:[#allocation4 + $0x90] sm:$0xff] %vm33, %v4203
    %4236 = vst.msk [vmem:[#allocation4 + $0x98] sm:$0xff] %vm33, %v4204
    %4237 = vst.msk [vmem:[#allocation4 + $0xa0] sm:$0xff] %vm33, %v4205
    %4238 = vst.msk [vmem:[#allocation4 + $0xa8] sm:$0xff] %vm33, %v4206
    %4239 = vst.msk [vmem:[#allocation4 + $0xb0] sm:$0xff] %vm33, %v4207
    %4240 = vst.msk [vmem:[#allocation4 + $0xb8] sm:$0xff] %vm33, %v4208
    %4241 = vst.msk [vmem:[#allocation4 + $0xc0] sm:$0xff] %vm33, %v4209
    %4242 = vst.msk [vmem:[#allocation4 + $0xc8] sm:$0xff] %vm33, %v4210
    %4243 = vst.msk [vmem:[#allocation4 + $0xd0] sm:$0xff] %vm33, %v4211
    %4244 = vst.msk [vmem:[#allocation4 + $0xd8] sm:$0xff] %vm33, %v4212
    %4245 = vst.msk [vmem:[#allocation4 + $0xe0] sm:$0xff] %vm33, %v4213
    %4246 = vst.msk [vmem:[#allocation4 + $0xe8] sm:$0xff] %vm33, %v4214
    %4247 = vst.msk [vmem:[#allocation4 + $0xf0] sm:$0xff] %vm33, %v4215
    %4248 = vst.msk [vmem:[#allocation4 + $0xf8] sm:$0xff] %vm33, %v4216
    %4249 = vst.msk [vmem:[#allocation4 + $0x100] sm:$0xff] %vm33, %v4217
    %4250 = vst.msk [vmem:[#allocation4 + $0x108] sm:$0xff] %vm33, %v4218
    %4251 = vst.msk [vmem:[#allocation4 + $0x110] sm:$0xff] %vm33, %v4219
    %4252 = vst.msk [vmem:[#allocation4 + $0x118] sm:$0xff] %vm33, %v4220
    %v4253 = vld [vmem:[#allocation3 + $0x20] sm:$0xff]
    %v4254 = vld [vmem:[#allocation3 + $0x28] sm:$0xff]
    %v4255 = vld [vmem:[#allocation3 + $0x30] sm:$0xff]
    %v4256 = vld [vmem:[#allocation3 + $0x38] sm:$0xff]
    %v4257 = vld [vmem:[#allocation3 + $0x40] sm:$0xff]
    %v4258 = vld [vmem:[#allocation3 + $0x48] sm:$0xff]
    %v4259 = vld [vmem:[#allocation3 + $0x50] sm:$0xff]
    %v4260 = vld [vmem:[#allocation3 + $0x58] sm:$0xff]
    %v4261 = vld [vmem:[#allocation3 + $0x60] sm:$0xff]
    %v4262 = vld [vmem:[#allocation3 + $0x68] sm:$0xff]
    %v4263 = vld [vmem:[#allocation3 + $0x70] sm:$0xff]
    %v4264 = vld [vmem:[#allocation3 + $0x78] sm:$0xff]
    %v4265 = vld [vmem:[#allocation3 + $0x80] sm:$0xff]
    %v4266 = vld [vmem:[#allocation3 + $0x88] sm:$0xff]
    %v4267 = vld [vmem:[#allocation3 + $0x90] sm:$0xff]
    %v4268 = vld [vmem:[#allocation3 + $0x98] sm:$0xff]
    %v4269 = vld [vmem:[#allocation3 + $0xa0] sm:$0xff]
    %v4270 = vld [vmem:[#allocation3 + $0xa8] sm:$0xff]
    %v4271 = vld [vmem:[#allocation3 + $0xb0] sm:$0xff]
    %v4272 = vld [vmem:[#allocation3 + $0xb8] sm:$0xff]
    %v4273 = vld [vmem:[#allocation3 + $0xc0] sm:$0xff]
    %v4274 = vld [vmem:[#allocation3 + $0xc8] sm:$0xff]
    %v4275 = vld [vmem:[#allocation3 + $0xd0] sm:$0xff]
    %v4276 = vld [vmem:[#allocation3 + $0xd8] sm:$0xff]
    %v4277 = vld [vmem:[#allocation3 + $0xe0] sm:$0xff]
    %v4278 = vld [vmem:[#allocation3 + $0xe8] sm:$0xff]
    %v4279 = vld [vmem:[#allocation3 + $0xf0] sm:$0xff]
    %v4280 = vld [vmem:[#allocation3 + $0xf8] sm:$0xff]
    %v4281 = vld [vmem:[#allocation3 + $0x100] sm:$0xff]
    %v4282 = vld [vmem:[#allocation3 + $0x108] sm:$0xff]
    %v4283 = vld [vmem:[#allocation3 + $0x110] sm:$0xff]
    %v4284 = vld [vmem:[#allocation3 + $0x118] sm:$0xff]
    %v4285 = vpack.c.bf16 %v4254, %v4253
    %v4286 = vpack.c.bf16 %v4256, %v4255
    %v4287 = vpack.c.bf16 %v4258, %v4257
    %v4288 = vpack.c.bf16 %v4260, %v4259
    %v4289 = vpack.c.bf16 %v4262, %v4261
    %v4290 = vpack.c.bf16 %v4264, %v4263
    %v4291 = vpack.c.bf16 %v4266, %v4265
    %v4292 = vpack.c.bf16 %v4268, %v4267
    %v4293 = vpack.c.bf16 %v4270, %v4269
    %v4294 = vpack.c.bf16 %v4272, %v4271
    %v4295 = vpack.c.bf16 %v4274, %v4273
    %v4296 = vpack.c.bf16 %v4276, %v4275
    %v4297 = vpack.c.bf16 %v4278, %v4277
    %v4298 = vpack.c.bf16 %v4280, %v4279
    %v4299 = vpack.c.bf16 %v4282, %v4281
    %v4300 = vpack.c.bf16 %v4284, %v4283
    %v4301 = vld [vmem:[%s7] sm:$0xf]
    %v4302 = vld [vmem:[%s7 + $0x4] sm:$0xf]
    %v4303 = vld [vmem:[%s7 + $0x8] sm:$0xf]
    %v4304 = vld [vmem:[%s7 + $0xc] sm:$0xf]
    %v4305 = vld [vmem:[%s7 + $0x10] sm:$0xf]
    %v4306 = vld [vmem:[%s7 + $0x14] sm:$0xf]
    %v4307 = vld [vmem:[%s7 + $0x18] sm:$0xf]
    %v4308 = vld [vmem:[%s7 + $0x1c] sm:$0xf]
    %v4309 = vld [vmem:[#allocation4 + $0xf] sm:$0xff]
    %v4310 = vld [vmem:[#allocation4 + $0x17] sm:$0xff]
    %v4311 = vld [vmem:[#allocation4 + $0x1f] sm:$0xff]
    %v4312 = vld [vmem:[#allocation4 + $0x27] sm:$0xff]
    %v4313 = vld [vmem:[#allocation4 + $0x2f] sm:$0xff]
    %v4314 = vld [vmem:[#allocation4 + $0x37] sm:$0xff]
    %v4315 = vld [vmem:[#allocation4 + $0x3f] sm:$0xff]
    %v4316 = vld [vmem:[#allocation4 + $0x47] sm:$0xff]
    %v4317 = vld [vmem:[#allocation4 + $0x4f] sm:$0xff]
    %v4318 = vld [vmem:[#allocation4 + $0x57] sm:$0xff]
    %v4319 = vld [vmem:[#allocation4 + $0x5f] sm:$0xff]
    %v4320 = vld [vmem:[#allocation4 + $0x67] sm:$0xff]
    %v4321 = vld [vmem:[#allocation4 + $0x6f] sm:$0xff]
    %v4322 = vld [vmem:[#allocation4 + $0x77] sm:$0xff]
    %v4323 = vld [vmem:[#allocation4 + $0x7f] sm:$0xff]
    %v4324 = vld [vmem:[#allocation4 + $0x87] sm:$0xff]
    %v4325 = vld [vmem:[#allocation4 + $0x8f] sm:$0xff]
    %v4326 = vld [vmem:[#allocation4 + $0x97] sm:$0xff]
    %v4327 = vld [vmem:[#allocation4 + $0x9f] sm:$0xff]
    %v4328 = vld [vmem:[#allocation4 + $0xa7] sm:$0xff]
    %v4329 = vld [vmem:[#allocation4 + $0xaf] sm:$0xff]
    %v4330 = vld [vmem:[#allocation4 + $0xb7] sm:$0xff]
    %v4331 = vld [vmem:[#allocation4 + $0xbf] sm:$0xff]
    %v4332 = vld [vmem:[#allocation4 + $0xc7] sm:$0xff]
    %v4333 = vld [vmem:[#allocation4 + $0xcf] sm:$0xff]
    %v4334 = vld [vmem:[#allocation4 + $0xd7] sm:$0xff]
    %v4335 = vld [vmem:[#allocation4 + $0xdf] sm:$0xff]
    %v4336 = vld [vmem:[#allocation4 + $0xe7] sm:$0xff]
    %v4337 = vld [vmem:[#allocation4 + $0xef] sm:$0xff]
    %v4338 = vld [vmem:[#allocation4 + $0xf7] sm:$0xff]
    %v4339 = vld [vmem:[#allocation4 + $0xff] sm:$0xff]
    %v4340 = vld [vmem:[#allocation4 + $0x107] sm:$0xff]
    %v4341 = vpack.c.bf16 %v4310, %v4309
    %v4342 = vpack.c.bf16 %v4312, %v4311
    %v4343 = vpack.c.bf16 %v4314, %v4313
    %v4344 = vpack.c.bf16 %v4316, %v4315
    %v4345 = vpack.c.bf16 %v4318, %v4317
    %v4346 = vpack.c.bf16 %v4320, %v4319
    %v4347 = vpack.c.bf16 %v4322, %v4321
    %v4348 = vpack.c.bf16 %v4324, %v4323
    %v4349 = vpack.c.bf16 %v4326, %v4325
    %v4350 = vpack.c.bf16 %v4328, %v4327
    %v4351 = vpack.c.bf16 %v4330, %v4329
    %v4352 = vpack.c.bf16 %v4332, %v4331
    %v4353 = vpack.c.bf16 %v4334, %v4333
    %v4354 = vpack.c.bf16 %v4336, %v4335
    %v4355 = vpack.c.bf16 %v4338, %v4337
    %v4356 = vpack.c.bf16 %v4340, %v4339
    %v4357 = vld [vmem:[%s5] sm:$0xf]
    %v4358 = vld [vmem:[%s5 + $0x4] sm:$0xf]
    %v4359 = vld [vmem:[%s5 + $0x8] sm:$0xf]
    %v4360 = vld [vmem:[%s5 + $0xc] sm:$0xf]
    %v4361 = vld [vmem:[%s5 + $0x10] sm:$0xf]
    %v4362 = vld [vmem:[%s5 + $0x14] sm:$0xf]
    %v4363 = vld [vmem:[%s5 + $0x18] sm:$0xf]
    %v4364 = vld [vmem:[%s5 + $0x1c] sm:$0xf]
    %v4373 = vunpack.c.l.b16 %v4357
    %v4374 = vunpack.c.l.b16 %v4358
    %v4375 = vunpack.c.l.b16 %v4359
    %v4376 = vunpack.c.l.b16 %v4360
    %v4377 = vunpack.c.l.b16 %v4361
    %v4378 = vunpack.c.l.b16 %v4362
    %v4379 = vunpack.c.l.b16 %v4363
    %v4380 = vunpack.c.l.b16 %v4364
    %v4381 = vpack.c.b16 %v4374, %v4373
    %v4382 = vpack.c.b16 %v4376, %v4375
    %v4383 = vpack.c.b16 %v4378, %v4377
    %v4384 = vpack.c.b16 %v4380, %v4379
    %v4390 = vsel %vm33, %v4341, 0
    %v4393 = vsel %vm33, %v4342, 0
    %v4396 = vsel %vm33, %v4343, 0
    %v4399 = vsel %vm33, %v4344, 0
    %v4402 = vsel %vm33, %v4345, 0
    %v4405 = vsel %vm33, %v4346, 0
    %v4408 = vsel %vm33, %v4347, 0
    %v4411 = vsel %vm33, %v4348, 0
    %v4414 = vsel %vm33, %v4349, 0
    %v4417 = vsel %vm33, %v4350, 0
    %v4420 = vsel %vm33, %v4351, 0
    %v4423 = vsel %vm33, %v4352, 0
    %v4426 = vsel %vm33, %v4353, 0
    %v4429 = vsel %vm33, %v4354, 0
    %v4432 = vsel %vm33, %v4355, 0
    %v4435 = vsel %vm33, %v4356, 0
    %4437 = vmatpush.bf16.msra.mxu0 0
    %4438 = vmatpush.bf16.msra.mxu0 0
    %4439 = vmatpush.bf16.msra.mxu0 0
    %4440 = vmatpush.bf16.msra.mxu0 0
    %4441 = vmatpush.bf16.msra.mxu0 %v4384
    %4442 = vmatpush.bf16.msra.mxu0 %v4383
    %4443 = vmatpush.bf16.msra.mxu0 %v4382
    %4444 = vmatpush.bf16.msra.mxu0 %v4381
    %4445 = vmatmul.bf16.gmra.mxu0 %v4390
    %v4446 = vpop.f32.mrf.mxu0
    %v4447 = vadd.f32 0.0, %v4446
    %v4448 = vpop.f32.mrf.mxu0
    %v4449 = vadd.f32 0.0, %v4448
    %4450 = vmatmul.bf16.gmra.mxu0 %v4393
    %v4451 = vpop.f32.mrf.mxu0
    %v4452 = vadd.f32 0.0, %v4451
    %v4453 = vpop.f32.mrf.mxu0
    %v4454 = vadd.f32 0.0, %v4453
    %4455 = vmatmul.bf16.gmra.mxu0 %v4396
    %v4456 = vpop.f32.mrf.mxu0
    %v4457 = vadd.f32 0.0, %v4456
    %v4458 = vpop.f32.mrf.mxu0
    %v4459 = vadd.f32 0.0, %v4458
    %4460 = vmatmul.bf16.gmra.mxu0 %v4399
    %v4461 = vpop.f32.mrf.mxu0
    %v4462 = vadd.f32 0.0, %v4461
    %v4463 = vpop.f32.mrf.mxu0
    %v4464 = vadd.f32 0.0, %v4463
    %4465 = vmatmul.bf16.gmra.mxu0 %v4402
    %v4466 = vpop.f32.mrf.mxu0
    %v4467 = vadd.f32 0.0, %v4466
    %v4468 = vpop.f32.mrf.mxu0
    %v4469 = vadd.f32 0.0, %v4468
    %4470 = vmatmul.bf16.gmra.mxu0 %v4405
    %v4471 = vpop.f32.mrf.mxu0
    %v4472 = vadd.f32 0.0, %v4471
    %v4473 = vpop.f32.mrf.mxu0
    %v4474 = vadd.f32 0.0, %v4473
    %4475 = vmatmul.bf16.gmra.mxu0 %v4408
    %v4476 = vpop.f32.mrf.mxu0
    %v4477 = vadd.f32 0.0, %v4476
    %v4478 = vpop.f32.mrf.mxu0
    %v4479 = vadd.f32 0.0, %v4478
    %4480 = vmatmul.bf16.gmra.mxu0 %v4411
    %v4481 = vpop.f32.mrf.mxu0
    %v4482 = vadd.f32 0.0, %v4481
    %v4483 = vpop.f32.mrf.mxu0
    %v4484 = vadd.f32 0.0, %v4483
    %4485 = vmatmul.bf16.gmra.mxu0 %v4414
    %v4486 = vpop.f32.mrf.mxu0
    %v4487 = vadd.f32 0.0, %v4486
    %v4488 = vpop.f32.mrf.mxu0
    %v4489 = vadd.f32 0.0, %v4488
    %4490 = vmatmul.bf16.gmra.mxu0 %v4417
    %v4491 = vpop.f32.mrf.mxu0
    %v4492 = vadd.f32 0.0, %v4491
    %v4493 = vpop.f32.mrf.mxu0
    %v4494 = vadd.f32 0.0, %v4493
    %4495 = vmatmul.bf16.gmra.mxu0 %v4420
    %v4496 = vpop.f32.mrf.mxu0
    %v4497 = vadd.f32 0.0, %v4496
    %v4498 = vpop.f32.mrf.mxu0
    %v4499 = vadd.f32 0.0, %v4498
    %4500 = vmatmul.bf16.gmra.mxu0 %v4423
    %v4501 = vpop.f32.mrf.mxu0
    %v4502 = vadd.f32 0.0, %v4501
    %v4503 = vpop.f32.mrf.mxu0
    %v4504 = vadd.f32 0.0, %v4503
    %4505 = vmatmul.bf16.gmra.mxu0 %v4426
    %v4506 = vpop.f32.mrf.mxu0
    %v4507 = vadd.f32 0.0, %v4506
    %v4508 = vpop.f32.mrf.mxu0
    %v4509 = vadd.f32 0.0, %v4508
    %4510 = vmatmul.bf16.gmra.mxu0 %v4429
    %v4511 = vpop.f32.mrf.mxu0
    %v4512 = vadd.f32 0.0, %v4511
    %v4513 = vpop.f32.mrf.mxu0
    %v4514 = vadd.f32 0.0, %v4513
    %4515 = vmatmul.bf16.gmra.mxu0 %v4432
    %v4516 = vpop.f32.mrf.mxu0
    %v4517 = vadd.f32 0.0, %v4516
    %v4518 = vpop.f32.mrf.mxu0
    %v4519 = vadd.f32 0.0, %v4518
    %4520 = vmatmul.bf16.gmra.mxu0 %v4435
    %v4521 = vpop.f32.mrf.mxu0
    %v4522 = vadd.f32 0.0, %v4521
    %v4523 = vpop.f32.mrf.mxu0
    %v4524 = vadd.f32 0.0, %v4523
    %4525 = vdwg.mxu0
    %v4534 = vunpack.c.l.b16 %v4301
    %v4535 = vunpack.c.l.b16 %v4302
    %v4536 = vunpack.c.l.b16 %v4303
    %v4537 = vunpack.c.l.b16 %v4304
    %v4538 = vunpack.c.l.b16 %v4305
    %v4539 = vunpack.c.l.b16 %v4306
    %v4540 = vunpack.c.l.b16 %v4307
    %v4541 = vunpack.c.l.b16 %v4308
    %v4542 = vpack.c.b16 %v4535, %v4534
    %v4543 = vpack.c.b16 %v4537, %v4536
    %v4544 = vpack.c.b16 %v4539, %v4538
    %v4545 = vpack.c.b16 %v4541, %v4540
    %v4551 = vsel %vm33, %v4285, 0
    %v4554 = vsel %vm33, %v4286, 0
    %v4557 = vsel %vm33, %v4287, 0
    %v4560 = vsel %vm33, %v4288, 0
    %v4563 = vsel %vm33, %v4289, 0
    %v4566 = vsel %vm33, %v4290, 0
    %v4569 = vsel %vm33, %v4291, 0
    %v4572 = vsel %vm33, %v4292, 0
    %v4575 = vsel %vm33, %v4293, 0
    %v4578 = vsel %vm33, %v4294, 0
    %v4581 = vsel %vm33, %v4295, 0
    %v4584 = vsel %vm33, %v4296, 0
    %v4587 = vsel %vm33, %v4297, 0
    %v4590 = vsel %vm33, %v4298, 0
    %v4593 = vsel %vm33, %v4299, 0
    %v4596 = vsel %vm33, %v4300, 0
    %4598 = vmatpush.bf16.msra.mxu0 0
    %4599 = vmatpush.bf16.msra.mxu0 0
    %4600 = vmatpush.bf16.msra.mxu0 0
    %4601 = vmatpush.bf16.msra.mxu0 0
    %4602 = vmatpush.bf16.msra.mxu0 %v4545
    %4603 = vmatpush.bf16.msra.mxu0 %v4544
    %4604 = vmatpush.bf16.msra.mxu0 %v4543
    %4605 = vmatpush.bf16.msra.mxu0 %v4542
    %4606 = vmatmul.bf16.gmra.mxu0 %v4551
    %v4607 = vpop.f32.mrf.mxu0
    %v4608 = vadd.f32 %v4447, %v4607
    %v4609 = vpop.f32.mrf.mxu0
    %v4610 = vadd.f32 %v4449, %v4609
    %4611 = vmatmul.bf16.gmra.mxu0 %v4554
    %v4612 = vpop.f32.mrf.mxu0
    %v4613 = vadd.f32 %v4452, %v4612
    %v4614 = vpop.f32.mrf.mxu0
    %v4615 = vadd.f32 %v4454, %v4614
    %4616 = vmatmul.bf16.gmra.mxu0 %v4557
    %v4617 = vpop.f32.mrf.mxu0
    %v4618 = vadd.f32 %v4457, %v4617
    %v4619 = vpop.f32.mrf.mxu0
    %v4620 = vadd.f32 %v4459, %v4619
    %4621 = vmatmul.bf16.gmra.mxu0 %v4560
    %v4622 = vpop.f32.mrf.mxu0
    %v4623 = vadd.f32 %v4462, %v4622
    %v4624 = vpop.f32.mrf.mxu0
    %v4625 = vadd.f32 %v4464, %v4624
    %4626 = vmatmul.bf16.gmra.mxu0 %v4563
    %v4627 = vpop.f32.mrf.mxu0
    %v4628 = vadd.f32 %v4467, %v4627
    %v4629 = vpop.f32.mrf.mxu0
    %v4630 = vadd.f32 %v4469, %v4629
    %4631 = vmatmul.bf16.gmra.mxu0 %v4566
    %v4632 = vpop.f32.mrf.mxu0
    %v4633 = vadd.f32 %v4472, %v4632
    %v4634 = vpop.f32.mrf.mxu0
    %v4635 = vadd.f32 %v4474, %v4634
    %4636 = vmatmul.bf16.gmra.mxu0 %v4569
    %v4637 = vpop.f32.mrf.mxu0
    %v4638 = vadd.f32 %v4477, %v4637
    %v4639 = vpop.f32.mrf.mxu0
    %v4640 = vadd.f32 %v4479, %v4639
    %4641 = vmatmul.bf16.gmra.mxu0 %v4572
    %v4642 = vpop.f32.mrf.mxu0
    %v4643 = vadd.f32 %v4482, %v4642
    %v4644 = vpop.f32.mrf.mxu0
    %v4645 = vadd.f32 %v4484, %v4644
    %4646 = vmatmul.bf16.gmra.mxu0 %v4575
    %v4647 = vpop.f32.mrf.mxu0
    %v4648 = vadd.f32 %v4487, %v4647
    %v4649 = vpop.f32.mrf.mxu0
    %v4650 = vadd.f32 %v4489, %v4649
    %4651 = vmatmul.bf16.gmra.mxu0 %v4578
    %v4652 = vpop.f32.mrf.mxu0
    %v4653 = vadd.f32 %v4492, %v4652
    %v4654 = vpop.f32.mrf.mxu0
    %v4655 = vadd.f32 %v4494, %v4654
    %4656 = vmatmul.bf16.gmra.mxu0 %v4581
    %v4657 = vpop.f32.mrf.mxu0
    %v4658 = vadd.f32 %v4497, %v4657
    %v4659 = vpop.f32.mrf.mxu0
    %v4660 = vadd.f32 %v4499, %v4659
    %4661 = vmatmul.bf16.gmra.mxu0 %v4584
    %v4662 = vpop.f32.mrf.mxu0
    %v4663 = vadd.f32 %v4502, %v4662
    %v4664 = vpop.f32.mrf.mxu0
    %v4665 = vadd.f32 %v4504, %v4664
    %4666 = vmatmul.bf16.gmra.mxu0 %v4587
    %v4667 = vpop.f32.mrf.mxu0
    %v4668 = vadd.f32 %v4507, %v4667
    %v4669 = vpop.f32.mrf.mxu0
    %v4670 = vadd.f32 %v4509, %v4669
    %4671 = vmatmul.bf16.gmra.mxu0 %v4590
    %v4672 = vpop.f32.mrf.mxu0
    %v4673 = vadd.f32 %v4512, %v4672
    %v4674 = vpop.f32.mrf.mxu0
    %v4675 = vadd.f32 %v4514, %v4674
    %4676 = vmatmul.bf16.gmra.mxu0 %v4593
    %v4677 = vpop.f32.mrf.mxu0
    %v4678 = vadd.f32 %v4517, %v4677
    %v4679 = vpop.f32.mrf.mxu0
    %v4680 = vadd.f32 %v4519, %v4679
    %4681 = vmatmul.bf16.gmra.mxu0 %v4596
    %v4682 = vpop.f32.mrf.mxu0
    %v4683 = vadd.f32 %v4522, %v4682
    %v4684 = vpop.f32.mrf.mxu0
    %v4685 = vadd.f32 %v4524, %v4684
    %4686 = vdwg.mxu0
    %v4687 = vld [vmem:[#allocation4 + $0x10] sm:$0xff]
    %v4688 = vld [vmem:[#allocation4 + $0x18] sm:$0xff]
    %v4689 = vld [vmem:[#allocation4 + $0x20] sm:$0xff]
    %v4690 = vld [vmem:[#allocation4 + $0x28] sm:$0xff]
    %v4691 = vld [vmem:[#allocation4 + $0x30] sm:$0xff]
    %v4692 = vld [vmem:[#allocation4 + $0x38] sm:$0xff]
    %v4693 = vld [vmem:[#allocation4 + $0x40] sm:$0xff]
    %v4694 = vld [vmem:[#allocation4 + $0x48] sm:$0xff]
    %v4695 = vld [vmem:[#allocation4 + $0x50] sm:$0xff]
    %v4696 = vld [vmem:[#allocation4 + $0x58] sm:$0xff]
    %v4697 = vld [vmem:[#allocation4 + $0x60] sm:$0xff]
    %v4698 = vld [vmem:[#allocation4 + $0x68] sm:$0xff]
    %v4699 = vld [vmem:[#allocation4 + $0x70] sm:$0xff]
    %v4700 = vld [vmem:[#allocation4 + $0x78] sm:$0xff]
    %v4701 = vld [vmem:[#allocation4 + $0x80] sm:$0xff]
    %v4702 = vld [vmem:[#allocation4 + $0x88] sm:$0xff]
    %v4703 = vld [vmem:[#allocation4 + $0x90] sm:$0xff]
    %v4704 = vld [vmem:[#allocation4 + $0x98] sm:$0xff]
    %v4705 = vld [vmem:[#allocation4 + $0xa0] sm:$0xff]
    %v4706 = vld [vmem:[#allocation4 + $0xa8] sm:$0xff]
    %v4707 = vld [vmem:[#allocation4 + $0xb0] sm:$0xff]
    %v4708 = vld [vmem:[#allocation4 + $0xb8] sm:$0xff]
    %v4709 = vld [vmem:[#allocation4 + $0xc0] sm:$0xff]
    %v4710 = vld [vmem:[#allocation4 + $0xc8] sm:$0xff]
    %v4711 = vld [vmem:[#allocation4 + $0xd0] sm:$0xff]
    %v4712 = vld [vmem:[#allocation4 + $0xd8] sm:$0xff]
    %v4713 = vld [vmem:[#allocation4 + $0xe0] sm:$0xff]
    %v4714 = vld [vmem:[#allocation4 + $0xe8] sm:$0xff]
    %v4715 = vld [vmem:[#allocation4 + $0xf0] sm:$0xff]
    %v4716 = vld [vmem:[#allocation4 + $0xf8] sm:$0xff]
    %v4717 = vld [vmem:[#allocation4 + $0x100] sm:$0xff]
    %v4718 = vld [vmem:[#allocation4 + $0x108] sm:$0xff]
    %v4719 = vpack.c.bf16 %v4688, %v4687
    %v4720 = vpack.c.bf16 %v4690, %v4689
    %v4721 = vpack.c.bf16 %v4692, %v4691
    %v4722 = vpack.c.bf16 %v4694, %v4693
    %v4723 = vpack.c.bf16 %v4696, %v4695
    %v4724 = vpack.c.bf16 %v4698, %v4697
    %v4725 = vpack.c.bf16 %v4700, %v4699
    %v4726 = vpack.c.bf16 %v4702, %v4701
    %v4727 = vpack.c.bf16 %v4704, %v4703
    %v4728 = vpack.c.bf16 %v4706, %v4705
    %v4729 = vpack.c.bf16 %v4708, %v4707
    %v4730 = vpack.c.bf16 %v4710, %v4709
    %v4731 = vpack.c.bf16 %v4712, %v4711
    %v4732 = vpack.c.bf16 %v4714, %v4713
    %v4733 = vpack.c.bf16 %v4716, %v4715
    %v4734 = vpack.c.bf16 %v4718, %v4717
    %s4735 = scalar_lea.vmem %s5, 32
    %v4736 = vld [vmem:[%s4735] sm:$0xf]
    %v4737 = vld [vmem:[%s4735 + $0x4] sm:$0xf]
    %v4738 = vld [vmem:[%s4735 + $0x8] sm:$0xf]
    %v4739 = vld [vmem:[%s4735 + $0xc] sm:$0xf]
    %v4740 = vld [vmem:[%s4735 + $0x10] sm:$0xf]
    %v4741 = vld [vmem:[%s4735 + $0x14] sm:$0xf]
    %v4742 = vld [vmem:[%s4735 + $0x18] sm:$0xf]
    %v4743 = vld [vmem:[%s4735 + $0x1c] sm:$0xf]
    %v4752 = vunpack.c.l.b16 %v4736
    %v4753 = vunpack.c.l.b16 %v4737
    %v4754 = vunpack.c.l.b16 %v4738
    %v4755 = vunpack.c.l.b16 %v4739
    %v4756 = vunpack.c.l.b16 %v4740
    %v4757 = vunpack.c.l.b16 %v4741
    %v4758 = vunpack.c.l.b16 %v4742
    %v4759 = vunpack.c.l.b16 %v4743
    %v4760 = vpack.c.b16 %v4753, %v4752
    %v4761 = vpack.c.b16 %v4755, %v4754
    %v4762 = vpack.c.b16 %v4757, %v4756
    %v4763 = vpack.c.b16 %v4759, %v4758
    %v4769 = vsel %vm33, %v4719, 0
    %v4772 = vsel %vm33, %v4720, 0
    %v4775 = vsel %vm33, %v4721, 0
    %v4778 = vsel %vm33, %v4722, 0
    %v4781 = vsel %vm33, %v4723, 0
    %v4784 = vsel %vm33, %v4724, 0
    %v4787 = vsel %vm33, %v4725, 0
    %v4790 = vsel %vm33, %v4726, 0
    %v4793 = vsel %vm33, %v4727, 0
    %v4796 = vsel %vm33, %v4728, 0
    %v4799 = vsel %vm33, %v4729, 0
    %v4802 = vsel %vm33, %v4730, 0
    %v4805 = vsel %vm33, %v4731, 0
    %v4808 = vsel %vm33, %v4732, 0
    %v4811 = vsel %vm33, %v4733, 0
    %v4814 = vsel %vm33, %v4734, 0
    %4816 = vmatpush.bf16.msra.mxu0 0
    %4817 = vmatpush.bf16.msra.mxu0 0
    %4818 = vmatpush.bf16.msra.mxu0 0
    %4819 = vmatpush.bf16.msra.mxu0 0
    %4820 = vmatpush.bf16.msra.mxu0 %v4763
    %4821 = vmatpush.bf16.msra.mxu0 %v4762
    %4822 = vmatpush.bf16.msra.mxu0 %v4761
    %4823 = vmatpush.bf16.msra.mxu0 %v4760
    %4824 = vmatmul.bf16.gmra.mxu0 %v4769
    %v4825 = vpop.f32.mrf.mxu0
    %v4826 = vadd.f32 0.0, %v4825
    %v4827 = vpop.f32.mrf.mxu0
    %v4828 = vadd.f32 0.0, %v4827
    %4829 = vmatmul.bf16.gmra.mxu0 %v4772
    %v4830 = vpop.f32.mrf.mxu0
    %v4831 = vadd.f32 0.0, %v4830
    %v4832 = vpop.f32.mrf.mxu0
    %v4833 = vadd.f32 0.0, %v4832
    %4834 = vmatmul.bf16.gmra.mxu0 %v4775
    %v4835 = vpop.f32.mrf.mxu0
    %v4836 = vadd.f32 0.0, %v4835
    %v4837 = vpop.f32.mrf.mxu0
    %v4838 = vadd.f32 0.0, %v4837
    %4839 = vmatmul.bf16.gmra.mxu0 %v4778
    %v4840 = vpop.f32.mrf.mxu0
    %v4841 = vadd.f32 0.0, %v4840
    %v4842 = vpop.f32.mrf.mxu0
    %v4843 = vadd.f32 0.0, %v4842
    %4844 = vmatmul.bf16.gmra.mxu0 %v4781
    %v4845 = vpop.f32.mrf.mxu0
    %v4846 = vadd.f32 0.0, %v4845
    %v4847 = vpop.f32.mrf.mxu0
    %v4848 = vadd.f32 0.0, %v4847
    %4849 = vmatmul.bf16.gmra.mxu0 %v4784
    %v4850 = vpop.f32.mrf.mxu0
    %v4851 = vadd.f32 0.0, %v4850
    %v4852 = vpop.f32.mrf.mxu0
    %v4853 = vadd.f32 0.0, %v4852
    %4854 = vmatmul.bf16.gmra.mxu0 %v4787
    %v4855 = vpop.f32.mrf.mxu0
    %v4856 = vadd.f32 0.0, %v4855
    %v4857 = vpop.f32.mrf.mxu0
    %v4858 = vadd.f32 0.0, %v4857
    %4859 = vmatmul.bf16.gmra.mxu0 %v4790
    %v4860 = vpop.f32.mrf.mxu0
    %v4861 = vadd.f32 0.0, %v4860
    %v4862 = vpop.f32.mrf.mxu0
    %v4863 = vadd.f32 0.0, %v4862
    %4864 = vmatmul.bf16.gmra.mxu0 %v4793
    %v4865 = vpop.f32.mrf.mxu0
    %v4866 = vadd.f32 0.0, %v4865
    %v4867 = vpop.f32.mrf.mxu0
    %v4868 = vadd.f32 0.0, %v4867
    %4869 = vmatmul.bf16.gmra.mxu0 %v4796
    %v4870 = vpop.f32.mrf.mxu0
    %v4871 = vadd.f32 0.0, %v4870
    %v4872 = vpop.f32.mrf.mxu0
    %v4873 = vadd.f32 0.0, %v4872
    %4874 = vmatmul.bf16.gmra.mxu0 %v4799
    %v4875 = vpop.f32.mrf.mxu0
    %v4876 = vadd.f32 0.0, %v4875
    %v4877 = vpop.f32.mrf.mxu0
    %v4878 = vadd.f32 0.0, %v4877
    %4879 = vmatmul.bf16.gmra.mxu0 %v4802
    %v4880 = vpop.f32.mrf.mxu0
    %v4881 = vadd.f32 0.0, %v4880
    %v4882 = vpop.f32.mrf.mxu0
    %v4883 = vadd.f32 0.0, %v4882
    %4884 = vmatmul.bf16.gmra.mxu0 %v4805
    %v4885 = vpop.f32.mrf.mxu0
    %v4886 = vadd.f32 0.0, %v4885
    %v4887 = vpop.f32.mrf.mxu0
    %v4888 = vadd.f32 0.0, %v4887
    %4889 = vmatmul.bf16.gmra.mxu0 %v4808
    %v4890 = vpop.f32.mrf.mxu0
    %v4891 = vadd.f32 0.0, %v4890
    %v4892 = vpop.f32.mrf.mxu0
    %v4893 = vadd.f32 0.0, %v4892
    %4894 = vmatmul.bf16.gmra.mxu0 %v4811
    %v4895 = vpop.f32.mrf.mxu0
    %v4896 = vadd.f32 0.0, %v4895
    %v4897 = vpop.f32.mrf.mxu0
    %v4898 = vadd.f32 0.0, %v4897
    %4899 = vmatmul.bf16.gmra.mxu0 %v4814
    %v4900 = vpop.f32.mrf.mxu0
    %v4901 = vadd.f32 0.0, %v4900
    %v4902 = vpop.f32.mrf.mxu0
    %v4903 = vadd.f32 0.0, %v4902
    %4904 = vdwg.mxu0
    %v4905 = vadd.f32 %v4608, %v4826
    %v4906 = vadd.f32 %v4610, %v4828
    %v4907 = vadd.f32 %v4613, %v4831
    %v4908 = vadd.f32 %v4615, %v4833
    %v4909 = vadd.f32 %v4618, %v4836
    %v4910 = vadd.f32 %v4620, %v4838
    %v4911 = vadd.f32 %v4623, %v4841
    %v4912 = vadd.f32 %v4625, %v4843
    %v4913 = vadd.f32 %v4628, %v4846
    %v4914 = vadd.f32 %v4630, %v4848
    %v4915 = vadd.f32 %v4633, %v4851
    %v4916 = vadd.f32 %v4635, %v4853
    %v4917 = vadd.f32 %v4638, %v4856
    %v4918 = vadd.f32 %v4640, %v4858
    %v4919 = vadd.f32 %v4643, %v4861
    %v4920 = vadd.f32 %v4645, %v4863
    %v4921 = vadd.f32 %v4648, %v4866
    %v4922 = vadd.f32 %v4650, %v4868
    %v4923 = vadd.f32 %v4653, %v4871
    %v4924 = vadd.f32 %v4655, %v4873
    %v4925 = vadd.f32 %v4658, %v4876
    %v4926 = vadd.f32 %v4660, %v4878
    %v4927 = vadd.f32 %v4663, %v4881
    %v4928 = vadd.f32 %v4665, %v4883
    %v4929 = vadd.f32 %v4668, %v4886
    %v4930 = vadd.f32 %v4670, %v4888
    %v4931 = vadd.f32 %v4673, %v4891
    %v4932 = vadd.f32 %v4675, %v4893
    %v4933 = vadd.f32 %v4678, %v4896
    %v4934 = vadd.f32 %v4680, %v4898
    %v4935 = vadd.f32 %v4683, %v4901
    %v4936 = vadd.f32 %v4685, %v4903
    %v4937 = vld [vmem:[#allocation4 + $0x11] sm:$0xff]
    %v4938 = vld [vmem:[#allocation4 + $0x19] sm:$0xff]
    %v4939 = vld [vmem:[#allocation4 + $0x21] sm:$0xff]
    %v4940 = vld [vmem:[#allocation4 + $0x29] sm:$0xff]
    %v4941 = vld [vmem:[#allocation4 + $0x31] sm:$0xff]
    %v4942 = vld [vmem:[#allocation4 + $0x39] sm:$0xff]
    %v4943 = vld [vmem:[#allocation4 + $0x41] sm:$0xff]
    %v4944 = vld [vmem:[#allocation4 + $0x49] sm:$0xff]
    %v4945 = vld [vmem:[#allocation4 + $0x51] sm:$0xff]
    %v4946 = vld [vmem:[#allocation4 + $0x59] sm:$0xff]
    %v4947 = vld [vmem:[#allocation4 + $0x61] sm:$0xff]
    %v4948 = vld [vmem:[#allocation4 + $0x69] sm:$0xff]
    %v4949 = vld [vmem:[#allocation4 + $0x71] sm:$0xff]
    %v4950 = vld [vmem:[#allocation4 + $0x79] sm:$0xff]
    %v4951 = vld [vmem:[#allocation4 + $0x81] sm:$0xff]
    %v4952 = vld [vmem:[#allocation4 + $0x89] sm:$0xff]
    %v4953 = vld [vmem:[#allocation4 + $0x91] sm:$0xff]
    %v4954 = vld [vmem:[#allocation4 + $0x99] sm:$0xff]
    %v4955 = vld [vmem:[#allocation4 + $0xa1] sm:$0xff]
    %v4956 = vld [vmem:[#allocation4 + $0xa9] sm:$0xff]
    %v4957 = vld [vmem:[#allocation4 + $0xb1] sm:$0xff]
    %v4958 = vld [vmem:[#allocation4 + $0xb9] sm:$0xff]
    %v4959 = vld [vmem:[#allocation4 + $0xc1] sm:$0xff]
    %v4960 = vld [vmem:[#allocation4 + $0xc9] sm:$0xff]
    %v4961 = vld [vmem:[#allocation4 + $0xd1] sm:$0xff]
    %v4962 = vld [vmem:[#allocation4 + $0xd9] sm:$0xff]
    %v4963 = vld [vmem:[#allocation4 + $0xe1] sm:$0xff]
    %v4964 = vld [vmem:[#allocation4 + $0xe9] sm:$0xff]
    %v4965 = vld [vmem:[#allocation4 + $0xf1] sm:$0xff]
    %v4966 = vld [vmem:[#allocation4 + $0xf9] sm:$0xff]
    %v4967 = vld [vmem:[#allocation4 + $0x101] sm:$0xff]
    %v4968 = vld [vmem:[#allocation4 + $0x109] sm:$0xff]
    %v4969 = vpack.c.bf16 %v4938, %v4937
    %v4970 = vpack.c.bf16 %v4940, %v4939
    %v4971 = vpack.c.bf16 %v4942, %v4941
    %v4972 = vpack.c.bf16 %v4944, %v4943
    %v4973 = vpack.c.bf16 %v4946, %v4945
    %v4974 = vpack.c.bf16 %v4948, %v4947
    %v4975 = vpack.c.bf16 %v4950, %v4949
    %v4976 = vpack.c.bf16 %v4952, %v4951
    %v4977 = vpack.c.bf16 %v4954, %v4953
    %v4978 = vpack.c.bf16 %v4956, %v4955
    %v4979 = vpack.c.bf16 %v4958, %v4957
    %v4980 = vpack.c.bf16 %v4960, %v4959
    %v4981 = vpack.c.bf16 %v4962, %v4961
    %v4982 = vpack.c.bf16 %v4964, %v4963
    %v4983 = vpack.c.bf16 %v4966, %v4965
    %v4984 = vpack.c.bf16 %v4968, %v4967
    %s4985 = scalar_lea.vmem %s5, 64
    %v4986 = vld [vmem:[%s4985] sm:$0xf]
    %v4987 = vld [vmem:[%s4985 + $0x4] sm:$0xf]
    %v4988 = vld [vmem:[%s4985 + $0x8] sm:$0xf]
    %v4989 = vld [vmem:[%s4985 + $0xc] sm:$0xf]
    %v4990 = vld [vmem:[%s4985 + $0x10] sm:$0xf]
    %v4991 = vld [vmem:[%s4985 + $0x14] sm:$0xf]
    %v4992 = vld [vmem:[%s4985 + $0x18] sm:$0xf]
    %v4993 = vld [vmem:[%s4985 + $0x1c] sm:$0xf]
    %v5002 = vunpack.c.l.b16 %v4986
    %v5003 = vunpack.c.l.b16 %v4987
    %v5004 = vunpack.c.l.b16 %v4988
    %v5005 = vunpack.c.l.b16 %v4989
    %v5006 = vunpack.c.l.b16 %v4990
    %v5007 = vunpack.c.l.b16 %v4991
    %v5008 = vunpack.c.l.b16 %v4992
    %v5009 = vunpack.c.l.b16 %v4993
    %v5010 = vpack.c.b16 %v5003, %v5002
    %v5011 = vpack.c.b16 %v5005, %v5004
    %v5012 = vpack.c.b16 %v5007, %v5006
    %v5013 = vpack.c.b16 %v5009, %v5008
    %v5019 = vsel %vm33, %v4969, 0
    %v5022 = vsel %vm33, %v4970, 0
    %v5025 = vsel %vm33, %v4971, 0
    %v5028 = vsel %vm33, %v4972, 0
    %v5031 = vsel %vm33, %v4973, 0
    %v5034 = vsel %vm33, %v4974, 0
    %v5037 = vsel %vm33, %v4975, 0
    %v5040 = vsel %vm33, %v4976, 0
    %v5043 = vsel %vm33, %v4977, 0
    %v5046 = vsel %vm33, %v4978, 0
    %v5049 = vsel %vm33, %v4979, 0
    %v5052 = vsel %vm33, %v4980, 0
    %v5055 = vsel %vm33, %v4981, 0
    %v5058 = vsel %vm33, %v4982, 0
    %v5061 = vsel %vm33, %v4983, 0
    %v5064 = vsel %vm33, %v4984, 0
    %5066 = vmatpush.bf16.msra.mxu0 0
    %5067 = vmatpush.bf16.msra.mxu0 0
    %5068 = vmatpush.bf16.msra.mxu0 0
    %5069 = vmatpush.bf16.msra.mxu0 0
    %5070 = vmatpush.bf16.msra.mxu0 %v5013
    %5071 = vmatpush.bf16.msra.mxu0 %v5012
    %5072 = vmatpush.bf16.msra.mxu0 %v5011
    %5073 = vmatpush.bf16.msra.mxu0 %v5010
    %5074 = vmatmul.bf16.gmra.mxu0 %v5019
    %v5075 = vpop.f32.mrf.mxu0
    %v5076 = vadd.f32 0.0, %v5075
    %v5077 = vpop.f32.mrf.mxu0
    %v5078 = vadd.f32 0.0, %v5077
    %5079 = vmatmul.bf16.gmra.mxu0 %v5022
    %v5080 = vpop.f32.mrf.mxu0
    %v5081 = vadd.f32 0.0, %v5080
    %v5082 = vpop.f32.mrf.mxu0
    %v5083 = vadd.f32 0.0, %v5082
    %5084 = vmatmul.bf16.gmra.mxu0 %v5025
    %v5085 = vpop.f32.mrf.mxu0
    %v5086 = vadd.f32 0.0, %v5085
    %v5087 = vpop.f32.mrf.mxu0
    %v5088 = vadd.f32 0.0, %v5087
    %5089 = vmatmul.bf16.gmra.mxu0 %v5028
    %v5090 = vpop.f32.mrf.mxu0
    %v5091 = vadd.f32 0.0, %v5090
    %v5092 = vpop.f32.mrf.mxu0
    %v5093 = vadd.f32 0.0, %v5092
    %5094 = vmatmul.bf16.gmra.mxu0 %v5031
    %v5095 = vpop.f32.mrf.mxu0
    %v5096 = vadd.f32 0.0, %v5095
    %v5097 = vpop.f32.mrf.mxu0
    %v5098 = vadd.f32 0.0, %v5097
    %5099 = vmatmul.bf16.gmra.mxu0 %v5034
    %v5100 = vpop.f32.mrf.mxu0
    %v5101 = vadd.f32 0.0, %v5100
    %v5102 = vpop.f32.mrf.mxu0
    %v5103 = vadd.f32 0.0, %v5102
    %5104 = vmatmul.bf16.gmra.mxu0 %v5037
    %v5105 = vpop.f32.mrf.mxu0
    %v5106 = vadd.f32 0.0, %v5105
    %v5107 = vpop.f32.mrf.mxu0
    %v5108 = vadd.f32 0.0, %v5107
    %5109 = vmatmul.bf16.gmra.mxu0 %v5040
    %v5110 = vpop.f32.mrf.mxu0
    %v5111 = vadd.f32 0.0, %v5110
    %v5112 = vpop.f32.mrf.mxu0
    %v5113 = vadd.f32 0.0, %v5112
    %5114 = vmatmul.bf16.gmra.mxu0 %v5043
    %v5115 = vpop.f32.mrf.mxu0
    %v5116 = vadd.f32 0.0, %v5115
    %v5117 = vpop.f32.mrf.mxu0
    %v5118 = vadd.f32 0.0, %v5117
    %5119 = vmatmul.bf16.gmra.mxu0 %v5046
    %v5120 = vpop.f32.mrf.mxu0
    %v5121 = vadd.f32 0.0, %v5120
    %v5122 = vpop.f32.mrf.mxu0
    %v5123 = vadd.f32 0.0, %v5122
    %5124 = vmatmul.bf16.gmra.mxu0 %v5049
    %v5125 = vpop.f32.mrf.mxu0
    %v5126 = vadd.f32 0.0, %v5125
    %v5127 = vpop.f32.mrf.mxu0
    %v5128 = vadd.f32 0.0, %v5127
    %5129 = vmatmul.bf16.gmra.mxu0 %v5052
    %v5130 = vpop.f32.mrf.mxu0
    %v5131 = vadd.f32 0.0, %v5130
    %v5132 = vpop.f32.mrf.mxu0
    %v5133 = vadd.f32 0.0, %v5132
    %5134 = vmatmul.bf16.gmra.mxu0 %v5055
    %v5135 = vpop.f32.mrf.mxu0
    %v5136 = vadd.f32 0.0, %v5135
    %v5137 = vpop.f32.mrf.mxu0
    %v5138 = vadd.f32 0.0, %v5137
    %5139 = vmatmul.bf16.gmra.mxu0 %v5058
    %v5140 = vpop.f32.mrf.mxu0
    %v5141 = vadd.f32 0.0, %v5140
    %v5142 = vpop.f32.mrf.mxu0
    %v5143 = vadd.f32 0.0, %v5142
    %5144 = vmatmul.bf16.gmra.mxu0 %v5061
    %v5145 = vpop.f32.mrf.mxu0
    %v5146 = vadd.f32 0.0, %v5145
    %v5147 = vpop.f32.mrf.mxu0
    %v5148 = vadd.f32 0.0, %v5147
    %5149 = vmatmul.bf16.gmra.mxu0 %v5064
    %v5150 = vpop.f32.mrf.mxu0
    %v5151 = vadd.f32 0.0, %v5150
    %v5152 = vpop.f32.mrf.mxu0
    %v5153 = vadd.f32 0.0, %v5152
    %5154 = vdwg.mxu0
    %v5155 = vadd.f32 %v4905, %v5076
    %v5156 = vadd.f32 %v4906, %v5078
    %v5157 = vadd.f32 %v4907, %v5081
    %v5158 = vadd.f32 %v4908, %v5083
    %v5159 = vadd.f32 %v4909, %v5086
    %v5160 = vadd.f32 %v4910, %v5088
    %v5161 = vadd.f32 %v4911, %v5091
    %v5162 = vadd.f32 %v4912, %v5093
    %v5163 = vadd.f32 %v4913, %v5096
    %v5164 = vadd.f32 %v4914, %v5098
    %v5165 = vadd.f32 %v4915, %v5101
    %v5166 = vadd.f32 %v4916, %v5103
    %v5167 = vadd.f32 %v4917, %v5106
    %v5168 = vadd.f32 %v4918, %v5108
    %v5169 = vadd.f32 %v4919, %v5111
    %v5170 = vadd.f32 %v4920, %v5113
    %v5171 = vadd.f32 %v4921, %v5116
    %v5172 = vadd.f32 %v4922, %v5118
    %v5173 = vadd.f32 %v4923, %v5121
    %v5174 = vadd.f32 %v4924, %v5123
    %v5175 = vadd.f32 %v4925, %v5126
    %v5176 = vadd.f32 %v4926, %v5128
    %v5177 = vadd.f32 %v4927, %v5131
    %v5178 = vadd.f32 %v4928, %v5133
    %v5179 = vadd.f32 %v4929, %v5136
    %v5180 = vadd.f32 %v4930, %v5138
    %v5181 = vadd.f32 %v4931, %v5141
    %v5182 = vadd.f32 %v4932, %v5143
    %v5183 = vadd.f32 %v4933, %v5146
    %v5184 = vadd.f32 %v4934, %v5148
    %v5185 = vadd.f32 %v4935, %v5151
    %v5186 = vadd.f32 %v4936, %v5153
    %v5187 = vld [vmem:[#allocation4 + $0x1f] sm:$0xff]
    %v5188 = vld [vmem:[#allocation4 + $0x27] sm:$0xff]
    %v5189 = vld [vmem:[#allocation4 + $0x2f] sm:$0xff]
    %v5190 = vld [vmem:[#allocation4 + $0x37] sm:$0xff]
    %v5191 = vld [vmem:[#allocation4 + $0x3f] sm:$0xff]
    %v5192 = vld [vmem:[#allocation4 + $0x47] sm:$0xff]
    %v5193 = vld [vmem:[#allocation4 + $0x4f] sm:$0xff]
    %v5194 = vld [vmem:[#allocation4 + $0x57] sm:$0xff]
    %v5195 = vld [vmem:[#allocation4 + $0x5f] sm:$0xff]
    %v5196 = vld [vmem:[#allocation4 + $0x67] sm:$0xff]
    %v5197 = vld [vmem:[#allocation4 + $0x6f] sm:$0xff]
    %v5198 = vld [vmem:[#allocation4 + $0x77] sm:$0xff]
    %v5199 = vld [vmem:[#allocation4 + $0x7f] sm:$0xff]
    %v5200 = vld [vmem:[#allocation4 + $0x87] sm:$0xff]
    %v5201 = vld [vmem:[#allocation4 + $0x8f] sm:$0xff]
    %v5202 = vld [vmem:[#allocation4 + $0x97] sm:$0xff]
    %v5203 = vld [vmem:[#allocation4 + $0x9f] sm:$0xff]
    %v5204 = vld [vmem:[#allocation4 + $0xa7] sm:$0xff]
    %v5205 = vld [vmem:[#allocation4 + $0xaf] sm:$0xff]
    %v5206 = vld [vmem:[#allocation4 + $0xb7] sm:$0xff]
    %v5207 = vld [vmem:[#allocation4 + $0xbf] sm:$0xff]
    %v5208 = vld [vmem:[#allocation4 + $0xc7] sm:$0xff]
    %v5209 = vld [vmem:[#allocation4 + $0xcf] sm:$0xff]
    %v5210 = vld [vmem:[#allocation4 + $0xd7] sm:$0xff]
    %v5211 = vld [vmem:[#allocation4 + $0xdf] sm:$0xff]
    %v5212 = vld [vmem:[#allocation4 + $0xe7] sm:$0xff]
    %v5213 = vld [vmem:[#allocation4 + $0xef] sm:$0xff]
    %v5214 = vld [vmem:[#allocation4 + $0xf7] sm:$0xff]
    %v5215 = vld [vmem:[#allocation4 + $0xff] sm:$0xff]
    %v5216 = vld [vmem:[#allocation4 + $0x107] sm:$0xff]
    %v5217 = vld [vmem:[#allocation4 + $0x10f] sm:$0xff]
    %v5218 = vld [vmem:[#allocation4 + $0x117] sm:$0xff]
    %v5219 = vpack.c.bf16 %v5188, %v5187
    %v5220 = vpack.c.bf16 %v5190, %v5189
    %v5221 = vpack.c.bf16 %v5192, %v5191
    %v5222 = vpack.c.bf16 %v5194, %v5193
    %v5223 = vpack.c.bf16 %v5196, %v5195
    %v5224 = vpack.c.bf16 %v5198, %v5197
    %v5225 = vpack.c.bf16 %v5200, %v5199
    %v5226 = vpack.c.bf16 %v5202, %v5201
    %v5227 = vpack.c.bf16 %v5204, %v5203
    %v5228 = vpack.c.bf16 %v5206, %v5205
    %v5229 = vpack.c.bf16 %v5208, %v5207
    %v5230 = vpack.c.bf16 %v5210, %v5209
    %v5231 = vpack.c.bf16 %v5212, %v5211
    %v5232 = vpack.c.bf16 %v5214, %v5213
    %v5233 = vpack.c.bf16 %v5216, %v5215
    %v5234 = vpack.c.bf16 %v5218, %v5217
    %s5235 = scalar_lea.vmem %s5, 96
    %v5236 = vld [vmem:[%s5235] sm:$0xf]
    %v5237 = vld [vmem:[%s5235 + $0x4] sm:$0xf]
    %v5238 = vld [vmem:[%s5235 + $0x8] sm:$0xf]
    %v5239 = vld [vmem:[%s5235 + $0xc] sm:$0xf]
    %v5240 = vld [vmem:[%s5235 + $0x10] sm:$0xf]
    %v5241 = vld [vmem:[%s5235 + $0x14] sm:$0xf]
    %v5242 = vld [vmem:[%s5235 + $0x18] sm:$0xf]
    %v5243 = vld [vmem:[%s5235 + $0x1c] sm:$0xf]
    %v5252 = vunpack.c.l.b16 %v5236
    %v5253 = vunpack.c.l.b16 %v5237
    %v5254 = vunpack.c.l.b16 %v5238
    %v5255 = vunpack.c.l.b16 %v5239
    %v5256 = vunpack.c.l.b16 %v5240
    %v5257 = vunpack.c.l.b16 %v5241
    %v5258 = vunpack.c.l.b16 %v5242
    %v5259 = vunpack.c.l.b16 %v5243
    %v5260 = vpack.c.b16 %v5253, %v5252
    %v5261 = vpack.c.b16 %v5255, %v5254
    %v5262 = vpack.c.b16 %v5257, %v5256
    %v5263 = vpack.c.b16 %v5259, %v5258
    %v5269 = vsel %vm33, %v5219, 0
    %v5272 = vsel %vm33, %v5220, 0
    %v5275 = vsel %vm33, %v5221, 0
    %v5278 = vsel %vm33, %v5222, 0
    %v5281 = vsel %vm33, %v5223, 0
    %v5284 = vsel %vm33, %v5224, 0
    %v5287 = vsel %vm33, %v5225, 0
    %v5290 = vsel %vm33, %v5226, 0
    %v5293 = vsel %vm33, %v5227, 0
    %v5296 = vsel %vm33, %v5228, 0
    %v5299 = vsel %vm33, %v5229, 0
    %v5302 = vsel %vm33, %v5230, 0
    %v5305 = vsel %vm33, %v5231, 0
    %v5308 = vsel %vm33, %v5232, 0
    %v5311 = vsel %vm33, %v5233, 0
    %v5314 = vsel %vm33, %v5234, 0
    %5316 = vmatpush.bf16.msra.mxu0 0
    %5317 = vmatpush.bf16.msra.mxu0 0
    %5318 = vmatpush.bf16.msra.mxu0 0
    %5319 = vmatpush.bf16.msra.mxu0 0
    %5320 = vmatpush.bf16.msra.mxu0 %v5263
    %5321 = vmatpush.bf16.msra.mxu0 %v5262
    %5322 = vmatpush.bf16.msra.mxu0 %v5261
    %5323 = vmatpush.bf16.msra.mxu0 %v5260
    %5324 = vmatmul.bf16.gmra.mxu0 %v5269
    %v5325 = vpop.f32.mrf.mxu0
    %v5326 = vadd.f32 0.0, %v5325
    %v5327 = vpop.f32.mrf.mxu0
    %v5328 = vadd.f32 0.0, %v5327
    %5329 = vmatmul.bf16.gmra.mxu0 %v5272
    %v5330 = vpop.f32.mrf.mxu0
    %v5331 = vadd.f32 0.0, %v5330
    %v5332 = vpop.f32.mrf.mxu0
    %v5333 = vadd.f32 0.0, %v5332
    %5334 = vmatmul.bf16.gmra.mxu0 %v5275
    %v5335 = vpop.f32.mrf.mxu0
    %v5336 = vadd.f32 0.0, %v5335
    %v5337 = vpop.f32.mrf.mxu0
    %v5338 = vadd.f32 0.0, %v5337
    %5339 = vmatmul.bf16.gmra.mxu0 %v5278
    %v5340 = vpop.f32.mrf.mxu0
    %v5341 = vadd.f32 0.0, %v5340
    %v5342 = vpop.f32.mrf.mxu0
    %v5343 = vadd.f32 0.0, %v5342
    %5344 = vmatmul.bf16.gmra.mxu0 %v5281
    %v5345 = vpop.f32.mrf.mxu0
    %v5346 = vadd.f32 0.0, %v5345
    %v5347 = vpop.f32.mrf.mxu0
    %v5348 = vadd.f32 0.0, %v5347
    %5349 = vmatmul.bf16.gmra.mxu0 %v5284
    %v5350 = vpop.f32.mrf.mxu0
    %v5351 = vadd.f32 0.0, %v5350
    %v5352 = vpop.f32.mrf.mxu0
    %v5353 = vadd.f32 0.0, %v5352
    %5354 = vmatmul.bf16.gmra.mxu0 %v5287
    %v5355 = vpop.f32.mrf.mxu0
    %v5356 = vadd.f32 0.0, %v5355
    %v5357 = vpop.f32.mrf.mxu0
    %v5358 = vadd.f32 0.0, %v5357
    %5359 = vmatmul.bf16.gmra.mxu0 %v5290
    %v5360 = vpop.f32.mrf.mxu0
    %v5361 = vadd.f32 0.0, %v5360
    %v5362 = vpop.f32.mrf.mxu0
    %v5363 = vadd.f32 0.0, %v5362
    %5364 = vmatmul.bf16.gmra.mxu0 %v5293
    %v5365 = vpop.f32.mrf.mxu0
    %v5366 = vadd.f32 0.0, %v5365
    %v5367 = vpop.f32.mrf.mxu0
    %v5368 = vadd.f32 0.0, %v5367
    %5369 = vmatmul.bf16.gmra.mxu0 %v5296
    %v5370 = vpop.f32.mrf.mxu0
    %v5371 = vadd.f32 0.0, %v5370
    %v5372 = vpop.f32.mrf.mxu0
    %v5373 = vadd.f32 0.0, %v5372
    %5374 = vmatmul.bf16.gmra.mxu0 %v5299
    %v5375 = vpop.f32.mrf.mxu0
    %v5376 = vadd.f32 0.0, %v5375
    %v5377 = vpop.f32.mrf.mxu0
    %v5378 = vadd.f32 0.0, %v5377
    %5379 = vmatmul.bf16.gmra.mxu0 %v5302
    %v5380 = vpop.f32.mrf.mxu0
    %v5381 = vadd.f32 0.0, %v5380
    %v5382 = vpop.f32.mrf.mxu0
    %v5383 = vadd.f32 0.0, %v5382
    %5384 = vmatmul.bf16.gmra.mxu0 %v5305
    %v5385 = vpop.f32.mrf.mxu0
    %v5386 = vadd.f32 0.0, %v5385
    %v5387 = vpop.f32.mrf.mxu0
    %v5388 = vadd.f32 0.0, %v5387
    %5389 = vmatmul.bf16.gmra.mxu0 %v5308
    %v5390 = vpop.f32.mrf.mxu0
    %v5391 = vadd.f32 0.0, %v5390
    %v5392 = vpop.f32.mrf.mxu0
    %v5393 = vadd.f32 0.0, %v5392
    %5394 = vmatmul.bf16.gmra.mxu0 %v5311
    %v5395 = vpop.f32.mrf.mxu0
    %v5396 = vadd.f32 0.0, %v5395
    %v5397 = vpop.f32.mrf.mxu0
    %v5398 = vadd.f32 0.0, %v5397
    %5399 = vmatmul.bf16.gmra.mxu0 %v5314
    %v5400 = vpop.f32.mrf.mxu0
    %v5401 = vadd.f32 0.0, %v5400
    %v5402 = vpop.f32.mrf.mxu0
    %v5403 = vadd.f32 0.0, %v5402
    %5404 = vdwg.mxu0
    %v5405 = vadd.f32 %v5155, %v5326
    %v5406 = vadd.f32 %v5156, %v5328
    %v5407 = vadd.f32 %v5157, %v5331
    %v5408 = vadd.f32 %v5158, %v5333
    %v5409 = vadd.f32 %v5159, %v5336
    %v5410 = vadd.f32 %v5160, %v5338
    %v5411 = vadd.f32 %v5161, %v5341
    %v5412 = vadd.f32 %v5162, %v5343
    %v5413 = vadd.f32 %v5163, %v5346
    %v5414 = vadd.f32 %v5164, %v5348
    %v5415 = vadd.f32 %v5165, %v5351
    %v5416 = vadd.f32 %v5166, %v5353
    %v5417 = vadd.f32 %v5167, %v5356
    %v5418 = vadd.f32 %v5168, %v5358
    %v5419 = vadd.f32 %v5169, %v5361
    %v5420 = vadd.f32 %v5170, %v5363
    %v5421 = vadd.f32 %v5171, %v5366
    %v5422 = vadd.f32 %v5172, %v5368
    %v5423 = vadd.f32 %v5173, %v5371
    %v5424 = vadd.f32 %v5174, %v5373
    %v5425 = vadd.f32 %v5175, %v5376
    %v5426 = vadd.f32 %v5176, %v5378
    %v5427 = vadd.f32 %v5177, %v5381
    %v5428 = vadd.f32 %v5178, %v5383
    %v5429 = vadd.f32 %v5179, %v5386
    %v5430 = vadd.f32 %v5180, %v5388
    %v5431 = vadd.f32 %v5181, %v5391
    %v5432 = vadd.f32 %v5182, %v5393
    %v5433 = vadd.f32 %v5183, %v5396
    %v5434 = vadd.f32 %v5184, %v5398
    %v5435 = vadd.f32 %v5185, %v5401
    %v5436 = vadd.f32 %v5186, %v5403
    %v5437 = vld [vmem:[#allocation4 + $0x20] sm:$0xff]
    %v5438 = vld [vmem:[#allocation4 + $0x28] sm:$0xff]
    %v5439 = vld [vmem:[#allocation4 + $0x30] sm:$0xff]
    %v5440 = vld [vmem:[#allocation4 + $0x38] sm:$0xff]
    %v5441 = vld [vmem:[#allocation4 + $0x40] sm:$0xff]
    %v5442 = vld [vmem:[#allocation4 + $0x48] sm:$0xff]
    %v5443 = vld [vmem:[#allocation4 + $0x50] sm:$0xff]
    %v5444 = vld [vmem:[#allocation4 + $0x58] sm:$0xff]
    %v5445 = vld [vmem:[#allocation4 + $0x60] sm:$0xff]
    %v5446 = vld [vmem:[#allocation4 + $0x68] sm:$0xff]
    %v5447 = vld [vmem:[#allocation4 + $0x70] sm:$0xff]
    %v5448 = vld [vmem:[#allocation4 + $0x78] sm:$0xff]
    %v5449 = vld [vmem:[#allocation4 + $0x80] sm:$0xff]
    %v5450 = vld [vmem:[#allocation4 + $0x88] sm:$0xff]
    %v5451 = vld [vmem:[#allocation4 + $0x90] sm:$0xff]
    %v5452 = vld [vmem:[#allocation4 + $0x98] sm:$0xff]
    %v5453 = vld [vmem:[#allocation4 + $0xa0] sm:$0xff]
    %v5454 = vld [vmem:[#allocation4 + $0xa8] sm:$0xff]
    %v5455 = vld [vmem:[#allocation4 + $0xb0] sm:$0xff]
    %v5456 = vld [vmem:[#allocation4 + $0xb8] sm:$0xff]
    %v5457 = vld [vmem:[#allocation4 + $0xc0] sm:$0xff]
    %v5458 = vld [vmem:[#allocation4 + $0xc8] sm:$0xff]
    %v5459 = vld [vmem:[#allocation4 + $0xd0] sm:$0xff]
    %v5460 = vld [vmem:[#allocation4 + $0xd8] sm:$0xff]
    %v5461 = vld [vmem:[#allocation4 + $0xe0] sm:$0xff]
    %v5462 = vld [vmem:[#allocation4 + $0xe8] sm:$0xff]
    %v5463 = vld [vmem:[#allocation4 + $0xf0] sm:$0xff]
    %v5464 = vld [vmem:[#allocation4 + $0xf8] sm:$0xff]
    %v5465 = vld [vmem:[#allocation4 + $0x100] sm:$0xff]
    %v5466 = vld [vmem:[#allocation4 + $0x108] sm:$0xff]
    %v5467 = vld [vmem:[#allocation4 + $0x110] sm:$0xff]
    %v5468 = vld [vmem:[#allocation4 + $0x118] sm:$0xff]
    %v5469 = vpack.c.bf16 %v5438, %v5437
    %v5470 = vpack.c.bf16 %v5440, %v5439
    %v5471 = vpack.c.bf16 %v5442, %v5441
    %v5472 = vpack.c.bf16 %v5444, %v5443
    %v5473 = vpack.c.bf16 %v5446, %v5445
    %v5474 = vpack.c.bf16 %v5448, %v5447
    %v5475 = vpack.c.bf16 %v5450, %v5449
    %v5476 = vpack.c.bf16 %v5452, %v5451
    %v5477 = vpack.c.bf16 %v5454, %v5453
    %v5478 = vpack.c.bf16 %v5456, %v5455
    %v5479 = vpack.c.bf16 %v5458, %v5457
    %v5480 = vpack.c.bf16 %v5460, %v5459
    %v5481 = vpack.c.bf16 %v5462, %v5461
    %v5482 = vpack.c.bf16 %v5464, %v5463
    %v5483 = vpack.c.bf16 %v5466, %v5465
    %v5484 = vpack.c.bf16 %v5468, %v5467
    %s5485 = scalar_lea.vmem %s5, 128
    %v5486 = vld [vmem:[%s5485] sm:$0xf]
    %v5487 = vld [vmem:[%s5485 + $0x4] sm:$0xf]
    %v5488 = vld [vmem:[%s5485 + $0x8] sm:$0xf]
    %v5489 = vld [vmem:[%s5485 + $0xc] sm:$0xf]
    %v5490 = vld [vmem:[%s5485 + $0x10] sm:$0xf]
    %v5491 = vld [vmem:[%s5485 + $0x14] sm:$0xf]
    %v5492 = vld [vmem:[%s5485 + $0x18] sm:$0xf]
    %v5493 = vld [vmem:[%s5485 + $0x1c] sm:$0xf]
    %v5502 = vunpack.c.l.b16 %v5486
    %v5503 = vunpack.c.l.b16 %v5487
    %v5504 = vunpack.c.l.b16 %v5488
    %v5505 = vunpack.c.l.b16 %v5489
    %v5506 = vunpack.c.l.b16 %v5490
    %v5507 = vunpack.c.l.b16 %v5491
    %v5508 = vunpack.c.l.b16 %v5492
    %v5509 = vunpack.c.l.b16 %v5493
    %v5510 = vpack.c.b16 %v5503, %v5502
    %v5511 = vpack.c.b16 %v5505, %v5504
    %v5512 = vpack.c.b16 %v5507, %v5506
    %v5513 = vpack.c.b16 %v5509, %v5508
    %v5519 = vsel %vm33, %v5469, 0
    %v5522 = vsel %vm33, %v5470, 0
    %v5525 = vsel %vm33, %v5471, 0
    %v5528 = vsel %vm33, %v5472, 0
    %v5531 = vsel %vm33, %v5473, 0
    %v5534 = vsel %vm33, %v5474, 0
    %v5537 = vsel %vm33, %v5475, 0
    %v5540 = vsel %vm33, %v5476, 0
    %v5543 = vsel %vm33, %v5477, 0
    %v5546 = vsel %vm33, %v5478, 0
    %v5549 = vsel %vm33, %v5479, 0
    %v5552 = vsel %vm33, %v5480, 0
    %v5555 = vsel %vm33, %v5481, 0
    %v5558 = vsel %vm33, %v5482, 0
    %v5561 = vsel %vm33, %v5483, 0
    %v5564 = vsel %vm33, %v5484, 0
    %5566 = vmatpush.bf16.msra.mxu0 0
    %5567 = vmatpush.bf16.msra.mxu0 0
    %5568 = vmatpush.bf16.msra.mxu0 0
    %5569 = vmatpush.bf16.msra.mxu0 0
    %5570 = vmatpush.bf16.msra.mxu0 %v5513
    %5571 = vmatpush.bf16.msra.mxu0 %v5512
    %5572 = vmatpush.bf16.msra.mxu0 %v5511
    %5573 = vmatpush.bf16.msra.mxu0 %v5510
    %5574 = vmatmul.bf16.gmra.mxu0 %v5519
    %v5575 = vpop.f32.mrf.mxu0
    %v5576 = vadd.f32 0.0, %v5575
    %v5577 = vpop.f32.mrf.mxu0
    %v5578 = vadd.f32 0.0, %v5577
    %5579 = vmatmul.bf16.gmra.mxu0 %v5522
    %v5580 = vpop.f32.mrf.mxu0
    %v5581 = vadd.f32 0.0, %v5580
    %v5582 = vpop.f32.mrf.mxu0
    %v5583 = vadd.f32 0.0, %v5582
    %5584 = vmatmul.bf16.gmra.mxu0 %v5525
    %v5585 = vpop.f32.mrf.mxu0
    %v5586 = vadd.f32 0.0, %v5585
    %v5587 = vpop.f32.mrf.mxu0
    %v5588 = vadd.f32 0.0, %v5587
    %5589 = vmatmul.bf16.gmra.mxu0 %v5528
    %v5590 = vpop.f32.mrf.mxu0
    %v5591 = vadd.f32 0.0, %v5590
    %v5592 = vpop.f32.mrf.mxu0
    %v5593 = vadd.f32 0.0, %v5592
    %5594 = vmatmul.bf16.gmra.mxu0 %v5531
    %v5595 = vpop.f32.mrf.mxu0
    %v5596 = vadd.f32 0.0, %v5595
    %v5597 = vpop.f32.mrf.mxu0
    %v5598 = vadd.f32 0.0, %v5597
    %5599 = vmatmul.bf16.gmra.mxu0 %v5534
    %v5600 = vpop.f32.mrf.mxu0
    %v5601 = vadd.f32 0.0, %v5600
    %v5602 = vpop.f32.mrf.mxu0
    %v5603 = vadd.f32 0.0, %v5602
    %5604 = vmatmul.bf16.gmra.mxu0 %v5537
    %v5605 = vpop.f32.mrf.mxu0
    %v5606 = vadd.f32 0.0, %v5605
    %v5607 = vpop.f32.mrf.mxu0
    %v5608 = vadd.f32 0.0, %v5607
    %5609 = vmatmul.bf16.gmra.mxu0 %v5540
    %v5610 = vpop.f32.mrf.mxu0
    %v5611 = vadd.f32 0.0, %v5610
    %v5612 = vpop.f32.mrf.mxu0
    %v5613 = vadd.f32 0.0, %v5612
    %5614 = vmatmul.bf16.gmra.mxu0 %v5543
    %v5615 = vpop.f32.mrf.mxu0
    %v5616 = vadd.f32 0.0, %v5615
    %v5617 = vpop.f32.mrf.mxu0
    %v5618 = vadd.f32 0.0, %v5617
    %5619 = vmatmul.bf16.gmra.mxu0 %v5546
    %v5620 = vpop.f32.mrf.mxu0
    %v5621 = vadd.f32 0.0, %v5620
    %v5622 = vpop.f32.mrf.mxu0
    %v5623 = vadd.f32 0.0, %v5622
    %5624 = vmatmul.bf16.gmra.mxu0 %v5549
    %v5625 = vpop.f32.mrf.mxu0
    %v5626 = vadd.f32 0.0, %v5625
    %v5627 = vpop.f32.mrf.mxu0
    %v5628 = vadd.f32 0.0, %v5627
    %5629 = vmatmul.bf16.gmra.mxu0 %v5552
    %v5630 = vpop.f32.mrf.mxu0
    %v5631 = vadd.f32 0.0, %v5630
    %v5632 = vpop.f32.mrf.mxu0
    %v5633 = vadd.f32 0.0, %v5632
    %5634 = vmatmul.bf16.gmra.mxu0 %v5555
    %v5635 = vpop.f32.mrf.mxu0
    %v5636 = vadd.f32 0.0, %v5635
    %v5637 = vpop.f32.mrf.mxu0
    %v5638 = vadd.f32 0.0, %v5637
    %5639 = vmatmul.bf16.gmra.mxu0 %v5558
    %v5640 = vpop.f32.mrf.mxu0
    %v5641 = vadd.f32 0.0, %v5640
    %v5642 = vpop.f32.mrf.mxu0
    %v5643 = vadd.f32 0.0, %v5642
    %5644 = vmatmul.bf16.gmra.mxu0 %v5561
    %v5645 = vpop.f32.mrf.mxu0
    %v5646 = vadd.f32 0.0, %v5645
    %v5647 = vpop.f32.mrf.mxu0
    %v5648 = vadd.f32 0.0, %v5647
    %5649 = vmatmul.bf16.gmra.mxu0 %v5564
    %v5650 = vpop.f32.mrf.mxu0
    %v5651 = vadd.f32 0.0, %v5650
    %v5652 = vpop.f32.mrf.mxu0
    %v5653 = vadd.f32 0.0, %v5652
    %5654 = vdwg.mxu0
    %v5655 = vadd.f32 %v5405, %v5576
    %v5656 = vadd.f32 %v5406, %v5578
    %v5657 = vadd.f32 %v5407, %v5581
    %v5658 = vadd.f32 %v5408, %v5583
    %v5659 = vadd.f32 %v5409, %v5586
    %v5660 = vadd.f32 %v5410, %v5588
    %v5661 = vadd.f32 %v5411, %v5591
    %v5662 = vadd.f32 %v5412, %v5593
    %v5663 = vadd.f32 %v5413, %v5596
    %v5664 = vadd.f32 %v5414, %v5598
    %v5665 = vadd.f32 %v5415, %v5601
    %v5666 = vadd.f32 %v5416, %v5603
    %v5667 = vadd.f32 %v5417, %v5606
    %v5668 = vadd.f32 %v5418, %v5608
    %v5669 = vadd.f32 %v5419, %v5611
    %v5670 = vadd.f32 %v5420, %v5613
    %v5671 = vadd.f32 %v5421, %v5616
    %v5672 = vadd.f32 %v5422, %v5618
    %v5673 = vadd.f32 %v5423, %v5621
    %v5674 = vadd.f32 %v5424, %v5623
    %v5675 = vadd.f32 %v5425, %v5626
    %v5676 = vadd.f32 %v5426, %v5628
    %v5677 = vadd.f32 %v5427, %v5631
    %v5678 = vadd.f32 %v5428, %v5633
    %v5679 = vadd.f32 %v5429, %v5636
    %v5680 = vadd.f32 %v5430, %v5638
    %v5681 = vadd.f32 %v5431, %v5641
    %v5682 = vadd.f32 %v5432, %v5643
    %v5683 = vadd.f32 %v5433, %v5646
    %v5684 = vadd.f32 %v5434, %v5648
    %v5685 = vadd.f32 %v5435, %v5651
    %v5686 = vadd.f32 %v5436, %v5653
    %v5687 = vld [vmem:[#allocation4 + $0x21] sm:$0xff]
    %v5688 = vld [vmem:[#allocation4 + $0x29] sm:$0xff]
    %v5689 = vld [vmem:[#allocation4 + $0x31] sm:$0xff]
    %v5690 = vld [vmem:[#allocation4 + $0x39] sm:$0xff]
    %v5691 = vld [vmem:[#allocation4 + $0x41] sm:$0xff]
    %v5692 = vld [vmem:[#allocation4 + $0x49] sm:$0xff]
    %v5693 = vld [vmem:[#allocation4 + $0x51] sm:$0xff]
    %v5694 = vld [vmem:[#allocation4 + $0x59] sm:$0xff]
    %v5695 = vld [vmem:[#allocation4 + $0x61] sm:$0xff]
    %v5696 = vld [vmem:[#allocation4 + $0x69] sm:$0xff]
    %v5697 = vld [vmem:[#allocation4 + $0x71] sm:$0xff]
    %v5698 = vld [vmem:[#allocation4 + $0x79] sm:$0xff]
    %v5699 = vld [vmem:[#allocation4 + $0x81] sm:$0xff]
    %v5700 = vld [vmem:[#allocation4 + $0x89] sm:$0xff]
    %v5701 = vld [vmem:[#allocation4 + $0x91] sm:$0xff]
    %v5702 = vld [vmem:[#allocation4 + $0x99] sm:$0xff]
    %v5703 = vld [vmem:[#allocation4 + $0xa1] sm:$0xff]
    %v5704 = vld [vmem:[#allocation4 + $0xa9] sm:$0xff]
    %v5705 = vld [vmem:[#allocation4 + $0xb1] sm:$0xff]
    %v5706 = vld [vmem:[#allocation4 + $0xb9] sm:$0xff]
    %v5707 = vld [vmem:[#allocation4 + $0xc1] sm:$0xff]
    %v5708 = vld [vmem:[#allocation4 + $0xc9] sm:$0xff]
    %v5709 = vld [vmem:[#allocation4 + $0xd1] sm:$0xff]
    %v5710 = vld [vmem:[#allocation4 + $0xd9] sm:$0xff]
    %v5711 = vld [vmem:[#allocation4 + $0xe1] sm:$0xff]
    %v5712 = vld [vmem:[#allocation4 + $0xe9] sm:$0xff]
    %v5713 = vld [vmem:[#allocation4 + $0xf1] sm:$0xff]
    %v5714 = vld [vmem:[#allocation4 + $0xf9] sm:$0xff]
    %v5715 = vld [vmem:[#allocation4 + $0x101] sm:$0xff]
    %v5716 = vld [vmem:[#allocation4 + $0x109] sm:$0xff]
    %v5717 = vld [vmem:[#allocation4 + $0x111] sm:$0xff]
    %v5718 = vld [vmem:[#allocation4 + $0x119] sm:$0xff]
    %v5719 = vpack.c.bf16 %v5688, %v5687
    %v5720 = vpack.c.bf16 %v5690, %v5689
    %v5721 = vpack.c.bf16 %v5692, %v5691
    %v5722 = vpack.c.bf16 %v5694, %v5693
    %v5723 = vpack.c.bf16 %v5696, %v5695
    %v5724 = vpack.c.bf16 %v5698, %v5697
    %v5725 = vpack.c.bf16 %v5700, %v5699
    %v5726 = vpack.c.bf16 %v5702, %v5701
    %v5727 = vpack.c.bf16 %v5704, %v5703
    %v5728 = vpack.c.bf16 %v5706, %v5705
    %v5729 = vpack.c.bf16 %v5708, %v5707
    %v5730 = vpack.c.bf16 %v5710, %v5709
    %v5731 = vpack.c.bf16 %v5712, %v5711
    %v5732 = vpack.c.bf16 %v5714, %v5713
    %v5733 = vpack.c.bf16 %v5716, %v5715
    %v5734 = vpack.c.bf16 %v5718, %v5717
    %s5735 = scalar_lea.vmem %s5, 160
    %v5736 = vld [vmem:[%s5735] sm:$0xf]
    %v5737 = vld [vmem:[%s5735 + $0x4] sm:$0xf]
    %v5738 = vld [vmem:[%s5735 + $0x8] sm:$0xf]
    %v5739 = vld [vmem:[%s5735 + $0xc] sm:$0xf]
    %v5740 = vld [vmem:[%s5735 + $0x10] sm:$0xf]
    %v5741 = vld [vmem:[%s5735 + $0x14] sm:$0xf]
    %v5742 = vld [vmem:[%s5735 + $0x18] sm:$0xf]
    %v5743 = vld [vmem:[%s5735 + $0x1c] sm:$0xf]
    %v5752 = vunpack.c.l.b16 %v5736
    %v5753 = vunpack.c.l.b16 %v5737
    %v5754 = vunpack.c.l.b16 %v5738
    %v5755 = vunpack.c.l.b16 %v5739
    %v5756 = vunpack.c.l.b16 %v5740
    %v5757 = vunpack.c.l.b16 %v5741
    %v5758 = vunpack.c.l.b16 %v5742
    %v5759 = vunpack.c.l.b16 %v5743
    %v5760 = vpack.c.b16 %v5753, %v5752
    %v5761 = vpack.c.b16 %v5755, %v5754
    %v5762 = vpack.c.b16 %v5757, %v5756
    %v5763 = vpack.c.b16 %v5759, %v5758
    %v5769 = vsel %vm33, %v5719, 0
    %v5772 = vsel %vm33, %v5720, 0
    %v5775 = vsel %vm33, %v5721, 0
    %v5778 = vsel %vm33, %v5722, 0
    %v5781 = vsel %vm33, %v5723, 0
    %v5784 = vsel %vm33, %v5724, 0
    %v5787 = vsel %vm33, %v5725, 0
    %v5790 = vsel %vm33, %v5726, 0
    %v5793 = vsel %vm33, %v5727, 0
    %v5796 = vsel %vm33, %v5728, 0
    %v5799 = vsel %vm33, %v5729, 0
    %v5802 = vsel %vm33, %v5730, 0
    %v5805 = vsel %vm33, %v5731, 0
    %v5808 = vsel %vm33, %v5732, 0
    %v5811 = vsel %vm33, %v5733, 0
    %v5814 = vsel %vm33, %v5734, 0
    %5816 = vmatpush.bf16.msra.mxu0 0
    %5817 = vmatpush.bf16.msra.mxu0 0
    %5818 = vmatpush.bf16.msra.mxu0 0
    %5819 = vmatpush.bf16.msra.mxu0 0
    %5820 = vmatpush.bf16.msra.mxu0 %v5763
    %5821 = vmatpush.bf16.msra.mxu0 %v5762
    %5822 = vmatpush.bf16.msra.mxu0 %v5761
    %5823 = vmatpush.bf16.msra.mxu0 %v5760
    %5824 = vmatmul.bf16.gmra.mxu0 %v5769
    %v5825 = vpop.f32.mrf.mxu0
    %v5826 = vadd.f32 0.0, %v5825
    %v5827 = vpop.f32.mrf.mxu0
    %v5828 = vadd.f32 0.0, %v5827
    %5829 = vmatmul.bf16.gmra.mxu0 %v5772
    %v5830 = vpop.f32.mrf.mxu0
    %v5831 = vadd.f32 0.0, %v5830
    %v5832 = vpop.f32.mrf.mxu0
    %v5833 = vadd.f32 0.0, %v5832
    %5834 = vmatmul.bf16.gmra.mxu0 %v5775
    %v5835 = vpop.f32.mrf.mxu0
    %v5836 = vadd.f32 0.0, %v5835
    %v5837 = vpop.f32.mrf.mxu0
    %v5838 = vadd.f32 0.0, %v5837
    %5839 = vmatmul.bf16.gmra.mxu0 %v5778
    %v5840 = vpop.f32.mrf.mxu0
    %v5841 = vadd.f32 0.0, %v5840
    %v5842 = vpop.f32.mrf.mxu0
    %v5843 = vadd.f32 0.0, %v5842
    %5844 = vmatmul.bf16.gmra.mxu0 %v5781
    %v5845 = vpop.f32.mrf.mxu0
    %v5846 = vadd.f32 0.0, %v5845
    %v5847 = vpop.f32.mrf.mxu0
    %v5848 = vadd.f32 0.0, %v5847
    %5849 = vmatmul.bf16.gmra.mxu0 %v5784
    %v5850 = vpop.f32.mrf.mxu0
    %v5851 = vadd.f32 0.0, %v5850
    %v5852 = vpop.f32.mrf.mxu0
    %v5853 = vadd.f32 0.0, %v5852
    %5854 = vmatmul.bf16.gmra.mxu0 %v5787
    %v5855 = vpop.f32.mrf.mxu0
    %v5856 = vadd.f32 0.0, %v5855
    %v5857 = vpop.f32.mrf.mxu0
    %v5858 = vadd.f32 0.0, %v5857
    %5859 = vmatmul.bf16.gmra.mxu0 %v5790
    %v5860 = vpop.f32.mrf.mxu0
    %v5861 = vadd.f32 0.0, %v5860
    %v5862 = vpop.f32.mrf.mxu0
    %v5863 = vadd.f32 0.0, %v5862
    %5864 = vmatmul.bf16.gmra.mxu0 %v5793
    %v5865 = vpop.f32.mrf.mxu0
    %v5866 = vadd.f32 0.0, %v5865
    %v5867 = vpop.f32.mrf.mxu0
    %v5868 = vadd.f32 0.0, %v5867
    %5869 = vmatmul.bf16.gmra.mxu0 %v5796
    %v5870 = vpop.f32.mrf.mxu0
    %v5871 = vadd.f32 0.0, %v5870
    %v5872 = vpop.f32.mrf.mxu0
    %v5873 = vadd.f32 0.0, %v5872
    %5874 = vmatmul.bf16.gmra.mxu0 %v5799
    %v5875 = vpop.f32.mrf.mxu0
    %v5876 = vadd.f32 0.0, %v5875
    %v5877 = vpop.f32.mrf.mxu0
    %v5878 = vadd.f32 0.0, %v5877
    %5879 = vmatmul.bf16.gmra.mxu0 %v5802
    %v5880 = vpop.f32.mrf.mxu0
    %v5881 = vadd.f32 0.0, %v5880
    %v5882 = vpop.f32.mrf.mxu0
    %v5883 = vadd.f32 0.0, %v5882
    %5884 = vmatmul.bf16.gmra.mxu0 %v5805
    %v5885 = vpop.f32.mrf.mxu0
    %v5886 = vadd.f32 0.0, %v5885
    %v5887 = vpop.f32.mrf.mxu0
    %v5888 = vadd.f32 0.0, %v5887
    %5889 = vmatmul.bf16.gmra.mxu0 %v5808
    %v5890 = vpop.f32.mrf.mxu0
    %v5891 = vadd.f32 0.0, %v5890
    %v5892 = vpop.f32.mrf.mxu0
    %v5893 = vadd.f32 0.0, %v5892
    %5894 = vmatmul.bf16.gmra.mxu0 %v5811
    %v5895 = vpop.f32.mrf.mxu0
    %v5896 = vadd.f32 0.0, %v5895
    %v5897 = vpop.f32.mrf.mxu0
    %v5898 = vadd.f32 0.0, %v5897
    %5899 = vmatmul.bf16.gmra.mxu0 %v5814
    %v5900 = vpop.f32.mrf.mxu0
    %v5901 = vadd.f32 0.0, %v5900
    %v5902 = vpop.f32.mrf.mxu0
    %v5903 = vadd.f32 0.0, %v5902
    %5904 = vdwg.mxu0
    %v5905 = vadd.f32 %v5655, %v5826
    %v5906 = vadd.f32 %v5656, %v5828
    %v5907 = vadd.f32 %v5657, %v5831
    %v5908 = vadd.f32 %v5658, %v5833
    %v5909 = vadd.f32 %v5659, %v5836
    %v5910 = vadd.f32 %v5660, %v5838
    %v5911 = vadd.f32 %v5661, %v5841
    %v5912 = vadd.f32 %v5662, %v5843
    %v5913 = vadd.f32 %v5663, %v5846
    %v5914 = vadd.f32 %v5664, %v5848
    %v5915 = vadd.f32 %v5665, %v5851
    %v5916 = vadd.f32 %v5666, %v5853
    %v5917 = vadd.f32 %v5667, %v5856
    %v5918 = vadd.f32 %v5668, %v5858
    %v5919 = vadd.f32 %v5669, %v5861
    %v5920 = vadd.f32 %v5670, %v5863
    %v5921 = vadd.f32 %v5671, %v5866
    %v5922 = vadd.f32 %v5672, %v5868
    %v5923 = vadd.f32 %v5673, %v5871
    %v5924 = vadd.f32 %v5674, %v5873
    %v5925 = vadd.f32 %v5675, %v5876
    %v5926 = vadd.f32 %v5676, %v5878
    %v5927 = vadd.f32 %v5677, %v5881
    %v5928 = vadd.f32 %v5678, %v5883
    %v5929 = vadd.f32 %v5679, %v5886
    %v5930 = vadd.f32 %v5680, %v5888
    %v5931 = vadd.f32 %v5681, %v5891
    %v5932 = vadd.f32 %v5682, %v5893
    %v5933 = vadd.f32 %v5683, %v5896
    %v5934 = vadd.f32 %v5684, %v5898
    %v5935 = vadd.f32 %v5685, %v5901
    %v5936 = vadd.f32 %v5686, %v5903
    %v5937 = vld [vmem:[#allocation4 + $0x2f] sm:$0xff]
    %v5938 = vld [vmem:[#allocation4 + $0x37] sm:$0xff]
    %v5939 = vld [vmem:[#allocation4 + $0x3f] sm:$0xff]
    %v5940 = vld [vmem:[#allocation4 + $0x47] sm:$0xff]
    %v5941 = vld [vmem:[#allocation4 + $0x4f] sm:$0xff]
    %v5942 = vld [vmem:[#allocation4 + $0x57] sm:$0xff]
    %v5943 = vld [vmem:[#allocation4 + $0x5f] sm:$0xff]
    %v5944 = vld [vmem:[#allocation4 + $0x67] sm:$0xff]
    %v5945 = vld [vmem:[#allocation4 + $0x6f] sm:$0xff]
    %v5946 = vld [vmem:[#allocation4 + $0x77] sm:$0xff]
    %v5947 = vld [vmem:[#allocation4 + $0x7f] sm:$0xff]
    %v5948 = vld [vmem:[#allocation4 + $0x87] sm:$0xff]
    %v5949 = vld [vmem:[#allocation4 + $0x8f] sm:$0xff]
    %v5950 = vld [vmem:[#allocation4 + $0x97] sm:$0xff]
    %v5951 = vld [vmem:[#allocation4 + $0x9f] sm:$0xff]
    %v5952 = vld [vmem:[#allocation4 + $0xa7] sm:$0xff]
    %v5953 = vld [vmem:[#allocation4 + $0xaf] sm:$0xff]
    %v5954 = vld [vmem:[#allocation4 + $0xb7] sm:$0xff]
    %v5955 = vld [vmem:[#allocation4 + $0xbf] sm:$0xff]
    %v5956 = vld [vmem:[#allocation4 + $0xc7] sm:$0xff]
    %v5957 = vld [vmem:[#allocation4 + $0xcf] sm:$0xff]
    %v5958 = vld [vmem:[#allocation4 + $0xd7] sm:$0xff]
    %v5959 = vld [vmem:[#allocation4 + $0xdf] sm:$0xff]
    %v5960 = vld [vmem:[#allocation4 + $0xe7] sm:$0xff]
    %v5961 = vld [vmem:[#allocation4 + $0xef] sm:$0xff]
    %v5962 = vld [vmem:[#allocation4 + $0xf7] sm:$0xff]
    %v5963 = vld [vmem:[#allocation4 + $0xff] sm:$0xff]
    %v5964 = vld [vmem:[#allocation4 + $0x107] sm:$0xff]
    %v5965 = vld [vmem:[#allocation4 + $0x10f] sm:$0xff]
    %v5966 = vld [vmem:[#allocation4 + $0x117] sm:$0xff]
    %v5967 = vld [vmem:[#allocation4 + $0x11f] sm:$0xff]
    %v5968 = vld [vmem:[#allocation4 + $0x127] sm:$0xff]
    %v5969 = vpack.c.bf16 %v5938, %v5937
    %v5970 = vpack.c.bf16 %v5940, %v5939
    %v5971 = vpack.c.bf16 %v5942, %v5941
    %v5972 = vpack.c.bf16 %v5944, %v5943
    %v5973 = vpack.c.bf16 %v5946, %v5945
    %v5974 = vpack.c.bf16 %v5948, %v5947
    %v5975 = vpack.c.bf16 %v5950, %v5949
    %v5976 = vpack.c.bf16 %v5952, %v5951
    %v5977 = vpack.c.bf16 %v5954, %v5953
    %v5978 = vpack.c.bf16 %v5956, %v5955
    %v5979 = vpack.c.bf16 %v5958, %v5957
    %v5980 = vpack.c.bf16 %v5960, %v5959
    %v5981 = vpack.c.bf16 %v5962, %v5961
    %v5982 = vpack.c.bf16 %v5964, %v5963
    %v5983 = vpack.c.bf16 %v5966, %v5965
    %v5984 = vpack.c.bf16 %v5968, %v5967
    %s5985 = scalar_lea.vmem %s5, 192
    %v5986 = vld [vmem:[%s5985] sm:$0xf]
    %v5987 = vld [vmem:[%s5985 + $0x4] sm:$0xf]
    %v5988 = vld [vmem:[%s5985 + $0x8] sm:$0xf]
    %v5989 = vld [vmem:[%s5985 + $0xc] sm:$0xf]
    %v5990 = vld [vmem:[%s5985 + $0x10] sm:$0xf]
    %v5991 = vld [vmem:[%s5985 + $0x14] sm:$0xf]
    %v5992 = vld [vmem:[%s5985 + $0x18] sm:$0xf]
    %v5993 = vld [vmem:[%s5985 + $0x1c] sm:$0xf]
    %v6002 = vunpack.c.l.b16 %v5986
    %v6003 = vunpack.c.l.b16 %v5987
    %v6004 = vunpack.c.l.b16 %v5988
    %v6005 = vunpack.c.l.b16 %v5989
    %v6006 = vunpack.c.l.b16 %v5990
    %v6007 = vunpack.c.l.b16 %v5991
    %v6008 = vunpack.c.l.b16 %v5992
    %v6009 = vunpack.c.l.b16 %v5993
    %v6010 = vpack.c.b16 %v6003, %v6002
    %v6011 = vpack.c.b16 %v6005, %v6004
    %v6012 = vpack.c.b16 %v6007, %v6006
    %v6013 = vpack.c.b16 %v6009, %v6008
    %v6019 = vsel %vm33, %v5969, 0
    %v6022 = vsel %vm33, %v5970, 0
    %v6025 = vsel %vm33, %v5971, 0
    %v6028 = vsel %vm33, %v5972, 0
    %v6031 = vsel %vm33, %v5973, 0
    %v6034 = vsel %vm33, %v5974, 0
    %v6037 = vsel %vm33, %v5975, 0
    %v6040 = vsel %vm33, %v5976, 0
    %v6043 = vsel %vm33, %v5977, 0
    %v6046 = vsel %vm33, %v5978, 0
    %v6049 = vsel %vm33, %v5979, 0
    %v6052 = vsel %vm33, %v5980, 0
    %v6055 = vsel %vm33, %v5981, 0
    %v6058 = vsel %vm33, %v5982, 0
    %v6061 = vsel %vm33, %v5983, 0
    %v6064 = vsel %vm33, %v5984, 0
    %6066 = vmatpush.bf16.msra.mxu0 0
    %6067 = vmatpush.bf16.msra.mxu0 0
    %6068 = vmatpush.bf16.msra.mxu0 0
    %6069 = vmatpush.bf16.msra.mxu0 0
    %6070 = vmatpush.bf16.msra.mxu0 %v6013
    %6071 = vmatpush.bf16.msra.mxu0 %v6012
    %6072 = vmatpush.bf16.msra.mxu0 %v6011
    %6073 = vmatpush.bf16.msra.mxu0 %v6010
    %6074 = vmatmul.bf16.gmra.mxu0 %v6019
    %v6075 = vpop.f32.mrf.mxu0
    %v6076 = vadd.f32 0.0, %v6075
    %v6077 = vpop.f32.mrf.mxu0
    %v6078 = vadd.f32 0.0, %v6077
    %6079 = vmatmul.bf16.gmra.mxu0 %v6022
    %v6080 = vpop.f32.mrf.mxu0
    %v6081 = vadd.f32 0.0, %v6080
    %v6082 = vpop.f32.mrf.mxu0
    %v6083 = vadd.f32 0.0, %v6082
    %6084 = vmatmul.bf16.gmra.mxu0 %v6025
    %v6085 = vpop.f32.mrf.mxu0
    %v6086 = vadd.f32 0.0, %v6085
    %v6087 = vpop.f32.mrf.mxu0
    %v6088 = vadd.f32 0.0, %v6087
    %6089 = vmatmul.bf16.gmra.mxu0 %v6028
    %v6090 = vpop.f32.mrf.mxu0
    %v6091 = vadd.f32 0.0, %v6090
    %v6092 = vpop.f32.mrf.mxu0
    %v6093 = vadd.f32 0.0, %v6092
    %6094 = vmatmul.bf16.gmra.mxu0 %v6031
    %v6095 = vpop.f32.mrf.mxu0
    %v6096 = vadd.f32 0.0, %v6095
    %v6097 = vpop.f32.mrf.mxu0
    %v6098 = vadd.f32 0.0, %v6097
    %6099 = vmatmul.bf16.gmra.mxu0 %v6034
    %v6100 = vpop.f32.mrf.mxu0
    %v6101 = vadd.f32 0.0, %v6100
    %v6102 = vpop.f32.mrf.mxu0
    %v6103 = vadd.f32 0.0, %v6102
    %6104 = vmatmul.bf16.gmra.mxu0 %v6037
    %v6105 = vpop.f32.mrf.mxu0
    %v6106 = vadd.f32 0.0, %v6105
    %v6107 = vpop.f32.mrf.mxu0
    %v6108 = vadd.f32 0.0, %v6107
    %6109 = vmatmul.bf16.gmra.mxu0 %v6040
    %v6110 = vpop.f32.mrf.mxu0
    %v6111 = vadd.f32 0.0, %v6110
    %v6112 = vpop.f32.mrf.mxu0
    %v6113 = vadd.f32 0.0, %v6112
    %6114 = vmatmul.bf16.gmra.mxu0 %v6043
    %v6115 = vpop.f32.mrf.mxu0
    %v6116 = vadd.f32 0.0, %v6115
    %v6117 = vpop.f32.mrf.mxu0
    %v6118 = vadd.f32 0.0, %v6117
    %6119 = vmatmul.bf16.gmra.mxu0 %v6046
    %v6120 = vpop.f32.mrf.mxu0
    %v6121 = vadd.f32 0.0, %v6120
    %v6122 = vpop.f32.mrf.mxu0
    %v6123 = vadd.f32 0.0, %v6122
    %6124 = vmatmul.bf16.gmra.mxu0 %v6049
    %v6125 = vpop.f32.mrf.mxu0
    %v6126 = vadd.f32 0.0, %v6125
    %v6127 = vpop.f32.mrf.mxu0
    %v6128 = vadd.f32 0.0, %v6127
    %6129 = vmatmul.bf16.gmra.mxu0 %v6052
    %v6130 = vpop.f32.mrf.mxu0
    %v6131 = vadd.f32 0.0, %v6130
    %v6132 = vpop.f32.mrf.mxu0
    %v6133 = vadd.f32 0.0, %v6132
    %6134 = vmatmul.bf16.gmra.mxu0 %v6055
    %v6135 = vpop.f32.mrf.mxu0
    %v6136 = vadd.f32 0.0, %v6135
    %v6137 = vpop.f32.mrf.mxu0
    %v6138 = vadd.f32 0.0, %v6137
    %6139 = vmatmul.bf16.gmra.mxu0 %v6058
    %v6140 = vpop.f32.mrf.mxu0
    %v6141 = vadd.f32 0.0, %v6140
    %v6142 = vpop.f32.mrf.mxu0
    %v6143 = vadd.f32 0.0, %v6142
    %6144 = vmatmul.bf16.gmra.mxu0 %v6061
    %v6145 = vpop.f32.mrf.mxu0
    %v6146 = vadd.f32 0.0, %v6145
    %v6147 = vpop.f32.mrf.mxu0
    %v6148 = vadd.f32 0.0, %v6147
    %6149 = vmatmul.bf16.gmra.mxu0 %v6064
    %v6150 = vpop.f32.mrf.mxu0
    %v6151 = vadd.f32 0.0, %v6150
    %v6152 = vpop.f32.mrf.mxu0
    %v6153 = vadd.f32 0.0, %v6152
    %6154 = vdwg.mxu0
    %v6155 = vadd.f32 %v5905, %v6076
    %v6156 = vadd.f32 %v5906, %v6078
    %v6157 = vadd.f32 %v5907, %v6081
    %v6158 = vadd.f32 %v5908, %v6083
    %v6159 = vadd.f32 %v5909, %v6086
    %v6160 = vadd.f32 %v5910, %v6088
    %v6161 = vadd.f32 %v5911, %v6091
    %v6162 = vadd.f32 %v5912, %v6093
    %v6163 = vadd.f32 %v5913, %v6096
    %v6164 = vadd.f32 %v5914, %v6098
    %v6165 = vadd.f32 %v5915, %v6101
    %v6166 = vadd.f32 %v5916, %v6103
    %v6167 = vadd.f32 %v5917, %v6106
    %v6168 = vadd.f32 %v5918, %v6108
    %v6169 = vadd.f32 %v5919, %v6111
    %v6170 = vadd.f32 %v5920, %v6113
    %v6171 = vadd.f32 %v5921, %v6116
    %v6172 = vadd.f32 %v5922, %v6118
    %v6173 = vadd.f32 %v5923, %v6121
    %v6174 = vadd.f32 %v5924, %v6123
    %v6175 = vadd.f32 %v5925, %v6126
    %v6176 = vadd.f32 %v5926, %v6128
    %v6177 = vadd.f32 %v5927, %v6131
    %v6178 = vadd.f32 %v5928, %v6133
    %v6179 = vadd.f32 %v5929, %v6136
    %v6180 = vadd.f32 %v5930, %v6138
    %v6181 = vadd.f32 %v5931, %v6141
    %v6182 = vadd.f32 %v5932, %v6143
    %v6183 = vadd.f32 %v5933, %v6146
    %v6184 = vadd.f32 %v5934, %v6148
    %v6185 = vadd.f32 %v5935, %v6151
    %v6186 = vadd.f32 %v5936, %v6153
    %v6187 = vld [vmem:[#allocation4 + $0x30] sm:$0xff]
    %v6188 = vld [vmem:[#allocation4 + $0x38] sm:$0xff]
    %v6189 = vld [vmem:[#allocation4 + $0x40] sm:$0xff]
    %v6190 = vld [vmem:[#allocation4 + $0x48] sm:$0xff]
    %v6191 = vld [vmem:[#allocation4 + $0x50] sm:$0xff]
    %v6192 = vld [vmem:[#allocation4 + $0x58] sm:$0xff]
    %v6193 = vld [vmem:[#allocation4 + $0x60] sm:$0xff]
    %v6194 = vld [vmem:[#allocation4 + $0x68] sm:$0xff]
    %v6195 = vld [vmem:[#allocation4 + $0x70] sm:$0xff]
    %v6196 = vld [vmem:[#allocation4 + $0x78] sm:$0xff]
    %v6197 = vld [vmem:[#allocation4 + $0x80] sm:$0xff]
    %v6198 = vld [vmem:[#allocation4 + $0x88] sm:$0xff]
    %v6199 = vld [vmem:[#allocation4 + $0x90] sm:$0xff]
    %v6200 = vld [vmem:[#allocation4 + $0x98] sm:$0xff]
    %v6201 = vld [vmem:[#allocation4 + $0xa0] sm:$0xff]
    %v6202 = vld [vmem:[#allocation4 + $0xa8] sm:$0xff]
    %v6203 = vld [vmem:[#allocation4 + $0xb0] sm:$0xff]
    %v6204 = vld [vmem:[#allocation4 + $0xb8] sm:$0xff]
    %v6205 = vld [vmem:[#allocation4 + $0xc0] sm:$0xff]
    %v6206 = vld [vmem:[#allocation4 + $0xc8] sm:$0xff]
    %v6207 = vld [vmem:[#allocation4 + $0xd0] sm:$0xff]
    %v6208 = vld [vmem:[#allocation4 + $0xd8] sm:$0xff]
    %v6209 = vld [vmem:[#allocation4 + $0xe0] sm:$0xff]
    %v6210 = vld [vmem:[#allocation4 + $0xe8] sm:$0xff]
    %v6211 = vld [vmem:[#allocation4 + $0xf0] sm:$0xff]
    %v6212 = vld [vmem:[#allocation4 + $0xf8] sm:$0xff]
    %v6213 = vld [vmem:[#allocation4 + $0x100] sm:$0xff]
    %v6214 = vld [vmem:[#allocation4 + $0x108] sm:$0xff]
    %v6215 = vld [vmem:[#allocation4 + $0x110] sm:$0xff]
    %v6216 = vld [vmem:[#allocation4 + $0x118] sm:$0xff]
    %v6217 = vld [vmem:[#allocation4 + $0x120] sm:$0xff]
    %v6218 = vld [vmem:[#allocation4 + $0x128] sm:$0xff]
    %v6219 = vpack.c.bf16 %v6188, %v6187
    %v6220 = vpack.c.bf16 %v6190, %v6189
    %v6221 = vpack.c.bf16 %v6192, %v6191
    %v6222 = vpack.c.bf16 %v6194, %v6193
    %v6223 = vpack.c.bf16 %v6196, %v6195
    %v6224 = vpack.c.bf16 %v6198, %v6197
    %v6225 = vpack.c.bf16 %v6200, %v6199
    %v6226 = vpack.c.bf16 %v6202, %v6201
    %v6227 = vpack.c.bf16 %v6204, %v6203
    %v6228 = vpack.c.bf16 %v6206, %v6205
    %v6229 = vpack.c.bf16 %v6208, %v6207
    %v6230 = vpack.c.bf16 %v6210, %v6209
    %v6231 = vpack.c.bf16 %v6212, %v6211
    %v6232 = vpack.c.bf16 %v6214, %v6213
    %v6233 = vpack.c.bf16 %v6216, %v6215
    %v6234 = vpack.c.bf16 %v6218, %v6217
    %s6235 = scalar_lea.vmem %s5, 224
    %v6236 = vld [vmem:[%s6235] sm:$0xf]
    %v6237 = vld [vmem:[%s6235 + $0x4] sm:$0xf]
    %v6238 = vld [vmem:[%s6235 + $0x8] sm:$0xf]
    %v6239 = vld [vmem:[%s6235 + $0xc] sm:$0xf]
    %v6240 = vld [vmem:[%s6235 + $0x10] sm:$0xf]
    %v6241 = vld [vmem:[%s6235 + $0x14] sm:$0xf]
    %v6242 = vld [vmem:[%s6235 + $0x18] sm:$0xf]
    %v6243 = vld [vmem:[%s6235 + $0x1c] sm:$0xf]
    %v6252 = vunpack.c.l.b16 %v6236
    %v6253 = vunpack.c.l.b16 %v6237
    %v6254 = vunpack.c.l.b16 %v6238
    %v6255 = vunpack.c.l.b16 %v6239
    %v6256 = vunpack.c.l.b16 %v6240
    %v6257 = vunpack.c.l.b16 %v6241
    %v6258 = vunpack.c.l.b16 %v6242
    %v6259 = vunpack.c.l.b16 %v6243
    %v6260 = vpack.c.b16 %v6253, %v6252
    %v6261 = vpack.c.b16 %v6255, %v6254
    %v6262 = vpack.c.b16 %v6257, %v6256
    %v6263 = vpack.c.b16 %v6259, %v6258
    %v6269 = vsel %vm33, %v6219, 0
    %v6272 = vsel %vm33, %v6220, 0
    %v6275 = vsel %vm33, %v6221, 0
    %v6278 = vsel %vm33, %v6222, 0
    %v6281 = vsel %vm33, %v6223, 0
    %v6284 = vsel %vm33, %v6224, 0
    %v6287 = vsel %vm33, %v6225, 0
    %v6290 = vsel %vm33, %v6226, 0
    %v6293 = vsel %vm33, %v6227, 0
    %v6296 = vsel %vm33, %v6228, 0
    %v6299 = vsel %vm33, %v6229, 0
    %v6302 = vsel %vm33, %v6230, 0
    %v6305 = vsel %vm33, %v6231, 0
    %v6308 = vsel %vm33, %v6232, 0
    %v6311 = vsel %vm33, %v6233, 0
    %v6314 = vsel %vm33, %v6234, 0
    %6316 = vmatpush.bf16.msra.mxu0 0
    %6317 = vmatpush.bf16.msra.mxu0 0
    %6318 = vmatpush.bf16.msra.mxu0 0
    %6319 = vmatpush.bf16.msra.mxu0 0
    %6320 = vmatpush.bf16.msra.mxu0 %v6263
    %6321 = vmatpush.bf16.msra.mxu0 %v6262
    %6322 = vmatpush.bf16.msra.mxu0 %v6261
    %6323 = vmatpush.bf16.msra.mxu0 %v6260
    %6324 = vmatmul.bf16.gmra.mxu0 %v6269
    %v6325 = vpop.f32.mrf.mxu0
    %v6326 = vadd.f32 0.0, %v6325
    %v6327 = vpop.f32.mrf.mxu0
    %v6328 = vadd.f32 0.0, %v6327
    %6329 = vmatmul.bf16.gmra.mxu0 %v6272
    %v6330 = vpop.f32.mrf.mxu0
    %v6331 = vadd.f32 0.0, %v6330
    %v6332 = vpop.f32.mrf.mxu0
    %v6333 = vadd.f32 0.0, %v6332
    %6334 = vmatmul.bf16.gmra.mxu0 %v6275
    %v6335 = vpop.f32.mrf.mxu0
    %v6336 = vadd.f32 0.0, %v6335
    %v6337 = vpop.f32.mrf.mxu0
    %v6338 = vadd.f32 0.0, %v6337
    %6339 = vmatmul.bf16.gmra.mxu0 %v6278
    %v6340 = vpop.f32.mrf.mxu0
    %v6341 = vadd.f32 0.0, %v6340
    %v6342 = vpop.f32.mrf.mxu0
    %v6343 = vadd.f32 0.0, %v6342
    %6344 = vmatmul.bf16.gmra.mxu0 %v6281
    %v6345 = vpop.f32.mrf.mxu0
    %v6346 = vadd.f32 0.0, %v6345
    %v6347 = vpop.f32.mrf.mxu0
    %v6348 = vadd.f32 0.0, %v6347
    %6349 = vmatmul.bf16.gmra.mxu0 %v6284
    %v6350 = vpop.f32.mrf.mxu0
    %v6351 = vadd.f32 0.0, %v6350
    %v6352 = vpop.f32.mrf.mxu0
    %v6353 = vadd.f32 0.0, %v6352
    %6354 = vmatmul.bf16.gmra.mxu0 %v6287
    %v6355 = vpop.f32.mrf.mxu0
    %v6356 = vadd.f32 0.0, %v6355
    %v6357 = vpop.f32.mrf.mxu0
    %v6358 = vadd.f32 0.0, %v6357
    %6359 = vmatmul.bf16.gmra.mxu0 %v6290
    %v6360 = vpop.f32.mrf.mxu0
    %v6361 = vadd.f32 0.0, %v6360
    %v6362 = vpop.f32.mrf.mxu0
    %v6363 = vadd.f32 0.0, %v6362
    %6364 = vmatmul.bf16.gmra.mxu0 %v6293
    %v6365 = vpop.f32.mrf.mxu0
    %v6366 = vadd.f32 0.0, %v6365
    %v6367 = vpop.f32.mrf.mxu0
    %v6368 = vadd.f32 0.0, %v6367
    %6369 = vmatmul.bf16.gmra.mxu0 %v6296
    %v6370 = vpop.f32.mrf.mxu0
    %v6371 = vadd.f32 0.0, %v6370
    %v6372 = vpop.f32.mrf.mxu0
    %v6373 = vadd.f32 0.0, %v6372
    %6374 = vmatmul.bf16.gmra.mxu0 %v6299
    %v6375 = vpop.f32.mrf.mxu0
    %v6376 = vadd.f32 0.0, %v6375
    %v6377 = vpop.f32.mrf.mxu0
    %v6378 = vadd.f32 0.0, %v6377
    %6379 = vmatmul.bf16.gmra.mxu0 %v6302
    %v6380 = vpop.f32.mrf.mxu0
    %v6381 = vadd.f32 0.0, %v6380
    %v6382 = vpop.f32.mrf.mxu0
    %v6383 = vadd.f32 0.0, %v6382
    %6384 = vmatmul.bf16.gmra.mxu0 %v6305
    %v6385 = vpop.f32.mrf.mxu0
    %v6386 = vadd.f32 0.0, %v6385
    %v6387 = vpop.f32.mrf.mxu0
    %v6388 = vadd.f32 0.0, %v6387
    %6389 = vmatmul.bf16.gmra.mxu0 %v6308
    %v6390 = vpop.f32.mrf.mxu0
    %v6391 = vadd.f32 0.0, %v6390
    %v6392 = vpop.f32.mrf.mxu0
    %v6393 = vadd.f32 0.0, %v6392
    %6394 = vmatmul.bf16.gmra.mxu0 %v6311
    %v6395 = vpop.f32.mrf.mxu0
    %v6396 = vadd.f32 0.0, %v6395
    %v6397 = vpop.f32.mrf.mxu0
    %v6398 = vadd.f32 0.0, %v6397
    %6399 = vmatmul.bf16.gmra.mxu0 %v6314
    %v6400 = vpop.f32.mrf.mxu0
    %v6401 = vadd.f32 0.0, %v6400
    %v6402 = vpop.f32.mrf.mxu0
    %v6403 = vadd.f32 0.0, %v6402
    %6404 = vdwg.mxu0
    %v6405 = vadd.f32 %v6155, %v6326
    %v6406 = vadd.f32 %v6156, %v6328
    %v6407 = vadd.f32 %v6157, %v6331
    %v6408 = vadd.f32 %v6158, %v6333
    %v6409 = vadd.f32 %v6159, %v6336
    %v6410 = vadd.f32 %v6160, %v6338
    %v6411 = vadd.f32 %v6161, %v6341
    %v6412 = vadd.f32 %v6162, %v6343
    %v6413 = vadd.f32 %v6163, %v6346
    %v6414 = vadd.f32 %v6164, %v6348
    %v6415 = vadd.f32 %v6165, %v6351
    %v6416 = vadd.f32 %v6166, %v6353
    %v6417 = vadd.f32 %v6167, %v6356
    %v6418 = vadd.f32 %v6168, %v6358
    %v6419 = vadd.f32 %v6169, %v6361
    %v6420 = vadd.f32 %v6170, %v6363
    %v6421 = vadd.f32 %v6171, %v6366
    %v6422 = vadd.f32 %v6172, %v6368
    %v6423 = vadd.f32 %v6173, %v6371
    %v6424 = vadd.f32 %v6174, %v6373
    %v6425 = vadd.f32 %v6175, %v6376
    %v6426 = vadd.f32 %v6176, %v6378
    %v6427 = vadd.f32 %v6177, %v6381
    %v6428 = vadd.f32 %v6178, %v6383
    %v6429 = vadd.f32 %v6179, %v6386
    %v6430 = vadd.f32 %v6180, %v6388
    %v6431 = vadd.f32 %v6181, %v6391
    %v6432 = vadd.f32 %v6182, %v6393
    %v6433 = vadd.f32 %v6183, %v6396
    %v6434 = vadd.f32 %v6184, %v6398
    %v6435 = vadd.f32 %v6185, %v6401
    %v6436 = vadd.f32 %v6186, %v6403
    %v6437 = vld [vmem:[#allocation4 + $0x31] sm:$0xff]
    %v6438 = vld [vmem:[#allocation4 + $0x39] sm:$0xff]
    %v6439 = vld [vmem:[#allocation4 + $0x41] sm:$0xff]
    %v6440 = vld [vmem:[#allocation4 + $0x49] sm:$0xff]
    %v6441 = vld [vmem:[#allocation4 + $0x51] sm:$0xff]
    %v6442 = vld [vmem:[#allocation4 + $0x59] sm:$0xff]
    %v6443 = vld [vmem:[#allocation4 + $0x61] sm:$0xff]
    %v6444 = vld [vmem:[#allocation4 + $0x69] sm:$0xff]
    %v6445 = vld [vmem:[#allocation4 + $0x71] sm:$0xff]
    %v6446 = vld [vmem:[#allocation4 + $0x79] sm:$0xff]
    %v6447 = vld [vmem:[#allocation4 + $0x81] sm:$0xff]
    %v6448 = vld [vmem:[#allocation4 + $0x89] sm:$0xff]
    %v6449 = vld [vmem:[#allocation4 + $0x91] sm:$0xff]
    %v6450 = vld [vmem:[#allocation4 + $0x99] sm:$0xff]
    %v6451 = vld [vmem:[#allocation4 + $0xa1] sm:$0xff]
    %v6452 = vld [vmem:[#allocation4 + $0xa9] sm:$0xff]
    %v6453 = vld [vmem:[#allocation4 + $0xb1] sm:$0xff]
    %v6454 = vld [vmem:[#allocation4 + $0xb9] sm:$0xff]
    %v6455 = vld [vmem:[#allocation4 + $0xc1] sm:$0xff]
    %v6456 = vld [vmem:[#allocation4 + $0xc9] sm:$0xff]
    %v6457 = vld [vmem:[#allocation4 + $0xd1] sm:$0xff]
    %v6458 = vld [vmem:[#allocation4 + $0xd9] sm:$0xff]
    %v6459 = vld [vmem:[#allocation4 + $0xe1] sm:$0xff]
    %v6460 = vld [vmem:[#allocation4 + $0xe9] sm:$0xff]
    %v6461 = vld [vmem:[#allocation4 + $0xf1] sm:$0xff]
    %v6462 = vld [vmem:[#allocation4 + $0xf9] sm:$0xff]
    %v6463 = vld [vmem:[#allocation4 + $0x101] sm:$0xff]
    %v6464 = vld [vmem:[#allocation4 + $0x109] sm:$0xff]
    %v6465 = vld [vmem:[#allocation4 + $0x111] sm:$0xff]
    %v6466 = vld [vmem:[#allocation4 + $0x119] sm:$0xff]
    %v6467 = vld [vmem:[#allocation4 + $0x121] sm:$0xff]
    %v6468 = vld [vmem:[#allocation4 + $0x129] sm:$0xff]
    %v6469 = vpack.c.bf16 %v6438, %v6437
    %v6470 = vpack.c.bf16 %v6440, %v6439
    %v6471 = vpack.c.bf16 %v6442, %v6441
    %v6472 = vpack.c.bf16 %v6444, %v6443
    %v6473 = vpack.c.bf16 %v6446, %v6445
    %v6474 = vpack.c.bf16 %v6448, %v6447
    %v6475 = vpack.c.bf16 %v6450, %v6449
    %v6476 = vpack.c.bf16 %v6452, %v6451
    %v6477 = vpack.c.bf16 %v6454, %v6453
    %v6478 = vpack.c.bf16 %v6456, %v6455
    %v6479 = vpack.c.bf16 %v6458, %v6457
    %v6480 = vpack.c.bf16 %v6460, %v6459
    %v6481 = vpack.c.bf16 %v6462, %v6461
    %v6482 = vpack.c.bf16 %v6464, %v6463
    %v6483 = vpack.c.bf16 %v6466, %v6465
    %v6484 = vpack.c.bf16 %v6468, %v6467
    %s6485 = scalar_lea.vmem %s5, 256
    %v6486 = vld [vmem:[%s6485] sm:$0xf]
    %v6487 = vld [vmem:[%s6485 + $0x4] sm:$0xf]
    %v6488 = vld [vmem:[%s6485 + $0x8] sm:$0xf]
    %v6489 = vld [vmem:[%s6485 + $0xc] sm:$0xf]
    %v6490 = vld [vmem:[%s6485 + $0x10] sm:$0xf]
    %v6491 = vld [vmem:[%s6485 + $0x14] sm:$0xf]
    %v6492 = vld [vmem:[%s6485 + $0x18] sm:$0xf]
    %v6493 = vld [vmem:[%s6485 + $0x1c] sm:$0xf]
    %v6502 = vunpack.c.l.b16 %v6486
    %v6503 = vunpack.c.l.b16 %v6487
    %v6504 = vunpack.c.l.b16 %v6488
    %v6505 = vunpack.c.l.b16 %v6489
    %v6506 = vunpack.c.l.b16 %v6490
    %v6507 = vunpack.c.l.b16 %v6491
    %v6508 = vunpack.c.l.b16 %v6492
    %v6509 = vunpack.c.l.b16 %v6493
    %v6510 = vpack.c.b16 %v6503, %v6502
    %v6511 = vpack.c.b16 %v6505, %v6504
    %v6512 = vpack.c.b16 %v6507, %v6506
    %v6513 = vpack.c.b16 %v6509, %v6508
    %v6519 = vsel %vm33, %v6469, 0
    %v6522 = vsel %vm33, %v6470, 0
    %v6525 = vsel %vm33, %v6471, 0
    %v6528 = vsel %vm33, %v6472, 0
    %v6531 = vsel %vm33, %v6473, 0
    %v6534 = vsel %vm33, %v6474, 0
    %v6537 = vsel %vm33, %v6475, 0
    %v6540 = vsel %vm33, %v6476, 0
    %v6543 = vsel %vm33, %v6477, 0
    %v6546 = vsel %vm33, %v6478, 0
    %v6549 = vsel %vm33, %v6479, 0
    %v6552 = vsel %vm33, %v6480, 0
    %v6555 = vsel %vm33, %v6481, 0
    %v6558 = vsel %vm33, %v6482, 0
    %v6561 = vsel %vm33, %v6483, 0
    %v6564 = vsel %vm33, %v6484, 0
    %6566 = vmatpush.bf16.msra.mxu0 0
    %6567 = vmatpush.bf16.msra.mxu0 0
    %6568 = vmatpush.bf16.msra.mxu0 0
    %6569 = vmatpush.bf16.msra.mxu0 0
    %6570 = vmatpush.bf16.msra.mxu0 %v6513
    %6571 = vmatpush.bf16.msra.mxu0 %v6512
    %6572 = vmatpush.bf16.msra.mxu0 %v6511
    %6573 = vmatpush.bf16.msra.mxu0 %v6510
    %6574 = vmatmul.bf16.gmra.mxu0 %v6519
    %v6575 = vpop.f32.mrf.mxu0
    %v6576 = vadd.f32 0.0, %v6575
    %v6577 = vpop.f32.mrf.mxu0
    %v6578 = vadd.f32 0.0, %v6577
    %6579 = vmatmul.bf16.gmra.mxu0 %v6522
    %v6580 = vpop.f32.mrf.mxu0
    %v6581 = vadd.f32 0.0, %v6580
    %v6582 = vpop.f32.mrf.mxu0
    %v6583 = vadd.f32 0.0, %v6582
    %6584 = vmatmul.bf16.gmra.mxu0 %v6525
    %v6585 = vpop.f32.mrf.mxu0
    %v6586 = vadd.f32 0.0, %v6585
    %v6587 = vpop.f32.mrf.mxu0
    %v6588 = vadd.f32 0.0, %v6587
    %6589 = vmatmul.bf16.gmra.mxu0 %v6528
    %v6590 = vpop.f32.mrf.mxu0
    %v6591 = vadd.f32 0.0, %v6590
    %v6592 = vpop.f32.mrf.mxu0
    %v6593 = vadd.f32 0.0, %v6592
    %6594 = vmatmul.bf16.gmra.mxu0 %v6531
    %v6595 = vpop.f32.mrf.mxu0
    %v6596 = vadd.f32 0.0, %v6595
    %v6597 = vpop.f32.mrf.mxu0
    %v6598 = vadd.f32 0.0, %v6597
    %6599 = vmatmul.bf16.gmra.mxu0 %v6534
    %v6600 = vpop.f32.mrf.mxu0
    %v6601 = vadd.f32 0.0, %v6600
    %v6602 = vpop.f32.mrf.mxu0
    %v6603 = vadd.f32 0.0, %v6602
    %6604 = vmatmul.bf16.gmra.mxu0 %v6537
    %v6605 = vpop.f32.mrf.mxu0
    %v6606 = vadd.f32 0.0, %v6605
    %v6607 = vpop.f32.mrf.mxu0
    %v6608 = vadd.f32 0.0, %v6607
    %6609 = vmatmul.bf16.gmra.mxu0 %v6540
    %v6610 = vpop.f32.mrf.mxu0
    %v6611 = vadd.f32 0.0, %v6610
    %v6612 = vpop.f32.mrf.mxu0
    %v6613 = vadd.f32 0.0, %v6612
    %6614 = vmatmul.bf16.gmra.mxu0 %v6543
    %v6615 = vpop.f32.mrf.mxu0
    %v6616 = vadd.f32 0.0, %v6615
    %v6617 = vpop.f32.mrf.mxu0
    %v6618 = vadd.f32 0.0, %v6617
    %6619 = vmatmul.bf16.gmra.mxu0 %v6546
    %v6620 = vpop.f32.mrf.mxu0
    %v6621 = vadd.f32 0.0, %v6620
    %v6622 = vpop.f32.mrf.mxu0
    %v6623 = vadd.f32 0.0, %v6622
    %6624 = vmatmul.bf16.gmra.mxu0 %v6549
    %v6625 = vpop.f32.mrf.mxu0
    %v6626 = vadd.f32 0.0, %v6625
    %v6627 = vpop.f32.mrf.mxu0
    %v6628 = vadd.f32 0.0, %v6627
    %6629 = vmatmul.bf16.gmra.mxu0 %v6552
    %v6630 = vpop.f32.mrf.mxu0
    %v6631 = vadd.f32 0.0, %v6630
    %v6632 = vpop.f32.mrf.mxu0
    %v6633 = vadd.f32 0.0, %v6632
    %6634 = vmatmul.bf16.gmra.mxu0 %v6555
    %v6635 = vpop.f32.mrf.mxu0
    %v6636 = vadd.f32 0.0, %v6635
    %v6637 = vpop.f32.mrf.mxu0
    %v6638 = vadd.f32 0.0, %v6637
    %6639 = vmatmul.bf16.gmra.mxu0 %v6558
    %v6640 = vpop.f32.mrf.mxu0
    %v6641 = vadd.f32 0.0, %v6640
    %v6642 = vpop.f32.mrf.mxu0
    %v6643 = vadd.f32 0.0, %v6642
    %6644 = vmatmul.bf16.gmra.mxu0 %v6561
    %v6645 = vpop.f32.mrf.mxu0
    %v6646 = vadd.f32 0.0, %v6645
    %v6647 = vpop.f32.mrf.mxu0
    %v6648 = vadd.f32 0.0, %v6647
    %6649 = vmatmul.bf16.gmra.mxu0 %v6564
    %v6650 = vpop.f32.mrf.mxu0
    %v6651 = vadd.f32 0.0, %v6650
    %v6652 = vpop.f32.mrf.mxu0
    %v6653 = vadd.f32 0.0, %v6652
    %6654 = vdwg.mxu0
    %v6655 = vadd.f32 %v6405, %v6576
    %v6656 = vadd.f32 %v6406, %v6578
    %v6657 = vadd.f32 %v6407, %v6581
    %v6658 = vadd.f32 %v6408, %v6583
    %v6659 = vadd.f32 %v6409, %v6586
    %v6660 = vadd.f32 %v6410, %v6588
    %v6661 = vadd.f32 %v6411, %v6591
    %v6662 = vadd.f32 %v6412, %v6593
    %v6663 = vadd.f32 %v6413, %v6596
    %v6664 = vadd.f32 %v6414, %v6598
    %v6665 = vadd.f32 %v6415, %v6601
    %v6666 = vadd.f32 %v6416, %v6603
    %v6667 = vadd.f32 %v6417, %v6606
    %v6668 = vadd.f32 %v6418, %v6608
    %v6669 = vadd.f32 %v6419, %v6611
    %v6670 = vadd.f32 %v6420, %v6613
    %v6671 = vadd.f32 %v6421, %v6616
    %v6672 = vadd.f32 %v6422, %v6618
    %v6673 = vadd.f32 %v6423, %v6621
    %v6674 = vadd.f32 %v6424, %v6623
    %v6675 = vadd.f32 %v6425, %v6626
    %v6676 = vadd.f32 %v6426, %v6628
    %v6677 = vadd.f32 %v6427, %v6631
    %v6678 = vadd.f32 %v6428, %v6633
    %v6679 = vadd.f32 %v6429, %v6636
    %v6680 = vadd.f32 %v6430, %v6638
    %v6681 = vadd.f32 %v6431, %v6641
    %v6682 = vadd.f32 %v6432, %v6643
    %v6683 = vadd.f32 %v6433, %v6646
    %v6684 = vadd.f32 %v6434, %v6648
    %v6685 = vadd.f32 %v6435, %v6651
    %v6686 = vadd.f32 %v6436, %v6653
    %v6687 = vld [vmem:[%s6] sm:$0x1]
    %v6689 = vperm.slane %v6687, 0
    %v6691 = vadd.f32 %v6655, %v6689
    %v6692 = vadd.f32 %v6656, %v6689
    %v6693 = vadd.f32 %v6657, %v6689
    %v6694 = vadd.f32 %v6658, %v6689
    %v6695 = vadd.f32 %v6659, %v6689
    %v6696 = vadd.f32 %v6660, %v6689
    %v6697 = vadd.f32 %v6661, %v6689
    %v6698 = vadd.f32 %v6662, %v6689
    %v6699 = vadd.f32 %v6663, %v6689
    %v6700 = vadd.f32 %v6664, %v6689
    %v6701 = vadd.f32 %v6665, %v6689
    %v6702 = vadd.f32 %v6666, %v6689
    %v6703 = vadd.f32 %v6667, %v6689
    %v6704 = vadd.f32 %v6668, %v6689
    %v6705 = vadd.f32 %v6669, %v6689
    %v6706 = vadd.f32 %v6670, %v6689
    %v6707 = vadd.f32 %v6671, %v6689
    %v6708 = vadd.f32 %v6672, %v6689
    %v6709 = vadd.f32 %v6673, %v6689
    %v6710 = vadd.f32 %v6674, %v6689
    %v6711 = vadd.f32 %v6675, %v6689
    %v6712 = vadd.f32 %v6676, %v6689
    %v6713 = vadd.f32 %v6677, %v6689
    %v6714 = vadd.f32 %v6678, %v6689
    %v6715 = vadd.f32 %v6679, %v6689
    %v6716 = vadd.f32 %v6680, %v6689
    %v6717 = vadd.f32 %v6681, %v6689
    %v6718 = vadd.f32 %v6682, %v6689
    %v6719 = vadd.f32 %v6683, %v6689
    %v6720 = vadd.f32 %v6684, %v6689
    %v6721 = vadd.f32 %v6685, %v6689
    %v6722 = vadd.f32 %v6686, %v6689
    %v6723 = vld [vmem:[%s8] sm:$0x1]
    %v6725 = vperm.slane %v6723, 0
    %v6727 = vadd.f32 %v6691, %v6725
    %v6728 = vadd.f32 %v6692, %v6725
    %v6729 = vadd.f32 %v6693, %v6725
    %v6730 = vadd.f32 %v6694, %v6725
    %v6731 = vadd.f32 %v6695, %v6725
    %v6732 = vadd.f32 %v6696, %v6725
    %v6733 = vadd.f32 %v6697, %v6725
    %v6734 = vadd.f32 %v6698, %v6725
    %v6735 = vadd.f32 %v6699, %v6725
    %v6736 = vadd.f32 %v6700, %v6725
    %v6737 = vadd.f32 %v6701, %v6725
    %v6738 = vadd.f32 %v6702, %v6725
    %v6739 = vadd.f32 %v6703, %v6725
    %v6740 = vadd.f32 %v6704, %v6725
    %v6741 = vadd.f32 %v6705, %v6725
    %v6742 = vadd.f32 %v6706, %v6725
    %v6743 = vadd.f32 %v6707, %v6725
    %v6744 = vadd.f32 %v6708, %v6725
    %v6745 = vadd.f32 %v6709, %v6725
    %v6746 = vadd.f32 %v6710, %v6725
    %v6747 = vadd.f32 %v6711, %v6725
    %v6748 = vadd.f32 %v6712, %v6725
    %v6749 = vadd.f32 %v6713, %v6725
    %v6750 = vadd.f32 %v6714, %v6725
    %v6751 = vadd.f32 %v6715, %v6725
    %v6752 = vadd.f32 %v6716, %v6725
    %v6753 = vadd.f32 %v6717, %v6725
    %v6754 = vadd.f32 %v6718, %v6725
    %v6755 = vadd.f32 %v6719, %v6725
    %v6756 = vadd.f32 %v6720, %v6725
    %v6757 = vadd.f32 %v6721, %v6725
    %v6758 = vadd.f32 %v6722, %v6725
    %v6759 = vmax.f32 %v6727, 0.0
    %v6760 = vmax.f32 %v6728, 0.0
    %v6761 = vmax.f32 %v6729, 0.0
    %v6762 = vmax.f32 %v6730, 0.0
    %v6763 = vmax.f32 %v6731, 0.0
    %v6764 = vmax.f32 %v6732, 0.0
    %v6765 = vmax.f32 %v6733, 0.0
    %v6766 = vmax.f32 %v6734, 0.0
    %v6767 = vmax.f32 %v6735, 0.0
    %v6768 = vmax.f32 %v6736, 0.0
    %v6769 = vmax.f32 %v6737, 0.0
    %v6770 = vmax.f32 %v6738, 0.0
    %v6771 = vmax.f32 %v6739, 0.0
    %v6772 = vmax.f32 %v6740, 0.0
    %v6773 = vmax.f32 %v6741, 0.0
    %v6774 = vmax.f32 %v6742, 0.0
    %v6775 = vmax.f32 %v6743, 0.0
    %v6776 = vmax.f32 %v6744, 0.0
    %v6777 = vmax.f32 %v6745, 0.0
    %v6778 = vmax.f32 %v6746, 0.0
    %v6779 = vmax.f32 %v6747, 0.0
    %v6780 = vmax.f32 %v6748, 0.0
    %v6781 = vmax.f32 %v6749, 0.0
    %v6782 = vmax.f32 %v6750, 0.0
    %v6783 = vmax.f32 %v6751, 0.0
    %v6784 = vmax.f32 %v6752, 0.0
    %v6785 = vmax.f32 %v6753, 0.0
    %v6786 = vmax.f32 %v6754, 0.0
    %v6787 = vmax.f32 %v6755, 0.0
    %v6788 = vmax.f32 %v6756, 0.0
    %v6789 = vmax.f32 %v6757, 0.0
    %v6790 = vmax.f32 %v6758, 0.0
    %6791 = vst.msk [vmem:[#allocation5] sm:$0xff] %vm33, %v6759
    %6792 = vst.msk [vmem:[#allocation5 + $0x8] sm:$0xff] %vm33, %v6760
    %6793 = vst.msk [vmem:[#allocation5 + $0x10] sm:$0xff] %vm33, %v6761
    %6794 = vst.msk [vmem:[#allocation5 + $0x18] sm:$0xff] %vm33, %v6762
    %6795 = vst.msk [vmem:[#allocation5 + $0x20] sm:$0xff] %vm33, %v6763
    %6796 = vst.msk [vmem:[#allocation5 + $0x28] sm:$0xff] %vm33, %v6764
    %6797 = vst.msk [vmem:[#allocation5 + $0x30] sm:$0xff] %vm33, %v6765
    %6798 = vst.msk [vmem:[#allocation5 + $0x38] sm:$0xff] %vm33, %v6766
    %6799 = vst.msk [vmem:[#allocation5 + $0x40] sm:$0xff] %vm33, %v6767
    %6800 = vst.msk [vmem:[#allocation5 + $0x48] sm:$0xff] %vm33, %v6768
    %6801 = vst.msk [vmem:[#allocation5 + $0x50] sm:$0xff] %vm33, %v6769
    %6802 = vst.msk [vmem:[#allocation5 + $0x58] sm:$0xff] %vm33, %v6770
    %6803 = vst.msk [vmem:[#allocation5 + $0x60] sm:$0xff] %vm33, %v6771
    %6804 = vst.msk [vmem:[#allocation5 + $0x68] sm:$0xff] %vm33, %v6772
    %6805 = vst.msk [vmem:[#allocation5 + $0x70] sm:$0xff] %vm33, %v6773
    %6806 = vst.msk [vmem:[#allocation5 + $0x78] sm:$0xff] %vm33, %v6774
    %6807 = vst.msk [vmem:[#allocation5 + $0x80] sm:$0xff] %vm33, %v6775
    %6808 = vst.msk [vmem:[#allocation5 + $0x88] sm:$0xff] %vm33, %v6776
    %6809 = vst.msk [vmem:[#allocation5 + $0x90] sm:$0xff] %vm33, %v6777
    %6810 = vst.msk [vmem:[#allocation5 + $0x98] sm:$0xff] %vm33, %v6778
    %6811 = vst.msk [vmem:[#allocation5 + $0xa0] sm:$0xff] %vm33, %v6779
    %6812 = vst.msk [vmem:[#allocation5 + $0xa8] sm:$0xff] %vm33, %v6780
    %6813 = vst.msk [vmem:[#allocation5 + $0xb0] sm:$0xff] %vm33, %v6781
    %6814 = vst.msk [vmem:[#allocation5 + $0xb8] sm:$0xff] %vm33, %v6782
    %6815 = vst.msk [vmem:[#allocation5 + $0xc0] sm:$0xff] %vm33, %v6783
    %6816 = vst.msk [vmem:[#allocation5 + $0xc8] sm:$0xff] %vm33, %v6784
    %6817 = vst.msk [vmem:[#allocation5 + $0xd0] sm:$0xff] %vm33, %v6785
    %6818 = vst.msk [vmem:[#allocation5 + $0xd8] sm:$0xff] %vm33, %v6786
    %6819 = vst.msk [vmem:[#allocation5 + $0xe0] sm:$0xff] %vm33, %v6787
    %6820 = vst.msk [vmem:[#allocation5 + $0xe8] sm:$0xff] %vm33, %v6788
    %6821 = vst.msk [vmem:[#allocation5 + $0xf0] sm:$0xff] %vm33, %v6789
    %6822 = vst.msk [vmem:[#allocation5 + $0xf8] sm:$0xff] %vm33, %v6790
    %s6823 = scalar_lea.vmem [#allocation5], 17
    %v6824 = vld [vmem:[%s6823] ss:$2 sm:$0xff]
    %s6825 = scalar_lea.vmem [#allocation5], 33
    %v6826 = vld [vmem:[%s6825] ss:$2 sm:$0xff]
    %s6827 = scalar_lea.vmem [#allocation5], 49
    %v6828 = vld [vmem:[%s6827] ss:$2 sm:$0xff]
    %s6829 = scalar_lea.vmem [#allocation5], 65
    %v6830 = vld [vmem:[%s6829] ss:$2 sm:$0xff]
    %s6831 = scalar_lea.vmem [#allocation5], 81
    %v6832 = vld [vmem:[%s6831] ss:$2 sm:$0xff]
    %s6833 = scalar_lea.vmem [#allocation5], 97
    %v6834 = vld [vmem:[%s6833] ss:$2 sm:$0xff]
    %s6835 = scalar_lea.vmem [#allocation5], 113
    %v6836 = vld [vmem:[%s6835] ss:$2 sm:$0xff]
    %s6837 = scalar_lea.vmem [#allocation5], 129
    %v6838 = vld [vmem:[%s6837] ss:$2 sm:$0xff]
    %s6839 = scalar_lea.vmem [#allocation5], 145
    %v6840 = vld [vmem:[%s6839] ss:$2 sm:$0xff]
    %s6841 = scalar_lea.vmem [#allocation5], 161
    %v6842 = vld [vmem:[%s6841] ss:$2 sm:$0xff]
    %s6843 = scalar_lea.vmem [#allocation5], 177
    %v6844 = vld [vmem:[%s6843] ss:$2 sm:$0xff]
    %s6845 = scalar_lea.vmem [#allocation5], 193
    %v6846 = vld [vmem:[%s6845] ss:$2 sm:$0xff]
    %s6847 = scalar_lea.vmem [#allocation5], 209
    %v6848 = vld [vmem:[%s6847] ss:$2 sm:$0xff]
    %s6849 = scalar_lea.vmem [#allocation5], 225
    %v6850 = vld [vmem:[%s6849] ss:$2 sm:$0xff]
    %s6851 = scalar_lea.vmem [#allocation5], 18
    %v6852 = vld [vmem:[%s6851] ss:$2 sm:$0xff]
    %s6853 = scalar_lea.vmem [#allocation5], 34
    %v6854 = vld [vmem:[%s6853] ss:$2 sm:$0xff]
    %s6855 = scalar_lea.vmem [#allocation5], 50
    %v6856 = vld [vmem:[%s6855] ss:$2 sm:$0xff]
    %s6857 = scalar_lea.vmem [#allocation5], 66
    %v6858 = vld [vmem:[%s6857] ss:$2 sm:$0xff]
    %s6859 = scalar_lea.vmem [#allocation5], 82
    %v6860 = vld [vmem:[%s6859] ss:$2 sm:$0xff]
    %s6861 = scalar_lea.vmem [#allocation5], 98
    %v6862 = vld [vmem:[%s6861] ss:$2 sm:$0xff]
    %s6863 = scalar_lea.vmem [#allocation5], 114
    %v6864 = vld [vmem:[%s6863] ss:$2 sm:$0xff]
    %s6865 = scalar_lea.vmem [#allocation5], 130
    %v6866 = vld [vmem:[%s6865] ss:$2 sm:$0xff]
    %s6867 = scalar_lea.vmem [#allocation5], 146
    %v6868 = vld [vmem:[%s6867] ss:$2 sm:$0xff]
    %s6869 = scalar_lea.vmem [#allocation5], 162
    %v6870 = vld [vmem:[%s6869] ss:$2 sm:$0xff]
    %s6871 = scalar_lea.vmem [#allocation5], 178
    %v6872 = vld [vmem:[%s6871] ss:$2 sm:$0xff]
    %s6873 = scalar_lea.vmem [#allocation5], 194
    %v6874 = vld [vmem:[%s6873] ss:$2 sm:$0xff]
    %s6875 = scalar_lea.vmem [#allocation5], 210
    %v6876 = vld [vmem:[%s6875] ss:$2 sm:$0xff]
    %s6877 = scalar_lea.vmem [#allocation5], 226
    %v6878 = vld [vmem:[%s6877] ss:$2 sm:$0xff]
    %v6879 = vmax.f32 %v6824, %v6852
    %v6880 = vmax.f32 %v6826, %v6854
    %v6881 = vmax.f32 %v6828, %v6856
    %v6882 = vmax.f32 %v6830, %v6858
    %v6883 = vmax.f32 %v6832, %v6860
    %v6884 = vmax.f32 %v6834, %v6862
    %v6885 = vmax.f32 %v6836, %v6864
    %v6886 = vmax.f32 %v6838, %v6866
    %v6887 = vmax.f32 %v6840, %v6868
    %v6888 = vmax.f32 %v6842, %v6870
    %v6889 = vmax.f32 %v6844, %v6872
    %v6890 = vmax.f32 %v6846, %v6874
    %v6891 = vmax.f32 %v6848, %v6876
    %v6892 = vmax.f32 %v6850, %v6878
    %v6893 = vmax.f32 %v6879, %v6880
    %v6894 = vmax.f32 %v6881, %v6882
    %v6895 = vmax.f32 %v6883, %v6884
    %v6896 = vmax.f32 %v6885, %v6886
    %v6897 = vmax.f32 %v6887, %v6888
    %v6898 = vmax.f32 %v6889, %v6890
    %v6899 = vmax.f32 %v6891, %v6892
    %v6900 = vpack.c.bf16 %v6893, %v6893
    %v6901 = vpack.c.bf16 %v6894, %v6894
    %v6902 = vpack.c.bf16 %v6895, %v6895
    %v6903 = vpack.c.bf16 %v6896, %v6896
    %v6904 = vpack.c.bf16 %v6897, %v6897
    %v6905 = vpack.c.bf16 %v6898, %v6898
    %v6906 = vpack.c.bf16 %v6899, %v6899
    %s6907 = smul.u32 %s500, 7
    %s6908 = smul.addr %s6907, 4
    %s6909 = scalar_lea.vmem %s9, %s6908
    %vm6910 = vcmask 519168
    %6911 = vst.msk [vmem:[%s6909] sm:$0xf] %vm6910, %v6900
    %6912 = vst.msk [vmem:[%s6909 + $0x4] sm:$0xf] %vm6910, %v6901
    %6913 = vst.msk [vmem:[%s6909 + $0x8] sm:$0xf] %vm6910, %v6902
    %6914 = vst.msk [vmem:[%s6909 + $0xc] sm:$0xf] %vm6910, %v6903
    %6915 = vst.msk [vmem:[%s6909 + $0x10] sm:$0xf] %vm6910, %v6904
    %6916 = vst.msk [vmem:[%s6909 + $0x14] sm:$0xf] %vm6910, %v6905
    %6917 = vst.msk [vmem:[%s6909 + $0x18] sm:$0xf] %vm6910, %v6906
  $region42: #{vae_forward.2} parent=0 // loop_footer
    %s504 = sadd.s32 1, %s500
  $region43: #{vae_forward.2} parent=0 // loop_footer_branch
    %499 = sbr.rel target = $region39
  $region44: #{vae_forward.2} parent=0 // loop_exit
    _
  // Predicated region
  $region45: #{vae_forward.2} parent=0 // pred_check
    _
  $region46: #{vae_forward.2} parent=0 // pred_check_branch
    %6919 = sbr.rel (0) target = $region48
  $region47: #{vae_forward.2} parent=0 // pred_region
    _
  $region48: #{vae_forward.2} parent=0 // pred_fallthru
    _
  // Predicated region
  $region49: #{vae_forward.2} parent=0 // pred_check
    _
  $region50: #{vae_forward.2} parent=0 // pred_check_branch
    %6921 = sbr.rel (0) target = $region52
  $region51: #{vae_forward.2} parent=0 // pred_region
    _
  $region52: #{vae_forward.2} parent=0 // pred_fallthru
    _

// kernel: vae_forward.3
$region0: #{vae_forward.3}
  #allocation0 [shape = 'u32[]', space=smem, size = 0x4, offset = 0x4, fixed_abs, tag = 'smem constant byte address 0x4 - core index']
  #allocation1 [shape = 'u32[72,128]{1,0:T(1,128)}', space=vmem, size = 0x9000, scoped, tag = 'internal scratch']
  %s0 = inlined_call_operand.vmem [shape: bf16[8,3584], index: 0, kind: input, shape index: {}]
  %s1 = inlined_call_operand.vmem [shape: f32[8,10], index: 1, kind: input, shape index: {}]
  %s2 = inlined_call_operand.vmem [shape: bf16[3584,128], index: 2, kind: input, shape index: {}]
  %s3 = inlined_call_operand.vmem [shape: f32[1,128], index: 3, kind: input, shape index: {}]
  %s4 = inlined_call_operand.vmem [shape: bf16[128,10], index: 4, kind: input, shape index: {}]
  %s5 = inlined_call_operand.vmem [shape: f32[1,10], index: 5, kind: input, shape index: {}]
  %s6 = inlined_call_operand.vmem [shape: bf16[128,10], index: 6, kind: input, shape index: {}]
  %s7 = inlined_call_operand.vmem [shape: f32[1,10], index: 7, kind: input, shape index: {}]
  %s8 = inlined_call_operand.vmem [shape: bf16[10,256], index: 8, kind: input, shape index: {}]
  %s9 = inlined_call_operand.vmem [shape: f32[1,256], index: 9, kind: input, shape index: {}]
  %s10 = inlined_call_operand.vmem [shape: bf16[256,512], index: 10, kind: input, shape index: {}]
  %s11 = inlined_call_operand.vmem [shape: f32[1,512], index: 11, kind: input, shape index: {}]
  %s12 = inlined_call_operand.vmem [shape: bf16[512,784], index: 12, kind: input, shape index: {}]
  %s13 = inlined_call_operand.vmem [shape: f32[1,784], index: 13, kind: input, shape index: {}]
  %s14 = inlined_call_operand.vmem [shape: f32[8,784], index: 14, kind: output, shape index: {0}]
  %s15 = inlined_call_operand.vmem [shape: f32[8,10], index: 15, kind: output, shape index: {1}]
  %s16 = inlined_call_operand.vmem [shape: f32[8,10], index: 16, kind: output, shape index: {2}]
  %17 = xla_tuple %s14, %s15, %s16
  %s18 = sld [smem:[#allocation0]]
  $region82: #{vae_forward.3} parent=0
    _
  %s20 = ssub.s32 1, %s18
  %s21 = scalar_select 0, %s20, %s18
  // Predicated region
  $region2: #{vae_forward.3} parent=0 // pred_check
    _
  $region3: #{vae_forward.3} parent=0 // pred_check_branch
    %23 = sbr.rel (0) target = $region5
  $region4: #{vae_forward.3} parent=0 // pred_region
    _
  $region5: #{vae_forward.3} parent=0 // pred_fallthru
    _
  // Predicated region
  $region6: #{vae_forward.3} parent=0 // pred_check
    _
  $region7: #{vae_forward.3} parent=0 // pred_check_branch
    %25 = sbr.rel (0) target = $region9
  $region8: #{vae_forward.3} parent=0 // pred_region
    _
  $region9: #{vae_forward.3} parent=0 // pred_fallthru
    _
  // Predicated region
  $region10: #{vae_forward.3} parent=0 // pred_check
    _
  $region11: #{vae_forward.3} parent=0 // pred_check_branch
    %27 = sbr.rel (0) target = $region13
  $region12: #{vae_forward.3} parent=0 // pred_region
    _
  $region13: #{vae_forward.3} parent=0 // pred_fallthru
    _
  // Predicated region
  $region14: #{vae_forward.3} parent=0 // pred_check
    _
  $region15: #{vae_forward.3} parent=0 // pred_check_branch
    %29 = sbr.rel (0) target = $region17
  $region16: #{vae_forward.3} parent=0 // pred_region
    _
  $region17: #{vae_forward.3} parent=0 // pred_fallthru
    _
  // Predicated region
  $region18: #{vae_forward.3} parent=0 // pred_check
    _
  $region19: #{vae_forward.3} parent=0 // pred_check_branch
    %31 = sbr.rel (0) target = $region21
  $region20: #{vae_forward.3} parent=0 // pred_region
    _
  $region21: #{vae_forward.3} parent=0 // pred_fallthru
    _
  // Predicated region
  $region22: #{vae_forward.3} parent=0 // pred_check
    _
  $region23: #{vae_forward.3} parent=0 // pred_check_branch
    %33 = sbr.rel (0) target = $region25
  $region24: #{vae_forward.3} parent=0 // pred_region
    _
  $region25: #{vae_forward.3} parent=0 // pred_fallthru
    _
  // Predicated region
  $region26: #{vae_forward.3} parent=0 // pred_check
    _
  $region27: #{vae_forward.3} parent=0 // pred_check_branch
    %35 = sbr.rel (0) target = $region29
  $region28: #{vae_forward.3} parent=0 // pred_region
    _
  $region29: #{vae_forward.3} parent=0 // pred_fallthru
    _
  // Predicated region
  $region30: #{vae_forward.3} parent=0 // pred_check
    _
  $region31: #{vae_forward.3} parent=0 // pred_check_branch
    %37 = sbr.rel (0) target = $region33
  $region32: #{vae_forward.3} parent=0 // pred_region
    _
  $region33: #{vae_forward.3} parent=0 // pred_fallthru
    _
  // Predicated region
  $region34: #{vae_forward.3} parent=0 // pred_check
    _
  $region35: #{vae_forward.3} parent=0 // pred_check_branch
    %39 = sbr.rel (0) target = $region37
  $region36: #{vae_forward.3} parent=0 // pred_region
    _
  $region37: #{vae_forward.3} parent=0 // pred_fallthru
    _
  // Predicated region
  $region38: #{vae_forward.3} parent=0 // pred_check
    _
  $region39: #{vae_forward.3} parent=0 // pred_check_branch
    %41 = sbr.rel (0) target = $region41
  $region40: #{vae_forward.3} parent=0 // pred_region
    _
  $region41: #{vae_forward.3} parent=0 // pred_fallthru
    _
  // Predicated region
  $region42: #{vae_forward.3} parent=0 // pred_check
    _
  $region43: #{vae_forward.3} parent=0 // pred_check_branch
    %43 = sbr.rel (0) target = $region45
  $region44: #{vae_forward.3} parent=0 // pred_region
    _
  $region45: #{vae_forward.3} parent=0 // pred_fallthru
    _
  // Predicated region
  $region46: #{vae_forward.3} parent=0 // pred_check
    _
  $region47: #{vae_forward.3} parent=0 // pred_check_branch
    %45 = sbr.rel (0) target = $region49
  $region48: #{vae_forward.3} parent=0 // pred_region
    _
  $region49: #{vae_forward.3} parent=0 // pred_fallthru
    _
  // Predicated region
  $region50: #{vae_forward.3} parent=0 // pred_check
    _
  $region51: #{vae_forward.3} parent=0 // pred_check_branch
    %47 = sbr.rel (0) target = $region53
  $region52: #{vae_forward.3} parent=0 // pred_region
    _
  $region53: #{vae_forward.3} parent=0 // pred_fallthru
    _
  // Predicated region
  $region54: #{vae_forward.3} parent=0 // pred_check
    _
  $region55: #{vae_forward.3} parent=0 // pred_check_branch
    %49 = sbr.rel (0) target = $region57
  $region56: #{vae_forward.3} parent=0 // pred_region
    _
  $region57: #{vae_forward.3} parent=0 // pred_fallthru
    _
  %v51 = vld [vmem:[%s0] sm:$0xff]
  %v52 = vld [vmem:[%s0 + $0x8] sm:$0xff]
  %v53 = vld [vmem:[%s0 + $0x10] sm:$0xff]
  %v54 = vld [vmem:[%s0 + $0x18] sm:$0xff]
  %v55 = vld [vmem:[%s0 + $0x20] sm:$0xff]
  %v56 = vld [vmem:[%s0 + $0x28] sm:$0xff]
  %v57 = vld [vmem:[%s0 + $0x30] sm:$0xff]
  %v58 = vld [vmem:[%s0 + $0x38] sm:$0xff]
  %v59 = vld [vmem:[%s0 + $0x40] sm:$0xff]
  %v60 = vld [vmem:[%s0 + $0x48] sm:$0xff]
  %v61 = vld [vmem:[%s0 + $0x50] sm:$0xff]
  %v62 = vld [vmem:[%s0 + $0x58] sm:$0xff]
  %v63 = vld [vmem:[%s0 + $0x60] sm:$0xff]
  %v64 = vld [vmem:[%s0 + $0x68] sm:$0xff]
  %v65 = vld [vmem:[%s2] sm:$0xf]
  %v66 = vld [vmem:[%s2 + $0x4] sm:$0xf]
  %v67 = vld [vmem:[%s2 + $0x8] sm:$0xf]
  %v68 = vld [vmem:[%s2 + $0xc] sm:$0xf]
  %v69 = vld [vmem:[%s2 + $0x10] sm:$0xf]
  %v70 = vld [vmem:[%s2 + $0x14] sm:$0xf]
  %v71 = vld [vmem:[%s2 + $0x18] sm:$0xf]
  %v72 = vld [vmem:[%s2 + $0x1c] sm:$0xf]
  %v73 = vld [vmem:[%s2 + $0x20] sm:$0xf]
  %v74 = vld [vmem:[%s2 + $0x24] sm:$0xf]
  %v75 = vld [vmem:[%s2 + $0x28] sm:$0xf]
  %v76 = vld [vmem:[%s2 + $0x2c] sm:$0xf]
  %v77 = vld [vmem:[%s2 + $0x30] sm:$0xf]
  %v78 = vld [vmem:[%s2 + $0x34] sm:$0xf]
  %v79 = vld [vmem:[%s2 + $0x38] sm:$0xf]
  %v80 = vld [vmem:[%s2 + $0x3c] sm:$0xf]
  %v81 = vld [vmem:[%s2 + $0x40] sm:$0xf]
  %v82 = vld [vmem:[%s2 + $0x44] sm:$0xf]
  %v83 = vld [vmem:[%s2 + $0x48] sm:$0xf]
  %v84 = vld [vmem:[%s2 + $0x4c] sm:$0xf]
  %v85 = vld [vmem:[%s2 + $0x50] sm:$0xf]
  %v86 = vld [vmem:[%s2 + $0x54] sm:$0xf]
  %v87 = vld [vmem:[%s2 + $0x58] sm:$0xf]
  %v88 = vld [vmem:[%s2 + $0x5c] sm:$0xf]
  %v89 = vld [vmem:[%s2 + $0x60] sm:$0xf]
  %v90 = vld [vmem:[%s2 + $0x64] sm:$0xf]
  %v91 = vld [vmem:[%s2 + $0x68] sm:$0xf]
  %v92 = vld [vmem:[%s2 + $0x6c] sm:$0xf]
  %v93 = vld [vmem:[%s2 + $0x70] sm:$0xf]
  %v94 = vld [vmem:[%s2 + $0x74] sm:$0xf]
  %v95 = vld [vmem:[%s2 + $0x78] sm:$0xf]
  %v96 = vld [vmem:[%s2 + $0x7c] sm:$0xf]
  %v97 = vld [vmem:[%s2 + $0x80] sm:$0xf]
  %v98 = vld [vmem:[%s2 + $0x84] sm:$0xf]
  %v99 = vld [vmem:[%s2 + $0x88] sm:$0xf]
  %v100 = vld [vmem:[%s2 + $0x8c] sm:$0xf]
  %v101 = vld [vmem:[%s2 + $0x90] sm:$0xf]
  %v102 = vld [vmem:[%s2 + $0x94] sm:$0xf]
  %v103 = vld [vmem:[%s2 + $0x98] sm:$0xf]
  %v104 = vld [vmem:[%s2 + $0x9c] sm:$0xf]
  %v105 = vld [vmem:[%s2 + $0xa0] sm:$0xf]
  %v106 = vld [vmem:[%s2 + $0xa4] sm:$0xf]
  %v107 = vld [vmem:[%s2 + $0xa8] sm:$0xf]
  %v108 = vld [vmem:[%s2 + $0xac] sm:$0xf]
  %v109 = vld [vmem:[%s2 + $0xb0] sm:$0xf]
  %v110 = vld [vmem:[%s2 + $0xb4] sm:$0xf]
  %v111 = vld [vmem:[%s2 + $0xb8] sm:$0xf]
  %v112 = vld [vmem:[%s2 + $0xbc] sm:$0xf]
  %v113 = vld [vmem:[%s2 + $0xc0] sm:$0xf]
  %v114 = vld [vmem:[%s2 + $0xc4] sm:$0xf]
  %v115 = vld [vmem:[%s2 + $0xc8] sm:$0xf]
  %v116 = vld [vmem:[%s2 + $0xcc] sm:$0xf]
  %v117 = vld [vmem:[%s2 + $0xd0] sm:$0xf]
  %v118 = vld [vmem:[%s2 + $0xd4] sm:$0xf]
  %v119 = vld [vmem:[%s2 + $0xd8] sm:$0xf]
  %v120 = vld [vmem:[%s2 + $0xdc] sm:$0xf]
  %v121 = vld [vmem:[%s2 + $0xe0] sm:$0xf]
  %v122 = vld [vmem:[%s2 + $0xe4] sm:$0xf]
  %v123 = vld [vmem:[%s2 + $0xe8] sm:$0xf]
  %v124 = vld [vmem:[%s2 + $0xec] sm:$0xf]
  %v125 = vld [vmem:[%s2 + $0xf0] sm:$0xf]
  %v126 = vld [vmem:[%s2 + $0xf4] sm:$0xf]
  %v127 = vld [vmem:[%s2 + $0xf8] sm:$0xf]
  %v128 = vld [vmem:[%s2 + $0xfc] sm:$0xf]
  %v129 = vld [vmem:[%s2 + $0x100] sm:$0xf]
  %v130 = vld [vmem:[%s2 + $0x104] sm:$0xf]
  %v131 = vld [vmem:[%s2 + $0x108] sm:$0xf]
  %v132 = vld [vmem:[%s2 + $0x10c] sm:$0xf]
  %v133 = vld [vmem:[%s2 + $0x110] sm:$0xf]
  %v134 = vld [vmem:[%s2 + $0x114] sm:$0xf]
  %v135 = vld [vmem:[%s2 + $0x118] sm:$0xf]
  %v136 = vld [vmem:[%s2 + $0x11c] sm:$0xf]
  %v137 = vld [vmem:[%s2 + $0x120] sm:$0xf]
  %v138 = vld [vmem:[%s2 + $0x124] sm:$0xf]
  %v139 = vld [vmem:[%s2 + $0x128] sm:$0xf]
  %v140 = vld [vmem:[%s2 + $0x12c] sm:$0xf]
  %v141 = vld [vmem:[%s2 + $0x130] sm:$0xf]
  %v142 = vld [vmem:[%s2 + $0x134] sm:$0xf]
  %v143 = vld [vmem:[%s2 + $0x138] sm:$0xf]
  %v144 = vld [vmem:[%s2 + $0x13c] sm:$0xf]
  %v145 = vld [vmem:[%s2 + $0x140] sm:$0xf]
  %v146 = vld [vmem:[%s2 + $0x144] sm:$0xf]
  %v147 = vld [vmem:[%s2 + $0x148] sm:$0xf]
  %v148 = vld [vmem:[%s2 + $0x14c] sm:$0xf]
  %v149 = vld [vmem:[%s2 + $0x150] sm:$0xf]
  %v150 = vld [vmem:[%s2 + $0x154] sm:$0xf]
  %v151 = vld [vmem:[%s2 + $0x158] sm:$0xf]
  %v152 = vld [vmem:[%s2 + $0x15c] sm:$0xf]
  %v153 = vld [vmem:[%s2 + $0x160] sm:$0xf]
  %v154 = vld [vmem:[%s2 + $0x164] sm:$0xf]
  %v155 = vld [vmem:[%s2 + $0x168] sm:$0xf]
  %v156 = vld [vmem:[%s2 + $0x16c] sm:$0xf]
  %v157 = vld [vmem:[%s2 + $0x170] sm:$0xf]
  %v158 = vld [vmem:[%s2 + $0x174] sm:$0xf]
  %v159 = vld [vmem:[%s2 + $0x178] sm:$0xf]
  %v160 = vld [vmem:[%s2 + $0x17c] sm:$0xf]
  %v161 = vld [vmem:[%s2 + $0x180] sm:$0xf]
  %v162 = vld [vmem:[%s2 + $0x184] sm:$0xf]
  %v163 = vld [vmem:[%s2 + $0x188] sm:$0xf]
  %v164 = vld [vmem:[%s2 + $0x18c] sm:$0xf]
  %v165 = vld [vmem:[%s2 + $0x190] sm:$0xf]
  %v166 = vld [vmem:[%s2 + $0x194] sm:$0xf]
  %v167 = vld [vmem:[%s2 + $0x198] sm:$0xf]
  %v168 = vld [vmem:[%s2 + $0x19c] sm:$0xf]
  %v169 = vld [vmem:[%s2 + $0x1a0] sm:$0xf]
  %v170 = vld [vmem:[%s2 + $0x1a4] sm:$0xf]
  %v171 = vld [vmem:[%s2 + $0x1a8] sm:$0xf]
  %v172 = vld [vmem:[%s2 + $0x1ac] sm:$0xf]
  %v173 = vld [vmem:[%s2 + $0x1b0] sm:$0xf]
  %v174 = vld [vmem:[%s2 + $0x1b4] sm:$0xf]
  %v175 = vld [vmem:[%s2 + $0x1b8] sm:$0xf]
  %v176 = vld [vmem:[%s2 + $0x1bc] sm:$0xf]
  %v177 = vld [vmem:[%s2 + $0x1c0] sm:$0xf]
  %v178 = vld [vmem:[%s2 + $0x1c4] sm:$0xf]
  %v179 = vld [vmem:[%s2 + $0x1c8] sm:$0xf]
  %v180 = vld [vmem:[%s2 + $0x1cc] sm:$0xf]
  %v181 = vld [vmem:[%s2 + $0x1d0] sm:$0xf]
  %v182 = vld [vmem:[%s2 + $0x1d4] sm:$0xf]
  %v183 = vld [vmem:[%s2 + $0x1d8] sm:$0xf]
  %v184 = vld [vmem:[%s2 + $0x1dc] sm:$0xf]
  %v185 = vld [vmem:[%s2 + $0x1e0] sm:$0xf]
  %v186 = vld [vmem:[%s2 + $0x1e4] sm:$0xf]
  %v187 = vld [vmem:[%s2 + $0x1e8] sm:$0xf]
  %v188 = vld [vmem:[%s2 + $0x1ec] sm:$0xf]
  %v189 = vld [vmem:[%s2 + $0x1f0] sm:$0xf]
  %v190 = vld [vmem:[%s2 + $0x1f4] sm:$0xf]
  %v191 = vld [vmem:[%s2 + $0x1f8] sm:$0xf]
  %v192 = vld [vmem:[%s2 + $0x1fc] sm:$0xf]
  %v193 = vld [vmem:[%s2 + $0x200] sm:$0xf]
  %v194 = vld [vmem:[%s2 + $0x204] sm:$0xf]
  %v195 = vld [vmem:[%s2 + $0x208] sm:$0xf]
  %v196 = vld [vmem:[%s2 + $0x20c] sm:$0xf]
  %v197 = vld [vmem:[%s2 + $0x210] sm:$0xf]
  %v198 = vld [vmem:[%s2 + $0x214] sm:$0xf]
  %v199 = vld [vmem:[%s2 + $0x218] sm:$0xf]
  %v200 = vld [vmem:[%s2 + $0x21c] sm:$0xf]
  %v201 = vld [vmem:[%s2 + $0x220] sm:$0xf]
  %v202 = vld [vmem:[%s2 + $0x224] sm:$0xf]
  %v203 = vld [vmem:[%s2 + $0x228] sm:$0xf]
  %v204 = vld [vmem:[%s2 + $0x22c] sm:$0xf]
  %v205 = vld [vmem:[%s2 + $0x230] sm:$0xf]
  %v206 = vld [vmem:[%s2 + $0x234] sm:$0xf]
  %v207 = vld [vmem:[%s2 + $0x238] sm:$0xf]
  %v208 = vld [vmem:[%s2 + $0x23c] sm:$0xf]
  %v209 = vld [vmem:[%s2 + $0x240] sm:$0xf]
  %v210 = vld [vmem:[%s2 + $0x244] sm:$0xf]
  %v211 = vld [vmem:[%s2 + $0x248] sm:$0xf]
  %v212 = vld [vmem:[%s2 + $0x24c] sm:$0xf]
  %v213 = vld [vmem:[%s2 + $0x250] sm:$0xf]
  %v214 = vld [vmem:[%s2 + $0x254] sm:$0xf]
  %v215 = vld [vmem:[%s2 + $0x258] sm:$0xf]
  %v216 = vld [vmem:[%s2 + $0x25c] sm:$0xf]
  %v217 = vld [vmem:[%s2 + $0x260] sm:$0xf]
  %v218 = vld [vmem:[%s2 + $0x264] sm:$0xf]
  %v219 = vld [vmem:[%s2 + $0x268] sm:$0xf]
  %v220 = vld [vmem:[%s2 + $0x26c] sm:$0xf]
  %v221 = vld [vmem:[%s2 + $0x270] sm:$0xf]
  %v222 = vld [vmem:[%s2 + $0x274] sm:$0xf]
  %v223 = vld [vmem:[%s2 + $0x278] sm:$0xf]
  %v224 = vld [vmem:[%s2 + $0x27c] sm:$0xf]
  %v225 = vld [vmem:[%s2 + $0x280] sm:$0xf]
  %v226 = vld [vmem:[%s2 + $0x284] sm:$0xf]
  %v227 = vld [vmem:[%s2 + $0x288] sm:$0xf]
  %v228 = vld [vmem:[%s2 + $0x28c] sm:$0xf]
  %v229 = vld [vmem:[%s2 + $0x290] sm:$0xf]
  %v230 = vld [vmem:[%s2 + $0x294] sm:$0xf]
  %v231 = vld [vmem:[%s2 + $0x298] sm:$0xf]
  %v232 = vld [vmem:[%s2 + $0x29c] sm:$0xf]
  %v233 = vld [vmem:[%s2 + $0x2a0] sm:$0xf]
  %v234 = vld [vmem:[%s2 + $0x2a4] sm:$0xf]
  %v235 = vld [vmem:[%s2 + $0x2a8] sm:$0xf]
  %v236 = vld [vmem:[%s2 + $0x2ac] sm:$0xf]
  %v237 = vld [vmem:[%s2 + $0x2b0] sm:$0xf]
  %v238 = vld [vmem:[%s2 + $0x2b4] sm:$0xf]
  %v239 = vld [vmem:[%s2 + $0x2b8] sm:$0xf]
  %v240 = vld [vmem:[%s2 + $0x2bc] sm:$0xf]
  %v241 = vld [vmem:[%s2 + $0x2c0] sm:$0xf]
  %v242 = vld [vmem:[%s2 + $0x2c4] sm:$0xf]
  %v243 = vld [vmem:[%s2 + $0x2c8] sm:$0xf]
  %v244 = vld [vmem:[%s2 + $0x2cc] sm:$0xf]
  %v245 = vld [vmem:[%s2 + $0x2d0] sm:$0xf]
  %v246 = vld [vmem:[%s2 + $0x2d4] sm:$0xf]
  %v247 = vld [vmem:[%s2 + $0x2d8] sm:$0xf]
  %v248 = vld [vmem:[%s2 + $0x2dc] sm:$0xf]
  %v249 = vld [vmem:[%s2 + $0x2e0] sm:$0xf]
  %v250 = vld [vmem:[%s2 + $0x2e4] sm:$0xf]
  %v251 = vld [vmem:[%s2 + $0x2e8] sm:$0xf]
  %v252 = vld [vmem:[%s2 + $0x2ec] sm:$0xf]
  %v253 = vld [vmem:[%s2 + $0x2f0] sm:$0xf]
  %v254 = vld [vmem:[%s2 + $0x2f4] sm:$0xf]
  %v255 = vld [vmem:[%s2 + $0x2f8] sm:$0xf]
  %v256 = vld [vmem:[%s2 + $0x2fc] sm:$0xf]
  %v257 = vld [vmem:[%s2 + $0x300] sm:$0xf]
  %v258 = vld [vmem:[%s2 + $0x304] sm:$0xf]
  %v259 = vld [vmem:[%s2 + $0x308] sm:$0xf]
  %v260 = vld [vmem:[%s2 + $0x30c] sm:$0xf]
  %v261 = vld [vmem:[%s2 + $0x310] sm:$0xf]
  %v262 = vld [vmem:[%s2 + $0x314] sm:$0xf]
  %v263 = vld [vmem:[%s2 + $0x318] sm:$0xf]
  %v264 = vld [vmem:[%s2 + $0x31c] sm:$0xf]
  %v265 = vld [vmem:[%s2 + $0x320] sm:$0xf]
  %v266 = vld [vmem:[%s2 + $0x324] sm:$0xf]
  %v267 = vld [vmem:[%s2 + $0x328] sm:$0xf]
  %v268 = vld [vmem:[%s2 + $0x32c] sm:$0xf]
  %v269 = vld [vmem:[%s2 + $0x330] sm:$0xf]
  %v270 = vld [vmem:[%s2 + $0x334] sm:$0xf]
  %v271 = vld [vmem:[%s2 + $0x338] sm:$0xf]
  %v272 = vld [vmem:[%s2 + $0x33c] sm:$0xf]
  %v273 = vld [vmem:[%s2 + $0x340] sm:$0xf]
  %v274 = vld [vmem:[%s2 + $0x344] sm:$0xf]
  %v275 = vld [vmem:[%s2 + $0x348] sm:$0xf]
  %v276 = vld [vmem:[%s2 + $0x34c] sm:$0xf]
  %v277 = vld [vmem:[%s2 + $0x350] sm:$0xf]
  %v278 = vld [vmem:[%s2 + $0x354] sm:$0xf]
  %v279 = vld [vmem:[%s2 + $0x358] sm:$0xf]
  %v280 = vld [vmem:[%s2 + $0x35c] sm:$0xf]
  %v281 = vld [vmem:[%s2 + $0x360] sm:$0xf]
  %v282 = vld [vmem:[%s2 + $0x364] sm:$0xf]
  %v283 = vld [vmem:[%s2 + $0x368] sm:$0xf]
  %v284 = vld [vmem:[%s2 + $0x36c] sm:$0xf]
  %v285 = vld [vmem:[%s2 + $0x370] sm:$0xf]
  %v286 = vld [vmem:[%s2 + $0x374] sm:$0xf]
  %v287 = vld [vmem:[%s2 + $0x378] sm:$0xf]
  %v288 = vld [vmem:[%s2 + $0x37c] sm:$0xf]
  %v289 = vld [vmem:[%s2 + $0x380] sm:$0xf]
  %v290 = vld [vmem:[%s2 + $0x384] sm:$0xf]
  %v291 = vld [vmem:[%s2 + $0x388] sm:$0xf]
  %v292 = vld [vmem:[%s2 + $0x38c] sm:$0xf]
  %v293 = vld [vmem:[%s2 + $0x390] sm:$0xf]
  %v294 = vld [vmem:[%s2 + $0x394] sm:$0xf]
  %v295 = vld [vmem:[%s2 + $0x398] sm:$0xf]
  %v296 = vld [vmem:[%s2 + $0x39c] sm:$0xf]
  %v297 = vld [vmem:[%s2 + $0x3a0] sm:$0xf]
  %v298 = vld [vmem:[%s2 + $0x3a4] sm:$0xf]
  %v299 = vld [vmem:[%s2 + $0x3a8] sm:$0xf]
  %v300 = vld [vmem:[%s2 + $0x3ac] sm:$0xf]
  %v301 = vld [vmem:[%s2 + $0x3b0] sm:$0xf]
  %v302 = vld [vmem:[%s2 + $0x3b4] sm:$0xf]
  %v303 = vld [vmem:[%s2 + $0x3b8] sm:$0xf]
  %v304 = vld [vmem:[%s2 + $0x3bc] sm:$0xf]
  %v305 = vld [vmem:[%s2 + $0x3c0] sm:$0xf]
  %v306 = vld [vmem:[%s2 + $0x3c4] sm:$0xf]
  %v307 = vld [vmem:[%s2 + $0x3c8] sm:$0xf]
  %v308 = vld [vmem:[%s2 + $0x3cc] sm:$0xf]
  %v309 = vld [vmem:[%s2 + $0x3d0] sm:$0xf]
  %v310 = vld [vmem:[%s2 + $0x3d4] sm:$0xf]
  %v311 = vld [vmem:[%s2 + $0x3d8] sm:$0xf]
  %v312 = vld [vmem:[%s2 + $0x3dc] sm:$0xf]
  %v313 = vld [vmem:[%s2 + $0x3e0] sm:$0xf]
  %v314 = vld [vmem:[%s2 + $0x3e4] sm:$0xf]
  %v315 = vld [vmem:[%s2 + $0x3e8] sm:$0xf]
  %v316 = vld [vmem:[%s2 + $0x3ec] sm:$0xf]
  %v317 = vld [vmem:[%s2 + $0x3f0] sm:$0xf]
  %v318 = vld [vmem:[%s2 + $0x3f4] sm:$0xf]
  %v319 = vld [vmem:[%s2 + $0x3f8] sm:$0xf]
  %v320 = vld [vmem:[%s2 + $0x3fc] sm:$0xf]
  %v321 = vld [vmem:[%s2 + $0x400] sm:$0xf]
  %v322 = vld [vmem:[%s2 + $0x404] sm:$0xf]
  %v323 = vld [vmem:[%s2 + $0x408] sm:$0xf]
  %v324 = vld [vmem:[%s2 + $0x40c] sm:$0xf]
  %v325 = vld [vmem:[%s2 + $0x410] sm:$0xf]
  %v326 = vld [vmem:[%s2 + $0x414] sm:$0xf]
  %v327 = vld [vmem:[%s2 + $0x418] sm:$0xf]
  %v328 = vld [vmem:[%s2 + $0x41c] sm:$0xf]
  %v329 = vld [vmem:[%s2 + $0x420] sm:$0xf]
  %v330 = vld [vmem:[%s2 + $0x424] sm:$0xf]
  %v331 = vld [vmem:[%s2 + $0x428] sm:$0xf]
  %v332 = vld [vmem:[%s2 + $0x42c] sm:$0xf]
  %v333 = vld [vmem:[%s2 + $0x430] sm:$0xf]
  %v334 = vld [vmem:[%s2 + $0x434] sm:$0xf]
  %v335 = vld [vmem:[%s2 + $0x438] sm:$0xf]
  %v336 = vld [vmem:[%s2 + $0x43c] sm:$0xf]
  %v337 = vld [vmem:[%s2 + $0x440] sm:$0xf]
  %v338 = vld [vmem:[%s2 + $0x444] sm:$0xf]
  %v339 = vld [vmem:[%s2 + $0x448] sm:$0xf]
  %v340 = vld [vmem:[%s2 + $0x44c] sm:$0xf]
  %v341 = vld [vmem:[%s2 + $0x450] sm:$0xf]
  %v342 = vld [vmem:[%s2 + $0x454] sm:$0xf]
  %v343 = vld [vmem:[%s2 + $0x458] sm:$0xf]
  %v344 = vld [vmem:[%s2 + $0x45c] sm:$0xf]
  %v345 = vld [vmem:[%s2 + $0x460] sm:$0xf]
  %v346 = vld [vmem:[%s2 + $0x464] sm:$0xf]
  %v347 = vld [vmem:[%s2 + $0x468] sm:$0xf]
  %v348 = vld [vmem:[%s2 + $0x46c] sm:$0xf]
  %v349 = vld [vmem:[%s2 + $0x470] sm:$0xf]
  %v350 = vld [vmem:[%s2 + $0x474] sm:$0xf]
  %v351 = vld [vmem:[%s2 + $0x478] sm:$0xf]
  %v352 = vld [vmem:[%s2 + $0x47c] sm:$0xf]
  %v353 = vld [vmem:[%s2 + $0x480] sm:$0xf]
  %v354 = vld [vmem:[%s2 + $0x484] sm:$0xf]
  %v355 = vld [vmem:[%s2 + $0x488] sm:$0xf]
  %v356 = vld [vmem:[%s2 + $0x48c] sm:$0xf]
  %v357 = vld [vmem:[%s2 + $0x490] sm:$0xf]
  %v358 = vld [vmem:[%s2 + $0x494] sm:$0xf]
  %v359 = vld [vmem:[%s2 + $0x498] sm:$0xf]
  %v360 = vld [vmem:[%s2 + $0x49c] sm:$0xf]
  %v361 = vld [vmem:[%s2 + $0x4a0] sm:$0xf]
  %v362 = vld [vmem:[%s2 + $0x4a4] sm:$0xf]
  %v363 = vld [vmem:[%s2 + $0x4a8] sm:$0xf]
  %v364 = vld [vmem:[%s2 + $0x4ac] sm:$0xf]
  %v365 = vld [vmem:[%s2 + $0x4b0] sm:$0xf]
  %v366 = vld [vmem:[%s2 + $0x4b4] sm:$0xf]
  %v367 = vld [vmem:[%s2 + $0x4b8] sm:$0xf]
  %v368 = vld [vmem:[%s2 + $0x4bc] sm:$0xf]
  %v369 = vld [vmem:[%s2 + $0x4c0] sm:$0xf]
  %v370 = vld [vmem:[%s2 + $0x4c4] sm:$0xf]
  %v371 = vld [vmem:[%s2 + $0x4c8] sm:$0xf]
  %v372 = vld [vmem:[%s2 + $0x4cc] sm:$0xf]
  %v373 = vld [vmem:[%s2 + $0x4d0] sm:$0xf]
  %v374 = vld [vmem:[%s2 + $0x4d4] sm:$0xf]
  %v375 = vld [vmem:[%s2 + $0x4d8] sm:$0xf]
  %v376 = vld [vmem:[%s2 + $0x4dc] sm:$0xf]
  %v377 = vld [vmem:[%s2 + $0x4e0] sm:$0xf]
  %v378 = vld [vmem:[%s2 + $0x4e4] sm:$0xf]
  %v379 = vld [vmem:[%s2 + $0x4e8] sm:$0xf]
  %v380 = vld [vmem:[%s2 + $0x4ec] sm:$0xf]
  %v381 = vld [vmem:[%s2 + $0x4f0] sm:$0xf]
  %v382 = vld [vmem:[%s2 + $0x4f4] sm:$0xf]
  %v383 = vld [vmem:[%s2 + $0x4f8] sm:$0xf]
  %v384 = vld [vmem:[%s2 + $0x4fc] sm:$0xf]
  %v385 = vld [vmem:[%s2 + $0x500] sm:$0xf]
  %v386 = vld [vmem:[%s2 + $0x504] sm:$0xf]
  %v387 = vld [vmem:[%s2 + $0x508] sm:$0xf]
  %v388 = vld [vmem:[%s2 + $0x50c] sm:$0xf]
  %v389 = vld [vmem:[%s2 + $0x510] sm:$0xf]
  %v390 = vld [vmem:[%s2 + $0x514] sm:$0xf]
  %v391 = vld [vmem:[%s2 + $0x518] sm:$0xf]
  %v392 = vld [vmem:[%s2 + $0x51c] sm:$0xf]
  %v393 = vld [vmem:[%s2 + $0x520] sm:$0xf]
  %v394 = vld [vmem:[%s2 + $0x524] sm:$0xf]
  %v395 = vld [vmem:[%s2 + $0x528] sm:$0xf]
  %v396 = vld [vmem:[%s2 + $0x52c] sm:$0xf]
  %v397 = vld [vmem:[%s2 + $0x530] sm:$0xf]
  %v398 = vld [vmem:[%s2 + $0x534] sm:$0xf]
  %v399 = vld [vmem:[%s2 + $0x538] sm:$0xf]
  %v400 = vld [vmem:[%s2 + $0x53c] sm:$0xf]
  %v401 = vld [vmem:[%s2 + $0x540] sm:$0xf]
  %v402 = vld [vmem:[%s2 + $0x544] sm:$0xf]
  %v403 = vld [vmem:[%s2 + $0x548] sm:$0xf]
  %v404 = vld [vmem:[%s2 + $0x54c] sm:$0xf]
  %v405 = vld [vmem:[%s2 + $0x550] sm:$0xf]
  %v406 = vld [vmem:[%s2 + $0x554] sm:$0xf]
  %v407 = vld [vmem:[%s2 + $0x558] sm:$0xf]
  %v408 = vld [vmem:[%s2 + $0x55c] sm:$0xf]
  %v409 = vld [vmem:[%s2 + $0x560] sm:$0xf]
  %v410 = vld [vmem:[%s2 + $0x564] sm:$0xf]
  %v411 = vld [vmem:[%s2 + $0x568] sm:$0xf]
  %v412 = vld [vmem:[%s2 + $0x56c] sm:$0xf]
  %v413 = vld [vmem:[%s2 + $0x570] sm:$0xf]
  %v414 = vld [vmem:[%s2 + $0x574] sm:$0xf]
  %v415 = vld [vmem:[%s2 + $0x578] sm:$0xf]
  %v416 = vld [vmem:[%s2 + $0x57c] sm:$0xf]
  %v417 = vld [vmem:[%s2 + $0x580] sm:$0xf]
  %v418 = vld [vmem:[%s2 + $0x584] sm:$0xf]
  %v419 = vld [vmem:[%s2 + $0x588] sm:$0xf]
  %v420 = vld [vmem:[%s2 + $0x58c] sm:$0xf]
  %v421 = vld [vmem:[%s2 + $0x590] sm:$0xf]
  %v422 = vld [vmem:[%s2 + $0x594] sm:$0xf]
  %v423 = vld [vmem:[%s2 + $0x598] sm:$0xf]
  %v424 = vld [vmem:[%s2 + $0x59c] sm:$0xf]
  %v425 = vld [vmem:[%s2 + $0x5a0] sm:$0xf]
  %v426 = vld [vmem:[%s2 + $0x5a4] sm:$0xf]
  %v427 = vld [vmem:[%s2 + $0x5a8] sm:$0xf]
  %v428 = vld [vmem:[%s2 + $0x5ac] sm:$0xf]
  %v429 = vld [vmem:[%s2 + $0x5b0] sm:$0xf]
  %v430 = vld [vmem:[%s2 + $0x5b4] sm:$0xf]
  %v431 = vld [vmem:[%s2 + $0x5b8] sm:$0xf]
  %v432 = vld [vmem:[%s2 + $0x5bc] sm:$0xf]
  %v433 = vld [vmem:[%s2 + $0x5c0] sm:$0xf]
  %v434 = vld [vmem:[%s2 + $0x5c4] sm:$0xf]
  %v435 = vld [vmem:[%s2 + $0x5c8] sm:$0xf]
  %v436 = vld [vmem:[%s2 + $0x5cc] sm:$0xf]
  %v437 = vld [vmem:[%s2 + $0x5d0] sm:$0xf]
  %v438 = vld [vmem:[%s2 + $0x5d4] sm:$0xf]
  %v439 = vld [vmem:[%s2 + $0x5d8] sm:$0xf]
  %v440 = vld [vmem:[%s2 + $0x5dc] sm:$0xf]
  %v441 = vld [vmem:[%s2 + $0x5e0] sm:$0xf]
  %v442 = vld [vmem:[%s2 + $0x5e4] sm:$0xf]
  %v443 = vld [vmem:[%s2 + $0x5e8] sm:$0xf]
  %v444 = vld [vmem:[%s2 + $0x5ec] sm:$0xf]
  %v445 = vld [vmem:[%s2 + $0x5f0] sm:$0xf]
  %v446 = vld [vmem:[%s2 + $0x5f4] sm:$0xf]
  %v447 = vld [vmem:[%s2 + $0x5f8] sm:$0xf]
  %v448 = vld [vmem:[%s2 + $0x5fc] sm:$0xf]
  %v449 = vld [vmem:[%s2 + $0x600] sm:$0xf]
  %v450 = vld [vmem:[%s2 + $0x604] sm:$0xf]
  %v451 = vld [vmem:[%s2 + $0x608] sm:$0xf]
  %v452 = vld [vmem:[%s2 + $0x60c] sm:$0xf]
  %v453 = vld [vmem:[%s2 + $0x610] sm:$0xf]
  %v454 = vld [vmem:[%s2 + $0x614] sm:$0xf]
  %v455 = vld [vmem:[%s2 + $0x618] sm:$0xf]
  %v456 = vld [vmem:[%s2 + $0x61c] sm:$0xf]
  %v457 = vld [vmem:[%s2 + $0x620] sm:$0xf]
  %v458 = vld [vmem:[%s2 + $0x624] sm:$0xf]
  %v459 = vld [vmem:[%s2 + $0x628] sm:$0xf]
  %v460 = vld [vmem:[%s2 + $0x62c] sm:$0xf]
  %v461 = vld [vmem:[%s2 + $0x630] sm:$0xf]
  %v462 = vld [vmem:[%s2 + $0x634] sm:$0xf]
  %v463 = vld [vmem:[%s2 + $0x638] sm:$0xf]
  %v464 = vld [vmem:[%s2 + $0x63c] sm:$0xf]
  %v465 = vld [vmem:[%s2 + $0x640] sm:$0xf]
  %v466 = vld [vmem:[%s2 + $0x644] sm:$0xf]
  %v467 = vld [vmem:[%s2 + $0x648] sm:$0xf]
  %v468 = vld [vmem:[%s2 + $0x64c] sm:$0xf]
  %v469 = vld [vmem:[%s2 + $0x650] sm:$0xf]
  %v470 = vld [vmem:[%s2 + $0x654] sm:$0xf]
  %v471 = vld [vmem:[%s2 + $0x658] sm:$0xf]
  %v472 = vld [vmem:[%s2 + $0x65c] sm:$0xf]
  %v473 = vld [vmem:[%s2 + $0x660] sm:$0xf]
  %v474 = vld [vmem:[%s2 + $0x664] sm:$0xf]
  %v475 = vld [vmem:[%s2 + $0x668] sm:$0xf]
  %v476 = vld [vmem:[%s2 + $0x66c] sm:$0xf]
  %v477 = vld [vmem:[%s2 + $0x670] sm:$0xf]
  %v478 = vld [vmem:[%s2 + $0x674] sm:$0xf]
  %v479 = vld [vmem:[%s2 + $0x678] sm:$0xf]
  %v480 = vld [vmem:[%s2 + $0x67c] sm:$0xf]
  %v481 = vld [vmem:[%s2 + $0x680] sm:$0xf]
  %v482 = vld [vmem:[%s2 + $0x684] sm:$0xf]
  %v483 = vld [vmem:[%s2 + $0x688] sm:$0xf]
  %v484 = vld [vmem:[%s2 + $0x68c] sm:$0xf]
  %v485 = vld [vmem:[%s2 + $0x690] sm:$0xf]
  %v486 = vld [vmem:[%s2 + $0x694] sm:$0xf]
  %v487 = vld [vmem:[%s2 + $0x698] sm:$0xf]
  %v488 = vld [vmem:[%s2 + $0x69c] sm:$0xf]
  %v489 = vld [vmem:[%s2 + $0x6a0] sm:$0xf]
  %v490 = vld [vmem:[%s2 + $0x6a4] sm:$0xf]
  %v491 = vld [vmem:[%s2 + $0x6a8] sm:$0xf]
  %v492 = vld [vmem:[%s2 + $0x6ac] sm:$0xf]
  %v493 = vld [vmem:[%s2 + $0x6b0] sm:$0xf]
  %v494 = vld [vmem:[%s2 + $0x6b4] sm:$0xf]
  %v495 = vld [vmem:[%s2 + $0x6b8] sm:$0xf]
  %v496 = vld [vmem:[%s2 + $0x6bc] sm:$0xf]
  %v497 = vld [vmem:[%s2 + $0x6c0] sm:$0xf]
  %v498 = vld [vmem:[%s2 + $0x6c4] sm:$0xf]
  %v499 = vld [vmem:[%s2 + $0x6c8] sm:$0xf]
  %v500 = vld [vmem:[%s2 + $0x6cc] sm:$0xf]
  %v501 = vld [vmem:[%s2 + $0x6d0] sm:$0xf]
  %v502 = vld [vmem:[%s2 + $0x6d4] sm:$0xf]
  %v503 = vld [vmem:[%s2 + $0x6d8] sm:$0xf]
  %v504 = vld [vmem:[%s2 + $0x6dc] sm:$0xf]
  %v505 = vld [vmem:[%s2 + $0x6e0] sm:$0xf]
  %v506 = vld [vmem:[%s2 + $0x6e4] sm:$0xf]
  %v507 = vld [vmem:[%s2 + $0x6e8] sm:$0xf]
  %v508 = vld [vmem:[%s2 + $0x6ec] sm:$0xf]
  %v509 = vld [vmem:[%s2 + $0x6f0] sm:$0xf]
  %v510 = vld [vmem:[%s2 + $0x6f4] sm:$0xf]
  %v511 = vld [vmem:[%s2 + $0x6f8] sm:$0xf]
  %v512 = vld [vmem:[%s2 + $0x6fc] sm:$0xf]
  %v513 = vld [vmem:[%s3] sm:$0x1]
  %v515 = vperm.slane %v513, 0
  %v531 = vunpack.c.l.b16 %v51
  %v532 = vunpack.c.h.b16 %v51
  %v533 = vunpack.c.l.b16 %v52
  %v534 = vunpack.c.h.b16 %v52
  %v535 = vunpack.c.l.b16 %v53
  %v536 = vunpack.c.h.b16 %v53
  %v537 = vunpack.c.l.b16 %v54
  %v538 = vunpack.c.h.b16 %v54
  %v539 = vunpack.c.l.b16 %v55
  %v540 = vunpack.c.h.b16 %v55
  %v541 = vunpack.c.l.b16 %v56
  %v542 = vunpack.c.h.b16 %v56
  %v543 = vunpack.c.l.b16 %v57
  %v544 = vunpack.c.h.b16 %v57
  %v545 = vunpack.c.l.b16 %v58
  %v546 = vunpack.c.h.b16 %v58
  %v547 = vunpack.c.l.b16 %v59
  %v548 = vunpack.c.h.b16 %v59
  %v549 = vunpack.c.l.b16 %v60
  %v550 = vunpack.c.h.b16 %v60
  %v551 = vunpack.c.l.b16 %v61
  %v552 = vunpack.c.h.b16 %v61
  %v553 = vunpack.c.l.b16 %v62
  %v554 = vunpack.c.h.b16 %v62
  %v555 = vunpack.c.l.b16 %v63
  %v556 = vunpack.c.h.b16 %v63
  %v557 = vunpack.c.l.b16 %v64
  %v558 = vunpack.c.h.b16 %v64
  %v559 = vpack.c.b16 %v531, %v531
  %v560 = vpack.c.b16 %v532, %v532
  %v561 = vpack.c.b16 %v533, %v533
  %v562 = vpack.c.b16 %v534, %v534
  %v563 = vpack.c.b16 %v535, %v535
  %v564 = vpack.c.b16 %v536, %v536
  %v565 = vpack.c.b16 %v537, %v537
  %v566 = vpack.c.b16 %v538, %v538
  %v567 = vpack.c.b16 %v539, %v539
  %v568 = vpack.c.b16 %v540, %v540
  %v569 = vpack.c.b16 %v541, %v541
  %v570 = vpack.c.b16 %v542, %v542
  %v571 = vpack.c.b16 %v543, %v543
  %v572 = vpack.c.b16 %v544, %v544
  %v573 = vpack.c.b16 %v545, %v545
  %v574 = vpack.c.b16 %v546, %v546
  %v575 = vpack.c.b16 %v547, %v547
  %v576 = vpack.c.b16 %v548, %v548
  %v577 = vpack.c.b16 %v549, %v549
  %v578 = vpack.c.b16 %v550, %v550
  %v579 = vpack.c.b16 %v551, %v551
  %v580 = vpack.c.b16 %v552, %v552
  %v581 = vpack.c.b16 %v553, %v553
  %v582 = vpack.c.b16 %v554, %v554
  %v583 = vpack.c.b16 %v555, %v555
  %v584 = vpack.c.b16 %v556, %v556
  %v585 = vpack.c.b16 %v557, %v557
  %v586 = vpack.c.b16 %v558, %v558
  %v1063 = vunpack.c.l.b16 %v65
  %v1064 = vunpack.c.l.b16 %v66
  %v1065 = vunpack.c.l.b16 %v67
  %v1066 = vunpack.c.l.b16 %v68
  %v1067 = vunpack.c.l.b16 %v69
  %v1068 = vunpack.c.l.b16 %v70
  %v1069 = vunpack.c.l.b16 %v71
  %v1070 = vunpack.c.l.b16 %v72
  %v1071 = vunpack.c.l.b16 %v73
  %v1072 = vunpack.c.l.b16 %v74
  %v1073 = vunpack.c.l.b16 %v75
  %v1074 = vunpack.c.l.b16 %v76
  %v1075 = vunpack.c.l.b16 %v77
  %v1076 = vunpack.c.l.b16 %v78
  %v1077 = vunpack.c.l.b16 %v79
  %v1078 = vunpack.c.l.b16 %v80
  %v1079 = vunpack.c.l.b16 %v81
  %v1080 = vunpack.c.l.b16 %v82
  %v1081 = vunpack.c.l.b16 %v83
  %v1082 = vunpack.c.l.b16 %v84
  %v1083 = vunpack.c.l.b16 %v85
  %v1084 = vunpack.c.l.b16 %v86
  %v1085 = vunpack.c.l.b16 %v87
  %v1086 = vunpack.c.l.b16 %v88
  %v1087 = vunpack.c.l.b16 %v89
  %v1088 = vunpack.c.l.b16 %v90
  %v1089 = vunpack.c.l.b16 %v91
  %v1090 = vunpack.c.l.b16 %v92
  %v1091 = vunpack.c.l.b16 %v93
  %v1092 = vunpack.c.l.b16 %v94
  %v1093 = vunpack.c.l.b16 %v95
  %v1094 = vunpack.c.l.b16 %v96
  %v1095 = vunpack.c.l.b16 %v97
  %v1096 = vunpack.c.l.b16 %v98
  %v1097 = vunpack.c.l.b16 %v99
  %v1098 = vunpack.c.l.b16 %v100
  %v1099 = vunpack.c.l.b16 %v101
  %v1100 = vunpack.c.l.b16 %v102
  %v1101 = vunpack.c.l.b16 %v103
  %v1102 = vunpack.c.l.b16 %v104
  %v1103 = vunpack.c.l.b16 %v105
  %v1104 = vunpack.c.l.b16 %v106
  %v1105 = vunpack.c.l.b16 %v107
  %v1106 = vunpack.c.l.b16 %v108
  %v1107 = vunpack.c.l.b16 %v109
  %v1108 = vunpack.c.l.b16 %v110
  %v1109 = vunpack.c.l.b16 %v111
  %v1110 = vunpack.c.l.b16 %v112
  %v1111 = vunpack.c.l.b16 %v113
  %v1112 = vunpack.c.l.b16 %v114
  %v1113 = vunpack.c.l.b16 %v115
  %v1114 = vunpack.c.l.b16 %v116
  %v1115 = vunpack.c.l.b16 %v117
  %v1116 = vunpack.c.l.b16 %v118
  %v1117 = vunpack.c.l.b16 %v119
  %v1118 = vunpack.c.l.b16 %v120
  %v1119 = vunpack.c.l.b16 %v121
  %v1120 = vunpack.c.l.b16 %v122
  %v1121 = vunpack.c.l.b16 %v123
  %v1122 = vunpack.c.l.b16 %v124
  %v1123 = vunpack.c.l.b16 %v125
  %v1124 = vunpack.c.l.b16 %v126
  %v1125 = vunpack.c.l.b16 %v127
  %v1126 = vunpack.c.l.b16 %v128
  %v1127 = vunpack.c.l.b16 %v129
  %v1128 = vunpack.c.l.b16 %v130
  %v1129 = vunpack.c.l.b16 %v131
  %v1130 = vunpack.c.l.b16 %v132
  %v1131 = vunpack.c.l.b16 %v133
  %v1132 = vunpack.c.l.b16 %v134
  %v1133 = vunpack.c.l.b16 %v135
  %v1134 = vunpack.c.l.b16 %v136
  %v1135 = vunpack.c.l.b16 %v137
  %v1136 = vunpack.c.l.b16 %v138
  %v1137 = vunpack.c.l.b16 %v139
  %v1138 = vunpack.c.l.b16 %v140
  %v1139 = vunpack.c.l.b16 %v141
  %v1140 = vunpack.c.l.b16 %v142
  %v1141 = vunpack.c.l.b16 %v143
  %v1142 = vunpack.c.l.b16 %v144
  %v1143 = vunpack.c.l.b16 %v145
  %v1144 = vunpack.c.l.b16 %v146
  %v1145 = vunpack.c.l.b16 %v147
  %v1146 = vunpack.c.l.b16 %v148
  %v1147 = vunpack.c.l.b16 %v149
  %v1148 = vunpack.c.l.b16 %v150
  %v1149 = vunpack.c.l.b16 %v151
  %v1150 = vunpack.c.l.b16 %v152
  %v1151 = vunpack.c.l.b16 %v153
  %v1152 = vunpack.c.l.b16 %v154
  %v1153 = vunpack.c.l.b16 %v155
  %v1154 = vunpack.c.l.b16 %v156
  %v1155 = vunpack.c.l.b16 %v157
  %v1156 = vunpack.c.l.b16 %v158
  %v1157 = vunpack.c.l.b16 %v159
  %v1158 = vunpack.c.l.b16 %v160
  %v1159 = vunpack.c.l.b16 %v161
  %v1160 = vunpack.c.l.b16 %v162
  %v1161 = vunpack.c.l.b16 %v163
  %v1162 = vunpack.c.l.b16 %v164
  %v1163 = vunpack.c.l.b16 %v165
  %v1164 = vunpack.c.l.b16 %v166
  %v1165 = vunpack.c.l.b16 %v167
  %v1166 = vunpack.c.l.b16 %v168
  %v1167 = vunpack.c.l.b16 %v169
  %v1168 = vunpack.c.l.b16 %v170
  %v1169 = vunpack.c.l.b16 %v171
  %v1170 = vunpack.c.l.b16 %v172
  %v1171 = vunpack.c.l.b16 %v173
  %v1172 = vunpack.c.l.b16 %v174
  %v1173 = vunpack.c.l.b16 %v175
  %v1174 = vunpack.c.l.b16 %v176
  %v1175 = vunpack.c.l.b16 %v177
  %v1176 = vunpack.c.l.b16 %v178
  %v1177 = vunpack.c.l.b16 %v179
  %v1178 = vunpack.c.l.b16 %v180
  %v1179 = vunpack.c.l.b16 %v181
  %v1180 = vunpack.c.l.b16 %v182
  %v1181 = vunpack.c.l.b16 %v183
  %v1182 = vunpack.c.l.b16 %v184
  %v1183 = vunpack.c.l.b16 %v185
  %v1184 = vunpack.c.l.b16 %v186
  %v1185 = vunpack.c.l.b16 %v187
  %v1186 = vunpack.c.l.b16 %v188
  %v1187 = vunpack.c.l.b16 %v189
  %v1188 = vunpack.c.l.b16 %v190
  %v1189 = vunpack.c.l.b16 %v191
  %v1190 = vunpack.c.l.b16 %v192
  %v1191 = vunpack.c.l.b16 %v193
  %v1192 = vunpack.c.l.b16 %v194
  %v1193 = vunpack.c.l.b16 %v195
  %v1194 = vunpack.c.l.b16 %v196
  %v1195 = vunpack.c.l.b16 %v197
  %v1196 = vunpack.c.l.b16 %v198
  %v1197 = vunpack.c.l.b16 %v199
  %v1198 = vunpack.c.l.b16 %v200
  %v1199 = vunpack.c.l.b16 %v201
  %v1200 = vunpack.c.l.b16 %v202
  %v1201 = vunpack.c.l.b16 %v203
  %v1202 = vunpack.c.l.b16 %v204
  %v1203 = vunpack.c.l.b16 %v205
  %v1204 = vunpack.c.l.b16 %v206
  %v1205 = vunpack.c.l.b16 %v207
  %v1206 = vunpack.c.l.b16 %v208
  %v1207 = vunpack.c.l.b16 %v209
  %v1208 = vunpack.c.l.b16 %v210
  %v1209 = vunpack.c.l.b16 %v211
  %v1210 = vunpack.c.l.b16 %v212
  %v1211 = vunpack.c.l.b16 %v213
  %v1212 = vunpack.c.l.b16 %v214
  %v1213 = vunpack.c.l.b16 %v215
  %v1214 = vunpack.c.l.b16 %v216
  %v1215 = vunpack.c.l.b16 %v217
  %v1216 = vunpack.c.l.b16 %v218
  %v1217 = vunpack.c.l.b16 %v219
  %v1218 = vunpack.c.l.b16 %v220
  %v1219 = vunpack.c.l.b16 %v221
  %v1220 = vunpack.c.l.b16 %v222
  %v1221 = vunpack.c.l.b16 %v223
  %v1222 = vunpack.c.l.b16 %v224
  %v1223 = vunpack.c.l.b16 %v225
  %v1224 = vunpack.c.l.b16 %v226
  %v1225 = vunpack.c.l.b16 %v227
  %v1226 = vunpack.c.l.b16 %v228
  %v1227 = vunpack.c.l.b16 %v229
  %v1228 = vunpack.c.l.b16 %v230
  %v1229 = vunpack.c.l.b16 %v231
  %v1230 = vunpack.c.l.b16 %v232
  %v1231 = vunpack.c.l.b16 %v233
  %v1232 = vunpack.c.l.b16 %v234
  %v1233 = vunpack.c.l.b16 %v235
  %v1234 = vunpack.c.l.b16 %v236
  %v1235 = vunpack.c.l.b16 %v237
  %v1236 = vunpack.c.l.b16 %v238
  %v1237 = vunpack.c.l.b16 %v239
  %v1238 = vunpack.c.l.b16 %v240
  %v1239 = vunpack.c.l.b16 %v241
  %v1240 = vunpack.c.l.b16 %v242
  %v1241 = vunpack.c.l.b16 %v243
  %v1242 = vunpack.c.l.b16 %v244
  %v1243 = vunpack.c.l.b16 %v245
  %v1244 = vunpack.c.l.b16 %v246
  %v1245 = vunpack.c.l.b16 %v247
  %v1246 = vunpack.c.l.b16 %v248
  %v1247 = vunpack.c.l.b16 %v249
  %v1248 = vunpack.c.l.b16 %v250
  %v1249 = vunpack.c.l.b16 %v251
  %v1250 = vunpack.c.l.b16 %v252
  %v1251 = vunpack.c.l.b16 %v253
  %v1252 = vunpack.c.l.b16 %v254
  %v1253 = vunpack.c.l.b16 %v255
  %v1254 = vunpack.c.l.b16 %v256
  %v1255 = vunpack.c.l.b16 %v257
  %v1256 = vunpack.c.l.b16 %v258
  %v1257 = vunpack.c.l.b16 %v259
  %v1258 = vunpack.c.l.b16 %v260
  %v1259 = vunpack.c.l.b16 %v261
  %v1260 = vunpack.c.l.b16 %v262
  %v1261 = vunpack.c.l.b16 %v263
  %v1262 = vunpack.c.l.b16 %v264
  %v1263 = vunpack.c.l.b16 %v265
  %v1264 = vunpack.c.l.b16 %v266
  %v1265 = vunpack.c.l.b16 %v267
  %v1266 = vunpack.c.l.b16 %v268
  %v1267 = vunpack.c.l.b16 %v269
  %v1268 = vunpack.c.l.b16 %v270
  %v1269 = vunpack.c.l.b16 %v271
  %v1270 = vunpack.c.l.b16 %v272
  %v1271 = vunpack.c.l.b16 %v273
  %v1272 = vunpack.c.l.b16 %v274
  %v1273 = vunpack.c.l.b16 %v275
  %v1274 = vunpack.c.l.b16 %v276
  %v1275 = vunpack.c.l.b16 %v277
  %v1276 = vunpack.c.l.b16 %v278
  %v1277 = vunpack.c.l.b16 %v279
  %v1278 = vunpack.c.l.b16 %v280
  %v1279 = vunpack.c.l.b16 %v281
  %v1280 = vunpack.c.l.b16 %v282
  %v1281 = vunpack.c.l.b16 %v283
  %v1282 = vunpack.c.l.b16 %v284
  %v1283 = vunpack.c.l.b16 %v285
  %v1284 = vunpack.c.l.b16 %v286
  %v1285 = vunpack.c.l.b16 %v287
  %v1286 = vunpack.c.l.b16 %v288
  %v1287 = vunpack.c.l.b16 %v289
  %v1288 = vunpack.c.l.b16 %v290
  %v1289 = vunpack.c.l.b16 %v291
  %v1290 = vunpack.c.l.b16 %v292
  %v1291 = vunpack.c.l.b16 %v293
  %v1292 = vunpack.c.l.b16 %v294
  %v1293 = vunpack.c.l.b16 %v295
  %v1294 = vunpack.c.l.b16 %v296
  %v1295 = vunpack.c.l.b16 %v297
  %v1296 = vunpack.c.l.b16 %v298
  %v1297 = vunpack.c.l.b16 %v299
  %v1298 = vunpack.c.l.b16 %v300
  %v1299 = vunpack.c.l.b16 %v301
  %v1300 = vunpack.c.l.b16 %v302
  %v1301 = vunpack.c.l.b16 %v303
  %v1302 = vunpack.c.l.b16 %v304
  %v1303 = vunpack.c.l.b16 %v305
  %v1304 = vunpack.c.l.b16 %v306
  %v1305 = vunpack.c.l.b16 %v307
  %v1306 = vunpack.c.l.b16 %v308
  %v1307 = vunpack.c.l.b16 %v309
  %v1308 = vunpack.c.l.b16 %v310
  %v1309 = vunpack.c.l.b16 %v311
  %v1310 = vunpack.c.l.b16 %v312
  %v1311 = vunpack.c.l.b16 %v313
  %v1312 = vunpack.c.l.b16 %v314
  %v1313 = vunpack.c.l.b16 %v315
  %v1314 = vunpack.c.l.b16 %v316
  %v1315 = vunpack.c.l.b16 %v317
  %v1316 = vunpack.c.l.b16 %v318
  %v1317 = vunpack.c.l.b16 %v319
  %v1318 = vunpack.c.l.b16 %v320
  %v1319 = vunpack.c.l.b16 %v321
  %v1320 = vunpack.c.l.b16 %v322
  %v1321 = vunpack.c.l.b16 %v323
  %v1322 = vunpack.c.l.b16 %v324
  %v1323 = vunpack.c.l.b16 %v325
  %v1324 = vunpack.c.l.b16 %v326
  %v1325 = vunpack.c.l.b16 %v327
  %v1326 = vunpack.c.l.b16 %v328
  %v1327 = vunpack.c.l.b16 %v329
  %v1328 = vunpack.c.l.b16 %v330
  %v1329 = vunpack.c.l.b16 %v331
  %v1330 = vunpack.c.l.b16 %v332
  %v1331 = vunpack.c.l.b16 %v333
  %v1332 = vunpack.c.l.b16 %v334
  %v1333 = vunpack.c.l.b16 %v335
  %v1334 = vunpack.c.l.b16 %v336
  %v1335 = vunpack.c.l.b16 %v337
  %v1336 = vunpack.c.l.b16 %v338
  %v1337 = vunpack.c.l.b16 %v339
  %v1338 = vunpack.c.l.b16 %v340
  %v1339 = vunpack.c.l.b16 %v341
  %v1340 = vunpack.c.l.b16 %v342
  %v1341 = vunpack.c.l.b16 %v343
  %v1342 = vunpack.c.l.b16 %v344
  %v1343 = vunpack.c.l.b16 %v345
  %v1344 = vunpack.c.l.b16 %v346
  %v1345 = vunpack.c.l.b16 %v347
  %v1346 = vunpack.c.l.b16 %v348
  %v1347 = vunpack.c.l.b16 %v349
  %v1348 = vunpack.c.l.b16 %v350
  %v1349 = vunpack.c.l.b16 %v351
  %v1350 = vunpack.c.l.b16 %v352
  %v1351 = vunpack.c.l.b16 %v353
  %v1352 = vunpack.c.l.b16 %v354
  %v1353 = vunpack.c.l.b16 %v355
  %v1354 = vunpack.c.l.b16 %v356
  %v1355 = vunpack.c.l.b16 %v357
  %v1356 = vunpack.c.l.b16 %v358
  %v1357 = vunpack.c.l.b16 %v359
  %v1358 = vunpack.c.l.b16 %v360
  %v1359 = vunpack.c.l.b16 %v361
  %v1360 = vunpack.c.l.b16 %v362
  %v1361 = vunpack.c.l.b16 %v363
  %v1362 = vunpack.c.l.b16 %v364
  %v1363 = vunpack.c.l.b16 %v365
  %v1364 = vunpack.c.l.b16 %v366
  %v1365 = vunpack.c.l.b16 %v367
  %v1366 = vunpack.c.l.b16 %v368
  %v1367 = vunpack.c.l.b16 %v369
  %v1368 = vunpack.c.l.b16 %v370
  %v1369 = vunpack.c.l.b16 %v371
  %v1370 = vunpack.c.l.b16 %v372
  %v1371 = vunpack.c.l.b16 %v373
  %v1372 = vunpack.c.l.b16 %v374
  %v1373 = vunpack.c.l.b16 %v375
  %v1374 = vunpack.c.l.b16 %v376
  %v1375 = vunpack.c.l.b16 %v377
  %v1376 = vunpack.c.l.b16 %v378
  %v1377 = vunpack.c.l.b16 %v379
  %v1378 = vunpack.c.l.b16 %v380
  %v1379 = vunpack.c.l.b16 %v381
  %v1380 = vunpack.c.l.b16 %v382
  %v1381 = vunpack.c.l.b16 %v383
  %v1382 = vunpack.c.l.b16 %v384
  %v1383 = vunpack.c.l.b16 %v385
  %v1384 = vunpack.c.l.b16 %v386
  %v1385 = vunpack.c.l.b16 %v387
  %v1386 = vunpack.c.l.b16 %v388
  %v1387 = vunpack.c.l.b16 %v389
  %v1388 = vunpack.c.l.b16 %v390
  %v1389 = vunpack.c.l.b16 %v391
  %v1390 = vunpack.c.l.b16 %v392
  %v1391 = vunpack.c.l.b16 %v393
  %v1392 = vunpack.c.l.b16 %v394
  %v1393 = vunpack.c.l.b16 %v395
  %v1394 = vunpack.c.l.b16 %v396
  %v1395 = vunpack.c.l.b16 %v397
  %v1396 = vunpack.c.l.b16 %v398
  %v1397 = vunpack.c.l.b16 %v399
  %v1398 = vunpack.c.l.b16 %v400
  %v1399 = vunpack.c.l.b16 %v401
  %v1400 = vunpack.c.l.b16 %v402
  %v1401 = vunpack.c.l.b16 %v403
  %v1402 = vunpack.c.l.b16 %v404
  %v1403 = vunpack.c.l.b16 %v405
  %v1404 = vunpack.c.l.b16 %v406
  %v1405 = vunpack.c.l.b16 %v407
  %v1406 = vunpack.c.l.b16 %v408
  %v1407 = vunpack.c.l.b16 %v409
  %v1408 = vunpack.c.l.b16 %v410
  %v1409 = vunpack.c.l.b16 %v411
  %v1410 = vunpack.c.l.b16 %v412
  %v1411 = vunpack.c.l.b16 %v413
  %v1412 = vunpack.c.l.b16 %v414
  %v1413 = vunpack.c.l.b16 %v415
  %v1414 = vunpack.c.l.b16 %v416
  %v1415 = vunpack.c.l.b16 %v417
  %v1416 = vunpack.c.l.b16 %v418
  %v1417 = vunpack.c.l.b16 %v419
  %v1418 = vunpack.c.l.b16 %v420
  %v1419 = vunpack.c.l.b16 %v421
  %v1420 = vunpack.c.l.b16 %v422
  %v1421 = vunpack.c.l.b16 %v423
  %v1422 = vunpack.c.l.b16 %v424
  %v1423 = vunpack.c.l.b16 %v425
  %v1424 = vunpack.c.l.b16 %v426
  %v1425 = vunpack.c.l.b16 %v427
  %v1426 = vunpack.c.l.b16 %v428
  %v1427 = vunpack.c.l.b16 %v429
  %v1428 = vunpack.c.l.b16 %v430
  %v1429 = vunpack.c.l.b16 %v431
  %v1430 = vunpack.c.l.b16 %v432
  %v1431 = vunpack.c.l.b16 %v433
  %v1432 = vunpack.c.l.b16 %v434
  %v1433 = vunpack.c.l.b16 %v435
  %v1434 = vunpack.c.l.b16 %v436
  %v1435 = vunpack.c.l.b16 %v437
  %v1436 = vunpack.c.l.b16 %v438
  %v1437 = vunpack.c.l.b16 %v439
  %v1438 = vunpack.c.l.b16 %v440
  %v1439 = vunpack.c.l.b16 %v441
  %v1440 = vunpack.c.l.b16 %v442
  %v1441 = vunpack.c.l.b16 %v443
  %v1442 = vunpack.c.l.b16 %v444
  %v1443 = vunpack.c.l.b16 %v445
  %v1444 = vunpack.c.l.b16 %v446
  %v1445 = vunpack.c.l.b16 %v447
  %v1446 = vunpack.c.l.b16 %v448
  %v1447 = vunpack.c.l.b16 %v449
  %v1448 = vunpack.c.l.b16 %v450
  %v1449 = vunpack.c.l.b16 %v451
  %v1450 = vunpack.c.l.b16 %v452
  %v1451 = vunpack.c.l.b16 %v453
  %v1452 = vunpack.c.l.b16 %v454
  %v1453 = vunpack.c.l.b16 %v455
  %v1454 = vunpack.c.l.b16 %v456
  %v1455 = vunpack.c.l.b16 %v457
  %v1456 = vunpack.c.l.b16 %v458
  %v1457 = vunpack.c.l.b16 %v459
  %v1458 = vunpack.c.l.b16 %v460
  %v1459 = vunpack.c.l.b16 %v461
  %v1460 = vunpack.c.l.b16 %v462
  %v1461 = vunpack.c.l.b16 %v463
  %v1462 = vunpack.c.l.b16 %v464
  %v1463 = vunpack.c.l.b16 %v465
  %v1464 = vunpack.c.l.b16 %v466
  %v1465 = vunpack.c.l.b16 %v467
  %v1466 = vunpack.c.l.b16 %v468
  %v1467 = vunpack.c.l.b16 %v469
  %v1468 = vunpack.c.l.b16 %v470
  %v1469 = vunpack.c.l.b16 %v471
  %v1470 = vunpack.c.l.b16 %v472
  %v1471 = vunpack.c.l.b16 %v473
  %v1472 = vunpack.c.l.b16 %v474
  %v1473 = vunpack.c.l.b16 %v475
  %v1474 = vunpack.c.l.b16 %v476
  %v1475 = vunpack.c.l.b16 %v477
  %v1476 = vunpack.c.l.b16 %v478
  %v1477 = vunpack.c.l.b16 %v479
  %v1478 = vunpack.c.l.b16 %v480
  %v1479 = vunpack.c.l.b16 %v481
  %v1480 = vunpack.c.l.b16 %v482
  %v1481 = vunpack.c.l.b16 %v483
  %v1482 = vunpack.c.l.b16 %v484
  %v1483 = vunpack.c.l.b16 %v485
  %v1484 = vunpack.c.l.b16 %v486
  %v1485 = vunpack.c.l.b16 %v487
  %v1486 = vunpack.c.l.b16 %v488
  %v1487 = vunpack.c.l.b16 %v489
  %v1488 = vunpack.c.l.b16 %v490
  %v1489 = vunpack.c.l.b16 %v491
  %v1490 = vunpack.c.l.b16 %v492
  %v1491 = vunpack.c.l.b16 %v493
  %v1492 = vunpack.c.l.b16 %v494
  %v1493 = vunpack.c.l.b16 %v495
  %v1494 = vunpack.c.l.b16 %v496
  %v1495 = vunpack.c.l.b16 %v497
  %v1496 = vunpack.c.l.b16 %v498
  %v1497 = vunpack.c.l.b16 %v499
  %v1498 = vunpack.c.l.b16 %v500
  %v1499 = vunpack.c.l.b16 %v501
  %v1500 = vunpack.c.l.b16 %v502
  %v1501 = vunpack.c.l.b16 %v503
  %v1502 = vunpack.c.l.b16 %v504
  %v1503 = vunpack.c.l.b16 %v505
  %v1504 = vunpack.c.l.b16 %v506
  %v1505 = vunpack.c.l.b16 %v507
  %v1506 = vunpack.c.l.b16 %v508
  %v1507 = vunpack.c.l.b16 %v509
  %v1508 = vunpack.c.l.b16 %v510
  %v1509 = vunpack.c.l.b16 %v511
  %v1510 = vunpack.c.l.b16 %v512
  %v1511 = vpack.c.b16 %v1064, %v1063
  %v1512 = vpack.c.b16 %v1066, %v1065
  %v1513 = vpack.c.b16 %v1068, %v1067
  %v1514 = vpack.c.b16 %v1070, %v1069
  %v1515 = vpack.c.b16 %v1072, %v1071
  %v1516 = vpack.c.b16 %v1074, %v1073
  %v1517 = vpack.c.b16 %v1076, %v1075
  %v1518 = vpack.c.b16 %v1078, %v1077
  %v1519 = vpack.c.b16 %v1080, %v1079
  %v1520 = vpack.c.b16 %v1082, %v1081
  %v1521 = vpack.c.b16 %v1084, %v1083
  %v1522 = vpack.c.b16 %v1086, %v1085
  %v1523 = vpack.c.b16 %v1088, %v1087
  %v1524 = vpack.c.b16 %v1090, %v1089
  %v1525 = vpack.c.b16 %v1092, %v1091
  %v1526 = vpack.c.b16 %v1094, %v1093
  %v1527 = vpack.c.b16 %v1096, %v1095
  %v1528 = vpack.c.b16 %v1098, %v1097
  %v1529 = vpack.c.b16 %v1100, %v1099
  %v1530 = vpack.c.b16 %v1102, %v1101
  %v1531 = vpack.c.b16 %v1104, %v1103
  %v1532 = vpack.c.b16 %v1106, %v1105
  %v1533 = vpack.c.b16 %v1108, %v1107
  %v1534 = vpack.c.b16 %v1110, %v1109
  %v1535 = vpack.c.b16 %v1112, %v1111
  %v1536 = vpack.c.b16 %v1114, %v1113
  %v1537 = vpack.c.b16 %v1116, %v1115
  %v1538 = vpack.c.b16 %v1118, %v1117
  %v1539 = vpack.c.b16 %v1120, %v1119
  %v1540 = vpack.c.b16 %v1122, %v1121
  %v1541 = vpack.c.b16 %v1124, %v1123
  %v1542 = vpack.c.b16 %v1126, %v1125
  %v1543 = vpack.c.b16 %v1128, %v1127
  %v1544 = vpack.c.b16 %v1130, %v1129
  %v1545 = vpack.c.b16 %v1132, %v1131
  %v1546 = vpack.c.b16 %v1134, %v1133
  %v1547 = vpack.c.b16 %v1136, %v1135
  %v1548 = vpack.c.b16 %v1138, %v1137
  %v1549 = vpack.c.b16 %v1140, %v1139
  %v1550 = vpack.c.b16 %v1142, %v1141
  %v1551 = vpack.c.b16 %v1144, %v1143
  %v1552 = vpack.c.b16 %v1146, %v1145
  %v1553 = vpack.c.b16 %v1148, %v1147
  %v1554 = vpack.c.b16 %v1150, %v1149
  %v1555 = vpack.c.b16 %v1152, %v1151
  %v1556 = vpack.c.b16 %v1154, %v1153
  %v1557 = vpack.c.b16 %v1156, %v1155
  %v1558 = vpack.c.b16 %v1158, %v1157
  %v1559 = vpack.c.b16 %v1160, %v1159
  %v1560 = vpack.c.b16 %v1162, %v1161
  %v1561 = vpack.c.b16 %v1164, %v1163
  %v1562 = vpack.c.b16 %v1166, %v1165
  %v1563 = vpack.c.b16 %v1168, %v1167
  %v1564 = vpack.c.b16 %v1170, %v1169
  %v1565 = vpack.c.b16 %v1172, %v1171
  %v1566 = vpack.c.b16 %v1174, %v1173
  %v1567 = vpack.c.b16 %v1176, %v1175
  %v1568 = vpack.c.b16 %v1178, %v1177
  %v1569 = vpack.c.b16 %v1180, %v1179
  %v1570 = vpack.c.b16 %v1182, %v1181
  %v1571 = vpack.c.b16 %v1184, %v1183
  %v1572 = vpack.c.b16 %v1186, %v1185
  %v1573 = vpack.c.b16 %v1188, %v1187
  %v1574 = vpack.c.b16 %v1190, %v1189
  %v1575 = vpack.c.b16 %v1192, %v1191
  %v1576 = vpack.c.b16 %v1194, %v1193
  %v1577 = vpack.c.b16 %v1196, %v1195
  %v1578 = vpack.c.b16 %v1198, %v1197
  %v1579 = vpack.c.b16 %v1200, %v1199
  %v1580 = vpack.c.b16 %v1202, %v1201
  %v1581 = vpack.c.b16 %v1204, %v1203
  %v1582 = vpack.c.b16 %v1206, %v1205
  %v1583 = vpack.c.b16 %v1208, %v1207
  %v1584 = vpack.c.b16 %v1210, %v1209
  %v1585 = vpack.c.b16 %v1212, %v1211
  %v1586 = vpack.c.b16 %v1214, %v1213
  %v1587 = vpack.c.b16 %v1216, %v1215
  %v1588 = vpack.c.b16 %v1218, %v1217
  %v1589 = vpack.c.b16 %v1220, %v1219
  %v1590 = vpack.c.b16 %v1222, %v1221
  %v1591 = vpack.c.b16 %v1224, %v1223
  %v1592 = vpack.c.b16 %v1226, %v1225
  %v1593 = vpack.c.b16 %v1228, %v1227
  %v1594 = vpack.c.b16 %v1230, %v1229
  %v1595 = vpack.c.b16 %v1232, %v1231
  %v1596 = vpack.c.b16 %v1234, %v1233
  %v1597 = vpack.c.b16 %v1236, %v1235
  %v1598 = vpack.c.b16 %v1238, %v1237
  %v1599 = vpack.c.b16 %v1240, %v1239
  %v1600 = vpack.c.b16 %v1242, %v1241
  %v1601 = vpack.c.b16 %v1244, %v1243
  %v1602 = vpack.c.b16 %v1246, %v1245
  %v1603 = vpack.c.b16 %v1248, %v1247
  %v1604 = vpack.c.b16 %v1250, %v1249
  %v1605 = vpack.c.b16 %v1252, %v1251
  %v1606 = vpack.c.b16 %v1254, %v1253
  %v1607 = vpack.c.b16 %v1256, %v1255
  %v1608 = vpack.c.b16 %v1258, %v1257
  %v1609 = vpack.c.b16 %v1260, %v1259
  %v1610 = vpack.c.b16 %v1262, %v1261
  %v1611 = vpack.c.b16 %v1264, %v1263
  %v1612 = vpack.c.b16 %v1266, %v1265
  %v1613 = vpack.c.b16 %v1268, %v1267
  %v1614 = vpack.c.b16 %v1270, %v1269
  %v1615 = vpack.c.b16 %v1272, %v1271
  %v1616 = vpack.c.b16 %v1274, %v1273
  %v1617 = vpack.c.b16 %v1276, %v1275
  %v1618 = vpack.c.b16 %v1278, %v1277
  %v1619 = vpack.c.b16 %v1280, %v1279
  %v1620 = vpack.c.b16 %v1282, %v1281
  %v1621 = vpack.c.b16 %v1284, %v1283
  %v1622 = vpack.c.b16 %v1286, %v1285
  %v1623 = vpack.c.b16 %v1288, %v1287
  %v1624 = vpack.c.b16 %v1290, %v1289
  %v1625 = vpack.c.b16 %v1292, %v1291
  %v1626 = vpack.c.b16 %v1294, %v1293
  %v1627 = vpack.c.b16 %v1296, %v1295
  %v1628 = vpack.c.b16 %v1298, %v1297
  %v1629 = vpack.c.b16 %v1300, %v1299
  %v1630 = vpack.c.b16 %v1302, %v1301
  %v1631 = vpack.c.b16 %v1304, %v1303
  %v1632 = vpack.c.b16 %v1306, %v1305
  %v1633 = vpack.c.b16 %v1308, %v1307
  %v1634 = vpack.c.b16 %v1310, %v1309
  %v1635 = vpack.c.b16 %v1312, %v1311
  %v1636 = vpack.c.b16 %v1314, %v1313
  %v1637 = vpack.c.b16 %v1316, %v1315
  %v1638 = vpack.c.b16 %v1318, %v1317
  %v1639 = vpack.c.b16 %v1320, %v1319
  %v1640 = vpack.c.b16 %v1322, %v1321
  %v1641 = vpack.c.b16 %v1324, %v1323
  %v1642 = vpack.c.b16 %v1326, %v1325
  %v1643 = vpack.c.b16 %v1328, %v1327
  %v1644 = vpack.c.b16 %v1330, %v1329
  %v1645 = vpack.c.b16 %v1332, %v1331
  %v1646 = vpack.c.b16 %v1334, %v1333
  %v1647 = vpack.c.b16 %v1336, %v1335
  %v1648 = vpack.c.b16 %v1338, %v1337
  %v1649 = vpack.c.b16 %v1340, %v1339
  %v1650 = vpack.c.b16 %v1342, %v1341
  %v1651 = vpack.c.b16 %v1344, %v1343
  %v1652 = vpack.c.b16 %v1346, %v1345
  %v1653 = vpack.c.b16 %v1348, %v1347
  %v1654 = vpack.c.b16 %v1350, %v1349
  %v1655 = vpack.c.b16 %v1352, %v1351
  %v1656 = vpack.c.b16 %v1354, %v1353
  %v1657 = vpack.c.b16 %v1356, %v1355
  %v1658 = vpack.c.b16 %v1358, %v1357
  %v1659 = vpack.c.b16 %v1360, %v1359
  %v1660 = vpack.c.b16 %v1362, %v1361
  %v1661 = vpack.c.b16 %v1364, %v1363
  %v1662 = vpack.c.b16 %v1366, %v1365
  %v1663 = vpack.c.b16 %v1368, %v1367
  %v1664 = vpack.c.b16 %v1370, %v1369
  %v1665 = vpack.c.b16 %v1372, %v1371
  %v1666 = vpack.c.b16 %v1374, %v1373
  %v1667 = vpack.c.b16 %v1376, %v1375
  %v1668 = vpack.c.b16 %v1378, %v1377
  %v1669 = vpack.c.b16 %v1380, %v1379
  %v1670 = vpack.c.b16 %v1382, %v1381
  %v1671 = vpack.c.b16 %v1384, %v1383
  %v1672 = vpack.c.b16 %v1386, %v1385
  %v1673 = vpack.c.b16 %v1388, %v1387
  %v1674 = vpack.c.b16 %v1390, %v1389
  %v1675 = vpack.c.b16 %v1392, %v1391
  %v1676 = vpack.c.b16 %v1394, %v1393
  %v1677 = vpack.c.b16 %v1396, %v1395
  %v1678 = vpack.c.b16 %v1398, %v1397
  %v1679 = vpack.c.b16 %v1400, %v1399
  %v1680 = vpack.c.b16 %v1402, %v1401
  %v1681 = vpack.c.b16 %v1404, %v1403
  %v1682 = vpack.c.b16 %v1406, %v1405
  %v1683 = vpack.c.b16 %v1408, %v1407
  %v1684 = vpack.c.b16 %v1410, %v1409
  %v1685 = vpack.c.b16 %v1412, %v1411
  %v1686 = vpack.c.b16 %v1414, %v1413
  %v1687 = vpack.c.b16 %v1416, %v1415
  %v1688 = vpack.c.b16 %v1418, %v1417
  %v1689 = vpack.c.b16 %v1420, %v1419
  %v1690 = vpack.c.b16 %v1422, %v1421
  %v1691 = vpack.c.b16 %v1424, %v1423
  %v1692 = vpack.c.b16 %v1426, %v1425
  %v1693 = vpack.c.b16 %v1428, %v1427
  %v1694 = vpack.c.b16 %v1430, %v1429
  %v1695 = vpack.c.b16 %v1432, %v1431
  %v1696 = vpack.c.b16 %v1434, %v1433
  %v1697 = vpack.c.b16 %v1436, %v1435
  %v1698 = vpack.c.b16 %v1438, %v1437
  %v1699 = vpack.c.b16 %v1440, %v1439
  %v1700 = vpack.c.b16 %v1442, %v1441
  %v1701 = vpack.c.b16 %v1444, %v1443
  %v1702 = vpack.c.b16 %v1446, %v1445
  %v1703 = vpack.c.b16 %v1448, %v1447
  %v1704 = vpack.c.b16 %v1450, %v1449
  %v1705 = vpack.c.b16 %v1452, %v1451
  %v1706 = vpack.c.b16 %v1454, %v1453
  %v1707 = vpack.c.b16 %v1456, %v1455
  %v1708 = vpack.c.b16 %v1458, %v1457
  %v1709 = vpack.c.b16 %v1460, %v1459
  %v1710 = vpack.c.b16 %v1462, %v1461
  %v1711 = vpack.c.b16 %v1464, %v1463
  %v1712 = vpack.c.b16 %v1466, %v1465
  %v1713 = vpack.c.b16 %v1468, %v1467
  %v1714 = vpack.c.b16 %v1470, %v1469
  %v1715 = vpack.c.b16 %v1472, %v1471
  %v1716 = vpack.c.b16 %v1474, %v1473
  %v1717 = vpack.c.b16 %v1476, %v1475
  %v1718 = vpack.c.b16 %v1478, %v1477
  %v1719 = vpack.c.b16 %v1480, %v1479
  %v1720 = vpack.c.b16 %v1482, %v1481
  %v1721 = vpack.c.b16 %v1484, %v1483
  %v1722 = vpack.c.b16 %v1486, %v1485
  %v1723 = vpack.c.b16 %v1488, %v1487
  %v1724 = vpack.c.b16 %v1490, %v1489
  %v1725 = vpack.c.b16 %v1492, %v1491
  %v1726 = vpack.c.b16 %v1494, %v1493
  %v1727 = vpack.c.b16 %v1496, %v1495
  %v1728 = vpack.c.b16 %v1498, %v1497
  %v1729 = vpack.c.b16 %v1500, %v1499
  %v1730 = vpack.c.b16 %v1502, %v1501
  %v1731 = vpack.c.b16 %v1504, %v1503
  %v1732 = vpack.c.b16 %v1506, %v1505
  %v1733 = vpack.c.b16 %v1508, %v1507
  %v1734 = vpack.c.b16 %v1510, %v1509
  %1959 = vmatpush.bf16.msra.mxu0 %v1518
  %1960 = vmatpush.bf16.msra.mxu0 %v1517
  %1961 = vmatpush.bf16.msra.mxu0 %v1516
  %1962 = vmatpush.bf16.msra.mxu0 %v1515
  %1963 = vmatpush.bf16.msra.mxu0 %v1514
  %1964 = vmatpush.bf16.msra.mxu0 %v1513
  %1965 = vmatpush.bf16.msra.mxu0 %v1512
  %1966 = vmatpush.bf16.msra.mxu0 %v1511
  %1967 = vmatmul.bf16.gmra.mxu0 %v559
  %v1968 = vpop.f32.mrf.mxu0
  %v1969 = vadd.f32 %v515, %v1968
  %v1970 = vpop.f32.mrf.mxu0
  %1971 = vdwg.mxu0
  %1972 = vmatpush.bf16.msra.mxu0 %v1526
  %1973 = vmatpush.bf16.msra.mxu0 %v1525
  %1974 = vmatpush.bf16.msra.mxu0 %v1524
  %1975 = vmatpush.bf16.msra.mxu0 %v1523
  %1976 = vmatpush.bf16.msra.mxu0 %v1522
  %1977 = vmatpush.bf16.msra.mxu0 %v1521
  %1978 = vmatpush.bf16.msra.mxu0 %v1520
  %1979 = vmatpush.bf16.msra.mxu0 %v1519
  %1980 = vmatmul.bf16.gmra.mxu0 %v560
  %v1981 = vpop.f32.mrf.mxu0
  %v1982 = vadd.f32 %v1969, %v1981
  %v1983 = vpop.f32.mrf.mxu0
  %1984 = vdwg.mxu0
  %1985 = vmatpush.bf16.msra.mxu0 %v1534
  %1986 = vmatpush.bf16.msra.mxu0 %v1533
  %1987 = vmatpush.bf16.msra.mxu0 %v1532
  %1988 = vmatpush.bf16.msra.mxu0 %v1531
  %1989 = vmatpush.bf16.msra.mxu0 %v1530
  %1990 = vmatpush.bf16.msra.mxu0 %v1529
  %1991 = vmatpush.bf16.msra.mxu0 %v1528
  %1992 = vmatpush.bf16.msra.mxu0 %v1527
  %1993 = vmatmul.bf16.gmra.mxu0 %v561
  %v1994 = vpop.f32.mrf.mxu0
  %v1995 = vadd.f32 %v1982, %v1994
  %v1996 = vpop.f32.mrf.mxu0
  %1997 = vdwg.mxu0
  %1998 = vmatpush.bf16.msra.mxu0 %v1542
  %1999 = vmatpush.bf16.msra.mxu0 %v1541
  %2000 = vmatpush.bf16.msra.mxu0 %v1540
  %2001 = vmatpush.bf16.msra.mxu0 %v1539
  %2002 = vmatpush.bf16.msra.mxu0 %v1538
  %2003 = vmatpush.bf16.msra.mxu0 %v1537
  %2004 = vmatpush.bf16.msra.mxu0 %v1536
  %2005 = vmatpush.bf16.msra.mxu0 %v1535
  %2006 = vmatmul.bf16.gmra.mxu0 %v562
  %v2007 = vpop.f32.mrf.mxu0
  %v2008 = vadd.f32 %v1995, %v2007
  %v2009 = vpop.f32.mrf.mxu0
  %2010 = vdwg.mxu0
  %2011 = vmatpush.bf16.msra.mxu0 %v1550
  %2012 = vmatpush.bf16.msra.mxu0 %v1549
  %2013 = vmatpush.bf16.msra.mxu0 %v1548
  %2014 = vmatpush.bf16.msra.mxu0 %v1547
  %2015 = vmatpush.bf16.msra.mxu0 %v1546
  %2016 = vmatpush.bf16.msra.mxu0 %v1545
  %2017 = vmatpush.bf16.msra.mxu0 %v1544
  %2018 = vmatpush.bf16.msra.mxu0 %v1543
  %2019 = vmatmul.bf16.gmra.mxu0 %v563
  %v2020 = vpop.f32.mrf.mxu0
  %v2021 = vadd.f32 %v2008, %v2020
  %v2022 = vpop.f32.mrf.mxu0
  %2023 = vdwg.mxu0
  %2024 = vmatpush.bf16.msra.mxu0 %v1558
  %2025 = vmatpush.bf16.msra.mxu0 %v1557
  %2026 = vmatpush.bf16.msra.mxu0 %v1556
  %2027 = vmatpush.bf16.msra.mxu0 %v1555
  %2028 = vmatpush.bf16.msra.mxu0 %v1554
  %2029 = vmatpush.bf16.msra.mxu0 %v1553
  %2030 = vmatpush.bf16.msra.mxu0 %v1552
  %2031 = vmatpush.bf16.msra.mxu0 %v1551
  %2032 = vmatmul.bf16.gmra.mxu0 %v564
  %v2033 = vpop.f32.mrf.mxu0
  %v2034 = vadd.f32 %v2021, %v2033
  %v2035 = vpop.f32.mrf.mxu0
  %2036 = vdwg.mxu0
  %2037 = vmatpush.bf16.msra.mxu0 %v1566
  %2038 = vmatpush.bf16.msra.mxu0 %v1565
  %2039 = vmatpush.bf16.msra.mxu0 %v1564
  %2040 = vmatpush.bf16.msra.mxu0 %v1563
  %2041 = vmatpush.bf16.msra.mxu0 %v1562
  %2042 = vmatpush.bf16.msra.mxu0 %v1561
  %2043 = vmatpush.bf16.msra.mxu0 %v1560
  %2044 = vmatpush.bf16.msra.mxu0 %v1559
  %2045 = vmatmul.bf16.gmra.mxu0 %v565
  %v2046 = vpop.f32.mrf.mxu0
  %v2047 = vadd.f32 %v2034, %v2046
  %v2048 = vpop.f32.mrf.mxu0
  %2049 = vdwg.mxu0
  %2050 = vmatpush.bf16.msra.mxu0 %v1574
  %2051 = vmatpush.bf16.msra.mxu0 %v1573
  %2052 = vmatpush.bf16.msra.mxu0 %v1572
  %2053 = vmatpush.bf16.msra.mxu0 %v1571
  %2054 = vmatpush.bf16.msra.mxu0 %v1570
  %2055 = vmatpush.bf16.msra.mxu0 %v1569
  %2056 = vmatpush.bf16.msra.mxu0 %v1568
  %2057 = vmatpush.bf16.msra.mxu0 %v1567
  %2058 = vmatmul.bf16.gmra.mxu0 %v566
  %v2059 = vpop.f32.mrf.mxu0
  %v2060 = vadd.f32 %v2047, %v2059
  %v2061 = vpop.f32.mrf.mxu0
  %2062 = vdwg.mxu0
  %2063 = vmatpush.bf16.msra.mxu0 %v1582
  %2064 = vmatpush.bf16.msra.mxu0 %v1581
  %2065 = vmatpush.bf16.msra.mxu0 %v1580
  %2066 = vmatpush.bf16.msra.mxu0 %v1579
  %2067 = vmatpush.bf16.msra.mxu0 %v1578
  %2068 = vmatpush.bf16.msra.mxu0 %v1577
  %2069 = vmatpush.bf16.msra.mxu0 %v1576
  %2070 = vmatpush.bf16.msra.mxu0 %v1575
  %2071 = vmatmul.bf16.gmra.mxu0 %v567
  %v2072 = vpop.f32.mrf.mxu0
  %v2073 = vadd.f32 %v2060, %v2072
  %v2074 = vpop.f32.mrf.mxu0
  %2075 = vdwg.mxu0
  %2076 = vmatpush.bf16.msra.mxu0 %v1590
  %2077 = vmatpush.bf16.msra.mxu0 %v1589
  %2078 = vmatpush.bf16.msra.mxu0 %v1588
  %2079 = vmatpush.bf16.msra.mxu0 %v1587
  %2080 = vmatpush.bf16.msra.mxu0 %v1586
  %2081 = vmatpush.bf16.msra.mxu0 %v1585
  %2082 = vmatpush.bf16.msra.mxu0 %v1584
  %2083 = vmatpush.bf16.msra.mxu0 %v1583
  %2084 = vmatmul.bf16.gmra.mxu0 %v568
  %v2085 = vpop.f32.mrf.mxu0
  %v2086 = vadd.f32 %v2073, %v2085
  %v2087 = vpop.f32.mrf.mxu0
  %2088 = vdwg.mxu0
  %2089 = vmatpush.bf16.msra.mxu0 %v1598
  %2090 = vmatpush.bf16.msra.mxu0 %v1597
  %2091 = vmatpush.bf16.msra.mxu0 %v1596
  %2092 = vmatpush.bf16.msra.mxu0 %v1595
  %2093 = vmatpush.bf16.msra.mxu0 %v1594
  %2094 = vmatpush.bf16.msra.mxu0 %v1593
  %2095 = vmatpush.bf16.msra.mxu0 %v1592
  %2096 = vmatpush.bf16.msra.mxu0 %v1591
  %2097 = vmatmul.bf16.gmra.mxu0 %v569
  %v2098 = vpop.f32.mrf.mxu0
  %v2099 = vadd.f32 %v2086, %v2098
  %v2100 = vpop.f32.mrf.mxu0
  %2101 = vdwg.mxu0
  %2102 = vmatpush.bf16.msra.mxu0 %v1606
  %2103 = vmatpush.bf16.msra.mxu0 %v1605
  %2104 = vmatpush.bf16.msra.mxu0 %v1604
  %2105 = vmatpush.bf16.msra.mxu0 %v1603
  %2106 = vmatpush.bf16.msra.mxu0 %v1602
  %2107 = vmatpush.bf16.msra.mxu0 %v1601
  %2108 = vmatpush.bf16.msra.mxu0 %v1600
  %2109 = vmatpush.bf16.msra.mxu0 %v1599
  %2110 = vmatmul.bf16.gmra.mxu0 %v570
  %v2111 = vpop.f32.mrf.mxu0
  %v2112 = vadd.f32 %v2099, %v2111
  %v2113 = vpop.f32.mrf.mxu0
  %2114 = vdwg.mxu0
  %2115 = vmatpush.bf16.msra.mxu0 %v1614
  %2116 = vmatpush.bf16.msra.mxu0 %v1613
  %2117 = vmatpush.bf16.msra.mxu0 %v1612
  %2118 = vmatpush.bf16.msra.mxu0 %v1611
  %2119 = vmatpush.bf16.msra.mxu0 %v1610
  %2120 = vmatpush.bf16.msra.mxu0 %v1609
  %2121 = vmatpush.bf16.msra.mxu0 %v1608
  %2122 = vmatpush.bf16.msra.mxu0 %v1607
  %2123 = vmatmul.bf16.gmra.mxu0 %v571
  %v2124 = vpop.f32.mrf.mxu0
  %v2125 = vadd.f32 %v2112, %v2124
  %v2126 = vpop.f32.mrf.mxu0
  %2127 = vdwg.mxu0
  %2128 = vmatpush.bf16.msra.mxu0 %v1622
  %2129 = vmatpush.bf16.msra.mxu0 %v1621
  %2130 = vmatpush.bf16.msra.mxu0 %v1620
  %2131 = vmatpush.bf16.msra.mxu0 %v1619
  %2132 = vmatpush.bf16.msra.mxu0 %v1618
  %2133 = vmatpush.bf16.msra.mxu0 %v1617
  %2134 = vmatpush.bf16.msra.mxu0 %v1616
  %2135 = vmatpush.bf16.msra.mxu0 %v1615
  %2136 = vmatmul.bf16.gmra.mxu0 %v572
  %v2137 = vpop.f32.mrf.mxu0
  %v2138 = vadd.f32 %v2125, %v2137
  %v2139 = vpop.f32.mrf.mxu0
  %2140 = vdwg.mxu0
  %2141 = vmatpush.bf16.msra.mxu0 %v1630
  %2142 = vmatpush.bf16.msra.mxu0 %v1629
  %2143 = vmatpush.bf16.msra.mxu0 %v1628
  %2144 = vmatpush.bf16.msra.mxu0 %v1627
  %2145 = vmatpush.bf16.msra.mxu0 %v1626
  %2146 = vmatpush.bf16.msra.mxu0 %v1625
  %2147 = vmatpush.bf16.msra.mxu0 %v1624
  %2148 = vmatpush.bf16.msra.mxu0 %v1623
  %2149 = vmatmul.bf16.gmra.mxu0 %v573
  %v2150 = vpop.f32.mrf.mxu0
  %v2151 = vadd.f32 %v2138, %v2150
  %v2152 = vpop.f32.mrf.mxu0
  %2153 = vdwg.mxu0
  %2154 = vmatpush.bf16.msra.mxu0 %v1638
  %2155 = vmatpush.bf16.msra.mxu0 %v1637
  %2156 = vmatpush.bf16.msra.mxu0 %v1636
  %2157 = vmatpush.bf16.msra.mxu0 %v1635
  %2158 = vmatpush.bf16.msra.mxu0 %v1634
  %2159 = vmatpush.bf16.msra.mxu0 %v1633
  %2160 = vmatpush.bf16.msra.mxu0 %v1632
  %2161 = vmatpush.bf16.msra.mxu0 %v1631
  %2162 = vmatmul.bf16.gmra.mxu0 %v574
  %v2163 = vpop.f32.mrf.mxu0
  %v2164 = vadd.f32 %v2151, %v2163
  %v2165 = vpop.f32.mrf.mxu0
  %2166 = vdwg.mxu0
  %2167 = vmatpush.bf16.msra.mxu0 %v1646
  %2168 = vmatpush.bf16.msra.mxu0 %v1645
  %2169 = vmatpush.bf16.msra.mxu0 %v1644
  %2170 = vmatpush.bf16.msra.mxu0 %v1643
  %2171 = vmatpush.bf16.msra.mxu0 %v1642
  %2172 = vmatpush.bf16.msra.mxu0 %v1641
  %2173 = vmatpush.bf16.msra.mxu0 %v1640
  %2174 = vmatpush.bf16.msra.mxu0 %v1639
  %2175 = vmatmul.bf16.gmra.mxu0 %v575
  %v2176 = vpop.f32.mrf.mxu0
  %v2177 = vadd.f32 %v2164, %v2176
  %v2178 = vpop.f32.mrf.mxu0
  %2179 = vdwg.mxu0
  %2180 = vmatpush.bf16.msra.mxu0 %v1654
  %2181 = vmatpush.bf16.msra.mxu0 %v1653
  %2182 = vmatpush.bf16.msra.mxu0 %v1652
  %2183 = vmatpush.bf16.msra.mxu0 %v1651
  %2184 = vmatpush.bf16.msra.mxu0 %v1650
  %2185 = vmatpush.bf16.msra.mxu0 %v1649
  %2186 = vmatpush.bf16.msra.mxu0 %v1648
  %2187 = vmatpush.bf16.msra.mxu0 %v1647
  %2188 = vmatmul.bf16.gmra.mxu0 %v576
  %v2189 = vpop.f32.mrf.mxu0
  %v2190 = vadd.f32 %v2177, %v2189
  %v2191 = vpop.f32.mrf.mxu0
  %2192 = vdwg.mxu0
  %2193 = vmatpush.bf16.msra.mxu0 %v1662
  %2194 = vmatpush.bf16.msra.mxu0 %v1661
  %2195 = vmatpush.bf16.msra.mxu0 %v1660
  %2196 = vmatpush.bf16.msra.mxu0 %v1659
  %2197 = vmatpush.bf16.msra.mxu0 %v1658
  %2198 = vmatpush.bf16.msra.mxu0 %v1657
  %2199 = vmatpush.bf16.msra.mxu0 %v1656
  %2200 = vmatpush.bf16.msra.mxu0 %v1655
  %2201 = vmatmul.bf16.gmra.mxu0 %v577
  %v2202 = vpop.f32.mrf.mxu0
  %v2203 = vadd.f32 %v2190, %v2202
  %v2204 = vpop.f32.mrf.mxu0
  %2205 = vdwg.mxu0
  %2206 = vmatpush.bf16.msra.mxu0 %v1670
  %2207 = vmatpush.bf16.msra.mxu0 %v1669
  %2208 = vmatpush.bf16.msra.mxu0 %v1668
  %2209 = vmatpush.bf16.msra.mxu0 %v1667
  %2210 = vmatpush.bf16.msra.mxu0 %v1666
  %2211 = vmatpush.bf16.msra.mxu0 %v1665
  %2212 = vmatpush.bf16.msra.mxu0 %v1664
  %2213 = vmatpush.bf16.msra.mxu0 %v1663
  %2214 = vmatmul.bf16.gmra.mxu0 %v578
  %v2215 = vpop.f32.mrf.mxu0
  %v2216 = vadd.f32 %v2203, %v2215
  %v2217 = vpop.f32.mrf.mxu0
  %2218 = vdwg.mxu0
  %2219 = vmatpush.bf16.msra.mxu0 %v1678
  %2220 = vmatpush.bf16.msra.mxu0 %v1677
  %2221 = vmatpush.bf16.msra.mxu0 %v1676
  %2222 = vmatpush.bf16.msra.mxu0 %v1675
  %2223 = vmatpush.bf16.msra.mxu0 %v1674
  %2224 = vmatpush.bf16.msra.mxu0 %v1673
  %2225 = vmatpush.bf16.msra.mxu0 %v1672
  %2226 = vmatpush.bf16.msra.mxu0 %v1671
  %2227 = vmatmul.bf16.gmra.mxu0 %v579
  %v2228 = vpop.f32.mrf.mxu0
  %v2229 = vadd.f32 %v2216, %v2228
  %v2230 = vpop.f32.mrf.mxu0
  %2231 = vdwg.mxu0
  %2232 = vmatpush.bf16.msra.mxu0 %v1686
  %2233 = vmatpush.bf16.msra.mxu0 %v1685
  %2234 = vmatpush.bf16.msra.mxu0 %v1684
  %2235 = vmatpush.bf16.msra.mxu0 %v1683
  %2236 = vmatpush.bf16.msra.mxu0 %v1682
  %2237 = vmatpush.bf16.msra.mxu0 %v1681
  %2238 = vmatpush.bf16.msra.mxu0 %v1680
  %2239 = vmatpush.bf16.msra.mxu0 %v1679
  %2240 = vmatmul.bf16.gmra.mxu0 %v580
  %v2241 = vpop.f32.mrf.mxu0
  %v2242 = vadd.f32 %v2229, %v2241
  %v2243 = vpop.f32.mrf.mxu0
  %2244 = vdwg.mxu0
  %2245 = vmatpush.bf16.msra.mxu0 %v1694
  %2246 = vmatpush.bf16.msra.mxu0 %v1693
  %2247 = vmatpush.bf16.msra.mxu0 %v1692
  %2248 = vmatpush.bf16.msra.mxu0 %v1691
  %2249 = vmatpush.bf16.msra.mxu0 %v1690
  %2250 = vmatpush.bf16.msra.mxu0 %v1689
  %2251 = vmatpush.bf16.msra.mxu0 %v1688
  %2252 = vmatpush.bf16.msra.mxu0 %v1687
  %2253 = vmatmul.bf16.gmra.mxu0 %v581
  %v2254 = vpop.f32.mrf.mxu0
  %v2255 = vadd.f32 %v2242, %v2254
  %v2256 = vpop.f32.mrf.mxu0
  %2257 = vdwg.mxu0
  %2258 = vmatpush.bf16.msra.mxu0 %v1702
  %2259 = vmatpush.bf16.msra.mxu0 %v1701
  %2260 = vmatpush.bf16.msra.mxu0 %v1700
  %2261 = vmatpush.bf16.msra.mxu0 %v1699
  %2262 = vmatpush.bf16.msra.mxu0 %v1698
  %2263 = vmatpush.bf16.msra.mxu0 %v1697
  %2264 = vmatpush.bf16.msra.mxu0 %v1696
  %2265 = vmatpush.bf16.msra.mxu0 %v1695
  %2266 = vmatmul.bf16.gmra.mxu0 %v582
  %v2267 = vpop.f32.mrf.mxu0
  %v2268 = vadd.f32 %v2255, %v2267
  %v2269 = vpop.f32.mrf.mxu0
  %2270 = vdwg.mxu0
  %2271 = vmatpush.bf16.msra.mxu0 %v1710
  %2272 = vmatpush.bf16.msra.mxu0 %v1709
  %2273 = vmatpush.bf16.msra.mxu0 %v1708
  %2274 = vmatpush.bf16.msra.mxu0 %v1707
  %2275 = vmatpush.bf16.msra.mxu0 %v1706
  %2276 = vmatpush.bf16.msra.mxu0 %v1705
  %2277 = vmatpush.bf16.msra.mxu0 %v1704
  %2278 = vmatpush.bf16.msra.mxu0 %v1703
  %2279 = vmatmul.bf16.gmra.mxu0 %v583
  %v2280 = vpop.f32.mrf.mxu0
  %v2281 = vadd.f32 %v2268, %v2280
  %v2282 = vpop.f32.mrf.mxu0
  %2283 = vdwg.mxu0
  %2284 = vmatpush.bf16.msra.mxu0 %v1718
  %2285 = vmatpush.bf16.msra.mxu0 %v1717
  %2286 = vmatpush.bf16.msra.mxu0 %v1716
  %2287 = vmatpush.bf16.msra.mxu0 %v1715
  %2288 = vmatpush.bf16.msra.mxu0 %v1714
  %2289 = vmatpush.bf16.msra.mxu0 %v1713
  %2290 = vmatpush.bf16.msra.mxu0 %v1712
  %2291 = vmatpush.bf16.msra.mxu0 %v1711
  %2292 = vmatmul.bf16.gmra.mxu0 %v584
  %v2293 = vpop.f32.mrf.mxu0
  %v2294 = vadd.f32 %v2281, %v2293
  %v2295 = vpop.f32.mrf.mxu0
  %2296 = vdwg.mxu0
  %2297 = vmatpush.bf16.msra.mxu0 %v1726
  %2298 = vmatpush.bf16.msra.mxu0 %v1725
  %2299 = vmatpush.bf16.msra.mxu0 %v1724
  %2300 = vmatpush.bf16.msra.mxu0 %v1723
  %2301 = vmatpush.bf16.msra.mxu0 %v1722
  %2302 = vmatpush.bf16.msra.mxu0 %v1721
  %2303 = vmatpush.bf16.msra.mxu0 %v1720
  %2304 = vmatpush.bf16.msra.mxu0 %v1719
  %2305 = vmatmul.bf16.gmra.mxu0 %v585
  %v2306 = vpop.f32.mrf.mxu0
  %v2307 = vadd.f32 %v2294, %v2306
  %v2308 = vpop.f32.mrf.mxu0
  %2309 = vdwg.mxu0
  %2310 = vmatpush.bf16.msra.mxu0 %v1734
  %2311 = vmatpush.bf16.msra.mxu0 %v1733
  %2312 = vmatpush.bf16.msra.mxu0 %v1732
  %2313 = vmatpush.bf16.msra.mxu0 %v1731
  %2314 = vmatpush.bf16.msra.mxu0 %v1730
  %2315 = vmatpush.bf16.msra.mxu0 %v1729
  %2316 = vmatpush.bf16.msra.mxu0 %v1728
  %2317 = vmatpush.bf16.msra.mxu0 %v1727
  %2318 = vmatmul.bf16.gmra.mxu0 %v586
  %v2319 = vpop.f32.mrf.mxu0
  %v2320 = vadd.f32 %v2307, %v2319
  %v2321 = vpop.f32.mrf.mxu0
  %2322 = vdwg.mxu0
  %v2323 = vmax.f32 %v2320, 0.0
  %v2324 = vpack.c.bf16 %v2323, %v2323
  %v2325 = vld [vmem:[%s4] sm:$0xf]
  %v2326 = vld [vmem:[%s4 + $0x4] sm:$0xf]
  %v2327 = vld [vmem:[%s4 + $0x8] sm:$0xf]
  %v2328 = vld [vmem:[%s4 + $0xc] sm:$0xf]
  %v2329 = vld [vmem:[%s4 + $0x10] sm:$0xf]
  %v2330 = vld [vmem:[%s4 + $0x14] sm:$0xf]
  %v2331 = vld [vmem:[%s4 + $0x18] sm:$0xf]
  %v2332 = vld [vmem:[%s4 + $0x1c] sm:$0xf]
  %v2333 = vld [vmem:[%s4 + $0x20] sm:$0xf]
  %v2334 = vld [vmem:[%s4 + $0x24] sm:$0xf]
  %v2335 = vld [vmem:[%s4 + $0x28] sm:$0xf]
  %v2336 = vld [vmem:[%s4 + $0x2c] sm:$0xf]
  %v2337 = vld [vmem:[%s4 + $0x30] sm:$0xf]
  %v2338 = vld [vmem:[%s4 + $0x34] sm:$0xf]
  %v2339 = vld [vmem:[%s4 + $0x38] sm:$0xf]
  %v2340 = vld [vmem:[%s4 + $0x3c] sm:$0xf]
  %v2341 = vld [vmem:[%s5] sm:$0x1]
  %v2343 = vperm.slane %v2341, 0
  %v2361 = vunpack.c.l.b16 %v2325
  %v2362 = vunpack.c.l.b16 %v2326
  %v2363 = vunpack.c.l.b16 %v2327
  %v2364 = vunpack.c.l.b16 %v2328
  %v2365 = vunpack.c.l.b16 %v2329
  %v2366 = vunpack.c.l.b16 %v2330
  %v2367 = vunpack.c.l.b16 %v2331
  %v2368 = vunpack.c.l.b16 %v2332
  %v2369 = vunpack.c.l.b16 %v2333
  %v2370 = vunpack.c.l.b16 %v2334
  %v2371 = vunpack.c.l.b16 %v2335
  %v2372 = vunpack.c.l.b16 %v2336
  %v2373 = vunpack.c.l.b16 %v2337
  %v2374 = vunpack.c.l.b16 %v2338
  %v2375 = vunpack.c.l.b16 %v2339
  %v2376 = vunpack.c.l.b16 %v2340
  %v2377 = vpack.c.b16 %v2362, %v2361
  %v2378 = vpack.c.b16 %v2364, %v2363
  %v2379 = vpack.c.b16 %v2366, %v2365
  %v2380 = vpack.c.b16 %v2368, %v2367
  %v2381 = vpack.c.b16 %v2370, %v2369
  %v2382 = vpack.c.b16 %v2372, %v2371
  %v2383 = vpack.c.b16 %v2374, %v2373
  %v2384 = vpack.c.b16 %v2376, %v2375
  %2393 = vmatpush.bf16.msra.mxu0 %v2384
  %2394 = vmatpush.bf16.msra.mxu0 %v2383
  %2395 = vmatpush.bf16.msra.mxu0 %v2382
  %2396 = vmatpush.bf16.msra.mxu0 %v2381
  %2397 = vmatpush.bf16.msra.mxu0 %v2380
  %2398 = vmatpush.bf16.msra.mxu0 %v2379
  %2399 = vmatpush.bf16.msra.mxu0 %v2378
  %2400 = vmatpush.bf16.msra.mxu0 %v2377
  %2401 = vmatmul.bf16.gmra.mxu0 %v2324
  %v2402 = vpop.f32.mrf.mxu0
  %v2403 = vadd.f32 %v2343, %v2402
  %v2404 = vpop.f32.mrf.mxu0
  %2405 = vdwg.mxu0
  %v2406 = vld [vmem:[%s6] sm:$0xf]
  %v2407 = vld [vmem:[%s6 + $0x4] sm:$0xf]
  %v2408 = vld [vmem:[%s6 + $0x8] sm:$0xf]
  %v2409 = vld [vmem:[%s6 + $0xc] sm:$0xf]
  %v2410 = vld [vmem:[%s6 + $0x10] sm:$0xf]
  %v2411 = vld [vmem:[%s6 + $0x14] sm:$0xf]
  %v2412 = vld [vmem:[%s6 + $0x18] sm:$0xf]
  %v2413 = vld [vmem:[%s6 + $0x1c] sm:$0xf]
  %v2414 = vld [vmem:[%s6 + $0x20] sm:$0xf]
  %v2415 = vld [vmem:[%s6 + $0x24] sm:$0xf]
  %v2416 = vld [vmem:[%s6 + $0x28] sm:$0xf]
  %v2417 = vld [vmem:[%s6 + $0x2c] sm:$0xf]
  %v2418 = vld [vmem:[%s6 + $0x30] sm:$0xf]
  %v2419 = vld [vmem:[%s6 + $0x34] sm:$0xf]
  %v2420 = vld [vmem:[%s6 + $0x38] sm:$0xf]
  %v2421 = vld [vmem:[%s6 + $0x3c] sm:$0xf]
  %v2422 = vld [vmem:[%s7] sm:$0x1]
  %v2424 = vperm.slane %v2422, 0
  %v2442 = vunpack.c.l.b16 %v2406
  %v2443 = vunpack.c.l.b16 %v2407
  %v2444 = vunpack.c.l.b16 %v2408
  %v2445 = vunpack.c.l.b16 %v2409
  %v2446 = vunpack.c.l.b16 %v2410
  %v2447 = vunpack.c.l.b16 %v2411
  %v2448 = vunpack.c.l.b16 %v2412
  %v2449 = vunpack.c.l.b16 %v2413
  %v2450 = vunpack.c.l.b16 %v2414
  %v2451 = vunpack.c.l.b16 %v2415
  %v2452 = vunpack.c.l.b16 %v2416
  %v2453 = vunpack.c.l.b16 %v2417
  %v2454 = vunpack.c.l.b16 %v2418
  %v2455 = vunpack.c.l.b16 %v2419
  %v2456 = vunpack.c.l.b16 %v2420
  %v2457 = vunpack.c.l.b16 %v2421
  %v2458 = vpack.c.b16 %v2443, %v2442
  %v2459 = vpack.c.b16 %v2445, %v2444
  %v2460 = vpack.c.b16 %v2447, %v2446
  %v2461 = vpack.c.b16 %v2449, %v2448
  %v2462 = vpack.c.b16 %v2451, %v2450
  %v2463 = vpack.c.b16 %v2453, %v2452
  %v2464 = vpack.c.b16 %v2455, %v2454
  %v2465 = vpack.c.b16 %v2457, %v2456
  %2474 = vmatpush.bf16.msra.mxu0 %v2465
  %2475 = vmatpush.bf16.msra.mxu0 %v2464
  %2476 = vmatpush.bf16.msra.mxu0 %v2463
  %2477 = vmatpush.bf16.msra.mxu0 %v2462
  %2478 = vmatpush.bf16.msra.mxu0 %v2461
  %2479 = vmatpush.bf16.msra.mxu0 %v2460
  %2480 = vmatpush.bf16.msra.mxu0 %v2459
  %2481 = vmatpush.bf16.msra.mxu0 %v2458
  %2482 = vmatmul.bf16.gmra.mxu0 %v2324
  %v2483 = vpop.f32.mrf.mxu0
  %v2484 = vadd.f32 %v2424, %v2483
  %v2485 = vpop.f32.mrf.mxu0
  %2486 = vdwg.mxu0
  %v2487 = vld [vmem:[%s1] sm:$0xff]
  %v2488 = vmul.f32 %v2484, 0.5
  %v2489 = vmul.f32 %v2488, 1.442695
  %v2490 = vpow.pop %v2489
  %v2491 = vmul.f32 %v2487, %v2490
  %v2492 = vadd.f32 %v2403, %v2491
  %v2493 = vpack.c.bf16 %v2492, %v2492
  %v2494 = vld [vmem:[%s8] sm:$0xff]
  %v2495 = vld [vmem:[%s8 + $0x8] sm:$0x11]
  %v2496 = vld [vmem:[%s9] sm:$0x3]
  %v2498 = vperm.slane %v2496, 0
  %v2499 = vperm.slane %v2496, 1
  %v2504 = vunpack.c.l.b16 %v2494
  %v2505 = vunpack.c.h.b16 %v2494
  %v2506 = vunpack.c.l.b16 %v2495
  %v2507 = vunpack.c.h.b16 %v2495
  %v2508 = vpack.c.b16 %v2506, %v2504
  %v2509 = vpack.c.b16 %v2507, %v2505
  %vm2510 = vcmask 80896
  %v2512 = vsel %vm2510, %v2493, 0
  %vm2514 = vcmask 1044480
  %v2516 = vsel %vm2514, %v2508, 0
  %v2519 = vsel %vm2514, %v2509, 0
  %2521 = vmatpush.bf16.msra.mxu0 0
  %2522 = vmatpush.bf16.msra.mxu0 0
  %2523 = vmatpush.bf16.msra.mxu0 0
  %2524 = vmatpush.bf16.msra.mxu0 0
  %2525 = vmatpush.bf16.msra.mxu0 0
  %2526 = vmatpush.bf16.msra.mxu0 0
  %2527 = vmatpush.bf16.msra.mxu0 0
  %2528 = vmatpush.bf16.msra.mxu0 %v2516
  %2529 = vmatmul.bf16.gmra.mxu0 %v2512
  %v2530 = vpop.f32.mrf.mxu0
  %v2531 = vadd.f32 %v2498, %v2530
  %v2532 = vpop.f32.mrf.mxu0
  %2533 = vdwg.mxu0
  %2534 = vmatpush.bf16.msra.mxu0 0
  %2535 = vmatpush.bf16.msra.mxu0 0
  %2536 = vmatpush.bf16.msra.mxu0 0
  %2537 = vmatpush.bf16.msra.mxu0 0
  %2538 = vmatpush.bf16.msra.mxu0 0
  %2539 = vmatpush.bf16.msra.mxu0 0
  %2540 = vmatpush.bf16.msra.mxu0 0
  %2541 = vmatpush.bf16.msra.mxu0 %v2519
  %2542 = vmatmul.bf16.gmra.mxu0 %v2512
  %v2543 = vpop.f32.mrf.mxu0
  %v2544 = vadd.f32 %v2499, %v2543
  %v2545 = vpop.f32.mrf.mxu0
  %2546 = vdwg.mxu0
  %v2547 = vmax.f32 %v2531, 0.0
  %v2548 = vmax.f32 %v2544, 0.0
  %v2549 = vpack.c.bf16 %v2547, %v2547
  %v2550 = vpack.c.bf16 %v2548, %v2548
  %v2551 = vld [vmem:[%s10] sm:$0xff]
  %v2552 = vld [vmem:[%s10 + $0x8] sm:$0xff]
  %v2553 = vld [vmem:[%s10 + $0x10] sm:$0xff]
  %v2554 = vld [vmem:[%s10 + $0x18] sm:$0xff]
  %v2555 = vld [vmem:[%s10 + $0x20] sm:$0xff]
  %v2556 = vld [vmem:[%s10 + $0x28] sm:$0xff]
  %v2557 = vld [vmem:[%s10 + $0x30] sm:$0xff]
  %v2558 = vld [vmem:[%s10 + $0x38] sm:$0xff]
  %v2559 = vld [vmem:[%s10 + $0x40] sm:$0xff]
  %v2560 = vld [vmem:[%s10 + $0x48] sm:$0xff]
  %v2561 = vld [vmem:[%s10 + $0x50] sm:$0xff]
  %v2562 = vld [vmem:[%s10 + $0x58] sm:$0xff]
  %v2563 = vld [vmem:[%s10 + $0x60] sm:$0xff]
  %v2564 = vld [vmem:[%s10 + $0x68] sm:$0xff]
  %v2565 = vld [vmem:[%s10 + $0x70] sm:$0xff]
  %v2566 = vld [vmem:[%s10 + $0x78] sm:$0xff]
  %v2567 = vld [vmem:[%s10 + $0x80] sm:$0xff]
  %v2568 = vld [vmem:[%s10 + $0x88] sm:$0xff]
  %v2569 = vld [vmem:[%s10 + $0x90] sm:$0xff]
  %v2570 = vld [vmem:[%s10 + $0x98] sm:$0xff]
  %v2571 = vld [vmem:[%s10 + $0xa0] sm:$0xff]
  %v2572 = vld [vmem:[%s10 + $0xa8] sm:$0xff]
  %v2573 = vld [vmem:[%s10 + $0xb0] sm:$0xff]
  %v2574 = vld [vmem:[%s10 + $0xb8] sm:$0xff]
  %v2575 = vld [vmem:[%s10 + $0xc0] sm:$0xff]
  %v2576 = vld [vmem:[%s10 + $0xc8] sm:$0xff]
  %v2577 = vld [vmem:[%s10 + $0xd0] sm:$0xff]
  %v2578 = vld [vmem:[%s10 + $0xd8] sm:$0xff]
  %v2579 = vld [vmem:[%s10 + $0xe0] sm:$0xff]
  %v2580 = vld [vmem:[%s10 + $0xe8] sm:$0xff]
  %v2581 = vld [vmem:[%s10 + $0xf0] sm:$0xff]
  %v2582 = vld [vmem:[%s10 + $0xf8] sm:$0xff]
  %v2583 = vld [vmem:[%s10 + $0x100] sm:$0xff]
  %v2584 = vld [vmem:[%s10 + $0x108] sm:$0xff]
  %v2585 = vld [vmem:[%s10 + $0x110] sm:$0xff]
  %v2586 = vld [vmem:[%s10 + $0x118] sm:$0xff]
  %v2587 = vld [vmem:[%s10 + $0x120] sm:$0xff]
  %v2588 = vld [vmem:[%s10 + $0x128] sm:$0xff]
  %v2589 = vld [vmem:[%s10 + $0x130] sm:$0xff]
  %v2590 = vld [vmem:[%s10 + $0x138] sm:$0xff]
  %v2591 = vld [vmem:[%s10 + $0x140] sm:$0xff]
  %v2592 = vld [vmem:[%s10 + $0x148] sm:$0xff]
  %v2593 = vld [vmem:[%s10 + $0x150] sm:$0xff]
  %v2594 = vld [vmem:[%s10 + $0x158] sm:$0xff]
  %v2595 = vld [vmem:[%s10 + $0x160] sm:$0xff]
  %v2596 = vld [vmem:[%s10 + $0x168] sm:$0xff]
  %v2597 = vld [vmem:[%s10 + $0x170] sm:$0xff]
  %v2598 = vld [vmem:[%s10 + $0x178] sm:$0xff]
  %v2599 = vld [vmem:[%s10 + $0x180] sm:$0xff]
  %v2600 = vld [vmem:[%s10 + $0x188] sm:$0xff]
  %v2601 = vld [vmem:[%s10 + $0x190] sm:$0xff]
  %v2602 = vld [vmem:[%s10 + $0x198] sm:$0xff]
  %v2603 = vld [vmem:[%s10 + $0x1a0] sm:$0xff]
  %v2604 = vld [vmem:[%s10 + $0x1a8] sm:$0xff]
  %v2605 = vld [vmem:[%s10 + $0x1b0] sm:$0xff]
  %v2606 = vld [vmem:[%s10 + $0x1b8] sm:$0xff]
  %v2607 = vld [vmem:[%s10 + $0x1c0] sm:$0xff]
  %v2608 = vld [vmem:[%s10 + $0x1c8] sm:$0xff]
  %v2609 = vld [vmem:[%s10 + $0x1d0] sm:$0xff]
  %v2610 = vld [vmem:[%s10 + $0x1d8] sm:$0xff]
  %v2611 = vld [vmem:[%s10 + $0x1e0] sm:$0xff]
  %v2612 = vld [vmem:[%s10 + $0x1e8] sm:$0xff]
  %v2613 = vld [vmem:[%s10 + $0x1f0] sm:$0xff]
  %v2614 = vld [vmem:[%s10 + $0x1f8] sm:$0xff]
  %v2615 = vld [vmem:[%s11] sm:$0xf]
  %v2617 = vperm.slane %v2615, 0
  %v2618 = vperm.slane %v2615, 1
  %v2619 = vperm.slane %v2615, 2
  %v2620 = vperm.slane %v2615, 3
  %v2689 = vunpack.c.l.b16 %v2551
  %v2690 = vunpack.c.h.b16 %v2551
  %v2691 = vunpack.c.l.b16 %v2552
  %v2692 = vunpack.c.h.b16 %v2552
  %v2693 = vunpack.c.l.b16 %v2553
  %v2694 = vunpack.c.h.b16 %v2553
  %v2695 = vunpack.c.l.b16 %v2554
  %v2696 = vunpack.c.h.b16 %v2554
  %v2697 = vunpack.c.l.b16 %v2555
  %v2698 = vunpack.c.h.b16 %v2555
  %v2699 = vunpack.c.l.b16 %v2556
  %v2700 = vunpack.c.h.b16 %v2556
  %v2701 = vunpack.c.l.b16 %v2557
  %v2702 = vunpack.c.h.b16 %v2557
  %v2703 = vunpack.c.l.b16 %v2558
  %v2704 = vunpack.c.h.b16 %v2558
  %v2705 = vunpack.c.l.b16 %v2559
  %v2706 = vunpack.c.h.b16 %v2559
  %v2707 = vunpack.c.l.b16 %v2560
  %v2708 = vunpack.c.h.b16 %v2560
  %v2709 = vunpack.c.l.b16 %v2561
  %v2710 = vunpack.c.h.b16 %v2561
  %v2711 = vunpack.c.l.b16 %v2562
  %v2712 = vunpack.c.h.b16 %v2562
  %v2713 = vunpack.c.l.b16 %v2563
  %v2714 = vunpack.c.h.b16 %v2563
  %v2715 = vunpack.c.l.b16 %v2564
  %v2716 = vunpack.c.h.b16 %v2564
  %v2717 = vunpack.c.l.b16 %v2565
  %v2718 = vunpack.c.h.b16 %v2565
  %v2719 = vunpack.c.l.b16 %v2566
  %v2720 = vunpack.c.h.b16 %v2566
  %v2721 = vunpack.c.l.b16 %v2567
  %v2722 = vunpack.c.h.b16 %v2567
  %v2723 = vunpack.c.l.b16 %v2568
  %v2724 = vunpack.c.h.b16 %v2568
  %v2725 = vunpack.c.l.b16 %v2569
  %v2726 = vunpack.c.h.b16 %v2569
  %v2727 = vunpack.c.l.b16 %v2570
  %v2728 = vunpack.c.h.b16 %v2570
  %v2729 = vunpack.c.l.b16 %v2571
  %v2730 = vunpack.c.h.b16 %v2571
  %v2731 = vunpack.c.l.b16 %v2572
  %v2732 = vunpack.c.h.b16 %v2572
  %v2733 = vunpack.c.l.b16 %v2573
  %v2734 = vunpack.c.h.b16 %v2573
  %v2735 = vunpack.c.l.b16 %v2574
  %v2736 = vunpack.c.h.b16 %v2574
  %v2737 = vunpack.c.l.b16 %v2575
  %v2738 = vunpack.c.h.b16 %v2575
  %v2739 = vunpack.c.l.b16 %v2576
  %v2740 = vunpack.c.h.b16 %v2576
  %v2741 = vunpack.c.l.b16 %v2577
  %v2742 = vunpack.c.h.b16 %v2577
  %v2743 = vunpack.c.l.b16 %v2578
  %v2744 = vunpack.c.h.b16 %v2578
  %v2745 = vunpack.c.l.b16 %v2579
  %v2746 = vunpack.c.h.b16 %v2579
  %v2747 = vunpack.c.l.b16 %v2580
  %v2748 = vunpack.c.h.b16 %v2580
  %v2749 = vunpack.c.l.b16 %v2581
  %v2750 = vunpack.c.h.b16 %v2581
  %v2751 = vunpack.c.l.b16 %v2582
  %v2752 = vunpack.c.h.b16 %v2582
  %v2753 = vunpack.c.l.b16 %v2583
  %v2754 = vunpack.c.h.b16 %v2583
  %v2755 = vunpack.c.l.b16 %v2584
  %v2756 = vunpack.c.h.b16 %v2584
  %v2757 = vunpack.c.l.b16 %v2585
  %v2758 = vunpack.c.h.b16 %v2585
  %v2759 = vunpack.c.l.b16 %v2586
  %v2760 = vunpack.c.h.b16 %v2586
  %v2761 = vunpack.c.l.b16 %v2587
  %v2762 = vunpack.c.h.b16 %v2587
  %v2763 = vunpack.c.l.b16 %v2588
  %v2764 = vunpack.c.h.b16 %v2588
  %v2765 = vunpack.c.l.b16 %v2589
  %v2766 = vunpack.c.h.b16 %v2589
  %v2767 = vunpack.c.l.b16 %v2590
  %v2768 = vunpack.c.h.b16 %v2590
  %v2769 = vunpack.c.l.b16 %v2591
  %v2770 = vunpack.c.h.b16 %v2591
  %v2771 = vunpack.c.l.b16 %v2592
  %v2772 = vunpack.c.h.b16 %v2592
  %v2773 = vunpack.c.l.b16 %v2593
  %v2774 = vunpack.c.h.b16 %v2593
  %v2775 = vunpack.c.l.b16 %v2594
  %v2776 = vunpack.c.h.b16 %v2594
  %v2777 = vunpack.c.l.b16 %v2595
  %v2778 = vunpack.c.h.b16 %v2595
  %v2779 = vunpack.c.l.b16 %v2596
  %v2780 = vunpack.c.h.b16 %v2596
  %v2781 = vunpack.c.l.b16 %v2597
  %v2782 = vunpack.c.h.b16 %v2597
  %v2783 = vunpack.c.l.b16 %v2598
  %v2784 = vunpack.c.h.b16 %v2598
  %v2785 = vunpack.c.l.b16 %v2599
  %v2786 = vunpack.c.h.b16 %v2599
  %v2787 = vunpack.c.l.b16 %v2600
  %v2788 = vunpack.c.h.b16 %v2600
  %v2789 = vunpack.c.l.b16 %v2601
  %v2790 = vunpack.c.h.b16 %v2601
  %v2791 = vunpack.c.l.b16 %v2602
  %v2792 = vunpack.c.h.b16 %v2602
  %v2793 = vunpack.c.l.b16 %v2603
  %v2794 = vunpack.c.h.b16 %v2603
  %v2795 = vunpack.c.l.b16 %v2604
  %v2796 = vunpack.c.h.b16 %v2604
  %v2797 = vunpack.c.l.b16 %v2605
  %v2798 = vunpack.c.h.b16 %v2605
  %v2799 = vunpack.c.l.b16 %v2606
  %v2800 = vunpack.c.h.b16 %v2606
  %v2801 = vunpack.c.l.b16 %v2607
  %v2802 = vunpack.c.h.b16 %v2607
  %v2803 = vunpack.c.l.b16 %v2608
  %v2804 = vunpack.c.h.b16 %v2608
  %v2805 = vunpack.c.l.b16 %v2609
  %v2806 = vunpack.c.h.b16 %v2609
  %v2807 = vunpack.c.l.b16 %v2610
  %v2808 = vunpack.c.h.b16 %v2610
  %v2809 = vunpack.c.l.b16 %v2611
  %v2810 = vunpack.c.h.b16 %v2611
  %v2811 = vunpack.c.l.b16 %v2612
  %v2812 = vunpack.c.h.b16 %v2612
  %v2813 = vunpack.c.l.b16 %v2613
  %v2814 = vunpack.c.h.b16 %v2613
  %v2815 = vunpack.c.l.b16 %v2614
  %v2816 = vunpack.c.h.b16 %v2614
  %v2817 = vpack.c.b16 %v2693, %v2689
  %v2818 = vpack.c.b16 %v2694, %v2690
  %v2819 = vpack.c.b16 %v2695, %v2691
  %v2820 = vpack.c.b16 %v2696, %v2692
  %v2821 = vpack.c.b16 %v2701, %v2697
  %v2822 = vpack.c.b16 %v2702, %v2698
  %v2823 = vpack.c.b16 %v2703, %v2699
  %v2824 = vpack.c.b16 %v2704, %v2700
  %v2825 = vpack.c.b16 %v2709, %v2705
  %v2826 = vpack.c.b16 %v2710, %v2706
  %v2827 = vpack.c.b16 %v2711, %v2707
  %v2828 = vpack.c.b16 %v2712, %v2708
  %v2829 = vpack.c.b16 %v2717, %v2713
  %v2830 = vpack.c.b16 %v2718, %v2714
  %v2831 = vpack.c.b16 %v2719, %v2715
  %v2832 = vpack.c.b16 %v2720, %v2716
  %v2833 = vpack.c.b16 %v2725, %v2721
  %v2834 = vpack.c.b16 %v2726, %v2722
  %v2835 = vpack.c.b16 %v2727, %v2723
  %v2836 = vpack.c.b16 %v2728, %v2724
  %v2837 = vpack.c.b16 %v2733, %v2729
  %v2838 = vpack.c.b16 %v2734, %v2730
  %v2839 = vpack.c.b16 %v2735, %v2731
  %v2840 = vpack.c.b16 %v2736, %v2732
  %v2841 = vpack.c.b16 %v2741, %v2737
  %v2842 = vpack.c.b16 %v2742, %v2738
  %v2843 = vpack.c.b16 %v2743, %v2739
  %v2844 = vpack.c.b16 %v2744, %v2740
  %v2845 = vpack.c.b16 %v2749, %v2745
  %v2846 = vpack.c.b16 %v2750, %v2746
  %v2847 = vpack.c.b16 %v2751, %v2747
  %v2848 = vpack.c.b16 %v2752, %v2748
  %v2849 = vpack.c.b16 %v2757, %v2753
  %v2850 = vpack.c.b16 %v2758, %v2754
  %v2851 = vpack.c.b16 %v2759, %v2755
  %v2852 = vpack.c.b16 %v2760, %v2756
  %v2853 = vpack.c.b16 %v2765, %v2761
  %v2854 = vpack.c.b16 %v2766, %v2762
  %v2855 = vpack.c.b16 %v2767, %v2763
  %v2856 = vpack.c.b16 %v2768, %v2764
  %v2857 = vpack.c.b16 %v2773, %v2769
  %v2858 = vpack.c.b16 %v2774, %v2770
  %v2859 = vpack.c.b16 %v2775, %v2771
  %v2860 = vpack.c.b16 %v2776, %v2772
  %v2861 = vpack.c.b16 %v2781, %v2777
  %v2862 = vpack.c.b16 %v2782, %v2778
  %v2863 = vpack.c.b16 %v2783, %v2779
  %v2864 = vpack.c.b16 %v2784, %v2780
  %v2865 = vpack.c.b16 %v2789, %v2785
  %v2866 = vpack.c.b16 %v2790, %v2786
  %v2867 = vpack.c.b16 %v2791, %v2787
  %v2868 = vpack.c.b16 %v2792, %v2788
  %v2869 = vpack.c.b16 %v2797, %v2793
  %v2870 = vpack.c.b16 %v2798, %v2794
  %v2871 = vpack.c.b16 %v2799, %v2795
  %v2872 = vpack.c.b16 %v2800, %v2796
  %v2873 = vpack.c.b16 %v2805, %v2801
  %v2874 = vpack.c.b16 %v2806, %v2802
  %v2875 = vpack.c.b16 %v2807, %v2803
  %v2876 = vpack.c.b16 %v2808, %v2804
  %v2877 = vpack.c.b16 %v2813, %v2809
  %v2878 = vpack.c.b16 %v2814, %v2810
  %v2879 = vpack.c.b16 %v2815, %v2811
  %v2880 = vpack.c.b16 %v2816, %v2812
  %2945 = vmatpush.bf16.msra.mxu0 %v2845
  %2946 = vmatpush.bf16.msra.mxu0 %v2841
  %2947 = vmatpush.bf16.msra.mxu0 %v2837
  %2948 = vmatpush.bf16.msra.mxu0 %v2833
  %2949 = vmatpush.bf16.msra.mxu0 %v2829
  %2950 = vmatpush.bf16.msra.mxu0 %v2825
  %2951 = vmatpush.bf16.msra.mxu0 %v2821
  %2952 = vmatpush.bf16.msra.mxu0 %v2817
  %2953 = vmatmul.bf16.gmra.mxu0 %v2549
  %v2954 = vpop.f32.mrf.mxu0
  %v2955 = vadd.f32 %v2617, %v2954
  %v2956 = vpop.f32.mrf.mxu0
  %2957 = vdwg.mxu0
  %2958 = vmatpush.bf16.msra.mxu0 %v2877
  %2959 = vmatpush.bf16.msra.mxu0 %v2873
  %2960 = vmatpush.bf16.msra.mxu0 %v2869
  %2961 = vmatpush.bf16.msra.mxu0 %v2865
  %2962 = vmatpush.bf16.msra.mxu0 %v2861
  %2963 = vmatpush.bf16.msra.mxu0 %v2857
  %2964 = vmatpush.bf16.msra.mxu0 %v2853
  %2965 = vmatpush.bf16.msra.mxu0 %v2849
  %2966 = vmatmul.bf16.gmra.mxu0 %v2550
  %v2967 = vpop.f32.mrf.mxu0
  %v2968 = vadd.f32 %v2955, %v2967
  %v2969 = vpop.f32.mrf.mxu0
  %2970 = vdwg.mxu0
  %2971 = vmatpush.bf16.msra.mxu0 %v2846
  %2972 = vmatpush.bf16.msra.mxu0 %v2842
  %2973 = vmatpush.bf16.msra.mxu0 %v2838
  %2974 = vmatpush.bf16.msra.mxu0 %v2834
  %2975 = vmatpush.bf16.msra.mxu0 %v2830
  %2976 = vmatpush.bf16.msra.mxu0 %v2826
  %2977 = vmatpush.bf16.msra.mxu0 %v2822
  %2978 = vmatpush.bf16.msra.mxu0 %v2818
  %2979 = vmatmul.bf16.gmra.mxu0 %v2549
  %v2980 = vpop.f32.mrf.mxu0
  %v2981 = vadd.f32 %v2618, %v2980
  %v2982 = vpop.f32.mrf.mxu0
  %2983 = vdwg.mxu0
  %2984 = vmatpush.bf16.msra.mxu0 %v2878
  %2985 = vmatpush.bf16.msra.mxu0 %v2874
  %2986 = vmatpush.bf16.msra.mxu0 %v2870
  %2987 = vmatpush.bf16.msra.mxu0 %v2866
  %2988 = vmatpush.bf16.msra.mxu0 %v2862
  %2989 = vmatpush.bf16.msra.mxu0 %v2858
  %2990 = vmatpush.bf16.msra.mxu0 %v2854
  %2991 = vmatpush.bf16.msra.mxu0 %v2850
  %2992 = vmatmul.bf16.gmra.mxu0 %v2550
  %v2993 = vpop.f32.mrf.mxu0
  %v2994 = vadd.f32 %v2981, %v2993
  %v2995 = vpop.f32.mrf.mxu0
  %2996 = vdwg.mxu0
  %2997 = vmatpush.bf16.msra.mxu0 %v2847
  %2998 = vmatpush.bf16.msra.mxu0 %v2843
  %2999 = vmatpush.bf16.msra.mxu0 %v2839
  %3000 = vmatpush.bf16.msra.mxu0 %v2835
  %3001 = vmatpush.bf16.msra.mxu0 %v2831
  %3002 = vmatpush.bf16.msra.mxu0 %v2827
  %3003 = vmatpush.bf16.msra.mxu0 %v2823
  %3004 = vmatpush.bf16.msra.mxu0 %v2819
  %3005 = vmatmul.bf16.gmra.mxu0 %v2549
  %v3006 = vpop.f32.mrf.mxu0
  %v3007 = vadd.f32 %v2619, %v3006
  %v3008 = vpop.f32.mrf.mxu0
  %3009 = vdwg.mxu0
  %3010 = vmatpush.bf16.msra.mxu0 %v2879
  %3011 = vmatpush.bf16.msra.mxu0 %v2875
  %3012 = vmatpush.bf16.msra.mxu0 %v2871
  %3013 = vmatpush.bf16.msra.mxu0 %v2867
  %3014 = vmatpush.bf16.msra.mxu0 %v2863
  %3015 = vmatpush.bf16.msra.mxu0 %v2859
  %3016 = vmatpush.bf16.msra.mxu0 %v2855
  %3017 = vmatpush.bf16.msra.mxu0 %v2851
  %3018 = vmatmul.bf16.gmra.mxu0 %v2550
  %v3019 = vpop.f32.mrf.mxu0
  %v3020 = vadd.f32 %v3007, %v3019
  %v3021 = vpop.f32.mrf.mxu0
  %3022 = vdwg.mxu0
  %3023 = vmatpush.bf16.msra.mxu0 %v2848
  %3024 = vmatpush.bf16.msra.mxu0 %v2844
  %3025 = vmatpush.bf16.msra.mxu0 %v2840
  %3026 = vmatpush.bf16.msra.mxu0 %v2836
  %3027 = vmatpush.bf16.msra.mxu0 %v2832
  %3028 = vmatpush.bf16.msra.mxu0 %v2828
  %3029 = vmatpush.bf16.msra.mxu0 %v2824
  %3030 = vmatpush.bf16.msra.mxu0 %v2820
  %3031 = vmatmul.bf16.gmra.mxu0 %v2549
  %v3032 = vpop.f32.mrf.mxu0
  %v3033 = vadd.f32 %v2620, %v3032
  %v3034 = vpop.f32.mrf.mxu0
  %3035 = vdwg.mxu0
  %3036 = vmatpush.bf16.msra.mxu0 %v2880
  %3037 = vmatpush.bf16.msra.mxu0 %v2876
  %3038 = vmatpush.bf16.msra.mxu0 %v2872
  %3039 = vmatpush.bf16.msra.mxu0 %v2868
  %3040 = vmatpush.bf16.msra.mxu0 %v2864
  %3041 = vmatpush.bf16.msra.mxu0 %v2860
  %3042 = vmatpush.bf16.msra.mxu0 %v2856
  %3043 = vmatpush.bf16.msra.mxu0 %v2852
  %3044 = vmatmul.bf16.gmra.mxu0 %v2550
  %v3045 = vpop.f32.mrf.mxu0
  %v3046 = vadd.f32 %v3033, %v3045
  %v3047 = vpop.f32.mrf.mxu0
  %3048 = vdwg.mxu0
  %v3049 = vmax.f32 %v2968, 0.0
  %v3050 = vmax.f32 %v2994, 0.0
  %v3051 = vmax.f32 %v3020, 0.0
  %v3052 = vmax.f32 %v3046, 0.0
  %v3053 = vpack.c.bf16 %v3049, %v3049
  %v3054 = vpack.c.bf16 %v3050, %v3050
  %v3055 = vpack.c.bf16 %v3051, %v3051
  %v3056 = vpack.c.bf16 %v3052, %v3052
  %v3057 = vld [vmem:[%s12] sm:$0xff]
  %v3058 = vld [vmem:[%s12 + $0x8] sm:$0xff]
  %v3059 = vld [vmem:[%s12 + $0x10] sm:$0xff]
  %v3060 = vld [vmem:[%s12 + $0x18] sm:$0xf]
  %v3061 = vld [vmem:[%s12 + $0x1c] sm:$0xff]
  %v3062 = vld [vmem:[%s12 + $0x24] sm:$0xff]
  %v3063 = vld [vmem:[%s12 + $0x2c] sm:$0xff]
  %v3064 = vld [vmem:[%s12 + $0x34] sm:$0xf]
  %v3065 = vld [vmem:[%s12 + $0x38] sm:$0xff]
  %v3066 = vld [vmem:[%s12 + $0x40] sm:$0xff]
  %v3067 = vld [vmem:[%s12 + $0x48] sm:$0xff]
  %v3068 = vld [vmem:[%s12 + $0x50] sm:$0xf]
  %v3069 = vld [vmem:[%s12 + $0x54] sm:$0xff]
  %v3070 = vld [vmem:[%s12 + $0x5c] sm:$0xff]
  %v3071 = vld [vmem:[%s12 + $0x64] sm:$0xff]
  %v3072 = vld [vmem:[%s12 + $0x6c] sm:$0xf]
  %v3073 = vld [vmem:[%s12 + $0x70] sm:$0xff]
  %v3074 = vld [vmem:[%s12 + $0x78] sm:$0xff]
  %v3075 = vld [vmem:[%s12 + $0x80] sm:$0xff]
  %v3076 = vld [vmem:[%s12 + $0x88] sm:$0xf]
  %v3077 = vld [vmem:[%s12 + $0x8c] sm:$0xff]
  %v3078 = vld [vmem:[%s12 + $0x94] sm:$0xff]
  %v3079 = vld [vmem:[%s12 + $0x9c] sm:$0xff]
  %v3080 = vld [vmem:[%s12 + $0xa4] sm:$0xf]
  %v3081 = vld [vmem:[%s12 + $0xa8] sm:$0xff]
  %v3082 = vld [vmem:[%s12 + $0xb0] sm:$0xff]
  %v3083 = vld [vmem:[%s12 + $0xb8] sm:$0xff]
  %v3084 = vld [vmem:[%s12 + $0xc0] sm:$0xf]
  %v3085 = vld [vmem:[%s12 + $0xc4] sm:$0xff]
  %v3086 = vld [vmem:[%s12 + $0xcc] sm:$0xff]
  %v3087 = vld [vmem:[%s12 + $0xd4] sm:$0xff]
  %v3088 = vld [vmem:[%s12 + $0xdc] sm:$0xf]
  %v3089 = vld [vmem:[%s12 + $0xe0] sm:$0xff]
  %v3090 = vld [vmem:[%s12 + $0xe8] sm:$0xff]
  %v3091 = vld [vmem:[%s12 + $0xf0] sm:$0xff]
  %v3092 = vld [vmem:[%s12 + $0xf8] sm:$0xf]
  %v3093 = vld [vmem:[%s12 + $0xfc] sm:$0xff]
  %v3094 = vld [vmem:[%s12 + $0x104] sm:$0xff]
  %v3095 = vld [vmem:[%s12 + $0x10c] sm:$0xff]
  %v3096 = vld [vmem:[%s12 + $0x114] sm:$0xf]
  %v3097 = vld [vmem:[%s12 + $0x118] sm:$0xff]
  %v3098 = vld [vmem:[%s12 + $0x120] sm:$0xff]
  %v3099 = vld [vmem:[%s12 + $0x128] sm:$0xff]
  %v3100 = vld [vmem:[%s12 + $0x130] sm:$0xf]
  %v3101 = vld [vmem:[%s12 + $0x134] sm:$0xff]
  %v3102 = vld [vmem:[%s12 + $0x13c] sm:$0xff]
  %v3103 = vld [vmem:[%s12 + $0x144] sm:$0xff]
  %v3104 = vld [vmem:[%s12 + $0x14c] sm:$0xf]
  %v3105 = vld [vmem:[%s12 + $0x150] sm:$0xff]
  %v3106 = vld [vmem:[%s12 + $0x158] sm:$0xff]
  %v3107 = vld [vmem:[%s12 + $0x160] sm:$0xff]
  %v3108 = vld [vmem:[%s12 + $0x168] sm:$0xf]
  %v3109 = vld [vmem:[%s12 + $0x16c] sm:$0xff]
  %v3110 = vld [vmem:[%s12 + $0x174] sm:$0xff]
  %v3111 = vld [vmem:[%s12 + $0x17c] sm:$0xff]
  %v3112 = vld [vmem:[%s12 + $0x184] sm:$0xf]
  %v3113 = vld [vmem:[%s12 + $0x188] sm:$0xff]
  %v3114 = vld [vmem:[%s12 + $0x190] sm:$0xff]
  %v3115 = vld [vmem:[%s12 + $0x198] sm:$0xff]
  %v3116 = vld [vmem:[%s12 + $0x1a0] sm:$0xf]
  %v3117 = vld [vmem:[%s12 + $0x1a4] sm:$0xff]
  %v3118 = vld [vmem:[%s12 + $0x1ac] sm:$0xff]
  %v3119 = vld [vmem:[%s12 + $0x1b4] sm:$0xff]
  %v3120 = vld [vmem:[%s12 + $0x1bc] sm:$0xf]
  %v3121 = vld [vmem:[%s12 + $0x1c0] sm:$0xff]
  %v3122 = vld [vmem:[%s12 + $0x1c8] sm:$0xff]
  %v3123 = vld [vmem:[%s12 + $0x1d0] sm:$0xff]
  %v3124 = vld [vmem:[%s12 + $0x1d8] sm:$0xf]
  %v3125 = vld [vmem:[%s12 + $0x1dc] sm:$0xff]
  %v3126 = vld [vmem:[%s12 + $0x1e4] sm:$0xff]
  %v3127 = vld [vmem:[%s12 + $0x1ec] sm:$0xff]
  %v3128 = vld [vmem:[%s12 + $0x1f4] sm:$0xf]
  %v3129 = vld [vmem:[%s12 + $0x1f8] sm:$0xff]
  %v3130 = vld [vmem:[%s12 + $0x200] sm:$0xff]
  %v3131 = vld [vmem:[%s12 + $0x208] sm:$0xff]
  %v3132 = vld [vmem:[%s12 + $0x210] sm:$0xf]
  %v3133 = vld [vmem:[%s12 + $0x214] sm:$0xff]
  %v3134 = vld [vmem:[%s12 + $0x21c] sm:$0xff]
  %v3135 = vld [vmem:[%s12 + $0x224] sm:$0xff]
  %v3136 = vld [vmem:[%s12 + $0x22c] sm:$0xf]
  %v3137 = vld [vmem:[%s12 + $0x230] sm:$0xff]
  %v3138 = vld [vmem:[%s12 + $0x238] sm:$0xff]
  %v3139 = vld [vmem:[%s12 + $0x240] sm:$0xff]
  %v3140 = vld [vmem:[%s12 + $0x248] sm:$0xf]
  %v3141 = vld [vmem:[%s12 + $0x24c] sm:$0xff]
  %v3142 = vld [vmem:[%s12 + $0x254] sm:$0xff]
  %v3143 = vld [vmem:[%s12 + $0x25c] sm:$0xff]
  %v3144 = vld [vmem:[%s12 + $0x264] sm:$0xf]
  %v3145 = vld [vmem:[%s12 + $0x268] sm:$0xff]
  %v3146 = vld [vmem:[%s12 + $0x270] sm:$0xff]
  %v3147 = vld [vmem:[%s12 + $0x278] sm:$0xff]
  %v3148 = vld [vmem:[%s12 + $0x280] sm:$0xf]
  %v3149 = vld [vmem:[%s12 + $0x284] sm:$0xff]
  %v3150 = vld [vmem:[%s12 + $0x28c] sm:$0xff]
  %v3151 = vld [vmem:[%s12 + $0x294] sm:$0xff]
  %v3152 = vld [vmem:[%s12 + $0x29c] sm:$0xf]
  %v3153 = vld [vmem:[%s12 + $0x2a0] sm:$0xff]
  %v3154 = vld [vmem:[%s12 + $0x2a8] sm:$0xff]
  %v3155 = vld [vmem:[%s12 + $0x2b0] sm:$0xff]
  %v3156 = vld [vmem:[%s12 + $0x2b8] sm:$0xf]
  %v3157 = vld [vmem:[%s12 + $0x2bc] sm:$0xff]
  %v3158 = vld [vmem:[%s12 + $0x2c4] sm:$0xff]
  %v3159 = vld [vmem:[%s12 + $0x2cc] sm:$0xff]
  %v3160 = vld [vmem:[%s12 + $0x2d4] sm:$0xf]
  %v3161 = vld [vmem:[%s12 + $0x2d8] sm:$0xff]
  %v3162 = vld [vmem:[%s12 + $0x2e0] sm:$0xff]
  %v3163 = vld [vmem:[%s12 + $0x2e8] sm:$0xff]
  %v3164 = vld [vmem:[%s12 + $0x2f0] sm:$0xf]
  %v3165 = vld [vmem:[%s12 + $0x2f4] sm:$0xff]
  %v3166 = vld [vmem:[%s12 + $0x2fc] sm:$0xff]
  %v3167 = vld [vmem:[%s12 + $0x304] sm:$0xff]
  %v3168 = vld [vmem:[%s12 + $0x30c] sm:$0xf]
  %v3169 = vld [vmem:[%s12 + $0x310] sm:$0xff]
  %v3170 = vld [vmem:[%s12 + $0x318] sm:$0xff]
  %v3171 = vld [vmem:[%s12 + $0x320] sm:$0xff]
  %v3172 = vld [vmem:[%s12 + $0x328] sm:$0xf]
  %v3173 = vld [vmem:[%s12 + $0x32c] sm:$0xff]
  %v3174 = vld [vmem:[%s12 + $0x334] sm:$0xff]
  %v3175 = vld [vmem:[%s12 + $0x33c] sm:$0xff]
  %v3176 = vld [vmem:[%s12 + $0x344] sm:$0xf]
  %v3177 = vld [vmem:[%s12 + $0x348] sm:$0xff]
  %v3178 = vld [vmem:[%s12 + $0x350] sm:$0xff]
  %v3179 = vld [vmem:[%s12 + $0x358] sm:$0xff]
  %v3180 = vld [vmem:[%s12 + $0x360] sm:$0xf]
  %v3181 = vld [vmem:[%s12 + $0x364] sm:$0xff]
  %v3182 = vld [vmem:[%s12 + $0x36c] sm:$0xff]
  %v3183 = vld [vmem:[%s12 + $0x374] sm:$0xff]
  %v3184 = vld [vmem:[%s12 + $0x37c] sm:$0xf]
  %v3185 = vld [vmem:[%s12 + $0x380] sm:$0xff]
  %v3186 = vld [vmem:[%s12 + $0x388] sm:$0xff]
  %v3187 = vld [vmem:[%s12 + $0x390] sm:$0xff]
  %v3188 = vld [vmem:[%s12 + $0x398] sm:$0xf]
  %v3189 = vld [vmem:[%s12 + $0x39c] sm:$0xff]
  %v3190 = vld [vmem:[%s12 + $0x3a4] sm:$0xff]
  %v3191 = vld [vmem:[%s12 + $0x3ac] sm:$0xff]
  %v3192 = vld [vmem:[%s12 + $0x3b4] sm:$0xf]
  %v3193 = vld [vmem:[%s12 + $0x3b8] sm:$0xff]
  %v3194 = vld [vmem:[%s12 + $0x3c0] sm:$0xff]
  %v3195 = vld [vmem:[%s12 + $0x3c8] sm:$0xff]
  %v3196 = vld [vmem:[%s12 + $0x3d0] sm:$0xf]
  %v3197 = vld [vmem:[%s12 + $0x3d4] sm:$0xff]
  %v3198 = vld [vmem:[%s12 + $0x3dc] sm:$0xff]
  %v3199 = vld [vmem:[%s12 + $0x3e4] sm:$0xff]
  %v3200 = vld [vmem:[%s12 + $0x3ec] sm:$0xf]
  %v3201 = vld [vmem:[%s12 + $0x3f0] sm:$0xff]
  %v3202 = vld [vmem:[%s12 + $0x3f8] sm:$0xff]
  %v3203 = vld [vmem:[%s12 + $0x400] sm:$0xff]
  %v3204 = vld [vmem:[%s12 + $0x408] sm:$0xf]
  %v3205 = vld [vmem:[%s12 + $0x40c] sm:$0xff]
  %v3206 = vld [vmem:[%s12 + $0x414] sm:$0xff]
  %v3207 = vld [vmem:[%s12 + $0x41c] sm:$0xff]
  %v3208 = vld [vmem:[%s12 + $0x424] sm:$0xf]
  %v3209 = vld [vmem:[%s12 + $0x428] sm:$0xff]
  %v3210 = vld [vmem:[%s12 + $0x430] sm:$0xff]
  %v3211 = vld [vmem:[%s12 + $0x438] sm:$0xff]
  %v3212 = vld [vmem:[%s12 + $0x440] sm:$0xf]
  %v3213 = vld [vmem:[%s12 + $0x444] sm:$0xff]
  %v3214 = vld [vmem:[%s12 + $0x44c] sm:$0xff]
  %v3215 = vld [vmem:[%s12 + $0x454] sm:$0xff]
  %v3216 = vld [vmem:[%s12 + $0x45c] sm:$0xf]
  %v3217 = vld [vmem:[%s12 + $0x460] sm:$0xff]
  %v3218 = vld [vmem:[%s12 + $0x468] sm:$0xff]
  %v3219 = vld [vmem:[%s12 + $0x470] sm:$0xff]
  %v3220 = vld [vmem:[%s12 + $0x478] sm:$0xf]
  %v3221 = vld [vmem:[%s12 + $0x47c] sm:$0xff]
  %v3222 = vld [vmem:[%s12 + $0x484] sm:$0xff]
  %v3223 = vld [vmem:[%s12 + $0x48c] sm:$0xff]
  %v3224 = vld [vmem:[%s12 + $0x494] sm:$0xf]
  %v3225 = vld [vmem:[%s12 + $0x498] sm:$0xff]
  %v3226 = vld [vmem:[%s12 + $0x4a0] sm:$0xff]
  %v3227 = vld [vmem:[%s12 + $0x4a8] sm:$0xff]
  %v3228 = vld [vmem:[%s12 + $0x4b0] sm:$0xf]
  %v3229 = vld [vmem:[%s12 + $0x4b4] sm:$0xff]
  %v3230 = vld [vmem:[%s12 + $0x4bc] sm:$0xff]
  %v3231 = vld [vmem:[%s12 + $0x4c4] sm:$0xff]
  %v3232 = vld [vmem:[%s12 + $0x4cc] sm:$0xf]
  %v3233 = vld [vmem:[%s12 + $0x4d0] sm:$0xff]
  %v3234 = vld [vmem:[%s12 + $0x4d8] sm:$0xff]
  %v3235 = vld [vmem:[%s12 + $0x4e0] sm:$0xff]
  %v3236 = vld [vmem:[%s12 + $0x4e8] sm:$0xf]
  %v3237 = vld [vmem:[%s12 + $0x4ec] sm:$0xff]
  %v3238 = vld [vmem:[%s12 + $0x4f4] sm:$0xff]
  %v3239 = vld [vmem:[%s12 + $0x4fc] sm:$0xff]
  %v3240 = vld [vmem:[%s12 + $0x504] sm:$0xf]
  %v3241 = vld [vmem:[%s12 + $0x508] sm:$0xff]
  %v3242 = vld [vmem:[%s12 + $0x510] sm:$0xff]
  %v3243 = vld [vmem:[%s12 + $0x518] sm:$0xff]
  %v3244 = vld [vmem:[%s12 + $0x520] sm:$0xf]
  %v3245 = vld [vmem:[%s12 + $0x524] sm:$0xff]
  %v3246 = vld [vmem:[%s12 + $0x52c] sm:$0xff]
  %v3247 = vld [vmem:[%s12 + $0x534] sm:$0xff]
  %v3248 = vld [vmem:[%s12 + $0x53c] sm:$0xf]
  %v3249 = vld [vmem:[%s12 + $0x540] sm:$0xff]
  %v3250 = vld [vmem:[%s12 + $0x548] sm:$0xff]
  %v3251 = vld [vmem:[%s12 + $0x550] sm:$0xff]
  %v3252 = vld [vmem:[%s12 + $0x558] sm:$0xf]
  %v3253 = vld [vmem:[%s12 + $0x55c] sm:$0xff]
  %v3254 = vld [vmem:[%s12 + $0x564] sm:$0xff]
  %v3255 = vld [vmem:[%s12 + $0x56c] sm:$0xff]
  %v3256 = vld [vmem:[%s12 + $0x574] sm:$0xf]
  %v3257 = vld [vmem:[%s12 + $0x578] sm:$0xff]
  %v3258 = vld [vmem:[%s12 + $0x580] sm:$0xff]
  %v3259 = vld [vmem:[%s12 + $0x588] sm:$0xff]
  %v3260 = vld [vmem:[%s12 + $0x590] sm:$0xf]
  %v3261 = vld [vmem:[%s12 + $0x594] sm:$0xff]
  %v3262 = vld [vmem:[%s12 + $0x59c] sm:$0xff]
  %v3263 = vld [vmem:[%s12 + $0x5a4] sm:$0xff]
  %v3264 = vld [vmem:[%s12 + $0x5ac] sm:$0xf]
  %v3265 = vld [vmem:[%s12 + $0x5b0] sm:$0xff]
  %v3266 = vld [vmem:[%s12 + $0x5b8] sm:$0xff]
  %v3267 = vld [vmem:[%s12 + $0x5c0] sm:$0xff]
  %v3268 = vld [vmem:[%s12 + $0x5c8] sm:$0xf]
  %v3269 = vld [vmem:[%s12 + $0x5cc] sm:$0xff]
  %v3270 = vld [vmem:[%s12 + $0x5d4] sm:$0xff]
  %v3271 = vld [vmem:[%s12 + $0x5dc] sm:$0xff]
  %v3272 = vld [vmem:[%s12 + $0x5e4] sm:$0xf]
  %v3273 = vld [vmem:[%s12 + $0x5e8] sm:$0xff]
  %v3274 = vld [vmem:[%s12 + $0x5f0] sm:$0xff]
  %v3275 = vld [vmem:[%s12 + $0x5f8] sm:$0xff]
  %v3276 = vld [vmem:[%s12 + $0x600] sm:$0xf]
  %v3277 = vld [vmem:[%s12 + $0x604] sm:$0xff]
  %v3278 = vld [vmem:[%s12 + $0x60c] sm:$0xff]
  %v3279 = vld [vmem:[%s12 + $0x614] sm:$0xff]
  %v3280 = vld [vmem:[%s12 + $0x61c] sm:$0xf]
  %v3281 = vld [vmem:[%s12 + $0x620] sm:$0xff]
  %v3282 = vld [vmem:[%s12 + $0x628] sm:$0xff]
  %v3283 = vld [vmem:[%s12 + $0x630] sm:$0xff]
  %v3284 = vld [vmem:[%s12 + $0x638] sm:$0xf]
  %v3285 = vld [vmem:[%s12 + $0x63c] sm:$0xff]
  %v3286 = vld [vmem:[%s12 + $0x644] sm:$0xff]
  %v3287 = vld [vmem:[%s12 + $0x64c] sm:$0xff]
  %v3288 = vld [vmem:[%s12 + $0x654] sm:$0xf]
  %v3289 = vld [vmem:[%s12 + $0x658] sm:$0xff]
  %v3290 = vld [vmem:[%s12 + $0x660] sm:$0xff]
  %v3291 = vld [vmem:[%s12 + $0x668] sm:$0xff]
  %v3292 = vld [vmem:[%s12 + $0x670] sm:$0xf]
  %v3293 = vld [vmem:[%s12 + $0x674] sm:$0xff]
  %v3294 = vld [vmem:[%s12 + $0x67c] sm:$0xff]
  %v3295 = vld [vmem:[%s12 + $0x684] sm:$0xff]
  %v3296 = vld [vmem:[%s12 + $0x68c] sm:$0xf]
  %v3297 = vld [vmem:[%s12 + $0x690] sm:$0xff]
  %v3298 = vld [vmem:[%s12 + $0x698] sm:$0xff]
  %v3299 = vld [vmem:[%s12 + $0x6a0] sm:$0xff]
  %v3300 = vld [vmem:[%s12 + $0x6a8] sm:$0xf]
  %v3301 = vld [vmem:[%s12 + $0x6ac] sm:$0xff]
  %v3302 = vld [vmem:[%s12 + $0x6b4] sm:$0xff]
  %v3303 = vld [vmem:[%s12 + $0x6bc] sm:$0xff]
  %v3304 = vld [vmem:[%s12 + $0x6c4] sm:$0xf]
  %v3305 = vld [vmem:[%s12 + $0x6c8] sm:$0xff]
  %v3306 = vld [vmem:[%s12 + $0x6d0] sm:$0xff]
  %v3307 = vld [vmem:[%s12 + $0x6d8] sm:$0xff]
  %v3308 = vld [vmem:[%s12 + $0x6e0] sm:$0xf]
  %v3309 = vld [vmem:[%s12 + $0x6e4] sm:$0xff]
  %v3310 = vld [vmem:[%s12 + $0x6ec] sm:$0xff]
  %v3311 = vld [vmem:[%s12 + $0x6f4] sm:$0xff]
  %v3312 = vld [vmem:[%s12 + $0x6fc] sm:$0xf]
  %v3313 = vld [vmem:[%s13] sm:$0x7f]
  %v3315 = vperm.slane %v3313, 0
  %v3316 = vperm.slane %v3313, 1
  %v3317 = vperm.slane %v3313, 2
  %v3318 = vperm.slane %v3313, 3
  %v3319 = vperm.slane %v3313, 4
  %v3320 = vperm.slane %v3313, 5
  %v3321 = vperm.slane %v3313, 6
  %v3585 = vunpack.c.l.b16 %v3057
  %v3586 = vunpack.c.h.b16 %v3057
  %v3587 = vunpack.c.l.b16 %v3058
  %v3588 = vunpack.c.h.b16 %v3058
  %v3589 = vunpack.c.l.b16 %v3059
  %v3590 = vunpack.c.h.b16 %v3059
  %v3591 = vunpack.c.l.b16 %v3060
  %v3592 = vunpack.c.l.b16 %v3061
  %v3593 = vunpack.c.h.b16 %v3061
  %v3594 = vunpack.c.l.b16 %v3062
  %v3595 = vunpack.c.h.b16 %v3062
  %v3596 = vunpack.c.l.b16 %v3063
  %v3597 = vunpack.c.h.b16 %v3063
  %v3598 = vunpack.c.l.b16 %v3064
  %v3599 = vunpack.c.l.b16 %v3065
  %v3600 = vunpack.c.h.b16 %v3065
  %v3601 = vunpack.c.l.b16 %v3066
  %v3602 = vunpack.c.h.b16 %v3066
  %v3603 = vunpack.c.l.b16 %v3067
  %v3604 = vunpack.c.h.b16 %v3067
  %v3605 = vunpack.c.l.b16 %v3068
  %v3606 = vunpack.c.l.b16 %v3069
  %v3607 = vunpack.c.h.b16 %v3069
  %v3608 = vunpack.c.l.b16 %v3070
  %v3609 = vunpack.c.h.b16 %v3070
  %v3610 = vunpack.c.l.b16 %v3071
  %v3611 = vunpack.c.h.b16 %v3071
  %v3612 = vunpack.c.l.b16 %v3072
  %v3613 = vunpack.c.l.b16 %v3073
  %v3614 = vunpack.c.h.b16 %v3073
  %v3615 = vunpack.c.l.b16 %v3074
  %v3616 = vunpack.c.h.b16 %v3074
  %v3617 = vunpack.c.l.b16 %v3075
  %v3618 = vunpack.c.h.b16 %v3075
  %v3619 = vunpack.c.l.b16 %v3076
  %v3620 = vunpack.c.l.b16 %v3077
  %v3621 = vunpack.c.h.b16 %v3077
  %v3622 = vunpack.c.l.b16 %v3078
  %v3623 = vunpack.c.h.b16 %v3078
  %v3624 = vunpack.c.l.b16 %v3079
  %v3625 = vunpack.c.h.b16 %v3079
  %v3626 = vunpack.c.l.b16 %v3080
  %v3627 = vunpack.c.l.b16 %v3081
  %v3628 = vunpack.c.h.b16 %v3081
  %v3629 = vunpack.c.l.b16 %v3082
  %v3630 = vunpack.c.h.b16 %v3082
  %v3631 = vunpack.c.l.b16 %v3083
  %v3632 = vunpack.c.h.b16 %v3083
  %v3633 = vunpack.c.l.b16 %v3084
  %v3634 = vunpack.c.l.b16 %v3085
  %v3635 = vunpack.c.h.b16 %v3085
  %v3636 = vunpack.c.l.b16 %v3086
  %v3637 = vunpack.c.h.b16 %v3086
  %v3638 = vunpack.c.l.b16 %v3087
  %v3639 = vunpack.c.h.b16 %v3087
  %v3640 = vunpack.c.l.b16 %v3088
  %v3641 = vunpack.c.l.b16 %v3089
  %v3642 = vunpack.c.h.b16 %v3089
  %v3643 = vunpack.c.l.b16 %v3090
  %v3644 = vunpack.c.h.b16 %v3090
  %v3645 = vunpack.c.l.b16 %v3091
  %v3646 = vunpack.c.h.b16 %v3091
  %v3647 = vunpack.c.l.b16 %v3092
  %v3648 = vunpack.c.l.b16 %v3093
  %v3649 = vunpack.c.h.b16 %v3093
  %v3650 = vunpack.c.l.b16 %v3094
  %v3651 = vunpack.c.h.b16 %v3094
  %v3652 = vunpack.c.l.b16 %v3095
  %v3653 = vunpack.c.h.b16 %v3095
  %v3654 = vunpack.c.l.b16 %v3096
  %v3655 = vunpack.c.l.b16 %v3097
  %v3656 = vunpack.c.h.b16 %v3097
  %v3657 = vunpack.c.l.b16 %v3098
  %v3658 = vunpack.c.h.b16 %v3098
  %v3659 = vunpack.c.l.b16 %v3099
  %v3660 = vunpack.c.h.b16 %v3099
  %v3661 = vunpack.c.l.b16 %v3100
  %v3662 = vunpack.c.l.b16 %v3101
  %v3663 = vunpack.c.h.b16 %v3101
  %v3664 = vunpack.c.l.b16 %v3102
  %v3665 = vunpack.c.h.b16 %v3102
  %v3666 = vunpack.c.l.b16 %v3103
  %v3667 = vunpack.c.h.b16 %v3103
  %v3668 = vunpack.c.l.b16 %v3104
  %v3669 = vunpack.c.l.b16 %v3105
  %v3670 = vunpack.c.h.b16 %v3105
  %v3671 = vunpack.c.l.b16 %v3106
  %v3672 = vunpack.c.h.b16 %v3106
  %v3673 = vunpack.c.l.b16 %v3107
  %v3674 = vunpack.c.h.b16 %v3107
  %v3675 = vunpack.c.l.b16 %v3108
  %v3676 = vunpack.c.l.b16 %v3109
  %v3677 = vunpack.c.h.b16 %v3109
  %v3678 = vunpack.c.l.b16 %v3110
  %v3679 = vunpack.c.h.b16 %v3110
  %v3680 = vunpack.c.l.b16 %v3111
  %v3681 = vunpack.c.h.b16 %v3111
  %v3682 = vunpack.c.l.b16 %v3112
  %v3683 = vunpack.c.l.b16 %v3113
  %v3684 = vunpack.c.h.b16 %v3113
  %v3685 = vunpack.c.l.b16 %v3114
  %v3686 = vunpack.c.h.b16 %v3114
  %v3687 = vunpack.c.l.b16 %v3115
  %v3688 = vunpack.c.h.b16 %v3115
  %v3689 = vunpack.c.l.b16 %v3116
  %v3690 = vunpack.c.l.b16 %v3117
  %v3691 = vunpack.c.h.b16 %v3117
  %v3692 = vunpack.c.l.b16 %v3118
  %v3693 = vunpack.c.h.b16 %v3118
  %v3694 = vunpack.c.l.b16 %v3119
  %v3695 = vunpack.c.h.b16 %v3119
  %v3696 = vunpack.c.l.b16 %v3120
  %v3697 = vunpack.c.l.b16 %v3121
  %v3698 = vunpack.c.h.b16 %v3121
  %v3699 = vunpack.c.l.b16 %v3122
  %v3700 = vunpack.c.h.b16 %v3122
  %v3701 = vunpack.c.l.b16 %v3123
  %v3702 = vunpack.c.h.b16 %v3123
  %v3703 = vunpack.c.l.b16 %v3124
  %v3704 = vunpack.c.l.b16 %v3125
  %v3705 = vunpack.c.h.b16 %v3125
  %v3706 = vunpack.c.l.b16 %v3126
  %v3707 = vunpack.c.h.b16 %v3126
  %v3708 = vunpack.c.l.b16 %v3127
  %v3709 = vunpack.c.h.b16 %v3127
  %v3710 = vunpack.c.l.b16 %v3128
  %v3711 = vunpack.c.l.b16 %v3129
  %v3712 = vunpack.c.h.b16 %v3129
  %v3713 = vunpack.c.l.b16 %v3130
  %v3714 = vunpack.c.h.b16 %v3130
  %v3715 = vunpack.c.l.b16 %v3131
  %v3716 = vunpack.c.h.b16 %v3131
  %v3717 = vunpack.c.l.b16 %v3132
  %v3718 = vunpack.c.l.b16 %v3133
  %v3719 = vunpack.c.h.b16 %v3133
  %v3720 = vunpack.c.l.b16 %v3134
  %v3721 = vunpack.c.h.b16 %v3134
  %v3722 = vunpack.c.l.b16 %v3135
  %v3723 = vunpack.c.h.b16 %v3135
  %v3724 = vunpack.c.l.b16 %v3136
  %v3725 = vunpack.c.l.b16 %v3137
  %v3726 = vunpack.c.h.b16 %v3137
  %v3727 = vunpack.c.l.b16 %v3138
  %v3728 = vunpack.c.h.b16 %v3138
  %v3729 = vunpack.c.l.b16 %v3139
  %v3730 = vunpack.c.h.b16 %v3139
  %v3731 = vunpack.c.l.b16 %v3140
  %v3732 = vunpack.c.l.b16 %v3141
  %v3733 = vunpack.c.h.b16 %v3141
  %v3734 = vunpack.c.l.b16 %v3142
  %v3735 = vunpack.c.h.b16 %v3142
  %v3736 = vunpack.c.l.b16 %v3143
  %v3737 = vunpack.c.h.b16 %v3143
  %v3738 = vunpack.c.l.b16 %v3144
  %v3739 = vunpack.c.l.b16 %v3145
  %v3740 = vunpack.c.h.b16 %v3145
  %v3741 = vunpack.c.l.b16 %v3146
  %v3742 = vunpack.c.h.b16 %v3146
  %v3743 = vunpack.c.l.b16 %v3147
  %v3744 = vunpack.c.h.b16 %v3147
  %v3745 = vunpack.c.l.b16 %v3148
  %v3746 = vunpack.c.l.b16 %v3149
  %v3747 = vunpack.c.h.b16 %v3149
  %v3748 = vunpack.c.l.b16 %v3150
  %v3749 = vunpack.c.h.b16 %v3150
  %v3750 = vunpack.c.l.b16 %v3151
  %v3751 = vunpack.c.h.b16 %v3151
  %v3752 = vunpack.c.l.b16 %v3152
  %v3753 = vunpack.c.l.b16 %v3153
  %v3754 = vunpack.c.h.b16 %v3153
  %v3755 = vunpack.c.l.b16 %v3154
  %v3756 = vunpack.c.h.b16 %v3154
  %v3757 = vunpack.c.l.b16 %v3155
  %v3758 = vunpack.c.h.b16 %v3155
  %v3759 = vunpack.c.l.b16 %v3156
  %v3760 = vunpack.c.l.b16 %v3157
  %v3761 = vunpack.c.h.b16 %v3157
  %v3762 = vunpack.c.l.b16 %v3158
  %v3763 = vunpack.c.h.b16 %v3158
  %v3764 = vunpack.c.l.b16 %v3159
  %v3765 = vunpack.c.h.b16 %v3159
  %v3766 = vunpack.c.l.b16 %v3160
  %v3767 = vunpack.c.l.b16 %v3161
  %v3768 = vunpack.c.h.b16 %v3161
  %v3769 = vunpack.c.l.b16 %v3162
  %v3770 = vunpack.c.h.b16 %v3162
  %v3771 = vunpack.c.l.b16 %v3163
  %v3772 = vunpack.c.h.b16 %v3163
  %v3773 = vunpack.c.l.b16 %v3164
  %v3774 = vunpack.c.l.b16 %v3165
  %v3775 = vunpack.c.h.b16 %v3165
  %v3776 = vunpack.c.l.b16 %v3166
  %v3777 = vunpack.c.h.b16 %v3166
  %v3778 = vunpack.c.l.b16 %v3167
  %v3779 = vunpack.c.h.b16 %v3167
  %v3780 = vunpack.c.l.b16 %v3168
  %v3781 = vunpack.c.l.b16 %v3169
  %v3782 = vunpack.c.h.b16 %v3169
  %v3783 = vunpack.c.l.b16 %v3170
  %v3784 = vunpack.c.h.b16 %v3170
  %v3785 = vunpack.c.l.b16 %v3171
  %v3786 = vunpack.c.h.b16 %v3171
  %v3787 = vunpack.c.l.b16 %v3172
  %v3788 = vunpack.c.l.b16 %v3173
  %v3789 = vunpack.c.h.b16 %v3173
  %v3790 = vunpack.c.l.b16 %v3174
  %v3791 = vunpack.c.h.b16 %v3174
  %v3792 = vunpack.c.l.b16 %v3175
  %v3793 = vunpack.c.h.b16 %v3175
  %v3794 = vunpack.c.l.b16 %v3176
  %v3795 = vunpack.c.l.b16 %v3177
  %v3796 = vunpack.c.h.b16 %v3177
  %v3797 = vunpack.c.l.b16 %v3178
  %v3798 = vunpack.c.h.b16 %v3178
  %v3799 = vunpack.c.l.b16 %v3179
  %v3800 = vunpack.c.h.b16 %v3179
  %v3801 = vunpack.c.l.b16 %v3180
  %v3802 = vunpack.c.l.b16 %v3181
  %v3803 = vunpack.c.h.b16 %v3181
  %v3804 = vunpack.c.l.b16 %v3182
  %v3805 = vunpack.c.h.b16 %v3182
  %v3806 = vunpack.c.l.b16 %v3183
  %v3807 = vunpack.c.h.b16 %v3183
  %v3808 = vunpack.c.l.b16 %v3184
  %v3809 = vunpack.c.l.b16 %v3185
  %v3810 = vunpack.c.h.b16 %v3185
  %v3811 = vunpack.c.l.b16 %v3186
  %v3812 = vunpack.c.h.b16 %v3186
  %v3813 = vunpack.c.l.b16 %v3187
  %v3814 = vunpack.c.h.b16 %v3187
  %v3815 = vunpack.c.l.b16 %v3188
  %v3816 = vunpack.c.l.b16 %v3189
  %v3817 = vunpack.c.h.b16 %v3189
  %v3818 = vunpack.c.l.b16 %v3190
  %v3819 = vunpack.c.h.b16 %v3190
  %v3820 = vunpack.c.l.b16 %v3191
  %v3821 = vunpack.c.h.b16 %v3191
  %v3822 = vunpack.c.l.b16 %v3192
  %v3823 = vunpack.c.l.b16 %v3193
  %v3824 = vunpack.c.h.b16 %v3193
  %v3825 = vunpack.c.l.b16 %v3194
  %v3826 = vunpack.c.h.b16 %v3194
  %v3827 = vunpack.c.l.b16 %v3195
  %v3828 = vunpack.c.h.b16 %v3195
  %v3829 = vunpack.c.l.b16 %v3196
  %v3830 = vunpack.c.l.b16 %v3197
  %v3831 = vunpack.c.h.b16 %v3197
  %v3832 = vunpack.c.l.b16 %v3198
  %v3833 = vunpack.c.h.b16 %v3198
  %v3834 = vunpack.c.l.b16 %v3199
  %v3835 = vunpack.c.h.b16 %v3199
  %v3836 = vunpack.c.l.b16 %v3200
  %v3837 = vunpack.c.l.b16 %v3201
  %v3838 = vunpack.c.h.b16 %v3201
  %v3839 = vunpack.c.l.b16 %v3202
  %v3840 = vunpack.c.h.b16 %v3202
  %v3841 = vunpack.c.l.b16 %v3203
  %v3842 = vunpack.c.h.b16 %v3203
  %v3843 = vunpack.c.l.b16 %v3204
  %v3844 = vunpack.c.l.b16 %v3205
  %v3845 = vunpack.c.h.b16 %v3205
  %v3846 = vunpack.c.l.b16 %v3206
  %v3847 = vunpack.c.h.b16 %v3206
  %v3848 = vunpack.c.l.b16 %v3207
  %v3849 = vunpack.c.h.b16 %v3207
  %v3850 = vunpack.c.l.b16 %v3208
  %v3851 = vunpack.c.l.b16 %v3209
  %v3852 = vunpack.c.h.b16 %v3209
  %v3853 = vunpack.c.l.b16 %v3210
  %v3854 = vunpack.c.h.b16 %v3210
  %v3855 = vunpack.c.l.b16 %v3211
  %v3856 = vunpack.c.h.b16 %v3211
  %v3857 = vunpack.c.l.b16 %v3212
  %v3858 = vunpack.c.l.b16 %v3213
  %v3859 = vunpack.c.h.b16 %v3213
  %v3860 = vunpack.c.l.b16 %v3214
  %v3861 = vunpack.c.h.b16 %v3214
  %v3862 = vunpack.c.l.b16 %v3215
  %v3863 = vunpack.c.h.b16 %v3215
  %v3864 = vunpack.c.l.b16 %v3216
  %v3865 = vunpack.c.l.b16 %v3217
  %v3866 = vunpack.c.h.b16 %v3217
  %v3867 = vunpack.c.l.b16 %v3218
  %v3868 = vunpack.c.h.b16 %v3218
  %v3869 = vunpack.c.l.b16 %v3219
  %v3870 = vunpack.c.h.b16 %v3219
  %v3871 = vunpack.c.l.b16 %v3220
  %v3872 = vunpack.c.l.b16 %v3221
  %v3873 = vunpack.c.h.b16 %v3221
  %v3874 = vunpack.c.l.b16 %v3222
  %v3875 = vunpack.c.h.b16 %v3222
  %v3876 = vunpack.c.l.b16 %v3223
  %v3877 = vunpack.c.h.b16 %v3223
  %v3878 = vunpack.c.l.b16 %v3224
  %v3879 = vunpack.c.l.b16 %v3225
  %v3880 = vunpack.c.h.b16 %v3225
  %v3881 = vunpack.c.l.b16 %v3226
  %v3882 = vunpack.c.h.b16 %v3226
  %v3883 = vunpack.c.l.b16 %v3227
  %v3884 = vunpack.c.h.b16 %v3227
  %v3885 = vunpack.c.l.b16 %v3228
  %v3886 = vunpack.c.l.b16 %v3229
  %v3887 = vunpack.c.h.b16 %v3229
  %v3888 = vunpack.c.l.b16 %v3230
  %v3889 = vunpack.c.h.b16 %v3230
  %v3890 = vunpack.c.l.b16 %v3231
  %v3891 = vunpack.c.h.b16 %v3231
  %v3892 = vunpack.c.l.b16 %v3232
  %v3893 = vunpack.c.l.b16 %v3233
  %v3894 = vunpack.c.h.b16 %v3233
  %v3895 = vunpack.c.l.b16 %v3234
  %v3896 = vunpack.c.h.b16 %v3234
  %v3897 = vunpack.c.l.b16 %v3235
  %v3898 = vunpack.c.h.b16 %v3235
  %v3899 = vunpack.c.l.b16 %v3236
  %v3900 = vunpack.c.l.b16 %v3237
  %v3901 = vunpack.c.h.b16 %v3237
  %v3902 = vunpack.c.l.b16 %v3238
  %v3903 = vunpack.c.h.b16 %v3238
  %v3904 = vunpack.c.l.b16 %v3239
  %v3905 = vunpack.c.h.b16 %v3239
  %v3906 = vunpack.c.l.b16 %v3240
  %v3907 = vunpack.c.l.b16 %v3241
  %v3908 = vunpack.c.h.b16 %v3241
  %v3909 = vunpack.c.l.b16 %v3242
  %v3910 = vunpack.c.h.b16 %v3242
  %v3911 = vunpack.c.l.b16 %v3243
  %v3912 = vunpack.c.h.b16 %v3243
  %v3913 = vunpack.c.l.b16 %v3244
  %v3914 = vunpack.c.l.b16 %v3245
  %v3915 = vunpack.c.h.b16 %v3245
  %v3916 = vunpack.c.l.b16 %v3246
  %v3917 = vunpack.c.h.b16 %v3246
  %v3918 = vunpack.c.l.b16 %v3247
  %v3919 = vunpack.c.h.b16 %v3247
  %v3920 = vunpack.c.l.b16 %v3248
  %v3921 = vunpack.c.l.b16 %v3249
  %v3922 = vunpack.c.h.b16 %v3249
  %v3923 = vunpack.c.l.b16 %v3250
  %v3924 = vunpack.c.h.b16 %v3250
  %v3925 = vunpack.c.l.b16 %v3251
  %v3926 = vunpack.c.h.b16 %v3251
  %v3927 = vunpack.c.l.b16 %v3252
  %v3928 = vunpack.c.l.b16 %v3253
  %v3929 = vunpack.c.h.b16 %v3253
  %v3930 = vunpack.c.l.b16 %v3254
  %v3931 = vunpack.c.h.b16 %v3254
  %v3932 = vunpack.c.l.b16 %v3255
  %v3933 = vunpack.c.h.b16 %v3255
  %v3934 = vunpack.c.l.b16 %v3256
  %v3935 = vunpack.c.l.b16 %v3257
  %v3936 = vunpack.c.h.b16 %v3257
  %v3937 = vunpack.c.l.b16 %v3258
  %v3938 = vunpack.c.h.b16 %v3258
  %v3939 = vunpack.c.l.b16 %v3259
  %v3940 = vunpack.c.h.b16 %v3259
  %v3941 = vunpack.c.l.b16 %v3260
  %v3942 = vunpack.c.l.b16 %v3261
  %v3943 = vunpack.c.h.b16 %v3261
  %v3944 = vunpack.c.l.b16 %v3262
  %v3945 = vunpack.c.h.b16 %v3262
  %v3946 = vunpack.c.l.b16 %v3263
  %v3947 = vunpack.c.h.b16 %v3263
  %v3948 = vunpack.c.l.b16 %v3264
  %v3949 = vunpack.c.l.b16 %v3265
  %v3950 = vunpack.c.h.b16 %v3265
  %v3951 = vunpack.c.l.b16 %v3266
  %v3952 = vunpack.c.h.b16 %v3266
  %v3953 = vunpack.c.l.b16 %v3267
  %v3954 = vunpack.c.h.b16 %v3267
  %v3955 = vunpack.c.l.b16 %v3268
  %v3956 = vunpack.c.l.b16 %v3269
  %v3957 = vunpack.c.h.b16 %v3269
  %v3958 = vunpack.c.l.b16 %v3270
  %v3959 = vunpack.c.h.b16 %v3270
  %v3960 = vunpack.c.l.b16 %v3271
  %v3961 = vunpack.c.h.b16 %v3271
  %v3962 = vunpack.c.l.b16 %v3272
  %v3963 = vunpack.c.l.b16 %v3273
  %v3964 = vunpack.c.h.b16 %v3273
  %v3965 = vunpack.c.l.b16 %v3274
  %v3966 = vunpack.c.h.b16 %v3274
  %v3967 = vunpack.c.l.b16 %v3275
  %v3968 = vunpack.c.h.b16 %v3275
  %v3969 = vunpack.c.l.b16 %v3276
  %v3970 = vunpack.c.l.b16 %v3277
  %v3971 = vunpack.c.h.b16 %v3277
  %v3972 = vunpack.c.l.b16 %v3278
  %v3973 = vunpack.c.h.b16 %v3278
  %v3974 = vunpack.c.l.b16 %v3279
  %v3975 = vunpack.c.h.b16 %v3279
  %v3976 = vunpack.c.l.b16 %v3280
  %v3977 = vunpack.c.l.b16 %v3281
  %v3978 = vunpack.c.h.b16 %v3281
  %v3979 = vunpack.c.l.b16 %v3282
  %v3980 = vunpack.c.h.b16 %v3282
  %v3981 = vunpack.c.l.b16 %v3283
  %v3982 = vunpack.c.h.b16 %v3283
  %v3983 = vunpack.c.l.b16 %v3284
  %v3984 = vunpack.c.l.b16 %v3285
  %v3985 = vunpack.c.h.b16 %v3285
  %v3986 = vunpack.c.l.b16 %v3286
  %v3987 = vunpack.c.h.b16 %v3286
  %v3988 = vunpack.c.l.b16 %v3287
  %v3989 = vunpack.c.h.b16 %v3287
  %v3990 = vunpack.c.l.b16 %v3288
  %v3991 = vunpack.c.l.b16 %v3289
  %v3992 = vunpack.c.h.b16 %v3289
  %v3993 = vunpack.c.l.b16 %v3290
  %v3994 = vunpack.c.h.b16 %v3290
  %v3995 = vunpack.c.l.b16 %v3291
  %v3996 = vunpack.c.h.b16 %v3291
  %v3997 = vunpack.c.l.b16 %v3292
  %v3998 = vunpack.c.l.b16 %v3293
  %v3999 = vunpack.c.h.b16 %v3293
  %v4000 = vunpack.c.l.b16 %v3294
  %v4001 = vunpack.c.h.b16 %v3294
  %v4002 = vunpack.c.l.b16 %v3295
  %v4003 = vunpack.c.h.b16 %v3295
  %v4004 = vunpack.c.l.b16 %v3296
  %v4005 = vunpack.c.l.b16 %v3297
  %v4006 = vunpack.c.h.b16 %v3297
  %v4007 = vunpack.c.l.b16 %v3298
  %v4008 = vunpack.c.h.b16 %v3298
  %v4009 = vunpack.c.l.b16 %v3299
  %v4010 = vunpack.c.h.b16 %v3299
  %v4011 = vunpack.c.l.b16 %v3300
  %v4012 = vunpack.c.l.b16 %v3301
  %v4013 = vunpack.c.h.b16 %v3301
  %v4014 = vunpack.c.l.b16 %v3302
  %v4015 = vunpack.c.h.b16 %v3302
  %v4016 = vunpack.c.l.b16 %v3303
  %v4017 = vunpack.c.h.b16 %v3303
  %v4018 = vunpack.c.l.b16 %v3304
  %v4019 = vunpack.c.l.b16 %v3305
  %v4020 = vunpack.c.h.b16 %v3305
  %v4021 = vunpack.c.l.b16 %v3306
  %v4022 = vunpack.c.h.b16 %v3306
  %v4023 = vunpack.c.l.b16 %v3307
  %v4024 = vunpack.c.h.b16 %v3307
  %v4025 = vunpack.c.l.b16 %v3308
  %v4026 = vunpack.c.l.b16 %v3309
  %v4027 = vunpack.c.h.b16 %v3309
  %v4028 = vunpack.c.l.b16 %v3310
  %v4029 = vunpack.c.h.b16 %v3310
  %v4030 = vunpack.c.l.b16 %v3311
  %v4031 = vunpack.c.h.b16 %v3311
  %v4032 = vunpack.c.l.b16 %v3312
  %v4033 = vpack.c.b16 %v3592, %v3585
  %v4034 = vpack.c.b16 %v3593, %v3586
  %v4035 = vpack.c.b16 %v3594, %v3587
  %v4036 = vpack.c.b16 %v3595, %v3588
  %v4037 = vpack.c.b16 %v3596, %v3589
  %v4038 = vpack.c.b16 %v3597, %v3590
  %v4039 = vpack.c.b16 %v3598, %v3591
  %v4040 = vpack.c.b16 %v3606, %v3599
  %v4041 = vpack.c.b16 %v3607, %v3600
  %v4042 = vpack.c.b16 %v3608, %v3601
  %v4043 = vpack.c.b16 %v3609, %v3602
  %v4044 = vpack.c.b16 %v3610, %v3603
  %v4045 = vpack.c.b16 %v3611, %v3604
  %v4046 = vpack.c.b16 %v3612, %v3605
  %v4047 = vpack.c.b16 %v3620, %v3613
  %v4048 = vpack.c.b16 %v3621, %v3614
  %v4049 = vpack.c.b16 %v3622, %v3615
  %v4050 = vpack.c.b16 %v3623, %v3616
  %v4051 = vpack.c.b16 %v3624, %v3617
  %v4052 = vpack.c.b16 %v3625, %v3618
  %v4053 = vpack.c.b16 %v3626, %v3619
  %v4054 = vpack.c.b16 %v3634, %v3627
  %v4055 = vpack.c.b16 %v3635, %v3628
  %v4056 = vpack.c.b16 %v3636, %v3629
  %v4057 = vpack.c.b16 %v3637, %v3630
  %v4058 = vpack.c.b16 %v3638, %v3631
  %v4059 = vpack.c.b16 %v3639, %v3632
  %v4060 = vpack.c.b16 %v3640, %v3633
  %v4061 = vpack.c.b16 %v3648, %v3641
  %v4062 = vpack.c.b16 %v3649, %v3642
  %v4063 = vpack.c.b16 %v3650, %v3643
  %v4064 = vpack.c.b16 %v3651, %v3644
  %v4065 = vpack.c.b16 %v3652, %v3645
  %v4066 = vpack.c.b16 %v3653, %v3646
  %v4067 = vpack.c.b16 %v3654, %v3647
  %v4068 = vpack.c.b16 %v3662, %v3655
  %v4069 = vpack.c.b16 %v3663, %v3656
  %v4070 = vpack.c.b16 %v3664, %v3657
  %v4071 = vpack.c.b16 %v3665, %v3658
  %v4072 = vpack.c.b16 %v3666, %v3659
  %v4073 = vpack.c.b16 %v3667, %v3660
  %v4074 = vpack.c.b16 %v3668, %v3661
  %v4075 = vpack.c.b16 %v3676, %v3669
  %v4076 = vpack.c.b16 %v3677, %v3670
  %v4077 = vpack.c.b16 %v3678, %v3671
  %v4078 = vpack.c.b16 %v3679, %v3672
  %v4079 = vpack.c.b16 %v3680, %v3673
  %v4080 = vpack.c.b16 %v3681, %v3674
  %v4081 = vpack.c.b16 %v3682, %v3675
  %v4082 = vpack.c.b16 %v3690, %v3683
  %v4083 = vpack.c.b16 %v3691, %v3684
  %v4084 = vpack.c.b16 %v3692, %v3685
  %v4085 = vpack.c.b16 %v3693, %v3686
  %v4086 = vpack.c.b16 %v3694, %v3687
  %v4087 = vpack.c.b16 %v3695, %v3688
  %v4088 = vpack.c.b16 %v3696, %v3689
  %v4089 = vpack.c.b16 %v3704, %v3697
  %v4090 = vpack.c.b16 %v3705, %v3698
  %v4091 = vpack.c.b16 %v3706, %v3699
  %v4092 = vpack.c.b16 %v3707, %v3700
  %v4093 = vpack.c.b16 %v3708, %v3701
  %v4094 = vpack.c.b16 %v3709, %v3702
  %v4095 = vpack.c.b16 %v3710, %v3703
  %v4096 = vpack.c.b16 %v3718, %v3711
  %v4097 = vpack.c.b16 %v3719, %v3712
  %v4098 = vpack.c.b16 %v3720, %v3713
  %v4099 = vpack.c.b16 %v3721, %v3714
  %v4100 = vpack.c.b16 %v3722, %v3715
  %v4101 = vpack.c.b16 %v3723, %v3716
  %v4102 = vpack.c.b16 %v3724, %v3717
  %v4103 = vpack.c.b16 %v3732, %v3725
  %v4104 = vpack.c.b16 %v3733, %v3726
  %v4105 = vpack.c.b16 %v3734, %v3727
  %v4106 = vpack.c.b16 %v3735, %v3728
  %v4107 = vpack.c.b16 %v3736, %v3729
  %v4108 = vpack.c.b16 %v3737, %v3730
  %v4109 = vpack.c.b16 %v3738, %v3731
  %v4110 = vpack.c.b16 %v3746, %v3739
  %v4111 = vpack.c.b16 %v3747, %v3740
  %v4112 = vpack.c.b16 %v3748, %v3741
  %v4113 = vpack.c.b16 %v3749, %v3742
  %v4114 = vpack.c.b16 %v3750, %v3743
  %v4115 = vpack.c.b16 %v3751, %v3744
  %v4116 = vpack.c.b16 %v3752, %v3745
  %v4117 = vpack.c.b16 %v3760, %v3753
  %v4118 = vpack.c.b16 %v3761, %v3754
  %v4119 = vpack.c.b16 %v3762, %v3755
  %v4120 = vpack.c.b16 %v3763, %v3756
  %v4121 = vpack.c.b16 %v3764, %v3757
  %v4122 = vpack.c.b16 %v3765, %v3758
  %v4123 = vpack.c.b16 %v3766, %v3759
  %v4124 = vpack.c.b16 %v3774, %v3767
  %v4125 = vpack.c.b16 %v3775, %v3768
  %v4126 = vpack.c.b16 %v3776, %v3769
  %v4127 = vpack.c.b16 %v3777, %v3770
  %v4128 = vpack.c.b16 %v3778, %v3771
  %v4129 = vpack.c.b16 %v3779, %v3772
  %v4130 = vpack.c.b16 %v3780, %v3773
  %v4131 = vpack.c.b16 %v3788, %v3781
  %v4132 = vpack.c.b16 %v3789, %v3782
  %v4133 = vpack.c.b16 %v3790, %v3783
  %v4134 = vpack.c.b16 %v3791, %v3784
  %v4135 = vpack.c.b16 %v3792, %v3785
  %v4136 = vpack.c.b16 %v3793, %v3786
  %v4137 = vpack.c.b16 %v3794, %v3787
  %v4138 = vpack.c.b16 %v3802, %v3795
  %v4139 = vpack.c.b16 %v3803, %v3796
  %v4140 = vpack.c.b16 %v3804, %v3797
  %v4141 = vpack.c.b16 %v3805, %v3798
  %v4142 = vpack.c.b16 %v3806, %v3799
  %v4143 = vpack.c.b16 %v3807, %v3800
  %v4144 = vpack.c.b16 %v3808, %v3801
  %v4145 = vpack.c.b16 %v3816, %v3809
  %v4146 = vpack.c.b16 %v3817, %v3810
  %v4147 = vpack.c.b16 %v3818, %v3811
  %v4148 = vpack.c.b16 %v3819, %v3812
  %v4149 = vpack.c.b16 %v3820, %v3813
  %v4150 = vpack.c.b16 %v3821, %v3814
  %v4151 = vpack.c.b16 %v3822, %v3815
  %v4152 = vpack.c.b16 %v3830, %v3823
  %v4153 = vpack.c.b16 %v3831, %v3824
  %v4154 = vpack.c.b16 %v3832, %v3825
  %v4155 = vpack.c.b16 %v3833, %v3826
  %v4156 = vpack.c.b16 %v3834, %v3827
  %v4157 = vpack.c.b16 %v3835, %v3828
  %v4158 = vpack.c.b16 %v3836, %v3829
  %v4159 = vpack.c.b16 %v3844, %v3837
  %v4160 = vpack.c.b16 %v3845, %v3838
  %v4161 = vpack.c.b16 %v3846, %v3839
  %v4162 = vpack.c.b16 %v3847, %v3840
  %v4163 = vpack.c.b16 %v3848, %v3841
  %v4164 = vpack.c.b16 %v3849, %v3842
  %v4165 = vpack.c.b16 %v3850, %v3843
  %v4166 = vpack.c.b16 %v3858, %v3851
  %v4167 = vpack.c.b16 %v3859, %v3852
  %v4168 = vpack.c.b16 %v3860, %v3853
  %v4169 = vpack.c.b16 %v3861, %v3854
  %v4170 = vpack.c.b16 %v3862, %v3855
  %v4171 = vpack.c.b16 %v3863, %v3856
  %v4172 = vpack.c.b16 %v3864, %v3857
  %v4173 = vpack.c.b16 %v3872, %v3865
  %v4174 = vpack.c.b16 %v3873, %v3866
  %v4175 = vpack.c.b16 %v3874, %v3867
  %v4176 = vpack.c.b16 %v3875, %v3868
  %v4177 = vpack.c.b16 %v3876, %v3869
  %v4178 = vpack.c.b16 %v3877, %v3870
  %v4179 = vpack.c.b16 %v3878, %v3871
  %v4180 = vpack.c.b16 %v3886, %v3879
  %v4181 = vpack.c.b16 %v3887, %v3880
  %v4182 = vpack.c.b16 %v3888, %v3881
  %v4183 = vpack.c.b16 %v3889, %v3882
  %v4184 = vpack.c.b16 %v3890, %v3883
  %v4185 = vpack.c.b16 %v3891, %v3884
  %v4186 = vpack.c.b16 %v3892, %v3885
  %v4187 = vpack.c.b16 %v3900, %v3893
  %v4188 = vpack.c.b16 %v3901, %v3894
  %v4189 = vpack.c.b16 %v3902, %v3895
  %v4190 = vpack.c.b16 %v3903, %v3896
  %v4191 = vpack.c.b16 %v3904, %v3897
  %v4192 = vpack.c.b16 %v3905, %v3898
  %v4193 = vpack.c.b16 %v3906, %v3899
  %v4194 = vpack.c.b16 %v3914, %v3907
  %v4195 = vpack.c.b16 %v3915, %v3908
  %v4196 = vpack.c.b16 %v3916, %v3909
  %v4197 = vpack.c.b16 %v3917, %v3910
  %v4198 = vpack.c.b16 %v3918, %v3911
  %v4199 = vpack.c.b16 %v3919, %v3912
  %v4200 = vpack.c.b16 %v3920, %v3913
  %v4201 = vpack.c.b16 %v3928, %v3921
  %v4202 = vpack.c.b16 %v3929, %v3922
  %v4203 = vpack.c.b16 %v3930, %v3923
  %v4204 = vpack.c.b16 %v3931, %v3924
  %v4205 = vpack.c.b16 %v3932, %v3925
  %v4206 = vpack.c.b16 %v3933, %v3926
  %v4207 = vpack.c.b16 %v3934, %v3927
  %v4208 = vpack.c.b16 %v3942, %v3935
  %v4209 = vpack.c.b16 %v3943, %v3936
  %v4210 = vpack.c.b16 %v3944, %v3937
  %v4211 = vpack.c.b16 %v3945, %v3938
  %v4212 = vpack.c.b16 %v3946, %v3939
  %v4213 = vpack.c.b16 %v3947, %v3940
  %v4214 = vpack.c.b16 %v3948, %v3941
  %v4215 = vpack.c.b16 %v3956, %v3949
  %v4216 = vpack.c.b16 %v3957, %v3950
  %v4217 = vpack.c.b16 %v3958, %v3951
  %v4218 = vpack.c.b16 %v3959, %v3952
  %v4219 = vpack.c.b16 %v3960, %v3953
  %v4220 = vpack.c.b16 %v3961, %v3954
  %v4221 = vpack.c.b16 %v3962, %v3955
  %v4222 = vpack.c.b16 %v3970, %v3963
  %v4223 = vpack.c.b16 %v3971, %v3964
  %v4224 = vpack.c.b16 %v3972, %v3965
  %v4225 = vpack.c.b16 %v3973, %v3966
  %v4226 = vpack.c.b16 %v3974, %v3967
  %v4227 = vpack.c.b16 %v3975, %v3968
  %v4228 = vpack.c.b16 %v3976, %v3969
  %v4229 = vpack.c.b16 %v3984, %v3977
  %v4230 = vpack.c.b16 %v3985, %v3978
  %v4231 = vpack.c.b16 %v3986, %v3979
  %v4232 = vpack.c.b16 %v3987, %v3980
  %v4233 = vpack.c.b16 %v3988, %v3981
  %v4234 = vpack.c.b16 %v3989, %v3982
  %v4235 = vpack.c.b16 %v3990, %v3983
  %v4236 = vpack.c.b16 %v3998, %v3991
  %v4237 = vpack.c.b16 %v3999, %v3992
  %v4238 = vpack.c.b16 %v4000, %v3993
  %v4239 = vpack.c.b16 %v4001, %v3994
  %v4240 = vpack.c.b16 %v4002, %v3995
  %v4241 = vpack.c.b16 %v4003, %v3996
  %v4242 = vpack.c.b16 %v4004, %v3997
  %v4243 = vpack.c.b16 %v4012, %v4005
  %v4244 = vpack.c.b16 %v4013, %v4006
  %v4245 = vpack.c.b16 %v4014, %v4007
  %v4246 = vpack.c.b16 %v4015, %v4008
  %v4247 = vpack.c.b16 %v4016, %v4009
  %v4248 = vpack.c.b16 %v4017, %v4010
  %v4249 = vpack.c.b16 %v4018, %v4011
  %v4250 = vpack.c.b16 %v4026, %v4019
  %v4251 = vpack.c.b16 %v4027, %v4020
  %v4252 = vpack.c.b16 %v4028, %v4021
  %v4253 = vpack.c.b16 %v4029, %v4022
  %v4254 = vpack.c.b16 %v4030, %v4023
  %v4255 = vpack.c.b16 %v4031, %v4024
  %v4256 = vpack.c.b16 %v4032, %v4025
  %4481 = vmatpush.bf16.msra.mxu0 %v4082
  %4482 = vmatpush.bf16.msra.mxu0 %v4075
  %4483 = vmatpush.bf16.msra.mxu0 %v4068
  %4484 = vmatpush.bf16.msra.mxu0 %v4061
  %4485 = vmatpush.bf16.msra.mxu0 %v4054
  %4486 = vmatpush.bf16.msra.mxu0 %v4047
  %4487 = vmatpush.bf16.msra.mxu0 %v4040
  %4488 = vmatpush.bf16.msra.mxu0 %v4033
  %4489 = vmatmul.bf16.gmra.mxu0 %v3053
  %v4490 = vpop.f32.mrf.mxu0
  %v4491 = vadd.f32 %v3315, %v4490
  %v4492 = vpop.f32.mrf.mxu0
  %4493 = vdwg.mxu0
  %4494 = vmatpush.bf16.msra.mxu0 %v4138
  %4495 = vmatpush.bf16.msra.mxu0 %v4131
  %4496 = vmatpush.bf16.msra.mxu0 %v4124
  %4497 = vmatpush.bf16.msra.mxu0 %v4117
  %4498 = vmatpush.bf16.msra.mxu0 %v4110
  %4499 = vmatpush.bf16.msra.mxu0 %v4103
  %4500 = vmatpush.bf16.msra.mxu0 %v4096
  %4501 = vmatpush.bf16.msra.mxu0 %v4089
  %4502 = vmatmul.bf16.gmra.mxu0 %v3054
  %v4503 = vpop.f32.mrf.mxu0
  %v4504 = vadd.f32 %v4491, %v4503
  %v4505 = vpop.f32.mrf.mxu0
  %4506 = vdwg.mxu0
  %4507 = vmatpush.bf16.msra.mxu0 %v4194
  %4508 = vmatpush.bf16.msra.mxu0 %v4187
  %4509 = vmatpush.bf16.msra.mxu0 %v4180
  %4510 = vmatpush.bf16.msra.mxu0 %v4173
  %4511 = vmatpush.bf16.msra.mxu0 %v4166
  %4512 = vmatpush.bf16.msra.mxu0 %v4159
  %4513 = vmatpush.bf16.msra.mxu0 %v4152
  %4514 = vmatpush.bf16.msra.mxu0 %v4145
  %4515 = vmatmul.bf16.gmra.mxu0 %v3055
  %v4516 = vpop.f32.mrf.mxu0
  %v4517 = vadd.f32 %v4504, %v4516
  %v4518 = vpop.f32.mrf.mxu0
  %4519 = vdwg.mxu0
  %4520 = vmatpush.bf16.msra.mxu0 %v4250
  %4521 = vmatpush.bf16.msra.mxu0 %v4243
  %4522 = vmatpush.bf16.msra.mxu0 %v4236
  %4523 = vmatpush.bf16.msra.mxu0 %v4229
  %4524 = vmatpush.bf16.msra.mxu0 %v4222
  %4525 = vmatpush.bf16.msra.mxu0 %v4215
  %4526 = vmatpush.bf16.msra.mxu0 %v4208
  %4527 = vmatpush.bf16.msra.mxu0 %v4201
  %4528 = vmatmul.bf16.gmra.mxu0 %v3056
  %v4529 = vpop.f32.mrf.mxu0
  %v4530 = vadd.f32 %v4517, %v4529
  %v4531 = vpop.f32.mrf.mxu0
  %4532 = vdwg.mxu0
  %4533 = vmatpush.bf16.msra.mxu0 %v4083
  %4534 = vmatpush.bf16.msra.mxu0 %v4076
  %4535 = vmatpush.bf16.msra.mxu0 %v4069
  %4536 = vmatpush.bf16.msra.mxu0 %v4062
  %4537 = vmatpush.bf16.msra.mxu0 %v4055
  %4538 = vmatpush.bf16.msra.mxu0 %v4048
  %4539 = vmatpush.bf16.msra.mxu0 %v4041
  %4540 = vmatpush.bf16.msra.mxu0 %v4034
  %4541 = vmatmul.bf16.gmra.mxu0 %v3053
  %v4542 = vpop.f32.mrf.mxu0
  %v4543 = vadd.f32 %v3316, %v4542
  %v4544 = vpop.f32.mrf.mxu0
  %4545 = vdwg.mxu0
  %4546 = vmatpush.bf16.msra.mxu0 %v4139
  %4547 = vmatpush.bf16.msra.mxu0 %v4132
  %4548 = vmatpush.bf16.msra.mxu0 %v4125
  %4549 = vmatpush.bf16.msra.mxu0 %v4118
  %4550 = vmatpush.bf16.msra.mxu0 %v4111
  %4551 = vmatpush.bf16.msra.mxu0 %v4104
  %4552 = vmatpush.bf16.msra.mxu0 %v4097
  %4553 = vmatpush.bf16.msra.mxu0 %v4090
  %4554 = vmatmul.bf16.gmra.mxu0 %v3054
  %v4555 = vpop.f32.mrf.mxu0
  %v4556 = vadd.f32 %v4543, %v4555
  %v4557 = vpop.f32.mrf.mxu0
  %4558 = vdwg.mxu0
  %4559 = vmatpush.bf16.msra.mxu0 %v4195
  %4560 = vmatpush.bf16.msra.mxu0 %v4188
  %4561 = vmatpush.bf16.msra.mxu0 %v4181
  %4562 = vmatpush.bf16.msra.mxu0 %v4174
  %4563 = vmatpush.bf16.msra.mxu0 %v4167
  %4564 = vmatpush.bf16.msra.mxu0 %v4160
  %4565 = vmatpush.bf16.msra.mxu0 %v4153
  %4566 = vmatpush.bf16.msra.mxu0 %v4146
  %4567 = vmatmul.bf16.gmra.mxu0 %v3055
  %v4568 = vpop.f32.mrf.mxu0
  %v4569 = vadd.f32 %v4556, %v4568
  %v4570 = vpop.f32.mrf.mxu0
  %4571 = vdwg.mxu0
  %4572 = vmatpush.bf16.msra.mxu0 %v4251
  %4573 = vmatpush.bf16.msra.mxu0 %v4244
  %4574 = vmatpush.bf16.msra.mxu0 %v4237
  %4575 = vmatpush.bf16.msra.mxu0 %v4230
  %4576 = vmatpush.bf16.msra.mxu0 %v4223
  %4577 = vmatpush.bf16.msra.mxu0 %v4216
  %4578 = vmatpush.bf16.msra.mxu0 %v4209
  %4579 = vmatpush.bf16.msra.mxu0 %v4202
  %4580 = vmatmul.bf16.gmra.mxu0 %v3056
  %v4581 = vpop.f32.mrf.mxu0
  %v4582 = vadd.f32 %v4569, %v4581
  %v4583 = vpop.f32.mrf.mxu0
  %4584 = vdwg.mxu0
  %4585 = vmatpush.bf16.msra.mxu0 %v4084
  %4586 = vmatpush.bf16.msra.mxu0 %v4077
  %4587 = vmatpush.bf16.msra.mxu0 %v4070
  %4588 = vmatpush.bf16.msra.mxu0 %v4063
  %4589 = vmatpush.bf16.msra.mxu0 %v4056
  %4590 = vmatpush.bf16.msra.mxu0 %v4049
  %4591 = vmatpush.bf16.msra.mxu0 %v4042
  %4592 = vmatpush.bf16.msra.mxu0 %v4035
  %4593 = vmatmul.bf16.gmra.mxu0 %v3053
  %v4594 = vpop.f32.mrf.mxu0
  %v4595 = vadd.f32 %v3317, %v4594
  %v4596 = vpop.f32.mrf.mxu0
  %4597 = vdwg.mxu0
  %4598 = vmatpush.bf16.msra.mxu0 %v4140
  %4599 = vmatpush.bf16.msra.mxu0 %v4133
  %4600 = vmatpush.bf16.msra.mxu0 %v4126
  %4601 = vmatpush.bf16.msra.mxu0 %v4119
  %4602 = vmatpush.bf16.msra.mxu0 %v4112
  %4603 = vmatpush.bf16.msra.mxu0 %v4105
  %4604 = vmatpush.bf16.msra.mxu0 %v4098
  %4605 = vmatpush.bf16.msra.mxu0 %v4091
  %4606 = vmatmul.bf16.gmra.mxu0 %v3054
  %v4607 = vpop.f32.mrf.mxu0
  %v4608 = vadd.f32 %v4595, %v4607
  %v4609 = vpop.f32.mrf.mxu0
  %4610 = vdwg.mxu0
  %4611 = vmatpush.bf16.msra.mxu0 %v4196
  %4612 = vmatpush.bf16.msra.mxu0 %v4189
  %4613 = vmatpush.bf16.msra.mxu0 %v4182
  %4614 = vmatpush.bf16.msra.mxu0 %v4175
  %4615 = vmatpush.bf16.msra.mxu0 %v4168
  %4616 = vmatpush.bf16.msra.mxu0 %v4161
  %4617 = vmatpush.bf16.msra.mxu0 %v4154
  %4618 = vmatpush.bf16.msra.mxu0 %v4147
  %4619 = vmatmul.bf16.gmra.mxu0 %v3055
  %v4620 = vpop.f32.mrf.mxu0
  %v4621 = vadd.f32 %v4608, %v4620
  %v4622 = vpop.f32.mrf.mxu0
  %4623 = vdwg.mxu0
  %4624 = vmatpush.bf16.msra.mxu0 %v4252
  %4625 = vmatpush.bf16.msra.mxu0 %v4245
  %4626 = vmatpush.bf16.msra.mxu0 %v4238
  %4627 = vmatpush.bf16.msra.mxu0 %v4231
  %4628 = vmatpush.bf16.msra.mxu0 %v4224
  %4629 = vmatpush.bf16.msra.mxu0 %v4217
  %4630 = vmatpush.bf16.msra.mxu0 %v4210
  %4631 = vmatpush.bf16.msra.mxu0 %v4203
  %4632 = vmatmul.bf16.gmra.mxu0 %v3056
  %v4633 = vpop.f32.mrf.mxu0
  %v4634 = vadd.f32 %v4621, %v4633
  %v4635 = vpop.f32.mrf.mxu0
  %4636 = vdwg.mxu0
  %4637 = vmatpush.bf16.msra.mxu0 %v4085
  %4638 = vmatpush.bf16.msra.mxu0 %v4078
  %4639 = vmatpush.bf16.msra.mxu0 %v4071
  %4640 = vmatpush.bf16.msra.mxu0 %v4064
  %4641 = vmatpush.bf16.msra.mxu0 %v4057
  %4642 = vmatpush.bf16.msra.mxu0 %v4050
  %4643 = vmatpush.bf16.msra.mxu0 %v4043
  %4644 = vmatpush.bf16.msra.mxu0 %v4036
  %4645 = vmatmul.bf16.gmra.mxu0 %v3053
  %v4646 = vpop.f32.mrf.mxu0
  %v4647 = vadd.f32 %v3318, %v4646
  %v4648 = vpop.f32.mrf.mxu0
  %4649 = vdwg.mxu0
  %4650 = vmatpush.bf16.msra.mxu0 %v4141
  %4651 = vmatpush.bf16.msra.mxu0 %v4134
  %4652 = vmatpush.bf16.msra.mxu0 %v4127
  %4653 = vmatpush.bf16.msra.mxu0 %v4120
  %4654 = vmatpush.bf16.msra.mxu0 %v4113
  %4655 = vmatpush.bf16.msra.mxu0 %v4106
  %4656 = vmatpush.bf16.msra.mxu0 %v4099
  %4657 = vmatpush.bf16.msra.mxu0 %v4092
  %4658 = vmatmul.bf16.gmra.mxu0 %v3054
  %v4659 = vpop.f32.mrf.mxu0
  %v4660 = vadd.f32 %v4647, %v4659
  %v4661 = vpop.f32.mrf.mxu0
  %4662 = vdwg.mxu0
  %4663 = vmatpush.bf16.msra.mxu0 %v4197
  %4664 = vmatpush.bf16.msra.mxu0 %v4190
  %4665 = vmatpush.bf16.msra.mxu0 %v4183
  %4666 = vmatpush.bf16.msra.mxu0 %v4176
  %4667 = vmatpush.bf16.msra.mxu0 %v4169
  %4668 = vmatpush.bf16.msra.mxu0 %v4162
  %4669 = vmatpush.bf16.msra.mxu0 %v4155
  %4670 = vmatpush.bf16.msra.mxu0 %v4148
  %4671 = vmatmul.bf16.gmra.mxu0 %v3055
  %v4672 = vpop.f32.mrf.mxu0
  %v4673 = vadd.f32 %v4660, %v4672
  %v4674 = vpop.f32.mrf.mxu0
  %4675 = vdwg.mxu0
  %4676 = vmatpush.bf16.msra.mxu0 %v4253
  %4677 = vmatpush.bf16.msra.mxu0 %v4246
  %4678 = vmatpush.bf16.msra.mxu0 %v4239
  %4679 = vmatpush.bf16.msra.mxu0 %v4232
  %4680 = vmatpush.bf16.msra.mxu0 %v4225
  %4681 = vmatpush.bf16.msra.mxu0 %v4218
  %4682 = vmatpush.bf16.msra.mxu0 %v4211
  %4683 = vmatpush.bf16.msra.mxu0 %v4204
  %4684 = vmatmul.bf16.gmra.mxu0 %v3056
  %v4685 = vpop.f32.mrf.mxu0
  %v4686 = vadd.f32 %v4673, %v4685
  %v4687 = vpop.f32.mrf.mxu0
  %4688 = vdwg.mxu0
  %4689 = vmatpush.bf16.msra.mxu0 %v4086
  %4690 = vmatpush.bf16.msra.mxu0 %v4079
  %4691 = vmatpush.bf16.msra.mxu0 %v4072
  %4692 = vmatpush.bf16.msra.mxu0 %v4065
  %4693 = vmatpush.bf16.msra.mxu0 %v4058
  %4694 = vmatpush.bf16.msra.mxu0 %v4051
  %4695 = vmatpush.bf16.msra.mxu0 %v4044
  %4696 = vmatpush.bf16.msra.mxu0 %v4037
  %4697 = vmatmul.bf16.gmra.mxu0 %v3053
  %v4698 = vpop.f32.mrf.mxu0
  %v4699 = vadd.f32 %v3319, %v4698
  %v4700 = vpop.f32.mrf.mxu0
  %4701 = vdwg.mxu0
  %4702 = vmatpush.bf16.msra.mxu0 %v4142
  %4703 = vmatpush.bf16.msra.mxu0 %v4135
  %4704 = vmatpush.bf16.msra.mxu0 %v4128
  %4705 = vmatpush.bf16.msra.mxu0 %v4121
  %4706 = vmatpush.bf16.msra.mxu0 %v4114
  %4707 = vmatpush.bf16.msra.mxu0 %v4107
  %4708 = vmatpush.bf16.msra.mxu0 %v4100
  %4709 = vmatpush.bf16.msra.mxu0 %v4093
  %4710 = vmatmul.bf16.gmra.mxu0 %v3054
  %v4711 = vpop.f32.mrf.mxu0
  %v4712 = vadd.f32 %v4699, %v4711
  %v4713 = vpop.f32.mrf.mxu0
  %4714 = vdwg.mxu0
  %4715 = vmatpush.bf16.msra.mxu0 %v4198
  %4716 = vmatpush.bf16.msra.mxu0 %v4191
  %4717 = vmatpush.bf16.msra.mxu0 %v4184
  %4718 = vmatpush.bf16.msra.mxu0 %v4177
  %4719 = vmatpush.bf16.msra.mxu0 %v4170
  %4720 = vmatpush.bf16.msra.mxu0 %v4163
  %4721 = vmatpush.bf16.msra.mxu0 %v4156
  %4722 = vmatpush.bf16.msra.mxu0 %v4149
  %4723 = vmatmul.bf16.gmra.mxu0 %v3055
  %v4724 = vpop.f32.mrf.mxu0
  %v4725 = vadd.f32 %v4712, %v4724
  %v4726 = vpop.f32.mrf.mxu0
  %4727 = vdwg.mxu0
  %4728 = vmatpush.bf16.msra.mxu0 %v4254
  %4729 = vmatpush.bf16.msra.mxu0 %v4247
  %4730 = vmatpush.bf16.msra.mxu0 %v4240
  %4731 = vmatpush.bf16.msra.mxu0 %v4233
  %4732 = vmatpush.bf16.msra.mxu0 %v4226
  %4733 = vmatpush.bf16.msra.mxu0 %v4219
  %4734 = vmatpush.bf16.msra.mxu0 %v4212
  %4735 = vmatpush.bf16.msra.mxu0 %v4205
  %4736 = vmatmul.bf16.gmra.mxu0 %v3056
  %v4737 = vpop.f32.mrf.mxu0
  %v4738 = vadd.f32 %v4725, %v4737
  %v4739 = vpop.f32.mrf.mxu0
  %4740 = vdwg.mxu0
  %4741 = vmatpush.bf16.msra.mxu0 %v4087
  %4742 = vmatpush.bf16.msra.mxu0 %v4080
  %4743 = vmatpush.bf16.msra.mxu0 %v4073
  %4744 = vmatpush.bf16.msra.mxu0 %v4066
  %4745 = vmatpush.bf16.msra.mxu0 %v4059
  %4746 = vmatpush.bf16.msra.mxu0 %v4052
  %4747 = vmatpush.bf16.msra.mxu0 %v4045
  %4748 = vmatpush.bf16.msra.mxu0 %v4038
  %4749 = vmatmul.bf16.gmra.mxu0 %v3053
  %v4750 = vpop.f32.mrf.mxu0
  %v4751 = vadd.f32 %v3320, %v4750
  %v4752 = vpop.f32.mrf.mxu0
  %4753 = vdwg.mxu0
  %4754 = vmatpush.bf16.msra.mxu0 %v4143
  %4755 = vmatpush.bf16.msra.mxu0 %v4136
  %4756 = vmatpush.bf16.msra.mxu0 %v4129
  %4757 = vmatpush.bf16.msra.mxu0 %v4122
  %4758 = vmatpush.bf16.msra.mxu0 %v4115
  %4759 = vmatpush.bf16.msra.mxu0 %v4108
  %4760 = vmatpush.bf16.msra.mxu0 %v4101
  %4761 = vmatpush.bf16.msra.mxu0 %v4094
  %4762 = vmatmul.bf16.gmra.mxu0 %v3054
  %v4763 = vpop.f32.mrf.mxu0
  %v4764 = vadd.f32 %v4751, %v4763
  %v4765 = vpop.f32.mrf.mxu0
  %4766 = vdwg.mxu0
  %4767 = vmatpush.bf16.msra.mxu0 %v4199
  %4768 = vmatpush.bf16.msra.mxu0 %v4192
  %4769 = vmatpush.bf16.msra.mxu0 %v4185
  %4770 = vmatpush.bf16.msra.mxu0 %v4178
  %4771 = vmatpush.bf16.msra.mxu0 %v4171
  %4772 = vmatpush.bf16.msra.mxu0 %v4164
  %4773 = vmatpush.bf16.msra.mxu0 %v4157
  %4774 = vmatpush.bf16.msra.mxu0 %v4150
  %4775 = vmatmul.bf16.gmra.mxu0 %v3055
  %v4776 = vpop.f32.mrf.mxu0
  %v4777 = vadd.f32 %v4764, %v4776
  %v4778 = vpop.f32.mrf.mxu0
  %4779 = vdwg.mxu0
  %4780 = vmatpush.bf16.msra.mxu0 %v4255
  %4781 = vmatpush.bf16.msra.mxu0 %v4248
  %4782 = vmatpush.bf16.msra.mxu0 %v4241
  %4783 = vmatpush.bf16.msra.mxu0 %v4234
  %4784 = vmatpush.bf16.msra.mxu0 %v4227
  %4785 = vmatpush.bf16.msra.mxu0 %v4220
  %4786 = vmatpush.bf16.msra.mxu0 %v4213
  %4787 = vmatpush.bf16.msra.mxu0 %v4206
  %4788 = vmatmul.bf16.gmra.mxu0 %v3056
  %v4789 = vpop.f32.mrf.mxu0
  %v4790 = vadd.f32 %v4777, %v4789
  %v4791 = vpop.f32.mrf.mxu0
  %4792 = vdwg.mxu0
  %4793 = vmatpush.bf16.msra.mxu0 %v4088
  %4794 = vmatpush.bf16.msra.mxu0 %v4081
  %4795 = vmatpush.bf16.msra.mxu0 %v4074
  %4796 = vmatpush.bf16.msra.mxu0 %v4067
  %4797 = vmatpush.bf16.msra.mxu0 %v4060
  %4798 = vmatpush.bf16.msra.mxu0 %v4053
  %4799 = vmatpush.bf16.msra.mxu0 %v4046
  %4800 = vmatpush.bf16.msra.mxu0 %v4039
  %4801 = vmatmul.bf16.gmra.mxu0 %v3053
  %v4802 = vpop.f32.mrf.mxu0
  %v4803 = vadd.f32 %v3321, %v4802
  %v4804 = vpop.f32.mrf.mxu0
  %4805 = vdwg.mxu0
  %4806 = vmatpush.bf16.msra.mxu0 %v4144
  %4807 = vmatpush.bf16.msra.mxu0 %v4137
  %4808 = vmatpush.bf16.msra.mxu0 %v4130
  %4809 = vmatpush.bf16.msra.mxu0 %v4123
  %4810 = vmatpush.bf16.msra.mxu0 %v4116
  %4811 = vmatpush.bf16.msra.mxu0 %v4109
  %4812 = vmatpush.bf16.msra.mxu0 %v4102
  %4813 = vmatpush.bf16.msra.mxu0 %v4095
  %4814 = vmatmul.bf16.gmra.mxu0 %v3054
  %v4815 = vpop.f32.mrf.mxu0
  %v4816 = vadd.f32 %v4803, %v4815
  %v4817 = vpop.f32.mrf.mxu0
  %4818 = vdwg.mxu0
  %4819 = vmatpush.bf16.msra.mxu0 %v4200
  %4820 = vmatpush.bf16.msra.mxu0 %v4193
  %4821 = vmatpush.bf16.msra.mxu0 %v4186
  %4822 = vmatpush.bf16.msra.mxu0 %v4179
  %4823 = vmatpush.bf16.msra.mxu0 %v4172
  %4824 = vmatpush.bf16.msra.mxu0 %v4165
  %4825 = vmatpush.bf16.msra.mxu0 %v4158
  %4826 = vmatpush.bf16.msra.mxu0 %v4151
  %4827 = vmatmul.bf16.gmra.mxu0 %v3055
  %v4828 = vpop.f32.mrf.mxu0
  %v4829 = vadd.f32 %v4816, %v4828
  %v4830 = vpop.f32.mrf.mxu0
  %4831 = vdwg.mxu0
  %4832 = vmatpush.bf16.msra.mxu0 %v4256
  %4833 = vmatpush.bf16.msra.mxu0 %v4249
  %4834 = vmatpush.bf16.msra.mxu0 %v4242
  %4835 = vmatpush.bf16.msra.mxu0 %v4235
  %4836 = vmatpush.bf16.msra.mxu0 %v4228
  %4837 = vmatpush.bf16.msra.mxu0 %v4221
  %4838 = vmatpush.bf16.msra.mxu0 %v4214
  %4839 = vmatpush.bf16.msra.mxu0 %v4207
  %4840 = vmatmul.bf16.gmra.mxu0 %v3056
  %v4841 = vpop.f32.mrf.mxu0
  %v4842 = vadd.f32 %v4829, %v4841
  %v4843 = vpop.f32.mrf.mxu0
  %4844 = vdwg.mxu0
  %v4845 = vand.u32 2147483647, %v4530
  %v4846 = vand.u32 2147483647, %v4582
  %v4847 = vand.u32 2147483647, %v4634
  %v4848 = vand.u32 2147483647, %v4686
  %v4849 = vand.u32 2147483647, %v4738
  %v4850 = vand.u32 2147483647, %v4790
  %v4851 = vand.u32 2147483647, %v4842
  %v4852 = vsub.f32 0.0, %v4845
  %v4853 = vsub.f32 0.0, %v4846
  %v4854 = vsub.f32 0.0, %v4847
  %v4855 = vsub.f32 0.0, %v4848
  %v4856 = vsub.f32 0.0, %v4849
  %v4857 = vsub.f32 0.0, %v4850
  %v4858 = vsub.f32 0.0, %v4851
  %v4859 = vmul.f32 %v4852, 1.442695
  %v4860 = vpow.pop %v4859
  %v4861 = vmul.f32 %v4853, 1.442695
  %v4862 = vpow.pop %v4861
  %v4863 = vmul.f32 %v4854, 1.442695
  %v4864 = vpow.pop %v4863
  %v4865 = vmul.f32 %v4855, 1.442695
  %v4866 = vpow.pop %v4865
  %v4867 = vmul.f32 %v4856, 1.442695
  %v4868 = vpow.pop %v4867
  %v4869 = vmul.f32 %v4857, 1.442695
  %v4870 = vpow.pop %v4869
  %v4871 = vmul.f32 %v4858, 1.442695
  %v4872 = vpow.pop %v4871
  %vm4873 = vcmp.ge.f32.partialorder %v4530, 0.0
  %vm4874 = vcmp.ge.f32.partialorder %v4582, 0.0
  %vm4875 = vcmp.ge.f32.partialorder %v4634, 0.0
  %vm4876 = vcmp.ge.f32.partialorder %v4686, 0.0
  %vm4877 = vcmp.ge.f32.partialorder %v4738, 0.0
  %vm4878 = vcmp.ge.f32.partialorder %v4790, 0.0
  %vm4879 = vcmp.ge.f32.partialorder %v4842, 0.0
  %v4880 = vadd.f32 %v4860, 1.0
  %v4881 = vadd.f32 %v4862, 1.0
  %v4882 = vadd.f32 %v4864, 1.0
  %v4883 = vadd.f32 %v4866, 1.0
  %v4884 = vadd.f32 %v4868, 1.0
  %v4885 = vadd.f32 %v4870, 1.0
  %v4886 = vadd.f32 %v4872, 1.0
  %v4887 = vrcp.pop %v4880
  %v4888 = vmul.f32 %v4880, %v4887
  %v4889 = vsub.f32 1.0, %v4888
  %v4890 = vmul.f32 %v4887, %v4889
  %v4891 = vadd.f32 %v4887, %v4890
  %vm4892 = vweird.f32 %v4880
  %vm4893 = vweird.f32 %v4887
  %vm4894 = vmor %vm4892, %vm4893
  %v4895 = vsel %vm4894, %v4887, %v4891
  %v4896 = vand.u32 2147483647, %v4880
  %vm4897 = vcmp.eq.f32.partialorder %v4896, 8.507059e+37
  %v4898 = vand.u32 %v4880, 2147483648
  %v4899 = vor.u32 1.1754944e-38, %v4898
  %v4900 = vsel %vm4897, %v4899, %v4895
  %v4901 = vmul.f32 1.0, %v4900
  %v4902 = vrcp.pop %v4881
  %v4903 = vmul.f32 %v4881, %v4902
  %v4904 = vsub.f32 1.0, %v4903
  %v4905 = vmul.f32 %v4902, %v4904
  %v4906 = vadd.f32 %v4902, %v4905
  %vm4907 = vweird.f32 %v4881
  %vm4908 = vweird.f32 %v4902
  %vm4909 = vmor %vm4907, %vm4908
  %v4910 = vsel %vm4909, %v4902, %v4906
  %v4911 = vand.u32 2147483647, %v4881
  %vm4912 = vcmp.eq.f32.partialorder %v4911, 8.507059e+37
  %v4913 = vand.u32 %v4881, 2147483648
  %v4914 = vor.u32 1.1754944e-38, %v4913
  %v4915 = vsel %vm4912, %v4914, %v4910
  %v4916 = vmul.f32 1.0, %v4915
  %v4917 = vrcp.pop %v4882
  %v4918 = vmul.f32 %v4882, %v4917
  %v4919 = vsub.f32 1.0, %v4918
  %v4920 = vmul.f32 %v4917, %v4919
  %v4921 = vadd.f32 %v4917, %v4920
  %vm4922 = vweird.f32 %v4882
  %vm4923 = vweird.f32 %v4917
  %vm4924 = vmor %vm4922, %vm4923
  %v4925 = vsel %vm4924, %v4917, %v4921
  %v4926 = vand.u32 2147483647, %v4882
  %vm4927 = vcmp.eq.f32.partialorder %v4926, 8.507059e+37
  %v4928 = vand.u32 %v4882, 2147483648
  %v4929 = vor.u32 1.1754944e-38, %v4928
  %v4930 = vsel %vm4927, %v4929, %v4925
  %v4931 = vmul.f32 1.0, %v4930
  %v4932 = vrcp.pop %v4883
  %v4933 = vmul.f32 %v4883, %v4932
  %v4934 = vsub.f32 1.0, %v4933
  %v4935 = vmul.f32 %v4932, %v4934
  %v4936 = vadd.f32 %v4932, %v4935
  %vm4937 = vweird.f32 %v4883
  %vm4938 = vweird.f32 %v4932
  %vm4939 = vmor %vm4937, %vm4938
  %v4940 = vsel %vm4939, %v4932, %v4936
  %v4941 = vand.u32 2147483647, %v4883
  %vm4942 = vcmp.eq.f32.partialorder %v4941, 8.507059e+37
  %v4943 = vand.u32 %v4883, 2147483648
  %v4944 = vor.u32 1.1754944e-38, %v4943
  %v4945 = vsel %vm4942, %v4944, %v4940
  %v4946 = vmul.f32 1.0, %v4945
  %v4947 = vrcp.pop %v4884
  %v4948 = vmul.f32 %v4884, %v4947
  %v4949 = vsub.f32 1.0, %v4948
  %v4950 = vmul.f32 %v4947, %v4949
  %v4951 = vadd.f32 %v4947, %v4950
  %vm4952 = vweird.f32 %v4884
  %vm4953 = vweird.f32 %v4947
  %vm4954 = vmor %vm4952, %vm4953
  %v4955 = vsel %vm4954, %v4947, %v4951
  %v4956 = vand.u32 2147483647, %v4884
  %vm4957 = vcmp.eq.f32.partialorder %v4956, 8.507059e+37
  %v4958 = vand.u32 %v4884, 2147483648
  %v4959 = vor.u32 1.1754944e-38, %v4958
  %v4960 = vsel %vm4957, %v4959, %v4955
  %v4961 = vmul.f32 1.0, %v4960
  %v4962 = vrcp.pop %v4885
  %v4963 = vmul.f32 %v4885, %v4962
  %v4964 = vsub.f32 1.0, %v4963
  %v4965 = vmul.f32 %v4962, %v4964
  %v4966 = vadd.f32 %v4962, %v4965
  %vm4967 = vweird.f32 %v4885
  %vm4968 = vweird.f32 %v4962
  %vm4969 = vmor %vm4967, %vm4968
  %v4970 = vsel %vm4969, %v4962, %v4966
  %v4971 = vand.u32 2147483647, %v4885
  %vm4972 = vcmp.eq.f32.partialorder %v4971, 8.507059e+37
  %v4973 = vand.u32 %v4885, 2147483648
  %v4974 = vor.u32 1.1754944e-38, %v4973
  %v4975 = vsel %vm4972, %v4974, %v4970
  %v4976 = vmul.f32 1.0, %v4975
  %v4977 = vrcp.pop %v4886
  %v4978 = vmul.f32 %v4886, %v4977
  %v4979 = vsub.f32 1.0, %v4978
  %v4980 = vmul.f32 %v4977, %v4979
  %v4981 = vadd.f32 %v4977, %v4980
  %vm4982 = vweird.f32 %v4886
  %vm4983 = vweird.f32 %v4977
  %vm4984 = vmor %vm4982, %vm4983
  %v4985 = vsel %vm4984, %v4977, %v4981
  %v4986 = vand.u32 2147483647, %v4886
  %vm4987 = vcmp.eq.f32.partialorder %v4986, 8.507059e+37
  %v4988 = vand.u32 %v4886, 2147483648
  %v4989 = vor.u32 1.1754944e-38, %v4988
  %v4990 = vsel %vm4987, %v4989, %v4985
  %v4991 = vmul.f32 1.0, %v4990
  %v4992 = vmul.f32 %v4860, %v4900
  %v4993 = vmul.f32 %v4862, %v4915
  %v4994 = vmul.f32 %v4864, %v4930
  %v4995 = vmul.f32 %v4866, %v4945
  %v4996 = vmul.f32 %v4868, %v4960
  %v4997 = vmul.f32 %v4870, %v4975
  %v4998 = vmul.f32 %v4872, %v4990
  %v4999 = vsel %vm4873, %v4901, %v4992
  %v5000 = vsel %vm4874, %v4916, %v4993
  %v5001 = vsel %vm4875, %v4931, %v4994
  %v5002 = vsel %vm4876, %v4946, %v4995
  %v5003 = vsel %vm4877, %v4961, %v4996
  %v5004 = vsel %vm4878, %v4976, %v4997
  %v5005 = vsel %vm4879, %v4991, %v4998
  %5006 = vst [vmem:[%s14] sm:$0xff] %v4999
  %5007 = vst [vmem:[%s14 + $0x8] sm:$0xff] %v5000
  %5008 = vst [vmem:[%s14 + $0x10] sm:$0xff] %v5001
  %5009 = vst [vmem:[%s14 + $0x18] sm:$0xff] %v5002
  %5010 = vst [vmem:[%s14 + $0x20] sm:$0xff] %v5003
  %5011 = vst [vmem:[%s14 + $0x28] sm:$0xff] %v5004
  %vm5012 = vcmask 130048
  %5013 = vst.msk [vmem:[%s14 + $0x30] sm:$0xff] %vm5012, %v5005
  %5014 = vst.msk [vmem:[%s15] sm:$0xff] %vm2510, %v2403
  %5015 = vst.msk [vmem:[%s16] sm:$0xff] %vm2510, %v2484
  // Predicated region
  $region58: #{vae_forward.3} parent=0 // pred_check
    _
  $region59: #{vae_forward.3} parent=0 // pred_check_branch
    %5017 = sbr.rel (0) target = $region61
  $region60: #{vae_forward.3} parent=0 // pred_region
    _
  $region61: #{vae_forward.3} parent=0 // pred_fallthru
    _
  // Predicated region
  $region62: #{vae_forward.3} parent=0 // pred_check
    _
  $region63: #{vae_forward.3} parent=0 // pred_check_branch
    %5019 = sbr.rel (0) target = $region65
  $region64: #{vae_forward.3} parent=0 // pred_region
    _
  $region65: #{vae_forward.3} parent=0 // pred_fallthru
    _
  // Predicated region
  $region66: #{vae_forward.3} parent=0 // pred_check
    _
  $region67: #{vae_forward.3} parent=0 // pred_check_branch
    %5021 = sbr.rel (0) target = $region69
  $region68: #{vae_forward.3} parent=0 // pred_region
    _
  $region69: #{vae_forward.3} parent=0 // pred_fallthru
    _
  // Predicated region
  $region70: #{vae_forward.3} parent=0 // pred_check
    _
  $region71: #{vae_forward.3} parent=0 // pred_check_branch
    %5023 = sbr.rel (0) target = $region73
  $region72: #{vae_forward.3} parent=0 // pred_region
    _
  $region73: #{vae_forward.3} parent=0 // pred_fallthru
    _
  // Predicated region
  $region74: #{vae_forward.3} parent=0 // pred_check
    _
  $region75: #{vae_forward.3} parent=0 // pred_check_branch
    %5025 = sbr.rel (0) target = $region77
  $region76: #{vae_forward.3} parent=0 // pred_region
    _
  $region77: #{vae_forward.3} parent=0 // pred_fallthru
    _
  // Predicated region
  $region78: #{vae_forward.3} parent=0 // pred_check
    _
  $region79: #{vae_forward.3} parent=0 // pred_check_branch
    %5027 = sbr.rel (0) target = $region81
  $region80: #{vae_forward.3} parent=0 // pred_region
    _
  $region81: #{vae_forward.3} parent=0 // pred_fallthru
    _

</llo_original>
